<compile_context>
chip_gen: v7x
topology: tpu7x:2x2x1
jax: 0.10.0
libtpu: 0.0.40
codegen_flags: <defaults>
</compile_context>

<pallas_src>
import functools

import jax
import jax.numpy as jnp
from jax import lax
from jax.experimental import pallas as pl
from jax.experimental.pallas import tpu as pltpu


# ---------------------------------------------------------------------------
# Pallas kernel 1: single-step GEMM with fused bias (+ReLU) for the convs.
#   out = relu?(x @ w + b),  x:(M,K)  w:(K,N)  b:(1,N)
# Full-K block; M optionally split into 2 "parallel" blocks (v7x megacore).
# ---------------------------------------------------------------------------
def _gemm_bias_relu_kernel(x_ref, w_ref, b_ref, o_ref, *, relu):
    y = jnp.dot(x_ref[...], w_ref[...], preferred_element_type=jnp.float32)
    y = y + b_ref[...]
    if relu:
        y = jnp.maximum(y, 0.0)
    o_ref[...] = y.astype(o_ref.dtype)


def pallas_gemm(x, w, b, *, relu=False):
    M, K = x.shape
    Kw, N = w.shape
    assert K == Kw and b.shape == (1, N)
    # Split M in two parallel blocks when large and evenly splittable (no padding).
    m_blocks = 2 if (M >= 512 and M % 16 == 0) else 1
    bm = M // m_blocks
    return pl.pallas_call(
        functools.partial(_gemm_bias_relu_kernel, relu=relu),
        out_shape=jax.ShapeDtypeStruct((M, N), x.dtype),
        grid_spec=pltpu.PrefetchScalarGridSpec(
            num_scalar_prefetch=0,
            grid=(m_blocks,),
            in_specs=[
                pl.BlockSpec((bm, K), lambda i: (i, 0)),
                pl.BlockSpec((K, N), lambda i: (0, 0)),
                pl.BlockSpec((1, N), lambda i: (0, 0)),
            ],
            out_specs=pl.BlockSpec((bm, N), lambda i: (i, 0)),
        ),
        compiler_params=pltpu.CompilerParams(
            dimension_semantics=("parallel",),
        ),
    )(x, w, b)


# ---------------------------------------------------------------------------
# Pallas kernel 2: fused 2-layer MLP head.
#   out = relu(f @ w1 + b1) @ w2 + b2
# Used for the fc1+output head and for each dueling stream (one launch each).
# w2/b2 are pre-padded to 128 lanes at init; caller slices the real columns.
# ---------------------------------------------------------------------------
def _mlp_head_kernel(f_ref, w1_ref, b1_ref, w2_ref, b2_ref, o_ref):
    h = jnp.dot(f_ref[...], w1_ref[...], preferred_element_type=jnp.float32)
    h = jnp.maximum(h + b1_ref[...], 0.0)
    y = jnp.dot(h, w2_ref[...], preferred_element_type=jnp.float32) + b2_ref[...]
    o_ref[...] = y.astype(o_ref.dtype)


def pallas_mlp_head(f, w1, b1, w2, b2):
    M, K = f.shape
    K1, H = w1.shape
    H2, N = w2.shape
    assert K == K1 and H == H2 and b1.shape == (1, H) and b2.shape == (1, N)
    return pl.pallas_call(
        _mlp_head_kernel,
        out_shape=jax.ShapeDtypeStruct((M, N), f.dtype),
        grid_spec=pltpu.PrefetchScalarGridSpec(
            num_scalar_prefetch=0,
            grid=(1,),
            in_specs=[
                pl.BlockSpec((M, K), lambda i: (0, 0)),
                pl.BlockSpec((K, H), lambda i: (0, 0)),
                pl.BlockSpec((1, H), lambda i: (0, 0)),
                pl.BlockSpec((H, N), lambda i: (0, 0)),
                pl.BlockSpec((1, N), lambda i: (0, 0)),
            ],
            out_specs=pl.BlockSpec((M, N), lambda i: (0, 0)),
        ),
        compiler_params=pltpu.CompilerParams(
            dimension_semantics=("arbitrary",),
        ),
    )(f, w1, b1, w2, b2)


# ---------------------------------------------------------------------------
# Patch extraction (NHWC, valid padding) via static strided slices — no
# gather, no big transposes.  Patch flatten order is (kh, kw, C).
# ---------------------------------------------------------------------------
def _extract_patches_nhwc(x, kh, kw, stride):
    B, H, W, C = x.shape
    oh = (H - kh) // stride + 1
    ow = (W - kw) // stride + 1
    pieces = []
    for i in range(kh):
        for j in range(kw):
            pieces.append(
                lax.slice(
                    x,
                    (0, i, j, 0),
                    (B, i + (oh - 1) * stride + 1, j + (ow - 1) * stride + 1, C),
                    (1, stride, stride, 1),
                )
            )
    patches = jnp.concatenate(pieces, axis=-1)           # (B, oh, ow, kh*kw*C)
    return patches.reshape(B * oh * ow, kh * kw * C), oh, ow


def conv2d_relu(x_nhwc, w_prep, b_prep, *, ksize, stride):
    """x_nhwc:(B,H,W,C); w_prep:(kh*kw*C, O) pre-permuted; b_prep:(1,O)."""
    B = x_nhwc.shape[0]
    cols, oh, ow = _extract_patches_nhwc(x_nhwc, ksize, ksize, stride)
    y = pallas_gemm(cols, w_prep, b_prep, relu=True)      # (B*oh*ow, O)
    return y.reshape(B, oh, ow, w_prep.shape[1])          # NHWC


# ---------------------------------------------------------------------------
# Parameter init (PyTorch-native layout, uniform(-1/sqrt(fan_in), ...)) and a
# one-time `prepare_params` that converts to the kernel layout (all padding /
# permutation hoisted out of the forward).
# ---------------------------------------------------------------------------
def init_params(key, actions=6):
    ks = jax.random.split(key, 16)

    def u(k, shape, fan_in):
        bound = 1.0 / float(fan_in) ** 0.5
        return jax.random.uniform(k, shape, jnp.float32, -bound, bound)

    feat = 64 * 7 * 7
    return {
        "conv1_w": u(ks[0], (32, 4, 8, 8), 4 * 8 * 8),
        "conv1_b": u(ks[1], (32,), 4 * 8 * 8),
        "conv2_w": u(ks[2], (64, 32, 4, 4), 32 * 4 * 4),
        "conv2_b": u(ks[3], (64,), 32 * 4 * 4),
        "conv3_w": u(ks[4], (64, 64, 3, 3), 64 * 3 * 3),
        "conv3_b": u(ks[5], (64,), 64 * 3 * 3),
        "fc1_w": u(ks[6], (512, feat), feat),             # torch (out, in)
        "fc1_b": u(ks[7], (512,), feat),
        "value_stream_w": u(ks[8], (512, feat), feat),
        "value_stream_b": u(ks[9], (512,), feat),
        "value_out_w": u(ks[10], (1, 512), 512),
        "value_out_b": u(ks[11], (1,), 512),
        "adv_stream_w": u(ks[12], (512, feat), feat),
        "adv_stream_b": u(ks[13], (512,), feat),
        "output_w": u(ks[14], (actions, 512), 512),
        "output_b": u(ks[15], (actions,), 512),
    }


def prepare_params(p, head_pad=128):
    """Convert PyTorch-layout params to kernel layout (run once at init)."""

    def conv_w(w):  # (O, C, kh, kw) -> (kh*kw*C, O), matching patch order
        return jnp.transpose(w, (2, 3, 1, 0)).reshape(-1, w.shape[0])

    def fc_w_from_chw(w):  # torch (out, 64*7*7 in (c,h,w)) -> ((h,w,c), out)
        out_dim = w.shape[0]
        return jnp.transpose(w.reshape(out_dim, 64, 7, 7), (2, 3, 1, 0)).reshape(
            64 * 7 * 7, out_dim
        )

    def head_w(w):  # torch (out, in) -> (in, head_pad) zero-padded lanes
        out_dim, in_dim = w.shape
        return jnp.zeros((in_dim, head_pad), w.dtype).at[:, :out_dim].set(w.T)

    def head_b(b):
        return jnp.zeros((1, head_pad), b.dtype).at[0, : b.shape[0]].set(b)

    row = lambda b: b.reshape(1, -1)

    return {
        "conv1_w": conv_w(p["conv1_w"]), "conv1_b": row(p["conv1_b"]),
        "conv2_w": conv_w(p["conv2_w"]), "conv2_b": row(p["conv2_b"]),
        "conv3_w": conv_w(p["conv3_w"]), "conv3_b": row(p["conv3_b"]),
        "fc1_w": fc_w_from_chw(p["fc1_w"]), "fc1_b": row(p["fc1_b"]),
        "value_stream_w": fc_w_from_chw(p["value_stream_w"]),
        "value_stream_b": row(p["value_stream_b"]),
        "value_out_w": head_w(p["value_out_w"]), "value_out_b": head_b(p["value_out_b"]),
        "adv_stream_w": fc_w_from_chw(p["adv_stream_w"]),
        "adv_stream_b": row(p["adv_stream_b"]),
        "output_w": head_w(p["output_w"]), "output_b": head_b(p["output_b"]),
    }


# ---------------------------------------------------------------------------
# Full forward (dueling=0 is the module default; dueling path also supported)
# ---------------------------------------------------------------------------
def net_forward(prep, x_nchw, dueling=0, actions=6):
    x = jnp.transpose(x_nchw, (0, 2, 3, 1))  # single small NCHW->NHWC relayout
    B = x.shape[0]
    out = conv2d_relu(x, prep["conv1_w"], prep["conv1_b"], ksize=8, stride=4)
    out = conv2d_relu(out, prep["conv2_w"], prep["conv2_b"], ksize=4, stride=2)
    out = conv2d_relu(out, prep["conv3_w"], prep["conv3_b"], ksize=3, stride=1)
    # (h, w, c) flatten; FC weight rows were permuted at init to match torch's
    # (c, h, w) view(B, -1) semantics exactly.
    feat = out.reshape(B, -1)  # (B, 3136)

    if dueling:
        # TODO(synk): backward-only register_hook (grad / sqrt(2)) has no forward equivalent.
        value = pallas_mlp_head(
            feat, prep["value_stream_w"], prep["value_stream_b"],
            prep["value_out_w"], prep["value_out_b"],
        )[:, :1]
        adv = pallas_mlp_head(
            feat, prep["adv_stream_w"], prep["adv_stream_b"],
            prep["output_w"], prep["output_b"],
        )[:, :actions]
        q = value + adv - adv.mean(axis=1, keepdims=True)  # tiny combine (glue)
    else:
        q = pallas_mlp_head(
            feat, prep["fc1_w"], prep["fc1_b"], prep["output_w"], prep["output_b"]
        )[:, :actions]
    return q  # DiscreteActionValue wrapper holds these Q-values


if __name__ == "__main__":
    key = jax.random.PRNGKey(0)
    pkey, xkey = jax.random.split(key)
    params = prepare_params(init_params(pkey, actions=6))
    # The FC layers require 84x84 input (-> 7x7 after the conv stack).
    x = jax.random.normal(xkey, (2, 4, 84, 84), jnp.float32)

    fwd = jax.jit(functools.partial(net_forward, dueling=0, actions=6))
    q = fwd(params, x)
    jax.block_until_ready(q)
    assert q.shape == (2, 6) and q.dtype == jnp.float32

    # Exercise the dueling head too (same kernel shapes, fused per stream).
    fwd_duel = jax.jit(functools.partial(net_forward, dueling=1, actions=6))
    q_duel = fwd_duel(params, x)
    jax.block_until_ready(q_duel)
    assert q_duel.shape == (2, 6) and q_duel.dtype == jnp.float32

    print("KERNEL_OK")
</pallas_src>

<mosaic_0001>
module attributes {stable_mosaic.version = 11 : i64} {
  func.func @_gemm_bias_relu_kernel(%arg0: i32, %arg1: memref<400x256xf32, #tpu.memory_space<vmem>>, %arg2: memref<256x32xf32, #tpu.memory_space<vmem>>, %arg3: memref<1x32xf32, #tpu.memory_space<vmem>>, %arg4: memref<400x32xf32, #tpu.memory_space<vmem>>) attributes {dimension_semantics = [#tpu.dimension_semantics<parallel>], iteration_bounds = array<i64: 2>, scalar_prefetch = 0 : i64, scratch_operands = 0 : i64, tpu.core_type = #tpu.core_type<tc>, window_params = [{transform_indices = @transform_0, window_bounds = array<i64: 400, 256>}, {pipeline_mode = #tpu.pipeline_mode<synchronous>, transform_indices = @transform_1, window_bounds = array<i64: 256, 32>}, {pipeline_mode = #tpu.pipeline_mode<synchronous>, transform_indices = @transform_2, window_bounds = array<i64: 1, 32>}, {transform_indices = @transform_3, window_bounds = array<i64: 400, 32>}]} {
    %c0 = arith.constant 0 : index
    %c0_0 = arith.constant 0 : index
    %0 = vector.load %arg1[%c0, %c0_0] : memref<400x256xf32, #tpu.memory_space<vmem>>, vector<400x256xf32>
    %c0_1 = arith.constant 0 : index
    %c0_2 = arith.constant 0 : index
    %1 = vector.load %arg2[%c0_1, %c0_2] : memref<256x32xf32, #tpu.memory_space<vmem>>, vector<256x32xf32>
    %cst = arith.constant dense<0.000000e+00> : vector<400x32xf32>
    %2 = tpu.matmul %0, %1, %cst {dimension_numbers = #tpu.dot_dimension_numbers<[1], [0], [0], [1], [0, 0, 1, 1], [], []>} : vector<400x256xf32>, vector<256x32xf32>, vector<400x32xf32> -> vector<400x32xf32>
    %c0_3 = arith.constant 0 : index
    %c0_4 = arith.constant 0 : index
    %3 = vector.load %arg3[%c0_3, %c0_4] : memref<1x32xf32, #tpu.memory_space<vmem>>, vector<1x32xf32>
    %4 = vector.broadcast %3 : vector<1x32xf32> to vector<400x32xf32>
    %5 = arith.addf %2, %4 : vector<400x32xf32>
    %cst_5 = arith.constant 0.000000e+00 : f32
    %6 = vector.broadcast %cst_5 : f32 to vector<400x32xf32>
    %7 = arith.maximumf %5, %6 : vector<400x32xf32>
    %c0_6 = arith.constant 0 : index
    %c0_7 = arith.constant 0 : index
    %8 = vector.load %arg4[%c0_6, %c0_7] : memref<400x32xf32, #tpu.memory_space<vmem>>, vector<400x32xf32>
    tpu.vector_store %arg4[%c0_6, %c0_7], %7 {strides = array<i32>} : memref<400x32xf32, #tpu.memory_space<vmem>>, vector<400x32xf32>,
    return
  }
  func.func @transform_0(%arg0: i32) -> (i32, i32) {
    %c0_i32 = arith.constant 0 : i32
    %c0_i32_0 = arith.constant 0 : i32
    return %arg0, %c0_i32 : i32, i32
  }
  func.func @transform_1(%arg0: i32) -> (i32, i32) {
    %c0_i32 = arith.constant 0 : i32
    %c0_i32_0 = arith.constant 0 : i32
    %c0_i32_1 = arith.constant 0 : i32
    return %c0_i32, %c0_i32_0 : i32, i32
  }
  func.func @transform_2(%arg0: i32) -> (i32, i32) {
    %c0_i32 = arith.constant 0 : i32
    %c0_i32_0 = arith.constant 0 : i32
    %c0_i32_1 = arith.constant 0 : i32
    return %c0_i32, %c0_i32_0 : i32, i32
  }
  func.func @transform_3(%arg0: i32) -> (i32, i32) {
    %c0_i32 = arith.constant 0 : i32
    %c0_i32_0 = arith.constant 0 : i32
    return %arg0, %c0_i32 : i32, i32
  }
}

module attributes {stable_mosaic.version = 11 : i64} {
  func.func @_gemm_bias_relu_kernel(%arg0: i32, %arg1: memref<162x512xf32, #tpu.memory_space<vmem>>, %arg2: memref<512x64xf32, #tpu.memory_space<vmem>>, %arg3: memref<1x64xf32, #tpu.memory_space<vmem>>, %arg4: memref<162x64xf32, #tpu.memory_space<vmem>>) attributes {dimension_semantics = [#tpu.dimension_semantics<parallel>], iteration_bounds = array<i64: 1>, scalar_prefetch = 0 : i64, scratch_operands = 0 : i64, tpu.core_type = #tpu.core_type<tc>, window_params = [{transform_indices = @transform_0, window_bounds = array<i64: 162, 512>}, {pipeline_mode = #tpu.pipeline_mode<synchronous>, transform_indices = @transform_1, window_bounds = array<i64: 512, 64>}, {pipeline_mode = #tpu.pipeline_mode<synchronous>, transform_indices = @transform_2, window_bounds = array<i64: 1, 64>}, {transform_indices = @transform_3, window_bounds = array<i64: 162, 64>}]} {
    %c0 = arith.constant 0 : index
    %c0_0 = arith.constant 0 : index
    %0 = vector.load %arg1[%c0, %c0_0] : memref<162x512xf32, #tpu.memory_space<vmem>>, vector<162x512xf32>
    %c0_1 = arith.constant 0 : index
    %c0_2 = arith.constant 0 : index
    %1 = vector.load %arg2[%c0_1, %c0_2] : memref<512x64xf32, #tpu.memory_space<vmem>>, vector<512x64xf32>
    %cst = arith.constant dense<0.000000e+00> : vector<162x64xf32>
    %2 = tpu.matmul %0, %1, %cst {dimension_numbers = #tpu.dot_dimension_numbers<[1], [0], [0], [1], [0, 0, 1, 1], [], []>} : vector<162x512xf32>, vector<512x64xf32>, vector<162x64xf32> -> vector<162x64xf32>
    %c0_3 = arith.constant 0 : index
    %c0_4 = arith.constant 0 : index
    %3 = vector.load %arg3[%c0_3, %c0_4] : memref<1x64xf32, #tpu.memory_space<vmem>>, vector<1x64xf32>
    %4 = vector.broadcast %3 : vector<1x64xf32> to vector<162x64xf32>
    %5 = arith.addf %2, %4 : vector<162x64xf32>
    %cst_5 = arith.constant 0.000000e+00 : f32
    %6 = vector.broadcast %cst_5 : f32 to vector<162x64xf32>
    %7 = arith.maximumf %5, %6 : vector<162x64xf32>
    %c0_6 = arith.constant 0 : index
    %c0_7 = arith.constant 0 : index
    %8 = vector.load %arg4[%c0_6, %c0_7] : memref<162x64xf32, #tpu.memory_space<vmem>>, vector<162x64xf32>
    tpu.vector_store %arg4[%c0_6, %c0_7], %7 {strides = array<i32>} : memref<162x64xf32, #tpu.memory_space<vmem>>, vector<162x64xf32>,
    return
  }
  func.func @transform_0(%arg0: i32) -> (i32, i32) {
    %c0_i32 = arith.constant 0 : i32
    %c0_i32_0 = arith.constant 0 : i32
    return %arg0, %c0_i32 : i32, i32
  }
  func.func @transform_1(%arg0: i32) -> (i32, i32) {
    %c0_i32 = arith.constant 0 : i32
    %c0_i32_0 = arith.constant 0 : i32
    %c0_i32_1 = arith.constant 0 : i32
    return %c0_i32, %c0_i32_0 : i32, i32
  }
  func.func @transform_2(%arg0: i32) -> (i32, i32) {
    %c0_i32 = arith.constant 0 : i32
    %c0_i32_0 = arith.constant 0 : i32
    %c0_i32_1 = arith.constant 0 : i32
    return %c0_i32, %c0_i32_0 : i32, i32
  }
  func.func @transform_3(%arg0: i32) -> (i32, i32) {
    %c0_i32 = arith.constant 0 : i32
    %c0_i32_0 = arith.constant 0 : i32
    return %arg0, %c0_i32 : i32, i32
  }
}

module attributes {stable_mosaic.version = 11 : i64} {
  func.func @_gemm_bias_relu_kernel(%arg0: i32, %arg1: memref<98x576xf32, #tpu.memory_space<vmem>>, %arg2: memref<576x64xf32, #tpu.memory_space<vmem>>, %arg3: memref<1x64xf32, #tpu.memory_space<vmem>>, %arg4: memref<98x64xf32, #tpu.memory_space<vmem>>) attributes {dimension_semantics = [#tpu.dimension_semantics<parallel>], iteration_bounds = array<i64: 1>, scalar_prefetch = 0 : i64, scratch_operands = 0 : i64, tpu.core_type = #tpu.core_type<tc>, window_params = [{transform_indices = @transform_0, window_bounds = array<i64: 98, 576>}, {pipeline_mode = #tpu.pipeline_mode<synchronous>, transform_indices = @transform_1, window_bounds = array<i64: 576, 64>}, {pipeline_mode = #tpu.pipeline_mode<synchronous>, transform_indices = @transform_2, window_bounds = array<i64: 1, 64>}, {transform_indices = @transform_3, window_bounds = array<i64: 98, 64>}]} {
    %c0 = arith.constant 0 : index
    %c0_0 = arith.constant 0 : index
    %0 = vector.load %arg1[%c0, %c0_0] : memref<98x576xf32, #tpu.memory_space<vmem>>, vector<98x576xf32>
    %c0_1 = arith.constant 0 : index
    %c0_2 = arith.constant 0 : index
    %1 = vector.load %arg2[%c0_1, %c0_2] : memref<576x64xf32, #tpu.memory_space<vmem>>, vector<576x64xf32>
    %cst = arith.constant dense<0.000000e+00> : vector<98x64xf32>
    %2 = tpu.matmul %0, %1, %cst {dimension_numbers = #tpu.dot_dimension_numbers<[1], [0], [0], [1], [0, 0, 1, 1], [], []>} : vector<98x576xf32>, vector<576x64xf32>, vector<98x64xf32> -> vector<98x64xf32>
    %c0_3 = arith.constant 0 : index
    %c0_4 = arith.constant 0 : index
    %3 = vector.load %arg3[%c0_3, %c0_4] : memref<1x64xf32, #tpu.memory_space<vmem>>, vector<1x64xf32>
    %4 = vector.broadcast %3 : vector<1x64xf32> to vector<98x64xf32>
    %5 = arith.addf %2, %4 : vector<98x64xf32>
    %cst_5 = arith.constant 0.000000e+00 : f32
    %6 = vector.broadcast %cst_5 : f32 to vector<98x64xf32>
    %7 = arith.maximumf %5, %6 : vector<98x64xf32>
    %c0_6 = arith.constant 0 : index
    %c0_7 = arith.constant 0 : index
    %8 = vector.load %arg4[%c0_6, %c0_7] : memref<98x64xf32, #tpu.memory_space<vmem>>, vector<98x64xf32>
    tpu.vector_store %arg4[%c0_6, %c0_7], %7 {strides = array<i32>} : memref<98x64xf32, #tpu.memory_space<vmem>>, vector<98x64xf32>,
    return
  }
  func.func @transform_0(%arg0: i32) -> (i32, i32) {
    %c0_i32 = arith.constant 0 : i32
    %c0_i32_0 = arith.constant 0 : i32
    return %arg0, %c0_i32 : i32, i32
  }
  func.func @transform_1(%arg0: i32) -> (i32, i32) {
    %c0_i32 = arith.constant 0 : i32
    %c0_i32_0 = arith.constant 0 : i32
    %c0_i32_1 = arith.constant 0 : i32
    return %c0_i32, %c0_i32_0 : i32, i32
  }
  func.func @transform_2(%arg0: i32) -> (i32, i32) {
    %c0_i32 = arith.constant 0 : i32
    %c0_i32_0 = arith.constant 0 : i32
    %c0_i32_1 = arith.constant 0 : i32
    return %c0_i32, %c0_i32_0 : i32, i32
  }
  func.func @transform_3(%arg0: i32) -> (i32, i32) {
    %c0_i32 = arith.constant 0 : i32
    %c0_i32_0 = arith.constant 0 : i32
    return %arg0, %c0_i32 : i32, i32
  }
}

module attributes {stable_mosaic.version = 11 : i64} {
  func.func @_mlp_head_kernel(%arg0: i32, %arg1: memref<2x3136xf32, #tpu.memory_space<vmem>>, %arg2: memref<3136x512xf32, #tpu.memory_space<vmem>>, %arg3: memref<1x512xf32, #tpu.memory_space<vmem>>, %arg4: memref<512x128xf32, #tpu.memory_space<vmem>>, %arg5: memref<1x128xf32, #tpu.memory_space<vmem>>, %arg6: memref<2x128xf32, #tpu.memory_space<vmem>>) attributes {dimension_semantics = [#tpu.dimension_semantics<arbitrary>], iteration_bounds = array<i64: 1>, scalar_prefetch = 0 : i64, scratch_operands = 0 : i64, tpu.core_type = #tpu.core_type<tc>, window_params = [{pipeline_mode = #tpu.pipeline_mode<synchronous>, transform_indices = @transform_0, window_bounds = array<i64: 2, 3136>}, {pipeline_mode = #tpu.pipeline_mode<synchronous>, transform_indices = @transform_1, window_bounds = array<i64: 3136, 512>}, {pipeline_mode = #tpu.pipeline_mode<synchronous>, transform_indices = @transform_2, window_bounds = array<i64: 1, 512>}, {pipeline_mode = #tpu.pipeline_mode<synchronous>, transform_indices = @transform_3, window_bounds = array<i64: 512, 128>}, {pipeline_mode = #tpu.pipeline_mode<synchronous>, transform_indices = @transform_4, window_bounds = array<i64: 1, 128>}, {pipeline_mode = #tpu.pipeline_mode<synchronous>, transform_indices = @transform_5, window_bounds = array<i64: 2, 128>}]} {
    %c0 = arith.constant 0 : index
    %c0_0 = arith.constant 0 : index
    %0 = vector.load %arg1[%c0, %c0_0] : memref<2x3136xf32, #tpu.memory_space<vmem>>, vector<2x3136xf32>
    %c0_1 = arith.constant 0 : index
    %c0_2 = arith.constant 0 : index
    %1 = vector.load %arg2[%c0_1, %c0_2] : memref<3136x512xf32, #tpu.memory_space<vmem>>, vector<3136x512xf32>
    %cst = arith.constant dense<0.000000e+00> : vector<2x512xf32>
    %2 = tpu.matmul %0, %1, %cst {dimension_numbers = #tpu.dot_dimension_numbers<[1], [0], [0], [1], [0, 0, 1, 1], [], []>} : vector<2x3136xf32>, vector<3136x512xf32>, vector<2x512xf32> -> vector<2x512xf32>
    %c0_3 = arith.constant 0 : index
    %c0_4 = arith.constant 0 : index
    %3 = vector.load %arg3[%c0_3, %c0_4] : memref<1x512xf32, #tpu.memory_space<vmem>>, vector<1x512xf32>
    %4 = vector.broadcast %3 : vector<1x512xf32> to vector<2x512xf32>
    %5 = arith.addf %2, %4 : vector<2x512xf32>
    %cst_5 = arith.constant 0.000000e+00 : f32
    %6 = vector.broadcast %cst_5 : f32 to vector<2x512xf32>
    %7 = arith.maximumf %5, %6 : vector<2x512xf32>
    %c0_6 = arith.constant 0 : index
    %c0_7 = arith.constant 0 : index
    %8 = vector.load %arg4[%c0_6, %c0_7] : memref<512x128xf32, #tpu.memory_space<vmem>>, vector<512x128xf32>
    %cst_8 = arith.constant dense<0.000000e+00> : vector<2x128xf32>
    %9 = tpu.matmul %7, %8, %cst_8 {dimension_numbers = #tpu.dot_dimension_numbers<[1], [0], [0], [1], [0, 0, 1, 1], [], []>} : vector<2x512xf32>, vector<512x128xf32>, vector<2x128xf32> -> vector<2x128xf32>
    %c0_9 = arith.constant 0 : index
    %c0_10 = arith.constant 0 : index
    %10 = vector.load %arg5[%c0_9, %c0_10] : memref<1x128xf32, #tpu.memory_space<vmem>>, vector<1x128xf32>
    %11 = vector.broadcast %10 : vector<1x128xf32> to vector<2x128xf32>
    %12 = arith.addf %9, %11 : vector<2x128xf32>
    %c0_11 = arith.constant 0 : index
    %c0_12 = arith.constant 0 : index
    %13 = vector.load %arg6[%c0_11, %c0_12] : memref<2x128xf32, #tpu.memory_space<vmem>>, vector<2x128xf32>
    tpu.vector_store %arg6[%c0_11, %c0_12], %12 {strides = array<i32>} : memref<2x128xf32, #tpu.memory_space<vmem>>, vector<2x128xf32>,
    return
  }
  func.func @transform_0(%arg0: i32) -> (i32, i32) {
    %c0_i32 = arith.constant 0 : i32
    %c0_i32_0 = arith.constant 0 : i32
    %c0_i32_1 = arith.constant 0 : i32
    return %c0_i32, %c0_i32_0 : i32, i32
  }
  func.func @transform_1(%arg0: i32) -> (i32, i32) {
    %c0_i32 = arith.constant 0 : i32
    %c0_i32_0 = arith.constant 0 : i32
    %c0_i32_1 = arith.constant 0 : i32
    return %c0_i32, %c0_i32_0 : i32, i32
  }
  func.func @transform_2(%arg0: i32) -> (i32, i32) {
    %c0_i32 = arith.constant 0 : i32
    %c0_i32_0 = arith.constant 0 : i32
    %c0_i32_1 = arith.constant 0 : i32
    return %c0_i32, %c0_i32_0 : i32, i32
  }
  func.func @transform_3(%arg0: i32) -> (i32, i32) {
    %c0_i32 = arith.constant 0 : i32
    %c0_i32_0 = arith.constant 0 : i32
    %c0_i32_1 = arith.constant 0 : i32
    return %c0_i32, %c0_i32_0 : i32, i32
  }
  func.func @transform_4(%arg0: i32) -> (i32, i32) {
    %c0_i32 = arith.constant 0 : i32
    %c0_i32_0 = arith.constant 0 : i32
    %c0_i32_1 = arith.constant 0 : i32
    return %c0_i32, %c0_i32_0 : i32, i32
  }
  func.func @transform_5(%arg0: i32) -> (i32, i32) {
    %c0_i32 = arith.constant 0 : i32
    %c0_i32_0 = arith.constant 0 : i32
    %c0_i32_1 = arith.constant 0 : i32
    return %c0_i32, %c0_i32_0 : i32, i32
  }
}

</mosaic_0001>

<llo_original>
// kernel: net_forward.4
$region0: #{net_forward.4}
  #allocation0 [shape = 'u32[]', space=smem, size = 0x4, offset = 0x4, fixed_abs, tag = 'smem constant byte address 0x4 - core index']
  #allocation1 [shape = 'u32[144,128]{1,0:T(1,128)}', space=vmem, size = 0x12000, scoped, tag = 'internal scratch']
  %s0 = inlined_call_operand.vmem [shape: f32[800,256], index: 0, kind: input, shape index: {}]
  %s1 = inlined_call_operand.vmem [shape: f32[256,32], index: 1, kind: input, shape index: {}]
  %s2 = inlined_call_operand.vmem [shape: f32[1,32], index: 2, kind: input, shape index: {}]
  %s3 = inlined_call_operand.vmem [shape: f32[800,32], index: 3, kind: output, shape index: {}]
  %s4 = sld [smem:[#allocation0]]
  $region45: #{net_forward.4} parent=0
    _
  %s6 = ssub.s32 1, %s4
  %s7 = scalar_select 0, %s6, %s4
  loop: start=0, step=1, limit=4
  $region2: #{net_forward.4} parent=0 // loop_pre_header
    _
  $region3: #{net_forward.4} parent=0 // loop_header
    %s9 = sphi 0, %s13
    %p10 = scmp.ge.s32.totalorder %s9, 4
    %s19 = sphi 0, %s21
    %s22 = sphi 0, %s19
    %s23 = sphi 0, %s22
    %s39 = sphi 0, %s23
    %s43 = sphi 0, %s43
    %s45 = sphi 0, %s43
    %s46 = sphi 0, %s45
    %s60 = sphi 0, %s46
    %s64 = sphi 0, %s64
    %s66 = sphi 0, %s64
    %s67 = sphi 0, %s66
    %s81 = sphi 0, %s67
    %s87 = sphi 0, %s89
    %s90 = sphi 0, %s87
    %s91 = sphi 0, %s90
    %s107 = sphi 0, %s91
  $region4: #{net_forward.4} parent=0 // loop_header_branch
    %12 = sbr.rel (%p10) target = $region8
  $region5: #{net_forward.4} parent=0 // loop_body
    %s14 = ssub.s32 %s9, 1
    %s15 = ssub.s32 %s9, 2
    %s16 = sadd.s32 %s9, 1
    %s17 = ssub.s32 %s9, %s16
    %p18 = scmp.eq.s32.totalorder %s17, 0
    %s20 = sadd.s32 %s19, 1
    %s21 = scalar_select %p18, %s19, %s20
    %p24 = pneg %p18
    %p25 = scmp.eq.s32.totalorder %s9, 1
    %p26 = por %p24, %p25
    %p27 = scmp.ne.s32.totalorder %s19, %s22
    %p28 = scmp.eq.s32.totalorder %s9, 0
    %p29 = por %p27, %p28
    %p30 = scmp.ne.s32.totalorder %s19, %s22
    %p31 = scmp.eq.s32.totalorder %s14, 1
    %p32 = por %p30, %p31
    %p33 = scmp.ne.s32.totalorder %s22, %s23
    %p34 = scmp.eq.s32.totalorder %s14, 0
    %p35 = por %p33, %p34
    %p36 = scmp.ne.s32.totalorder %s22, %s23
    %p37 = scmp.eq.s32.totalorder %s15, 1
    %p38 = por %p36, %p37
    %p40 = scmp.ne.s32.totalorder %s23, %s39
    %p41 = scmp.eq.s32.totalorder %s15, 0
    %p42 = por %p40, %p41
    %s44 = sadd.s32 %s43, 1
    %p47 = scmp.eq.s32.totalorder %s9, 1
    %p48 = scmp.ne.s32.totalorder %s43, %s45
    %p49 = scmp.eq.s32.totalorder %s9, 0
    %p50 = por %p48, %p49
    %p51 = scmp.ne.s32.totalorder %s43, %s45
    %p52 = scmp.eq.s32.totalorder %s14, 1
    %p53 = por %p51, %p52
    %p54 = scmp.ne.s32.totalorder %s45, %s46
    %p55 = scmp.eq.s32.totalorder %s14, 0
    %p56 = por %p54, %p55
    %p57 = scmp.ne.s32.totalorder %s45, %s46
    %p58 = scmp.eq.s32.totalorder %s15, 1
    %p59 = por %p57, %p58
    %p61 = scmp.ne.s32.totalorder %s46, %s60
    %p62 = scmp.eq.s32.totalorder %s15, 0
    %p63 = por %p61, %p62
    %s65 = sadd.s32 %s64, 1
    %p68 = scmp.eq.s32.totalorder %s9, 1
    %p69 = scmp.ne.s32.totalorder %s64, %s66
    %p70 = scmp.eq.s32.totalorder %s9, 0
    %p71 = por %p69, %p70
    %p72 = scmp.ne.s32.totalorder %s64, %s66
    %p73 = scmp.eq.s32.totalorder %s14, 1
    %p74 = por %p72, %p73
    %p75 = scmp.ne.s32.totalorder %s66, %s67
    %p76 = scmp.eq.s32.totalorder %s14, 0
    %p77 = por %p75, %p76
    %p78 = scmp.ne.s32.totalorder %s66, %s67
    %p79 = scmp.eq.s32.totalorder %s15, 1
    %p80 = por %p78, %p79
    %p82 = scmp.ne.s32.totalorder %s67, %s81
    %p83 = scmp.eq.s32.totalorder %s15, 0
    %p84 = por %p82, %p83
    %s85 = ssub.s32 %s9, %s16
    %p86 = scmp.eq.s32.totalorder %s85, 0
    %s88 = sadd.s32 %s87, 1
    %s89 = scalar_select %p86, %s87, %s88
    %p92 = pneg %p86
    %p93 = scmp.eq.s32.totalorder %s9, 1
    %p94 = por %p92, %p93
    %p95 = scmp.ne.s32.totalorder %s87, %s90
    %p96 = scmp.eq.s32.totalorder %s9, 0
    %p97 = por %p95, %p96
    %p98 = scmp.ne.s32.totalorder %s87, %s90
    %p99 = scmp.eq.s32.totalorder %s14, 1
    %p100 = por %p98, %p99
    %p101 = scmp.ne.s32.totalorder %s90, %s91
    %p102 = scmp.eq.s32.totalorder %s14, 0
    %p103 = por %p101, %p102
    %p104 = scmp.ne.s32.totalorder %s90, %s91
    %p105 = scmp.eq.s32.totalorder %s15, 1
    %p106 = por %p104, %p105
    %p108 = scmp.ne.s32.totalorder %s91, %s107
    %p109 = scmp.eq.s32.totalorder %s15, 0
    %p110 = por %p108, %p109
    %p111 = scmp.le.s32.totalorder 1, %s9
    %p112 = scmp.lt.s32.totalorder %s9, 3
    %p113 = pnand %p111, %p112
    %p114 = pneg %p113
    // Predicated region
    $region9: #{net_forward.4} parent=5 // pred_check
      _
    $region10: #{net_forward.4} parent=5 // pred_check_branch
      %116 = sbr.rel (%p113) target = $region12
    $region11: #{net_forward.4} parent=5 // pred_region
      %s117 = ssub.s32 %s9, 1
      // Predicated region
      $region13: #{net_forward.4} parent=11 // pred_check
        %p118 = pneg %p56
      $region14: #{net_forward.4} parent=11 // pred_check_branch
        %120 = sbr.rel (%p118) target = $region16
      $region15: #{net_forward.4} parent=11 // pred_region
        _
      $region16: #{net_forward.4} parent=11 // pred_fallthru
        _
      // Predicated region
      $region17: #{net_forward.4} parent=11 // pred_check
        %p121 = pneg %p77
      $region18: #{net_forward.4} parent=11 // pred_check_branch
        %123 = sbr.rel (%p121) target = $region20
      $region19: #{net_forward.4} parent=11 // pred_region
        _
      $region20: #{net_forward.4} parent=11 // pred_fallthru
        _
    $region12: #{net_forward.4} parent=5 // pred_fallthru
      _
    %p124 = scmp.lt.s32.totalorder %s9, 2
    // Predicated region
    $region21: #{net_forward.4} parent=5 // pred_check
      %p125 = pneg %p124
    $region22: #{net_forward.4} parent=5 // pred_check_branch
      %127 = sbr.rel (%p125) target = $region24
    $region23: #{net_forward.4} parent=5 // pred_region
      // Predicated region
      $region25: #{net_forward.4} parent=23 // pred_check
        %p128 = pneg %p29
      $region26: #{net_forward.4} parent=23 // pred_check_branch
        %130 = sbr.rel (%p128) target = $region28
      $region27: #{net_forward.4} parent=23 // pred_region
        %s131 = smul.u32 50, %s9
        %p132 = scmp.lt.s32.totalorder %s131, 99
        %s133 = scalar_select %p132, %s131, 99
        %s134 = smul.addr %s133, 2
        %s135 = smul.addr %s134, 8
        %s136 = scalar_lea.vmem %s0, %s135
        %s137 = smul.u32 50, %s9
      $region28: #{net_forward.4} parent=23 // pred_fallthru
        _
    $region24: #{net_forward.4} parent=5 // pred_fallthru
      _
    %p138 = scmp.le.s32.totalorder 1, %s9
    %p139 = scmp.lt.s32.totalorder %s9, 3
    %p140 = pnand %p138, %p139
    %p141 = pneg %p140
    // Predicated region
    $region29: #{net_forward.4} parent=5 // pred_check
      _
    $region30: #{net_forward.4} parent=5 // pred_check_branch
      %143 = sbr.rel (%p140) target = $region32
    $region31: #{net_forward.4} parent=5 // pred_region
      %s144 = ssub.s32 %s9, 1
      %s145 = smul.u32 50, %s14
      %p146 = scmp.lt.s32.totalorder %s145, 99
      %s147 = scalar_select %p146, %s145, 99
      %s148 = smul.addr %s147, 2
      %s149 = smul.addr %s148, 8
      %s150 = scalar_lea.vmem %s0, %s149
      %p151 = pneg %p35
      %p152 = pneg %p32
      %p153 = pneg %p56
      %p154 = pneg %p53
      %p155 = pneg %p77
      %p156 = pneg %p74
      %p157 = pneg %p103
      %p158 = pneg %p100
      %s159 = smul.u32 50, %s14
      %p160 = scmp.lt.s32.totalorder %s159, 99
      %s161 = scalar_select %p160, %s159, 99
      %s162 = smul.addr %s161, 8
      %s163 = scalar_lea.vmem %s3, %s162
      %s164 = smul.u32 50, %s14
      %p165 = scmp.lt.s32.totalorder %s164, 99
      %s166 = scalar_select %p165, %s164, 99
      %s167 = smul.addr %s166, 2
      %s168 = smul.addr %s167, 8
      %s169 = scalar_lea.vmem %s0, %s168
      %s170 = smul.u32 50, %s14
      %s171 = smul.u32 50, %s14
      %p172 = scmp.lt.s32.totalorder %s171, 99
      %s173 = scalar_select %p172, %s171, 99
      %s174 = smul.addr %s173, 8
      %s175 = scalar_lea.vmem %s3, %s174
      %s176 = smul.u32 50, %s14
      %v177 = vld [vmem:[%s169] sm:$0xff]
      %v178 = vld [vmem:[%s169 + $0x8] sm:$0xff]
      %v179 = vld [vmem:[%s169 + $0x10] sm:$0xff]
      %v180 = vld [vmem:[%s169 + $0x18] sm:$0xff]
      %v181 = vld [vmem:[%s169 + $0x20] sm:$0xff]
      %v182 = vld [vmem:[%s169 + $0x28] sm:$0xff]
      %v183 = vld [vmem:[%s169 + $0x30] sm:$0xff]
      %v184 = vld [vmem:[%s169 + $0x38] sm:$0xff]
      %v185 = vld [vmem:[%s169 + $0x40] sm:$0xff]
      %v186 = vld [vmem:[%s169 + $0x48] sm:$0xff]
      %v187 = vld [vmem:[%s169 + $0x50] sm:$0xff]
      %v188 = vld [vmem:[%s169 + $0x58] sm:$0xff]
      %v189 = vld [vmem:[%s169 + $0x60] sm:$0xff]
      %v190 = vld [vmem:[%s169 + $0x68] sm:$0xff]
      %v191 = vld [vmem:[%s169 + $0x70] sm:$0xff]
      %v192 = vld [vmem:[%s169 + $0x78] sm:$0xff]
      %v193 = vld [vmem:[%s169 + $0x80] sm:$0xff]
      %v194 = vld [vmem:[%s169 + $0x88] sm:$0xff]
      %v195 = vld [vmem:[%s169 + $0x90] sm:$0xff]
      %v196 = vld [vmem:[%s169 + $0x98] sm:$0xff]
      %v197 = vld [vmem:[%s169 + $0xa0] sm:$0xff]
      %v198 = vld [vmem:[%s169 + $0xa8] sm:$0xff]
      %v199 = vld [vmem:[%s169 + $0xb0] sm:$0xff]
      %v200 = vld [vmem:[%s169 + $0xb8] sm:$0xff]
      %v201 = vld [vmem:[%s169 + $0xc0] sm:$0xff]
      %v202 = vld [vmem:[%s169 + $0xc8] sm:$0xff]
      %v203 = vld [vmem:[%s169 + $0xd0] sm:$0xff]
      %v204 = vld [vmem:[%s169 + $0xd8] sm:$0xff]
      %v205 = vld [vmem:[%s169 + $0xe0] sm:$0xff]
      %v206 = vld [vmem:[%s169 + $0xe8] sm:$0xff]
      %v207 = vld [vmem:[%s169 + $0xf0] sm:$0xff]
      %v208 = vld [vmem:[%s169 + $0xf8] sm:$0xff]
      %v209 = vld [vmem:[%s169 + $0x100] sm:$0xff]
      %v210 = vld [vmem:[%s169 + $0x108] sm:$0xff]
      %v211 = vld [vmem:[%s169 + $0x110] sm:$0xff]
      %v212 = vld [vmem:[%s169 + $0x118] sm:$0xff]
      %v213 = vld [vmem:[%s169 + $0x120] sm:$0xff]
      %v214 = vld [vmem:[%s169 + $0x128] sm:$0xff]
      %v215 = vld [vmem:[%s169 + $0x130] sm:$0xff]
      %v216 = vld [vmem:[%s169 + $0x138] sm:$0xff]
      %v217 = vld [vmem:[%s169 + $0x140] sm:$0xff]
      %v218 = vld [vmem:[%s169 + $0x148] sm:$0xff]
      %v219 = vld [vmem:[%s169 + $0x150] sm:$0xff]
      %v220 = vld [vmem:[%s169 + $0x158] sm:$0xff]
      %v221 = vld [vmem:[%s169 + $0x160] sm:$0xff]
      %v222 = vld [vmem:[%s169 + $0x168] sm:$0xff]
      %v223 = vld [vmem:[%s169 + $0x170] sm:$0xff]
      %v224 = vld [vmem:[%s169 + $0x178] sm:$0xff]
      %v225 = vld [vmem:[%s169 + $0x180] sm:$0xff]
      %v226 = vld [vmem:[%s169 + $0x188] sm:$0xff]
      %v227 = vld [vmem:[%s169 + $0x190] sm:$0xff]
      %v228 = vld [vmem:[%s169 + $0x198] sm:$0xff]
      %v229 = vld [vmem:[%s169 + $0x1a0] sm:$0xff]
      %v230 = vld [vmem:[%s169 + $0x1a8] sm:$0xff]
      %v231 = vld [vmem:[%s169 + $0x1b0] sm:$0xff]
      %v232 = vld [vmem:[%s169 + $0x1b8] sm:$0xff]
      %v233 = vld [vmem:[%s169 + $0x1c0] sm:$0xff]
      %v234 = vld [vmem:[%s169 + $0x1c8] sm:$0xff]
      %v235 = vld [vmem:[%s169 + $0x1d0] sm:$0xff]
      %v236 = vld [vmem:[%s169 + $0x1d8] sm:$0xff]
      %v237 = vld [vmem:[%s169 + $0x1e0] sm:$0xff]
      %v238 = vld [vmem:[%s169 + $0x1e8] sm:$0xff]
      %v239 = vld [vmem:[%s169 + $0x1f0] sm:$0xff]
      %v240 = vld [vmem:[%s169 + $0x1f8] sm:$0xff]
      %v241 = vld [vmem:[%s169 + $0x200] sm:$0xff]
      %v242 = vld [vmem:[%s169 + $0x208] sm:$0xff]
      %v243 = vld [vmem:[%s169 + $0x210] sm:$0xff]
      %v244 = vld [vmem:[%s169 + $0x218] sm:$0xff]
      %v245 = vld [vmem:[%s169 + $0x220] sm:$0xff]
      %v246 = vld [vmem:[%s169 + $0x228] sm:$0xff]
      %v247 = vld [vmem:[%s169 + $0x230] sm:$0xff]
      %v248 = vld [vmem:[%s169 + $0x238] sm:$0xff]
      %v249 = vld [vmem:[%s169 + $0x240] sm:$0xff]
      %v250 = vld [vmem:[%s169 + $0x248] sm:$0xff]
      %v251 = vld [vmem:[%s169 + $0x250] sm:$0xff]
      %v252 = vld [vmem:[%s169 + $0x258] sm:$0xff]
      %v253 = vld [vmem:[%s169 + $0x260] sm:$0xff]
      %v254 = vld [vmem:[%s169 + $0x268] sm:$0xff]
      %v255 = vld [vmem:[%s169 + $0x270] sm:$0xff]
      %v256 = vld [vmem:[%s169 + $0x278] sm:$0xff]
      %v257 = vld [vmem:[%s169 + $0x280] sm:$0xff]
      %v258 = vld [vmem:[%s169 + $0x288] sm:$0xff]
      %v259 = vld [vmem:[%s169 + $0x290] sm:$0xff]
      %v260 = vld [vmem:[%s169 + $0x298] sm:$0xff]
      %v261 = vld [vmem:[%s169 + $0x2a0] sm:$0xff]
      %v262 = vld [vmem:[%s169 + $0x2a8] sm:$0xff]
      %v263 = vld [vmem:[%s169 + $0x2b0] sm:$0xff]
      %v264 = vld [vmem:[%s169 + $0x2b8] sm:$0xff]
      %v265 = vld [vmem:[%s169 + $0x2c0] sm:$0xff]
      %v266 = vld [vmem:[%s169 + $0x2c8] sm:$0xff]
      %v267 = vld [vmem:[%s169 + $0x2d0] sm:$0xff]
      %v268 = vld [vmem:[%s169 + $0x2d8] sm:$0xff]
      %v269 = vld [vmem:[%s169 + $0x2e0] sm:$0xff]
      %v270 = vld [vmem:[%s169 + $0x2e8] sm:$0xff]
      %v271 = vld [vmem:[%s169 + $0x2f0] sm:$0xff]
      %v272 = vld [vmem:[%s169 + $0x2f8] sm:$0xff]
      %v273 = vld [vmem:[%s169 + $0x300] sm:$0xff]
      %v274 = vld [vmem:[%s169 + $0x308] sm:$0xff]
      %v275 = vld [vmem:[%s169 + $0x310] sm:$0xff]
      %v276 = vld [vmem:[%s169 + $0x318] sm:$0xff]
      %v277 = vld [vmem:[%s1] sm:$0xff]
      %v278 = vld [vmem:[%s1 + $0x8] sm:$0xff]
      %v279 = vld [vmem:[%s1 + $0x10] sm:$0xff]
      %v280 = vld [vmem:[%s1 + $0x18] sm:$0xff]
      %v281 = vld [vmem:[%s1 + $0x20] sm:$0xff]
      %v282 = vld [vmem:[%s1 + $0x28] sm:$0xff]
      %v283 = vld [vmem:[%s1 + $0x30] sm:$0xff]
      %v284 = vld [vmem:[%s1 + $0x38] sm:$0xff]
      %v285 = vld [vmem:[%s1 + $0x40] sm:$0xff]
      %v286 = vld [vmem:[%s1 + $0x48] sm:$0xff]
      %v287 = vld [vmem:[%s1 + $0x50] sm:$0xff]
      %v288 = vld [vmem:[%s1 + $0x58] sm:$0xff]
      %v289 = vld [vmem:[%s1 + $0x60] sm:$0xff]
      %v290 = vld [vmem:[%s1 + $0x68] sm:$0xff]
      %v291 = vld [vmem:[%s1 + $0x70] sm:$0xff]
      %v292 = vld [vmem:[%s1 + $0x78] sm:$0xff]
      %v293 = vld [vmem:[%s1 + $0x80] sm:$0xff]
      %v294 = vld [vmem:[%s1 + $0x88] sm:$0xff]
      %v295 = vld [vmem:[%s1 + $0x90] sm:$0xff]
      %v296 = vld [vmem:[%s1 + $0x98] sm:$0xff]
      %v297 = vld [vmem:[%s1 + $0xa0] sm:$0xff]
      %v298 = vld [vmem:[%s1 + $0xa8] sm:$0xff]
      %v299 = vld [vmem:[%s1 + $0xb0] sm:$0xff]
      %v300 = vld [vmem:[%s1 + $0xb8] sm:$0xff]
      %v301 = vld [vmem:[%s1 + $0xc0] sm:$0xff]
      %v302 = vld [vmem:[%s1 + $0xc8] sm:$0xff]
      %v303 = vld [vmem:[%s1 + $0xd0] sm:$0xff]
      %v304 = vld [vmem:[%s1 + $0xd8] sm:$0xff]
      %v305 = vld [vmem:[%s1 + $0xe0] sm:$0xff]
      %v306 = vld [vmem:[%s1 + $0xe8] sm:$0xff]
      %v307 = vld [vmem:[%s1 + $0xf0] sm:$0xff]
      %v308 = vld [vmem:[%s1 + $0xf8] sm:$0xff]
      %v309 = vld [vmem:[%s2] sm:$0x1]
      %v311 = vlaneseq
      %v312 = vshrl.u32 %v311, 7
      %v313 = vsub.s32 0, %v312
      %v314 = vrot.slane %v309, %v313
      %316 = vmatprep.subr.mxu0 0.0
      %317 = vmatpush1.msra.mxu0 %v277
      %318 = vmatprep.subr.mxu0 0.0
      %319 = vmatpush1.msra.mxu0 %v278
      %320 = vmatprep.subr.mxu0 0.0
      %321 = vmatpush1.msra.mxu0 %v279
      %322 = vmatprep.subr.mxu0 0.0
      %323 = vmatpush1.msra.mxu0 %v280
      %324 = vmatprep.subr.mxu0 0.0
      %325 = vmatpush1.msra.mxu0 %v281
      %326 = vmatprep.subr.mxu0 0.0
      %327 = vmatpush1.msra.mxu0 %v282
      %328 = vmatprep.subr.mxu0 0.0
      %329 = vmatpush1.msra.mxu0 %v283
      %330 = vmatprep.subr.mxu0 0.0
      %331 = vmatpush1.msra.mxu0 %v284
      %332 = vmatprep.subr.mxu0 0.0
      %333 = vmatpush1.msra.mxu0 %v285
      %334 = vmatprep.subr.mxu0 0.0
      %335 = vmatpush1.msra.mxu0 %v286
      %336 = vmatprep.subr.mxu0 0.0
      %337 = vmatpush1.msra.mxu0 %v287
      %338 = vmatprep.subr.mxu0 0.0
      %339 = vmatpush1.msra.mxu0 %v288
      %340 = vmatprep.subr.mxu0 0.0
      %341 = vmatpush1.msra.mxu0 %v289
      %342 = vmatprep.subr.mxu0 0.0
      %343 = vmatpush1.msra.mxu0 %v290
      %344 = vmatprep.subr.mxu0 0.0
      %345 = vmatpush1.msra.mxu0 %v291
      %346 = vmatprep.subr.mxu0 0.0
      %347 = vmatpush1.msra.mxu0 %v292
      %348 = vmatprep.subr.mxu0 0.0
      %349 = vmatpush1.msra.mxu0 %v293
      %350 = vmatprep.subr.mxu0 0.0
      %351 = vmatpush1.msra.mxu0 %v294
      %352 = vmatprep.subr.mxu0 0.0
      %353 = vmatpush1.msra.mxu0 %v295
      %354 = vmatprep.subr.mxu0 0.0
      %355 = vmatpush1.msra.mxu0 %v296
      %356 = vmatprep.subr.mxu0 0.0
      %357 = vmatpush1.msra.mxu0 %v297
      %358 = vmatprep.subr.mxu0 0.0
      %359 = vmatpush1.msra.mxu0 %v298
      %360 = vmatprep.subr.mxu0 0.0
      %361 = vmatpush1.msra.mxu0 %v299
      %362 = vmatprep.subr.mxu0 0.0
      %363 = vmatpush1.msra.mxu0 %v300
      %364 = vmatprep.subr.mxu0 0.0
      %365 = vmatpush1.msra.mxu0 %v301
      %366 = vmatprep.subr.mxu0 0.0
      %367 = vmatpush1.msra.mxu0 %v302
      %368 = vmatprep.subr.mxu0 0.0
      %369 = vmatpush1.msra.mxu0 %v303
      %370 = vmatprep.subr.mxu0 0.0
      %371 = vmatpush1.msra.mxu0 %v304
      %372 = vmatprep.subr.mxu0 0.0
      %373 = vmatpush1.msra.mxu0 %v305
      %374 = vmatprep.subr.mxu0 0.0
      %375 = vmatpush1.msra.mxu0 %v306
      %376 = vmatprep.subr.mxu0 0.0
      %377 = vmatpush1.msra.mxu0 %v307
      %378 = vmatprep.subr.mxu0 0.0
      %379 = vmatpush1.msra.mxu0 %v308
      %380 = vmatprep.mubr.f32.mxu0 %v178
      %381 = vmatmul.mubr.f32.gmra.mrb[0].mxu0 %v177
      %v382 = vpop.f32.mrb[0].mxu0
      %v383 = vadd.f32 %v314, %v382
      %v384 = vpop.f32.mrb[0].mxu0
      %385 = vmatprep.mubr.f32.mxu0 %v180
      %386 = vmatmul.mubr.f32.gmra.mrb[0].mxu0 %v179
      %v387 = vpop.f32.mrb[0].mxu0
      %v388 = vadd.f32 %v314, %v387
      %v389 = vpop.f32.mrb[0].mxu0
      %390 = vmatprep.mubr.f32.mxu0 %v182
      %391 = vmatmul.mubr.f32.gmra.mrb[0].mxu0 %v181
      %v392 = vpop.f32.mrb[0].mxu0
      %v393 = vadd.f32 %v314, %v392
      %v394 = vpop.f32.mrb[0].mxu0
      %395 = vmatprep.mubr.f32.mxu0 %v184
      %396 = vmatmul.mubr.f32.gmra.mrb[0].mxu0 %v183
      %v397 = vpop.f32.mrb[0].mxu0
      %v398 = vadd.f32 %v314, %v397
      %v399 = vpop.f32.mrb[0].mxu0
      %400 = vmatprep.mubr.f32.mxu0 %v186
      %401 = vmatmul.mubr.f32.gmra.mrb[0].mxu0 %v185
      %v402 = vpop.f32.mrb[0].mxu0
      %v403 = vadd.f32 %v314, %v402
      %v404 = vpop.f32.mrb[0].mxu0
      %405 = vmatprep.mubr.f32.mxu0 %v188
      %406 = vmatmul.mubr.f32.gmra.mrb[0].mxu0 %v187
      %v407 = vpop.f32.mrb[0].mxu0
      %v408 = vadd.f32 %v314, %v407
      %v409 = vpop.f32.mrb[0].mxu0
      %410 = vmatprep.mubr.f32.mxu0 %v190
      %411 = vmatmul.mubr.f32.gmra.mrb[0].mxu0 %v189
      %v412 = vpop.f32.mrb[0].mxu0
      %v413 = vadd.f32 %v314, %v412
      %v414 = vpop.f32.mrb[0].mxu0
      %415 = vmatprep.mubr.f32.mxu0 %v192
      %416 = vmatmul.mubr.f32.gmra.mrb[0].mxu0 %v191
      %v417 = vpop.f32.mrb[0].mxu0
      %v418 = vadd.f32 %v314, %v417
      %v419 = vpop.f32.mrb[0].mxu0
      %420 = vmatprep.mubr.f32.mxu0 %v194
      %421 = vmatmul.mubr.f32.gmra.mrb[0].mxu0 %v193
      %v422 = vpop.f32.mrb[0].mxu0
      %v423 = vadd.f32 %v314, %v422
      %v424 = vpop.f32.mrb[0].mxu0
      %425 = vmatprep.mubr.f32.mxu0 %v196
      %426 = vmatmul.mubr.f32.gmra.mrb[0].mxu0 %v195
      %v427 = vpop.f32.mrb[0].mxu0
      %v428 = vadd.f32 %v314, %v427
      %v429 = vpop.f32.mrb[0].mxu0
      %430 = vmatprep.mubr.f32.mxu0 %v198
      %431 = vmatmul.mubr.f32.gmra.mrb[0].mxu0 %v197
      %v432 = vpop.f32.mrb[0].mxu0
      %v433 = vadd.f32 %v314, %v432
      %v434 = vpop.f32.mrb[0].mxu0
      %435 = vmatprep.mubr.f32.mxu0 %v200
      %436 = vmatmul.mubr.f32.gmra.mrb[0].mxu0 %v199
      %v437 = vpop.f32.mrb[0].mxu0
      %v438 = vadd.f32 %v314, %v437
      %v439 = vpop.f32.mrb[0].mxu0
      %440 = vmatprep.mubr.f32.mxu0 %v202
      %441 = vmatmul.mubr.f32.gmra.mrb[0].mxu0 %v201
      %v442 = vpop.f32.mrb[0].mxu0
      %v443 = vadd.f32 %v314, %v442
      %v444 = vpop.f32.mrb[0].mxu0
      %445 = vmatprep.mubr.f32.mxu0 %v204
      %446 = vmatmul.mubr.f32.gmra.mrb[0].mxu0 %v203
      %v447 = vpop.f32.mrb[0].mxu0
      %v448 = vadd.f32 %v314, %v447
      %v449 = vpop.f32.mrb[0].mxu0
      %450 = vmatprep.mubr.f32.mxu0 %v206
      %451 = vmatmul.mubr.f32.gmra.mrb[0].mxu0 %v205
      %v452 = vpop.f32.mrb[0].mxu0
      %v453 = vadd.f32 %v314, %v452
      %v454 = vpop.f32.mrb[0].mxu0
      %455 = vmatprep.mubr.f32.mxu0 %v208
      %456 = vmatmul.mubr.f32.gmra.mrb[0].mxu0 %v207
      %v457 = vpop.f32.mrb[0].mxu0
      %v458 = vadd.f32 %v314, %v457
      %v459 = vpop.f32.mrb[0].mxu0
      %460 = vmatprep.mubr.f32.mxu0 %v210
      %461 = vmatmul.mubr.f32.gmra.mrb[0].mxu0 %v209
      %v462 = vpop.f32.mrb[0].mxu0
      %v463 = vadd.f32 %v314, %v462
      %v464 = vpop.f32.mrb[0].mxu0
      %465 = vmatprep.mubr.f32.mxu0 %v212
      %466 = vmatmul.mubr.f32.gmra.mrb[0].mxu0 %v211
      %v467 = vpop.f32.mrb[0].mxu0
      %v468 = vadd.f32 %v314, %v467
      %v469 = vpop.f32.mrb[0].mxu0
      %470 = vmatprep.mubr.f32.mxu0 %v214
      %471 = vmatmul.mubr.f32.gmra.mrb[0].mxu0 %v213
      %v472 = vpop.f32.mrb[0].mxu0
      %v473 = vadd.f32 %v314, %v472
      %v474 = vpop.f32.mrb[0].mxu0
      %475 = vmatprep.mubr.f32.mxu0 %v216
      %476 = vmatmul.mubr.f32.gmra.mrb[0].mxu0 %v215
      %v477 = vpop.f32.mrb[0].mxu0
      %v478 = vadd.f32 %v314, %v477
      %v479 = vpop.f32.mrb[0].mxu0
      %480 = vmatprep.mubr.f32.mxu0 %v218
      %481 = vmatmul.mubr.f32.gmra.mrb[0].mxu0 %v217
      %v482 = vpop.f32.mrb[0].mxu0
      %v483 = vadd.f32 %v314, %v482
      %v484 = vpop.f32.mrb[0].mxu0
      %485 = vmatprep.mubr.f32.mxu0 %v220
      %486 = vmatmul.mubr.f32.gmra.mrb[0].mxu0 %v219
      %v487 = vpop.f32.mrb[0].mxu0
      %v488 = vadd.f32 %v314, %v487
      %v489 = vpop.f32.mrb[0].mxu0
      %490 = vmatprep.mubr.f32.mxu0 %v222
      %491 = vmatmul.mubr.f32.gmra.mrb[0].mxu0 %v221
      %v492 = vpop.f32.mrb[0].mxu0
      %v493 = vadd.f32 %v314, %v492
      %v494 = vpop.f32.mrb[0].mxu0
      %495 = vmatprep.mubr.f32.mxu0 %v224
      %496 = vmatmul.mubr.f32.gmra.mrb[0].mxu0 %v223
      %v497 = vpop.f32.mrb[0].mxu0
      %v498 = vadd.f32 %v314, %v497
      %v499 = vpop.f32.mrb[0].mxu0
      %500 = vmatprep.mubr.f32.mxu0 %v226
      %501 = vmatmul.mubr.f32.gmra.mrb[0].mxu0 %v225
      %v502 = vpop.f32.mrb[0].mxu0
      %v503 = vadd.f32 %v314, %v502
      %v504 = vpop.f32.mrb[0].mxu0
      %505 = vmatprep.mubr.f32.mxu0 %v228
      %506 = vmatmul.mubr.f32.gmra.mrb[0].mxu0 %v227
      %v507 = vpop.f32.mrb[0].mxu0
      %v508 = vadd.f32 %v314, %v507
      %v509 = vpop.f32.mrb[0].mxu0
      %510 = vmatprep.mubr.f32.mxu0 %v230
      %511 = vmatmul.mubr.f32.gmra.mrb[0].mxu0 %v229
      %v512 = vpop.f32.mrb[0].mxu0
      %v513 = vadd.f32 %v314, %v512
      %v514 = vpop.f32.mrb[0].mxu0
      %515 = vmatprep.mubr.f32.mxu0 %v232
      %516 = vmatmul.mubr.f32.gmra.mrb[0].mxu0 %v231
      %v517 = vpop.f32.mrb[0].mxu0
      %v518 = vadd.f32 %v314, %v517
      %v519 = vpop.f32.mrb[0].mxu0
      %520 = vmatprep.mubr.f32.mxu0 %v234
      %521 = vmatmul.mubr.f32.gmra.mrb[0].mxu0 %v233
      %v522 = vpop.f32.mrb[0].mxu0
      %v523 = vadd.f32 %v314, %v522
      %v524 = vpop.f32.mrb[0].mxu0
      %525 = vmatprep.mubr.f32.mxu0 %v236
      %526 = vmatmul.mubr.f32.gmra.mrb[0].mxu0 %v235
      %v527 = vpop.f32.mrb[0].mxu0
      %v528 = vadd.f32 %v314, %v527
      %v529 = vpop.f32.mrb[0].mxu0
      %530 = vmatprep.mubr.f32.mxu0 %v238
      %531 = vmatmul.mubr.f32.gmra.mrb[0].mxu0 %v237
      %v532 = vpop.f32.mrb[0].mxu0
      %v533 = vadd.f32 %v314, %v532
      %v534 = vpop.f32.mrb[0].mxu0
      %535 = vmatprep.mubr.f32.mxu0 %v240
      %536 = vmatmul.mubr.f32.gmra.mrb[0].mxu0 %v239
      %v537 = vpop.f32.mrb[0].mxu0
      %v538 = vadd.f32 %v314, %v537
      %v539 = vpop.f32.mrb[0].mxu0
      %540 = vmatprep.mubr.f32.mxu0 %v242
      %541 = vmatmul.mubr.f32.gmra.mrb[0].mxu0 %v241
      %v542 = vpop.f32.mrb[0].mxu0
      %v543 = vadd.f32 %v314, %v542
      %v544 = vpop.f32.mrb[0].mxu0
      %545 = vmatprep.mubr.f32.mxu0 %v244
      %546 = vmatmul.mubr.f32.gmra.mrb[0].mxu0 %v243
      %v547 = vpop.f32.mrb[0].mxu0
      %v548 = vadd.f32 %v314, %v547
      %v549 = vpop.f32.mrb[0].mxu0
      %550 = vmatprep.mubr.f32.mxu0 %v246
      %551 = vmatmul.mubr.f32.gmra.mrb[0].mxu0 %v245
      %v552 = vpop.f32.mrb[0].mxu0
      %v553 = vadd.f32 %v314, %v552
      %v554 = vpop.f32.mrb[0].mxu0
      %555 = vmatprep.mubr.f32.mxu0 %v248
      %556 = vmatmul.mubr.f32.gmra.mrb[0].mxu0 %v247
      %v557 = vpop.f32.mrb[0].mxu0
      %v558 = vadd.f32 %v314, %v557
      %v559 = vpop.f32.mrb[0].mxu0
      %560 = vmatprep.mubr.f32.mxu0 %v250
      %561 = vmatmul.mubr.f32.gmra.mrb[0].mxu0 %v249
      %v562 = vpop.f32.mrb[0].mxu0
      %v563 = vadd.f32 %v314, %v562
      %v564 = vpop.f32.mrb[0].mxu0
      %565 = vmatprep.mubr.f32.mxu0 %v252
      %566 = vmatmul.mubr.f32.gmra.mrb[0].mxu0 %v251
      %v567 = vpop.f32.mrb[0].mxu0
      %v568 = vadd.f32 %v314, %v567
      %v569 = vpop.f32.mrb[0].mxu0
      %570 = vmatprep.mubr.f32.mxu0 %v254
      %571 = vmatmul.mubr.f32.gmra.mrb[0].mxu0 %v253
      %v572 = vpop.f32.mrb[0].mxu0
      %v573 = vadd.f32 %v314, %v572
      %v574 = vpop.f32.mrb[0].mxu0
      %575 = vmatprep.mubr.f32.mxu0 %v256
      %576 = vmatmul.mubr.f32.gmra.mrb[0].mxu0 %v255
      %v577 = vpop.f32.mrb[0].mxu0
      %v578 = vadd.f32 %v314, %v577
      %v579 = vpop.f32.mrb[0].mxu0
      %580 = vmatprep.mubr.f32.mxu0 %v258
      %581 = vmatmul.mubr.f32.gmra.mrb[0].mxu0 %v257
      %v582 = vpop.f32.mrb[0].mxu0
      %v583 = vadd.f32 %v314, %v582
      %v584 = vpop.f32.mrb[0].mxu0
      %585 = vmatprep.mubr.f32.mxu0 %v260
      %586 = vmatmul.mubr.f32.gmra.mrb[0].mxu0 %v259
      %v587 = vpop.f32.mrb[0].mxu0
      %v588 = vadd.f32 %v314, %v587
      %v589 = vpop.f32.mrb[0].mxu0
      %590 = vmatprep.mubr.f32.mxu0 %v262
      %591 = vmatmul.mubr.f32.gmra.mrb[0].mxu0 %v261
      %v592 = vpop.f32.mrb[0].mxu0
      %v593 = vadd.f32 %v314, %v592
      %v594 = vpop.f32.mrb[0].mxu0
      %595 = vmatprep.mubr.f32.mxu0 %v264
      %596 = vmatmul.mubr.f32.gmra.mrb[0].mxu0 %v263
      %v597 = vpop.f32.mrb[0].mxu0
      %v598 = vadd.f32 %v314, %v597
      %v599 = vpop.f32.mrb[0].mxu0
      %600 = vmatprep.mubr.f32.mxu0 %v266
      %601 = vmatmul.mubr.f32.gmra.mrb[0].mxu0 %v265
      %v602 = vpop.f32.mrb[0].mxu0
      %v603 = vadd.f32 %v314, %v602
      %v604 = vpop.f32.mrb[0].mxu0
      %605 = vmatprep.mubr.f32.mxu0 %v268
      %606 = vmatmul.mubr.f32.gmra.mrb[0].mxu0 %v267
      %v607 = vpop.f32.mrb[0].mxu0
      %v608 = vadd.f32 %v314, %v607
      %v609 = vpop.f32.mrb[0].mxu0
      %610 = vmatprep.mubr.f32.mxu0 %v270
      %611 = vmatmul.mubr.f32.gmra.mrb[0].mxu0 %v269
      %v612 = vpop.f32.mrb[0].mxu0
      %v613 = vadd.f32 %v314, %v612
      %v614 = vpop.f32.mrb[0].mxu0
      %615 = vmatprep.mubr.f32.mxu0 %v272
      %616 = vmatmul.mubr.f32.gmra.mrb[0].mxu0 %v271
      %v617 = vpop.f32.mrb[0].mxu0
      %v618 = vadd.f32 %v314, %v617
      %v619 = vpop.f32.mrb[0].mxu0
      %620 = vmatprep.mubr.f32.mxu0 %v274
      %621 = vmatmul.mubr.f32.gmra.mrb[0].mxu0 %v273
      %v622 = vpop.f32.mrb[0].mxu0
      %v623 = vadd.f32 %v314, %v622
      %v624 = vpop.f32.mrb[0].mxu0
      %625 = vmatprep.mubr.f32.mxu0 %v276
      %626 = vmatmul.mubr.f32.gmra.mrb[0].mxu0 %v275
      %v627 = vpop.f32.mrb[0].mxu0
      %v628 = vadd.f32 %v314, %v627
      %v629 = vpop.f32.mrb[0].mxu0
      %630 = vdwg.mxu0
      %v631 = vmax.f32 %v383, 0.0
      %v632 = vmax.f32 %v388, 0.0
      %v633 = vmax.f32 %v393, 0.0
      %v634 = vmax.f32 %v398, 0.0
      %v635 = vmax.f32 %v403, 0.0
      %v636 = vmax.f32 %v408, 0.0
      %v637 = vmax.f32 %v413, 0.0
      %v638 = vmax.f32 %v418, 0.0
      %v639 = vmax.f32 %v423, 0.0
      %v640 = vmax.f32 %v428, 0.0
      %v641 = vmax.f32 %v433, 0.0
      %v642 = vmax.f32 %v438, 0.0
      %v643 = vmax.f32 %v443, 0.0
      %v644 = vmax.f32 %v448, 0.0
      %v645 = vmax.f32 %v453, 0.0
      %v646 = vmax.f32 %v458, 0.0
      %v647 = vmax.f32 %v463, 0.0
      %v648 = vmax.f32 %v468, 0.0
      %v649 = vmax.f32 %v473, 0.0
      %v650 = vmax.f32 %v478, 0.0
      %v651 = vmax.f32 %v483, 0.0
      %v652 = vmax.f32 %v488, 0.0
      %v653 = vmax.f32 %v493, 0.0
      %v654 = vmax.f32 %v498, 0.0
      %v655 = vmax.f32 %v503, 0.0
      %v656 = vmax.f32 %v508, 0.0
      %v657 = vmax.f32 %v513, 0.0
      %v658 = vmax.f32 %v518, 0.0
      %v659 = vmax.f32 %v523, 0.0
      %v660 = vmax.f32 %v528, 0.0
      %v661 = vmax.f32 %v533, 0.0
      %v662 = vmax.f32 %v538, 0.0
      %v663 = vmax.f32 %v543, 0.0
      %v664 = vmax.f32 %v548, 0.0
      %v665 = vmax.f32 %v553, 0.0
      %v666 = vmax.f32 %v558, 0.0
      %v667 = vmax.f32 %v563, 0.0
      %v668 = vmax.f32 %v568, 0.0
      %v669 = vmax.f32 %v573, 0.0
      %v670 = vmax.f32 %v578, 0.0
      %v671 = vmax.f32 %v583, 0.0
      %v672 = vmax.f32 %v588, 0.0
      %v673 = vmax.f32 %v593, 0.0
      %v674 = vmax.f32 %v598, 0.0
      %v675 = vmax.f32 %v603, 0.0
      %v676 = vmax.f32 %v608, 0.0
      %v677 = vmax.f32 %v613, 0.0
      %v678 = vmax.f32 %v618, 0.0
      %v679 = vmax.f32 %v623, 0.0
      %v680 = vmax.f32 %v628, 0.0
      %vm681 = vcmask 261120
      %682 = vst.msk [vmem:[%s175] sm:$0xff] %vm681, %v631
      %683 = vst.msk [vmem:[%s175 + $0x8] sm:$0xff] %vm681, %v632
      %684 = vst.msk [vmem:[%s175 + $0x10] sm:$0xff] %vm681, %v633
      %685 = vst.msk [vmem:[%s175 + $0x18] sm:$0xff] %vm681, %v634
      %686 = vst.msk [vmem:[%s175 + $0x20] sm:$0xff] %vm681, %v635
      %687 = vst.msk [vmem:[%s175 + $0x28] sm:$0xff] %vm681, %v636
      %688 = vst.msk [vmem:[%s175 + $0x30] sm:$0xff] %vm681, %v637
      %689 = vst.msk [vmem:[%s175 + $0x38] sm:$0xff] %vm681, %v638
      %690 = vst.msk [vmem:[%s175 + $0x40] sm:$0xff] %vm681, %v639
      %691 = vst.msk [vmem:[%s175 + $0x48] sm:$0xff] %vm681, %v640
      %692 = vst.msk [vmem:[%s175 + $0x50] sm:$0xff] %vm681, %v641
      %693 = vst.msk [vmem:[%s175 + $0x58] sm:$0xff] %vm681, %v642
      %694 = vst.msk [vmem:[%s175 + $0x60] sm:$0xff] %vm681, %v643
      %695 = vst.msk [vmem:[%s175 + $0x68] sm:$0xff] %vm681, %v644
      %696 = vst.msk [vmem:[%s175 + $0x70] sm:$0xff] %vm681, %v645
      %697 = vst.msk [vmem:[%s175 + $0x78] sm:$0xff] %vm681, %v646
      %698 = vst.msk [vmem:[%s175 + $0x80] sm:$0xff] %vm681, %v647
      %699 = vst.msk [vmem:[%s175 + $0x88] sm:$0xff] %vm681, %v648
      %700 = vst.msk [vmem:[%s175 + $0x90] sm:$0xff] %vm681, %v649
      %701 = vst.msk [vmem:[%s175 + $0x98] sm:$0xff] %vm681, %v650
      %702 = vst.msk [vmem:[%s175 + $0xa0] sm:$0xff] %vm681, %v651
      %703 = vst.msk [vmem:[%s175 + $0xa8] sm:$0xff] %vm681, %v652
      %704 = vst.msk [vmem:[%s175 + $0xb0] sm:$0xff] %vm681, %v653
      %705 = vst.msk [vmem:[%s175 + $0xb8] sm:$0xff] %vm681, %v654
      %706 = vst.msk [vmem:[%s175 + $0xc0] sm:$0xff] %vm681, %v655
      %707 = vst.msk [vmem:[%s175 + $0xc8] sm:$0xff] %vm681, %v656
      %708 = vst.msk [vmem:[%s175 + $0xd0] sm:$0xff] %vm681, %v657
      %709 = vst.msk [vmem:[%s175 + $0xd8] sm:$0xff] %vm681, %v658
      %710 = vst.msk [vmem:[%s175 + $0xe0] sm:$0xff] %vm681, %v659
      %711 = vst.msk [vmem:[%s175 + $0xe8] sm:$0xff] %vm681, %v660
      %712 = vst.msk [vmem:[%s175 + $0xf0] sm:$0xff] %vm681, %v661
      %713 = vst.msk [vmem:[%s175 + $0xf8] sm:$0xff] %vm681, %v662
      %714 = vst.msk [vmem:[%s175 + $0x100] sm:$0xff] %vm681, %v663
      %715 = vst.msk [vmem:[%s175 + $0x108] sm:$0xff] %vm681, %v664
      %716 = vst.msk [vmem:[%s175 + $0x110] sm:$0xff] %vm681, %v665
      %717 = vst.msk [vmem:[%s175 + $0x118] sm:$0xff] %vm681, %v666
      %718 = vst.msk [vmem:[%s175 + $0x120] sm:$0xff] %vm681, %v667
      %719 = vst.msk [vmem:[%s175 + $0x128] sm:$0xff] %vm681, %v668
      %720 = vst.msk [vmem:[%s175 + $0x130] sm:$0xff] %vm681, %v669
      %721 = vst.msk [vmem:[%s175 + $0x138] sm:$0xff] %vm681, %v670
      %722 = vst.msk [vmem:[%s175 + $0x140] sm:$0xff] %vm681, %v671
      %723 = vst.msk [vmem:[%s175 + $0x148] sm:$0xff] %vm681, %v672
      %724 = vst.msk [vmem:[%s175 + $0x150] sm:$0xff] %vm681, %v673
      %725 = vst.msk [vmem:[%s175 + $0x158] sm:$0xff] %vm681, %v674
      %726 = vst.msk [vmem:[%s175 + $0x160] sm:$0xff] %vm681, %v675
      %727 = vst.msk [vmem:[%s175 + $0x168] sm:$0xff] %vm681, %v676
      %728 = vst.msk [vmem:[%s175 + $0x170] sm:$0xff] %vm681, %v677
      %729 = vst.msk [vmem:[%s175 + $0x178] sm:$0xff] %vm681, %v678
      %730 = vst.msk [vmem:[%s175 + $0x180] sm:$0xff] %vm681, %v679
      %731 = vst.msk [vmem:[%s175 + $0x188] sm:$0xff] %vm681, %v680
      %s732 = smul.u32 50, %s14
      %p733 = scmp.lt.s32.totalorder %s732, 99
      %s734 = scalar_select %p733, %s732, 99
      %s735 = smul.addr %s734, 8
      %s736 = scalar_lea.vmem %s3, %s735
      // Predicated region
      $region33: #{net_forward.4} parent=31 // pred_check
        %p737 = pneg %p100
      $region34: #{net_forward.4} parent=31 // pred_check_branch
        %739 = sbr.rel (%p737) target = $region36
      $region35: #{net_forward.4} parent=31 // pred_region
        %s740 = smul.u32 50, %s14
      $region36: #{net_forward.4} parent=31 // pred_fallthru
        _
    $region32: #{net_forward.4} parent=5 // pred_fallthru
      _
    %p741 = scmp.le.s32.totalorder 2, %s9
    // Predicated region
    $region37: #{net_forward.4} parent=5 // pred_check
      %p742 = pneg %p741
    $region38: #{net_forward.4} parent=5 // pred_check_branch
      %744 = sbr.rel (%p742) target = $region40
    $region39: #{net_forward.4} parent=5 // pred_region
      %s745 = ssub.s32 %s9, 2
      // Predicated region
      $region41: #{net_forward.4} parent=39 // pred_check
        %p746 = pneg %p106
      $region42: #{net_forward.4} parent=39 // pred_check_branch
        %748 = sbr.rel (%p746) target = $region44
      $region43: #{net_forward.4} parent=39 // pred_region
        %s749 = smul.u32 50, %s15
        %p750 = scmp.lt.s32.totalorder %s749, 99
        %s751 = scalar_select %p750, %s749, 99
        %s752 = smul.addr %s751, 8
        %s753 = scalar_lea.vmem %s3, %s752
      $region44: #{net_forward.4} parent=39 // pred_fallthru
        _
    $region40: #{net_forward.4} parent=5 // pred_fallthru
      _
  $region6: #{net_forward.4} parent=0 // loop_footer
    %s13 = sadd.s32 1, %s9
  $region7: #{net_forward.4} parent=0 // loop_footer_branch
    %8 = sbr.rel target = $region3
  $region8: #{net_forward.4} parent=0 // loop_exit
    _

// kernel: net_forward.5
$region0: #{net_forward.5}
  #allocation0 [shape = 'u32[]', space=smem, size = 0x4, offset = 0x4, fixed_abs, tag = 'smem constant byte address 0x4 - core index']
  #allocation1 [shape = 'u32[144,128]{1,0:T(1,128)}', space=vmem, size = 0x12000, scoped, tag = 'internal scratch']
  %s0 = inlined_call_operand.vmem [shape: f32[162,512], index: 0, kind: input, shape index: {}]
  %s1 = inlined_call_operand.vmem [shape: f32[512,64], index: 1, kind: input, shape index: {}]
  %s2 = inlined_call_operand.vmem [shape: f32[1,64], index: 2, kind: input, shape index: {}]
  %s3 = inlined_call_operand.vmem [shape: f32[162,64], index: 3, kind: output, shape index: {}]
  %s4 = sld [smem:[#allocation0]]
  $region22: #{net_forward.5} parent=0
    _
  %s6 = ssub.s32 1, %s4
  %s7 = scalar_select 0, %s6, %s4
  // Predicated region
  $region2: #{net_forward.5} parent=0 // pred_check
    _
  $region3: #{net_forward.5} parent=0 // pred_check_branch
    %9 = sbr.rel (0) target = $region5
  $region4: #{net_forward.5} parent=0 // pred_region
    _
  $region5: #{net_forward.5} parent=0 // pred_fallthru
    _
  // Predicated region
  $region6: #{net_forward.5} parent=0 // pred_check
    _
  $region7: #{net_forward.5} parent=0 // pred_check_branch
    %11 = sbr.rel (0) target = $region9
  $region8: #{net_forward.5} parent=0 // pred_region
    _
  $region9: #{net_forward.5} parent=0 // pred_fallthru
    _
  // Predicated region
  $region10: #{net_forward.5} parent=0 // pred_check
    _
  $region11: #{net_forward.5} parent=0 // pred_check_branch
    %13 = sbr.rel (0) target = $region13
  $region12: #{net_forward.5} parent=0 // pred_region
    _
  $region13: #{net_forward.5} parent=0 // pred_fallthru
    _
  %v14 = vld [vmem:[%s0] sm:$0xff]
  %v15 = vld [vmem:[%s0 + $0x8] sm:$0xff]
  %v16 = vld [vmem:[%s0 + $0x10] sm:$0xff]
  %v17 = vld [vmem:[%s0 + $0x18] sm:$0xff]
  %v18 = vld [vmem:[%s0 + $0x20] sm:$0xff]
  %v19 = vld [vmem:[%s0 + $0x28] sm:$0xff]
  %v20 = vld [vmem:[%s0 + $0x30] sm:$0xff]
  %v21 = vld [vmem:[%s0 + $0x38] sm:$0xff]
  %v22 = vld [vmem:[%s0 + $0x40] sm:$0xff]
  %v23 = vld [vmem:[%s0 + $0x48] sm:$0xff]
  %v24 = vld [vmem:[%s0 + $0x50] sm:$0xff]
  %v25 = vld [vmem:[%s0 + $0x58] sm:$0xff]
  %v26 = vld [vmem:[%s0 + $0x60] sm:$0xff]
  %v27 = vld [vmem:[%s0 + $0x68] sm:$0xff]
  %v28 = vld [vmem:[%s0 + $0x70] sm:$0xff]
  %v29 = vld [vmem:[%s0 + $0x78] sm:$0xff]
  %v30 = vld [vmem:[%s0 + $0x80] sm:$0xff]
  %v31 = vld [vmem:[%s0 + $0x88] sm:$0xff]
  %v32 = vld [vmem:[%s0 + $0x90] sm:$0xff]
  %v33 = vld [vmem:[%s0 + $0x98] sm:$0xff]
  %v34 = vld [vmem:[%s0 + $0xa0] sm:$0xff]
  %v35 = vld [vmem:[%s0 + $0xa8] sm:$0xff]
  %v36 = vld [vmem:[%s0 + $0xb0] sm:$0xff]
  %v37 = vld [vmem:[%s0 + $0xb8] sm:$0xff]
  %v38 = vld [vmem:[%s0 + $0xc0] sm:$0xff]
  %v39 = vld [vmem:[%s0 + $0xc8] sm:$0xff]
  %v40 = vld [vmem:[%s0 + $0xd0] sm:$0xff]
  %v41 = vld [vmem:[%s0 + $0xd8] sm:$0xff]
  %v42 = vld [vmem:[%s0 + $0xe0] sm:$0xff]
  %v43 = vld [vmem:[%s0 + $0xe8] sm:$0xff]
  %v44 = vld [vmem:[%s0 + $0xf0] sm:$0xff]
  %v45 = vld [vmem:[%s0 + $0xf8] sm:$0xff]
  %v46 = vld [vmem:[%s0 + $0x100] sm:$0xff]
  %v47 = vld [vmem:[%s0 + $0x108] sm:$0xff]
  %v48 = vld [vmem:[%s0 + $0x110] sm:$0xff]
  %v49 = vld [vmem:[%s0 + $0x118] sm:$0xff]
  %v50 = vld [vmem:[%s0 + $0x120] sm:$0xff]
  %v51 = vld [vmem:[%s0 + $0x128] sm:$0xff]
  %v52 = vld [vmem:[%s0 + $0x130] sm:$0xff]
  %v53 = vld [vmem:[%s0 + $0x138] sm:$0xff]
  %v54 = vld [vmem:[%s0 + $0x140] sm:$0xff]
  %v55 = vld [vmem:[%s0 + $0x148] sm:$0xff]
  %v56 = vld [vmem:[%s0 + $0x150] sm:$0xff]
  %v57 = vld [vmem:[%s0 + $0x158] sm:$0xff]
  %v58 = vld [vmem:[%s0 + $0x160] sm:$0xff]
  %v59 = vld [vmem:[%s0 + $0x168] sm:$0xff]
  %v60 = vld [vmem:[%s0 + $0x170] sm:$0xff]
  %v61 = vld [vmem:[%s0 + $0x178] sm:$0xff]
  %v62 = vld [vmem:[%s0 + $0x180] sm:$0xff]
  %v63 = vld [vmem:[%s0 + $0x188] sm:$0xff]
  %v64 = vld [vmem:[%s0 + $0x190] sm:$0xff]
  %v65 = vld [vmem:[%s0 + $0x198] sm:$0xff]
  %v66 = vld [vmem:[%s0 + $0x1a0] sm:$0xff]
  %v67 = vld [vmem:[%s0 + $0x1a8] sm:$0xff]
  %v68 = vld [vmem:[%s0 + $0x1b0] sm:$0xff]
  %v69 = vld [vmem:[%s0 + $0x1b8] sm:$0xff]
  %v70 = vld [vmem:[%s0 + $0x1c0] sm:$0xff]
  %v71 = vld [vmem:[%s0 + $0x1c8] sm:$0xff]
  %v72 = vld [vmem:[%s0 + $0x1d0] sm:$0xff]
  %v73 = vld [vmem:[%s0 + $0x1d8] sm:$0xff]
  %v74 = vld [vmem:[%s0 + $0x1e0] sm:$0xff]
  %v75 = vld [vmem:[%s0 + $0x1e8] sm:$0xff]
  %v76 = vld [vmem:[%s0 + $0x1f0] sm:$0xff]
  %v77 = vld [vmem:[%s0 + $0x1f8] sm:$0xff]
  %v78 = vld [vmem:[%s0 + $0x200] sm:$0xff]
  %v79 = vld [vmem:[%s0 + $0x208] sm:$0xff]
  %v80 = vld [vmem:[%s0 + $0x210] sm:$0xff]
  %v81 = vld [vmem:[%s0 + $0x218] sm:$0xff]
  %v82 = vld [vmem:[%s0 + $0x220] sm:$0xff]
  %v83 = vld [vmem:[%s0 + $0x228] sm:$0xff]
  %v84 = vld [vmem:[%s0 + $0x230] sm:$0xff]
  %v85 = vld [vmem:[%s0 + $0x238] sm:$0xff]
  %v86 = vld [vmem:[%s0 + $0x240] sm:$0xff]
  %v87 = vld [vmem:[%s0 + $0x248] sm:$0xff]
  %v88 = vld [vmem:[%s0 + $0x250] sm:$0xff]
  %v89 = vld [vmem:[%s0 + $0x258] sm:$0xff]
  %v90 = vld [vmem:[%s0 + $0x260] sm:$0xff]
  %v91 = vld [vmem:[%s0 + $0x268] sm:$0xff]
  %v92 = vld [vmem:[%s0 + $0x270] sm:$0xff]
  %v93 = vld [vmem:[%s0 + $0x278] sm:$0xff]
  %v94 = vld [vmem:[%s0 + $0x280] sm:$0x3]
  %v95 = vld [vmem:[%s0 + $0x288] sm:$0x3]
  %v96 = vld [vmem:[%s0 + $0x290] sm:$0x3]
  %v97 = vld [vmem:[%s0 + $0x298] sm:$0x3]
  %v98 = vld [vmem:[%s1] sm:$0xff]
  %v99 = vld [vmem:[%s1 + $0x8] sm:$0xff]
  %v100 = vld [vmem:[%s1 + $0x10] sm:$0xff]
  %v101 = vld [vmem:[%s1 + $0x18] sm:$0xff]
  %v102 = vld [vmem:[%s1 + $0x20] sm:$0xff]
  %v103 = vld [vmem:[%s1 + $0x28] sm:$0xff]
  %v104 = vld [vmem:[%s1 + $0x30] sm:$0xff]
  %v105 = vld [vmem:[%s1 + $0x38] sm:$0xff]
  %v106 = vld [vmem:[%s1 + $0x40] sm:$0xff]
  %v107 = vld [vmem:[%s1 + $0x48] sm:$0xff]
  %v108 = vld [vmem:[%s1 + $0x50] sm:$0xff]
  %v109 = vld [vmem:[%s1 + $0x58] sm:$0xff]
  %v110 = vld [vmem:[%s1 + $0x60] sm:$0xff]
  %v111 = vld [vmem:[%s1 + $0x68] sm:$0xff]
  %v112 = vld [vmem:[%s1 + $0x70] sm:$0xff]
  %v113 = vld [vmem:[%s1 + $0x78] sm:$0xff]
  %v114 = vld [vmem:[%s1 + $0x80] sm:$0xff]
  %v115 = vld [vmem:[%s1 + $0x88] sm:$0xff]
  %v116 = vld [vmem:[%s1 + $0x90] sm:$0xff]
  %v117 = vld [vmem:[%s1 + $0x98] sm:$0xff]
  %v118 = vld [vmem:[%s1 + $0xa0] sm:$0xff]
  %v119 = vld [vmem:[%s1 + $0xa8] sm:$0xff]
  %v120 = vld [vmem:[%s1 + $0xb0] sm:$0xff]
  %v121 = vld [vmem:[%s1 + $0xb8] sm:$0xff]
  %v122 = vld [vmem:[%s1 + $0xc0] sm:$0xff]
  %v123 = vld [vmem:[%s1 + $0xc8] sm:$0xff]
  %v124 = vld [vmem:[%s1 + $0xd0] sm:$0xff]
  %v125 = vld [vmem:[%s1 + $0xd8] sm:$0xff]
  %v126 = vld [vmem:[%s1 + $0xe0] sm:$0xff]
  %v127 = vld [vmem:[%s1 + $0xe8] sm:$0xff]
  %v128 = vld [vmem:[%s1 + $0xf0] sm:$0xff]
  %v129 = vld [vmem:[%s1 + $0xf8] sm:$0xff]
  %v130 = vld [vmem:[%s1 + $0x100] sm:$0xff]
  %v131 = vld [vmem:[%s1 + $0x108] sm:$0xff]
  %v132 = vld [vmem:[%s1 + $0x110] sm:$0xff]
  %v133 = vld [vmem:[%s1 + $0x118] sm:$0xff]
  %v134 = vld [vmem:[%s1 + $0x120] sm:$0xff]
  %v135 = vld [vmem:[%s1 + $0x128] sm:$0xff]
  %v136 = vld [vmem:[%s1 + $0x130] sm:$0xff]
  %v137 = vld [vmem:[%s1 + $0x138] sm:$0xff]
  %v138 = vld [vmem:[%s1 + $0x140] sm:$0xff]
  %v139 = vld [vmem:[%s1 + $0x148] sm:$0xff]
  %v140 = vld [vmem:[%s1 + $0x150] sm:$0xff]
  %v141 = vld [vmem:[%s1 + $0x158] sm:$0xff]
  %v142 = vld [vmem:[%s1 + $0x160] sm:$0xff]
  %v143 = vld [vmem:[%s1 + $0x168] sm:$0xff]
  %v144 = vld [vmem:[%s1 + $0x170] sm:$0xff]
  %v145 = vld [vmem:[%s1 + $0x178] sm:$0xff]
  %v146 = vld [vmem:[%s1 + $0x180] sm:$0xff]
  %v147 = vld [vmem:[%s1 + $0x188] sm:$0xff]
  %v148 = vld [vmem:[%s1 + $0x190] sm:$0xff]
  %v149 = vld [vmem:[%s1 + $0x198] sm:$0xff]
  %v150 = vld [vmem:[%s1 + $0x1a0] sm:$0xff]
  %v151 = vld [vmem:[%s1 + $0x1a8] sm:$0xff]
  %v152 = vld [vmem:[%s1 + $0x1b0] sm:$0xff]
  %v153 = vld [vmem:[%s1 + $0x1b8] sm:$0xff]
  %v154 = vld [vmem:[%s1 + $0x1c0] sm:$0xff]
  %v155 = vld [vmem:[%s1 + $0x1c8] sm:$0xff]
  %v156 = vld [vmem:[%s1 + $0x1d0] sm:$0xff]
  %v157 = vld [vmem:[%s1 + $0x1d8] sm:$0xff]
  %v158 = vld [vmem:[%s1 + $0x1e0] sm:$0xff]
  %v159 = vld [vmem:[%s1 + $0x1e8] sm:$0xff]
  %v160 = vld [vmem:[%s1 + $0x1f0] sm:$0xff]
  %v161 = vld [vmem:[%s1 + $0x1f8] sm:$0xff]
  %v162 = vld [vmem:[%s2] sm:$0x1]
  %v164 = vlaneseq
  %v165 = vshrl.u32 %v164, 7
  %v166 = vsub.s32 0, %v165
  %v167 = vrot.slane %v162, %v166
  %169 = vmatprep.subr.mxu0 0.0
  %170 = vmatpush1.msra.mxu0 %v98
  %171 = vmatprep.subr.mxu0 0.0
  %172 = vmatpush1.msra.mxu0 %v99
  %173 = vmatprep.subr.mxu0 0.0
  %174 = vmatpush1.msra.mxu0 %v100
  %175 = vmatprep.subr.mxu0 0.0
  %176 = vmatpush1.msra.mxu0 %v101
  %177 = vmatprep.subr.mxu0 0.0
  %178 = vmatpush1.msra.mxu0 %v102
  %179 = vmatprep.subr.mxu0 0.0
  %180 = vmatpush1.msra.mxu0 %v103
  %181 = vmatprep.subr.mxu0 0.0
  %182 = vmatpush1.msra.mxu0 %v104
  %183 = vmatprep.subr.mxu0 0.0
  %184 = vmatpush1.msra.mxu0 %v105
  %185 = vmatprep.subr.mxu0 0.0
  %186 = vmatpush1.msra.mxu0 %v106
  %187 = vmatprep.subr.mxu0 0.0
  %188 = vmatpush1.msra.mxu0 %v107
  %189 = vmatprep.subr.mxu0 0.0
  %190 = vmatpush1.msra.mxu0 %v108
  %191 = vmatprep.subr.mxu0 0.0
  %192 = vmatpush1.msra.mxu0 %v109
  %193 = vmatprep.subr.mxu0 0.0
  %194 = vmatpush1.msra.mxu0 %v110
  %195 = vmatprep.subr.mxu0 0.0
  %196 = vmatpush1.msra.mxu0 %v111
  %197 = vmatprep.subr.mxu0 0.0
  %198 = vmatpush1.msra.mxu0 %v112
  %199 = vmatprep.subr.mxu0 0.0
  %200 = vmatpush1.msra.mxu0 %v113
  %201 = vmatprep.subr.mxu0 0.0
  %202 = vmatpush1.msra.mxu0 %v114
  %203 = vmatprep.subr.mxu0 0.0
  %204 = vmatpush1.msra.mxu0 %v115
  %205 = vmatprep.subr.mxu0 0.0
  %206 = vmatpush1.msra.mxu0 %v116
  %207 = vmatprep.subr.mxu0 0.0
  %208 = vmatpush1.msra.mxu0 %v117
  %209 = vmatprep.subr.mxu0 0.0
  %210 = vmatpush1.msra.mxu0 %v118
  %211 = vmatprep.subr.mxu0 0.0
  %212 = vmatpush1.msra.mxu0 %v119
  %213 = vmatprep.subr.mxu0 0.0
  %214 = vmatpush1.msra.mxu0 %v120
  %215 = vmatprep.subr.mxu0 0.0
  %216 = vmatpush1.msra.mxu0 %v121
  %217 = vmatprep.subr.mxu0 0.0
  %218 = vmatpush1.msra.mxu0 %v122
  %219 = vmatprep.subr.mxu0 0.0
  %220 = vmatpush1.msra.mxu0 %v123
  %221 = vmatprep.subr.mxu0 0.0
  %222 = vmatpush1.msra.mxu0 %v124
  %223 = vmatprep.subr.mxu0 0.0
  %224 = vmatpush1.msra.mxu0 %v125
  %225 = vmatprep.subr.mxu0 0.0
  %226 = vmatpush1.msra.mxu0 %v126
  %227 = vmatprep.subr.mxu0 0.0
  %228 = vmatpush1.msra.mxu0 %v127
  %229 = vmatprep.subr.mxu0 0.0
  %230 = vmatpush1.msra.mxu0 %v128
  %231 = vmatprep.subr.mxu0 0.0
  %232 = vmatpush1.msra.mxu0 %v129
  %233 = vmatprep.mubr.f32.mxu0 %v15
  %234 = vmatmul.mubr.f32.gmra.mrb[0].mxu0 %v14
  %v235 = vpop.f32.mrb[0].mxu0
  %v236 = vadd.f32 %v167, %v235
  %v237 = vpop.f32.mrb[0].mxu0
  %238 = vmatprep.mubr.f32.mxu0 %v19
  %239 = vmatmul.mubr.f32.gmra.mrb[0].mxu0 %v18
  %v240 = vpop.f32.mrb[0].mxu0
  %v241 = vadd.f32 %v167, %v240
  %v242 = vpop.f32.mrb[0].mxu0
  %243 = vmatprep.mubr.f32.mxu0 %v23
  %244 = vmatmul.mubr.f32.gmra.mrb[0].mxu0 %v22
  %v245 = vpop.f32.mrb[0].mxu0
  %v246 = vadd.f32 %v167, %v245
  %v247 = vpop.f32.mrb[0].mxu0
  %248 = vmatprep.mubr.f32.mxu0 %v27
  %249 = vmatmul.mubr.f32.gmra.mrb[0].mxu0 %v26
  %v250 = vpop.f32.mrb[0].mxu0
  %v251 = vadd.f32 %v167, %v250
  %v252 = vpop.f32.mrb[0].mxu0
  %253 = vmatprep.mubr.f32.mxu0 %v31
  %254 = vmatmul.mubr.f32.gmra.mrb[0].mxu0 %v30
  %v255 = vpop.f32.mrb[0].mxu0
  %v256 = vadd.f32 %v167, %v255
  %v257 = vpop.f32.mrb[0].mxu0
  %258 = vmatprep.mubr.f32.mxu0 %v35
  %259 = vmatmul.mubr.f32.gmra.mrb[0].mxu0 %v34
  %v260 = vpop.f32.mrb[0].mxu0
  %v261 = vadd.f32 %v167, %v260
  %v262 = vpop.f32.mrb[0].mxu0
  %263 = vmatprep.mubr.f32.mxu0 %v39
  %264 = vmatmul.mubr.f32.gmra.mrb[0].mxu0 %v38
  %v265 = vpop.f32.mrb[0].mxu0
  %v266 = vadd.f32 %v167, %v265
  %v267 = vpop.f32.mrb[0].mxu0
  %268 = vmatprep.mubr.f32.mxu0 %v43
  %269 = vmatmul.mubr.f32.gmra.mrb[0].mxu0 %v42
  %v270 = vpop.f32.mrb[0].mxu0
  %v271 = vadd.f32 %v167, %v270
  %v272 = vpop.f32.mrb[0].mxu0
  %273 = vmatprep.mubr.f32.mxu0 %v47
  %274 = vmatmul.mubr.f32.gmra.mrb[0].mxu0 %v46
  %v275 = vpop.f32.mrb[0].mxu0
  %v276 = vadd.f32 %v167, %v275
  %v277 = vpop.f32.mrb[0].mxu0
  %278 = vmatprep.mubr.f32.mxu0 %v51
  %279 = vmatmul.mubr.f32.gmra.mrb[0].mxu0 %v50
  %v280 = vpop.f32.mrb[0].mxu0
  %v281 = vadd.f32 %v167, %v280
  %v282 = vpop.f32.mrb[0].mxu0
  %283 = vmatprep.mubr.f32.mxu0 %v55
  %284 = vmatmul.mubr.f32.gmra.mrb[0].mxu0 %v54
  %v285 = vpop.f32.mrb[0].mxu0
  %v286 = vadd.f32 %v167, %v285
  %v287 = vpop.f32.mrb[0].mxu0
  %288 = vmatprep.mubr.f32.mxu0 %v59
  %289 = vmatmul.mubr.f32.gmra.mrb[0].mxu0 %v58
  %v290 = vpop.f32.mrb[0].mxu0
  %v291 = vadd.f32 %v167, %v290
  %v292 = vpop.f32.mrb[0].mxu0
  %293 = vmatprep.mubr.f32.mxu0 %v63
  %294 = vmatmul.mubr.f32.gmra.mrb[0].mxu0 %v62
  %v295 = vpop.f32.mrb[0].mxu0
  %v296 = vadd.f32 %v167, %v295
  %v297 = vpop.f32.mrb[0].mxu0
  %298 = vmatprep.mubr.f32.mxu0 %v67
  %299 = vmatmul.mubr.f32.gmra.mrb[0].mxu0 %v66
  %v300 = vpop.f32.mrb[0].mxu0
  %v301 = vadd.f32 %v167, %v300
  %v302 = vpop.f32.mrb[0].mxu0
  %303 = vmatprep.mubr.f32.mxu0 %v71
  %304 = vmatmul.mubr.f32.gmra.mrb[0].mxu0 %v70
  %v305 = vpop.f32.mrb[0].mxu0
  %v306 = vadd.f32 %v167, %v305
  %v307 = vpop.f32.mrb[0].mxu0
  %308 = vmatprep.mubr.f32.mxu0 %v75
  %309 = vmatmul.mubr.f32.gmra.mrb[0].mxu0 %v74
  %v310 = vpop.f32.mrb[0].mxu0
  %v311 = vadd.f32 %v167, %v310
  %v312 = vpop.f32.mrb[0].mxu0
  %313 = vmatprep.mubr.f32.mxu0 %v79
  %314 = vmatmul.mubr.f32.gmra.mrb[0].mxu0 %v78
  %v315 = vpop.f32.mrb[0].mxu0
  %v316 = vadd.f32 %v167, %v315
  %v317 = vpop.f32.mrb[0].mxu0
  %318 = vmatprep.mubr.f32.mxu0 %v83
  %319 = vmatmul.mubr.f32.gmra.mrb[0].mxu0 %v82
  %v320 = vpop.f32.mrb[0].mxu0
  %v321 = vadd.f32 %v167, %v320
  %v322 = vpop.f32.mrb[0].mxu0
  %323 = vmatprep.mubr.f32.mxu0 %v87
  %324 = vmatmul.mubr.f32.gmra.mrb[0].mxu0 %v86
  %v325 = vpop.f32.mrb[0].mxu0
  %v326 = vadd.f32 %v167, %v325
  %v327 = vpop.f32.mrb[0].mxu0
  %328 = vmatprep.mubr.f32.mxu0 %v91
  %329 = vmatmul.mubr.f32.gmra.mrb[0].mxu0 %v90
  %v330 = vpop.f32.mrb[0].mxu0
  %v331 = vadd.f32 %v167, %v330
  %v332 = vpop.f32.mrb[0].mxu0
  %333 = vmatprep.mubr.f32.mxu0 %v95
  %334 = vmatmul.mubr.f32.gmra.mrb[0].mxu0 %v94
  %v335 = vpop.f32.mrb[0].mxu0
  %v336 = vadd.f32 %v167, %v335
  %v337 = vpop.f32.mrb[0].mxu0
  %338 = vdwg.mxu0
  %339 = vmatprep.subr.mxu0 0.0
  %340 = vmatpush1.msra.mxu0 %v130
  %341 = vmatprep.subr.mxu0 0.0
  %342 = vmatpush1.msra.mxu0 %v131
  %343 = vmatprep.subr.mxu0 0.0
  %344 = vmatpush1.msra.mxu0 %v132
  %345 = vmatprep.subr.mxu0 0.0
  %346 = vmatpush1.msra.mxu0 %v133
  %347 = vmatprep.subr.mxu0 0.0
  %348 = vmatpush1.msra.mxu0 %v134
  %349 = vmatprep.subr.mxu0 0.0
  %350 = vmatpush1.msra.mxu0 %v135
  %351 = vmatprep.subr.mxu0 0.0
  %352 = vmatpush1.msra.mxu0 %v136
  %353 = vmatprep.subr.mxu0 0.0
  %354 = vmatpush1.msra.mxu0 %v137
  %355 = vmatprep.subr.mxu0 0.0
  %356 = vmatpush1.msra.mxu0 %v138
  %357 = vmatprep.subr.mxu0 0.0
  %358 = vmatpush1.msra.mxu0 %v139
  %359 = vmatprep.subr.mxu0 0.0
  %360 = vmatpush1.msra.mxu0 %v140
  %361 = vmatprep.subr.mxu0 0.0
  %362 = vmatpush1.msra.mxu0 %v141
  %363 = vmatprep.subr.mxu0 0.0
  %364 = vmatpush1.msra.mxu0 %v142
  %365 = vmatprep.subr.mxu0 0.0
  %366 = vmatpush1.msra.mxu0 %v143
  %367 = vmatprep.subr.mxu0 0.0
  %368 = vmatpush1.msra.mxu0 %v144
  %369 = vmatprep.subr.mxu0 0.0
  %370 = vmatpush1.msra.mxu0 %v145
  %371 = vmatprep.subr.mxu0 0.0
  %372 = vmatpush1.msra.mxu0 %v146
  %373 = vmatprep.subr.mxu0 0.0
  %374 = vmatpush1.msra.mxu0 %v147
  %375 = vmatprep.subr.mxu0 0.0
  %376 = vmatpush1.msra.mxu0 %v148
  %377 = vmatprep.subr.mxu0 0.0
  %378 = vmatpush1.msra.mxu0 %v149
  %379 = vmatprep.subr.mxu0 0.0
  %380 = vmatpush1.msra.mxu0 %v150
  %381 = vmatprep.subr.mxu0 0.0
  %382 = vmatpush1.msra.mxu0 %v151
  %383 = vmatprep.subr.mxu0 0.0
  %384 = vmatpush1.msra.mxu0 %v152
  %385 = vmatprep.subr.mxu0 0.0
  %386 = vmatpush1.msra.mxu0 %v153
  %387 = vmatprep.subr.mxu0 0.0
  %388 = vmatpush1.msra.mxu0 %v154
  %389 = vmatprep.subr.mxu0 0.0
  %390 = vmatpush1.msra.mxu0 %v155
  %391 = vmatprep.subr.mxu0 0.0
  %392 = vmatpush1.msra.mxu0 %v156
  %393 = vmatprep.subr.mxu0 0.0
  %394 = vmatpush1.msra.mxu0 %v157
  %395 = vmatprep.subr.mxu0 0.0
  %396 = vmatpush1.msra.mxu0 %v158
  %397 = vmatprep.subr.mxu0 0.0
  %398 = vmatpush1.msra.mxu0 %v159
  %399 = vmatprep.subr.mxu0 0.0
  %400 = vmatpush1.msra.mxu0 %v160
  %401 = vmatprep.subr.mxu0 0.0
  %402 = vmatpush1.msra.mxu0 %v161
  %403 = vmatprep.mubr.f32.mxu0 %v17
  %404 = vmatmul.mubr.f32.gmra.mrb[0].mxu0 %v16
  %v405 = vpop.f32.mrb[0].mxu0
  %v406 = vadd.f32 %v236, %v405
  %v407 = vpop.f32.mrb[0].mxu0
  %408 = vmatprep.mubr.f32.mxu0 %v21
  %409 = vmatmul.mubr.f32.gmra.mrb[0].mxu0 %v20
  %v410 = vpop.f32.mrb[0].mxu0
  %v411 = vadd.f32 %v241, %v410
  %v412 = vpop.f32.mrb[0].mxu0
  %413 = vmatprep.mubr.f32.mxu0 %v25
  %414 = vmatmul.mubr.f32.gmra.mrb[0].mxu0 %v24
  %v415 = vpop.f32.mrb[0].mxu0
  %v416 = vadd.f32 %v246, %v415
  %v417 = vpop.f32.mrb[0].mxu0
  %418 = vmatprep.mubr.f32.mxu0 %v29
  %419 = vmatmul.mubr.f32.gmra.mrb[0].mxu0 %v28
  %v420 = vpop.f32.mrb[0].mxu0
  %v421 = vadd.f32 %v251, %v420
  %v422 = vpop.f32.mrb[0].mxu0
  %423 = vmatprep.mubr.f32.mxu0 %v33
  %424 = vmatmul.mubr.f32.gmra.mrb[0].mxu0 %v32
  %v425 = vpop.f32.mrb[0].mxu0
  %v426 = vadd.f32 %v256, %v425
  %v427 = vpop.f32.mrb[0].mxu0
  %428 = vmatprep.mubr.f32.mxu0 %v37
  %429 = vmatmul.mubr.f32.gmra.mrb[0].mxu0 %v36
  %v430 = vpop.f32.mrb[0].mxu0
  %v431 = vadd.f32 %v261, %v430
  %v432 = vpop.f32.mrb[0].mxu0
  %433 = vmatprep.mubr.f32.mxu0 %v41
  %434 = vmatmul.mubr.f32.gmra.mrb[0].mxu0 %v40
  %v435 = vpop.f32.mrb[0].mxu0
  %v436 = vadd.f32 %v266, %v435
  %v437 = vpop.f32.mrb[0].mxu0
  %438 = vmatprep.mubr.f32.mxu0 %v45
  %439 = vmatmul.mubr.f32.gmra.mrb[0].mxu0 %v44
  %v440 = vpop.f32.mrb[0].mxu0
  %v441 = vadd.f32 %v271, %v440
  %v442 = vpop.f32.mrb[0].mxu0
  %443 = vmatprep.mubr.f32.mxu0 %v49
  %444 = vmatmul.mubr.f32.gmra.mrb[0].mxu0 %v48
  %v445 = vpop.f32.mrb[0].mxu0
  %v446 = vadd.f32 %v276, %v445
  %v447 = vpop.f32.mrb[0].mxu0
  %448 = vmatprep.mubr.f32.mxu0 %v53
  %449 = vmatmul.mubr.f32.gmra.mrb[0].mxu0 %v52
  %v450 = vpop.f32.mrb[0].mxu0
  %v451 = vadd.f32 %v281, %v450
  %v452 = vpop.f32.mrb[0].mxu0
  %453 = vmatprep.mubr.f32.mxu0 %v57
  %454 = vmatmul.mubr.f32.gmra.mrb[0].mxu0 %v56
  %v455 = vpop.f32.mrb[0].mxu0
  %v456 = vadd.f32 %v286, %v455
  %v457 = vpop.f32.mrb[0].mxu0
  %458 = vmatprep.mubr.f32.mxu0 %v61
  %459 = vmatmul.mubr.f32.gmra.mrb[0].mxu0 %v60
  %v460 = vpop.f32.mrb[0].mxu0
  %v461 = vadd.f32 %v291, %v460
  %v462 = vpop.f32.mrb[0].mxu0
  %463 = vmatprep.mubr.f32.mxu0 %v65
  %464 = vmatmul.mubr.f32.gmra.mrb[0].mxu0 %v64
  %v465 = vpop.f32.mrb[0].mxu0
  %v466 = vadd.f32 %v296, %v465
  %v467 = vpop.f32.mrb[0].mxu0
  %468 = vmatprep.mubr.f32.mxu0 %v69
  %469 = vmatmul.mubr.f32.gmra.mrb[0].mxu0 %v68
  %v470 = vpop.f32.mrb[0].mxu0
  %v471 = vadd.f32 %v301, %v470
  %v472 = vpop.f32.mrb[0].mxu0
  %473 = vmatprep.mubr.f32.mxu0 %v73
  %474 = vmatmul.mubr.f32.gmra.mrb[0].mxu0 %v72
  %v475 = vpop.f32.mrb[0].mxu0
  %v476 = vadd.f32 %v306, %v475
  %v477 = vpop.f32.mrb[0].mxu0
  %478 = vmatprep.mubr.f32.mxu0 %v77
  %479 = vmatmul.mubr.f32.gmra.mrb[0].mxu0 %v76
  %v480 = vpop.f32.mrb[0].mxu0
  %v481 = vadd.f32 %v311, %v480
  %v482 = vpop.f32.mrb[0].mxu0
  %483 = vmatprep.mubr.f32.mxu0 %v81
  %484 = vmatmul.mubr.f32.gmra.mrb[0].mxu0 %v80
  %v485 = vpop.f32.mrb[0].mxu0
  %v486 = vadd.f32 %v316, %v485
  %v487 = vpop.f32.mrb[0].mxu0
  %488 = vmatprep.mubr.f32.mxu0 %v85
  %489 = vmatmul.mubr.f32.gmra.mrb[0].mxu0 %v84
  %v490 = vpop.f32.mrb[0].mxu0
  %v491 = vadd.f32 %v321, %v490
  %v492 = vpop.f32.mrb[0].mxu0
  %493 = vmatprep.mubr.f32.mxu0 %v89
  %494 = vmatmul.mubr.f32.gmra.mrb[0].mxu0 %v88
  %v495 = vpop.f32.mrb[0].mxu0
  %v496 = vadd.f32 %v326, %v495
  %v497 = vpop.f32.mrb[0].mxu0
  %498 = vmatprep.mubr.f32.mxu0 %v93
  %499 = vmatmul.mubr.f32.gmra.mrb[0].mxu0 %v92
  %v500 = vpop.f32.mrb[0].mxu0
  %v501 = vadd.f32 %v331, %v500
  %v502 = vpop.f32.mrb[0].mxu0
  %503 = vmatprep.mubr.f32.mxu0 %v97
  %504 = vmatmul.mubr.f32.gmra.mrb[0].mxu0 %v96
  %v505 = vpop.f32.mrb[0].mxu0
  %v506 = vadd.f32 %v336, %v505
  %v507 = vpop.f32.mrb[0].mxu0
  %508 = vdwg.mxu0
  %v509 = vmax.f32 %v406, 0.0
  %v510 = vmax.f32 %v411, 0.0
  %v511 = vmax.f32 %v416, 0.0
  %v512 = vmax.f32 %v421, 0.0
  %v513 = vmax.f32 %v426, 0.0
  %v514 = vmax.f32 %v431, 0.0
  %v515 = vmax.f32 %v436, 0.0
  %v516 = vmax.f32 %v441, 0.0
  %v517 = vmax.f32 %v446, 0.0
  %v518 = vmax.f32 %v451, 0.0
  %v519 = vmax.f32 %v456, 0.0
  %v520 = vmax.f32 %v461, 0.0
  %v521 = vmax.f32 %v466, 0.0
  %v522 = vmax.f32 %v471, 0.0
  %v523 = vmax.f32 %v476, 0.0
  %v524 = vmax.f32 %v481, 0.0
  %v525 = vmax.f32 %v486, 0.0
  %v526 = vmax.f32 %v491, 0.0
  %v527 = vmax.f32 %v496, 0.0
  %v528 = vmax.f32 %v501, 0.0
  %v529 = vmax.f32 %v506, 0.0
  %vm530 = vcmask 523264
  %531 = vst.msk [vmem:[%s3] sm:$0xff] %vm530, %v509
  %532 = vst.msk [vmem:[%s3 + $0x8] sm:$0xff] %vm530, %v510
  %533 = vst.msk [vmem:[%s3 + $0x10] sm:$0xff] %vm530, %v511
  %534 = vst.msk [vmem:[%s3 + $0x18] sm:$0xff] %vm530, %v512
  %535 = vst.msk [vmem:[%s3 + $0x20] sm:$0xff] %vm530, %v513
  %536 = vst.msk [vmem:[%s3 + $0x28] sm:$0xff] %vm530, %v514
  %537 = vst.msk [vmem:[%s3 + $0x30] sm:$0xff] %vm530, %v515
  %538 = vst.msk [vmem:[%s3 + $0x38] sm:$0xff] %vm530, %v516
  %539 = vst.msk [vmem:[%s3 + $0x40] sm:$0xff] %vm530, %v517
  %540 = vst.msk [vmem:[%s3 + $0x48] sm:$0xff] %vm530, %v518
  %541 = vst.msk [vmem:[%s3 + $0x50] sm:$0xff] %vm530, %v519
  %542 = vst.msk [vmem:[%s3 + $0x58] sm:$0xff] %vm530, %v520
  %543 = vst.msk [vmem:[%s3 + $0x60] sm:$0xff] %vm530, %v521
  %544 = vst.msk [vmem:[%s3 + $0x68] sm:$0xff] %vm530, %v522
  %545 = vst.msk [vmem:[%s3 + $0x70] sm:$0xff] %vm530, %v523
  %546 = vst.msk [vmem:[%s3 + $0x78] sm:$0xff] %vm530, %v524
  %547 = vst.msk [vmem:[%s3 + $0x80] sm:$0xff] %vm530, %v525
  %548 = vst.msk [vmem:[%s3 + $0x88] sm:$0xff] %vm530, %v526
  %549 = vst.msk [vmem:[%s3 + $0x90] sm:$0xff] %vm530, %v527
  %550 = vst.msk [vmem:[%s3 + $0x98] sm:$0xff] %vm530, %v528
  %vm551 = vcmask 517120
  %552 = vst.msk [vmem:[%s3 + $0xa0] sm:$0x3] %vm551, %v529
  // Predicated region
  $region14: #{net_forward.5} parent=0 // pred_check
    _
  $region15: #{net_forward.5} parent=0 // pred_check_branch
    %554 = sbr.rel (0) target = $region17
  $region16: #{net_forward.5} parent=0 // pred_region
    _
  $region17: #{net_forward.5} parent=0 // pred_fallthru
    _
  // Predicated region
  $region18: #{net_forward.5} parent=0 // pred_check
    _
  $region19: #{net_forward.5} parent=0 // pred_check_branch
    %556 = sbr.rel (0) target = $region21
  $region20: #{net_forward.5} parent=0 // pred_region
    _
  $region21: #{net_forward.5} parent=0 // pred_fallthru
    _

// kernel: net_forward.6
$region0: #{net_forward.6}
  #allocation0 [shape = 'u32[]', space=smem, size = 0x4, offset = 0x4, fixed_abs, tag = 'smem constant byte address 0x4 - core index']
  #allocation1 [shape = 'u32[144,128]{1,0:T(1,128)}', space=vmem, size = 0x12000, scoped, tag = 'internal scratch']
  %s0 = inlined_call_operand.vmem [shape: f32[98,576], index: 0, kind: input, shape index: {}]
  %s1 = inlined_call_operand.vmem [shape: f32[576,64], index: 1, kind: input, shape index: {}]
  %s2 = inlined_call_operand.vmem [shape: f32[1,64], index: 2, kind: input, shape index: {}]
  %s3 = inlined_call_operand.vmem [shape: f32[98,64], index: 3, kind: output, shape index: {}]
  %s4 = sld [smem:[#allocation0]]
  $region22: #{net_forward.6} parent=0
    _
  %s6 = ssub.s32 1, %s4
  %s7 = scalar_select 0, %s6, %s4
  // Predicated region
  $region2: #{net_forward.6} parent=0 // pred_check
    _
  $region3: #{net_forward.6} parent=0 // pred_check_branch
    %9 = sbr.rel (0) target = $region5
  $region4: #{net_forward.6} parent=0 // pred_region
    _
  $region5: #{net_forward.6} parent=0 // pred_fallthru
    _
  // Predicated region
  $region6: #{net_forward.6} parent=0 // pred_check
    _
  $region7: #{net_forward.6} parent=0 // pred_check_branch
    %11 = sbr.rel (0) target = $region9
  $region8: #{net_forward.6} parent=0 // pred_region
    _
  $region9: #{net_forward.6} parent=0 // pred_fallthru
    _
  // Predicated region
  $region10: #{net_forward.6} parent=0 // pred_check
    _
  $region11: #{net_forward.6} parent=0 // pred_check_branch
    %13 = sbr.rel (0) target = $region13
  $region12: #{net_forward.6} parent=0 // pred_region
    _
  $region13: #{net_forward.6} parent=0 // pred_fallthru
    _
  %v14 = vld [vmem:[%s0] sm:$0xff]
  %v15 = vld [vmem:[%s0 + $0x8] sm:$0xff]
  %v16 = vld [vmem:[%s0 + $0x10] sm:$0xff]
  %v17 = vld [vmem:[%s0 + $0x18] sm:$0xff]
  %v18 = vld [vmem:[%s0 + $0x20] sm:$0xff]
  %v19 = vld [vmem:[%s0 + $0x28] sm:$0xff]
  %v20 = vld [vmem:[%s0 + $0x30] sm:$0xff]
  %v21 = vld [vmem:[%s0 + $0x38] sm:$0xff]
  %v22 = vld [vmem:[%s0 + $0x40] sm:$0xff]
  %v23 = vld [vmem:[%s0 + $0x48] sm:$0xff]
  %v24 = vld [vmem:[%s0 + $0x50] sm:$0xff]
  %v25 = vld [vmem:[%s0 + $0x58] sm:$0xff]
  %v26 = vld [vmem:[%s0 + $0x60] sm:$0xff]
  %v27 = vld [vmem:[%s0 + $0x68] sm:$0xff]
  %v28 = vld [vmem:[%s0 + $0x70] sm:$0xff]
  %v29 = vld [vmem:[%s0 + $0x78] sm:$0xff]
  %v30 = vld [vmem:[%s0 + $0x80] sm:$0xff]
  %v31 = vld [vmem:[%s0 + $0x88] sm:$0xff]
  %v32 = vld [vmem:[%s0 + $0x90] sm:$0xff]
  %v33 = vld [vmem:[%s0 + $0x98] sm:$0xff]
  %v34 = vld [vmem:[%s0 + $0xa0] sm:$0xff]
  %v35 = vld [vmem:[%s0 + $0xa8] sm:$0xff]
  %v36 = vld [vmem:[%s0 + $0xb0] sm:$0xff]
  %v37 = vld [vmem:[%s0 + $0xb8] sm:$0xff]
  %v38 = vld [vmem:[%s0 + $0xc0] sm:$0xff]
  %v39 = vld [vmem:[%s0 + $0xc8] sm:$0xff]
  %v40 = vld [vmem:[%s0 + $0xd0] sm:$0xff]
  %v41 = vld [vmem:[%s0 + $0xd8] sm:$0xff]
  %v42 = vld [vmem:[%s0 + $0xe0] sm:$0xff]
  %v43 = vld [vmem:[%s0 + $0xe8] sm:$0xff]
  %v44 = vld [vmem:[%s0 + $0xf0] sm:$0xff]
  %v45 = vld [vmem:[%s0 + $0xf8] sm:$0xff]
  %v46 = vld [vmem:[%s0 + $0x100] sm:$0xff]
  %v47 = vld [vmem:[%s0 + $0x108] sm:$0xff]
  %v48 = vld [vmem:[%s0 + $0x110] sm:$0xff]
  %v49 = vld [vmem:[%s0 + $0x118] sm:$0xff]
  %v50 = vld [vmem:[%s0 + $0x120] sm:$0xff]
  %v51 = vld [vmem:[%s0 + $0x128] sm:$0xff]
  %v52 = vld [vmem:[%s0 + $0x130] sm:$0xff]
  %v53 = vld [vmem:[%s0 + $0x138] sm:$0xff]
  %v54 = vld [vmem:[%s0 + $0x140] sm:$0xff]
  %v55 = vld [vmem:[%s0 + $0x148] sm:$0xff]
  %v56 = vld [vmem:[%s0 + $0x150] sm:$0xff]
  %v57 = vld [vmem:[%s0 + $0x158] sm:$0xff]
  %v58 = vld [vmem:[%s0 + $0x160] sm:$0xff]
  %v59 = vld [vmem:[%s0 + $0x168] sm:$0xff]
  %v60 = vld [vmem:[%s0 + $0x170] sm:$0xff]
  %v61 = vld [vmem:[%s0 + $0x178] sm:$0xff]
  %v62 = vld [vmem:[%s0 + $0x180] sm:$0xff]
  %v63 = vld [vmem:[%s0 + $0x188] sm:$0xff]
  %v64 = vld [vmem:[%s0 + $0x190] sm:$0xff]
  %v65 = vld [vmem:[%s0 + $0x198] sm:$0xff]
  %v66 = vld [vmem:[%s0 + $0x1a0] sm:$0xff]
  %v67 = vld [vmem:[%s0 + $0x1a8] sm:$0xff]
  %v68 = vld [vmem:[%s0 + $0x1b0] sm:$0xff]
  %v69 = vld [vmem:[%s0 + $0x1b8] sm:$0xff]
  %v70 = vld [vmem:[%s0 + $0x1c0] sm:$0xff]
  %v71 = vld [vmem:[%s0 + $0x1c8] sm:$0xff]
  %v72 = vld [vmem:[%s0 + $0x1d0] sm:$0xff]
  %v73 = vld [vmem:[%s0 + $0x1d8] sm:$0xff]
  %v74 = vld [vmem:[%s0 + $0x1e0] sm:$0x3]
  %v75 = vld [vmem:[%s0 + $0x1e8] sm:$0x3]
  %v76 = vld [vmem:[%s0 + $0x1f0] sm:$0x3]
  %v77 = vld [vmem:[%s0 + $0x1f8] sm:$0x3]
  %v78 = vld [vmem:[%s0 + $0x200] sm:$0x3]
  %v79 = vld [vmem:[%s1] sm:$0xff]
  %v80 = vld [vmem:[%s1 + $0x8] sm:$0xff]
  %v81 = vld [vmem:[%s1 + $0x10] sm:$0xff]
  %v82 = vld [vmem:[%s1 + $0x18] sm:$0xff]
  %v83 = vld [vmem:[%s1 + $0x20] sm:$0xff]
  %v84 = vld [vmem:[%s1 + $0x28] sm:$0xff]
  %v85 = vld [vmem:[%s1 + $0x30] sm:$0xff]
  %v86 = vld [vmem:[%s1 + $0x38] sm:$0xff]
  %v87 = vld [vmem:[%s1 + $0x40] sm:$0xff]
  %v88 = vld [vmem:[%s1 + $0x48] sm:$0xff]
  %v89 = vld [vmem:[%s1 + $0x50] sm:$0xff]
  %v90 = vld [vmem:[%s1 + $0x58] sm:$0xff]
  %v91 = vld [vmem:[%s1 + $0x60] sm:$0xff]
  %v92 = vld [vmem:[%s1 + $0x68] sm:$0xff]
  %v93 = vld [vmem:[%s1 + $0x70] sm:$0xff]
  %v94 = vld [vmem:[%s1 + $0x78] sm:$0xff]
  %v95 = vld [vmem:[%s1 + $0x80] sm:$0xff]
  %v96 = vld [vmem:[%s1 + $0x88] sm:$0xff]
  %v97 = vld [vmem:[%s1 + $0x90] sm:$0xff]
  %v98 = vld [vmem:[%s1 + $0x98] sm:$0xff]
  %v99 = vld [vmem:[%s1 + $0xa0] sm:$0xff]
  %v100 = vld [vmem:[%s1 + $0xa8] sm:$0xff]
  %v101 = vld [vmem:[%s1 + $0xb0] sm:$0xff]
  %v102 = vld [vmem:[%s1 + $0xb8] sm:$0xff]
  %v103 = vld [vmem:[%s1 + $0xc0] sm:$0xff]
  %v104 = vld [vmem:[%s1 + $0xc8] sm:$0xff]
  %v105 = vld [vmem:[%s1 + $0xd0] sm:$0xff]
  %v106 = vld [vmem:[%s1 + $0xd8] sm:$0xff]
  %v107 = vld [vmem:[%s1 + $0xe0] sm:$0xff]
  %v108 = vld [vmem:[%s1 + $0xe8] sm:$0xff]
  %v109 = vld [vmem:[%s1 + $0xf0] sm:$0xff]
  %v110 = vld [vmem:[%s1 + $0xf8] sm:$0xff]
  %v111 = vld [vmem:[%s1 + $0x100] sm:$0xff]
  %v112 = vld [vmem:[%s1 + $0x108] sm:$0xff]
  %v113 = vld [vmem:[%s1 + $0x110] sm:$0xff]
  %v114 = vld [vmem:[%s1 + $0x118] sm:$0xff]
  %v115 = vld [vmem:[%s1 + $0x120] sm:$0xff]
  %v116 = vld [vmem:[%s1 + $0x128] sm:$0xff]
  %v117 = vld [vmem:[%s1 + $0x130] sm:$0xff]
  %v118 = vld [vmem:[%s1 + $0x138] sm:$0xff]
  %v119 = vld [vmem:[%s1 + $0x140] sm:$0xff]
  %v120 = vld [vmem:[%s1 + $0x148] sm:$0xff]
  %v121 = vld [vmem:[%s1 + $0x150] sm:$0xff]
  %v122 = vld [vmem:[%s1 + $0x158] sm:$0xff]
  %v123 = vld [vmem:[%s1 + $0x160] sm:$0xff]
  %v124 = vld [vmem:[%s1 + $0x168] sm:$0xff]
  %v125 = vld [vmem:[%s1 + $0x170] sm:$0xff]
  %v126 = vld [vmem:[%s1 + $0x178] sm:$0xff]
  %v127 = vld [vmem:[%s1 + $0x180] sm:$0xff]
  %v128 = vld [vmem:[%s1 + $0x188] sm:$0xff]
  %v129 = vld [vmem:[%s1 + $0x190] sm:$0xff]
  %v130 = vld [vmem:[%s1 + $0x198] sm:$0xff]
  %v131 = vld [vmem:[%s1 + $0x1a0] sm:$0xff]
  %v132 = vld [vmem:[%s1 + $0x1a8] sm:$0xff]
  %v133 = vld [vmem:[%s1 + $0x1b0] sm:$0xff]
  %v134 = vld [vmem:[%s1 + $0x1b8] sm:$0xff]
  %v135 = vld [vmem:[%s1 + $0x1c0] sm:$0xff]
  %v136 = vld [vmem:[%s1 + $0x1c8] sm:$0xff]
  %v137 = vld [vmem:[%s1 + $0x1d0] sm:$0xff]
  %v138 = vld [vmem:[%s1 + $0x1d8] sm:$0xff]
  %v139 = vld [vmem:[%s1 + $0x1e0] sm:$0xff]
  %v140 = vld [vmem:[%s1 + $0x1e8] sm:$0xff]
  %v141 = vld [vmem:[%s1 + $0x1f0] sm:$0xff]
  %v142 = vld [vmem:[%s1 + $0x1f8] sm:$0xff]
  %v143 = vld [vmem:[%s1 + $0x200] sm:$0xff]
  %v144 = vld [vmem:[%s1 + $0x208] sm:$0xff]
  %v145 = vld [vmem:[%s1 + $0x210] sm:$0xff]
  %v146 = vld [vmem:[%s1 + $0x218] sm:$0xff]
  %v147 = vld [vmem:[%s1 + $0x220] sm:$0xff]
  %v148 = vld [vmem:[%s1 + $0x228] sm:$0xff]
  %v149 = vld [vmem:[%s1 + $0x230] sm:$0xff]
  %v150 = vld [vmem:[%s1 + $0x238] sm:$0xff]
  %v151 = vld [vmem:[%s2] sm:$0x1]
  %v153 = vlaneseq
  %v154 = vshrl.u32 %v153, 7
  %v155 = vsub.s32 0, %v154
  %v156 = vrot.slane %v151, %v155
  %vm158 = vcmask 523264
  %v160 = vsel %vm158, %v18, 0
  %v163 = vsel %vm158, %v23, 0
  %v166 = vsel %vm158, %v28, 0
  %v169 = vsel %vm158, %v33, 0
  %v172 = vsel %vm158, %v38, 0
  %v175 = vsel %vm158, %v43, 0
  %v178 = vsel %vm158, %v48, 0
  %v181 = vsel %vm158, %v53, 0
  %v184 = vsel %vm158, %v58, 0
  %v187 = vsel %vm158, %v63, 0
  %v190 = vsel %vm158, %v68, 0
  %v193 = vsel %vm158, %v73, 0
  %v196 = vsel %vm158, %v78, 0
  %198 = vmatprep.subr.mxu0 0.0
  %199 = vmatpush1.msra.mxu0 %v79
  %200 = vmatprep.subr.mxu0 0.0
  %201 = vmatpush1.msra.mxu0 %v80
  %202 = vmatprep.subr.mxu0 0.0
  %203 = vmatpush1.msra.mxu0 %v81
  %204 = vmatprep.subr.mxu0 0.0
  %205 = vmatpush1.msra.mxu0 %v82
  %206 = vmatprep.subr.mxu0 0.0
  %207 = vmatpush1.msra.mxu0 %v83
  %208 = vmatprep.subr.mxu0 0.0
  %209 = vmatpush1.msra.mxu0 %v84
  %210 = vmatprep.subr.mxu0 0.0
  %211 = vmatpush1.msra.mxu0 %v85
  %212 = vmatprep.subr.mxu0 0.0
  %213 = vmatpush1.msra.mxu0 %v86
  %214 = vmatprep.subr.mxu0 0.0
  %215 = vmatpush1.msra.mxu0 %v87
  %216 = vmatprep.subr.mxu0 0.0
  %217 = vmatpush1.msra.mxu0 %v88
  %218 = vmatprep.subr.mxu0 0.0
  %219 = vmatpush1.msra.mxu0 %v89
  %220 = vmatprep.subr.mxu0 0.0
  %221 = vmatpush1.msra.mxu0 %v90
  %222 = vmatprep.subr.mxu0 0.0
  %223 = vmatpush1.msra.mxu0 %v91
  %224 = vmatprep.subr.mxu0 0.0
  %225 = vmatpush1.msra.mxu0 %v92
  %226 = vmatprep.subr.mxu0 0.0
  %227 = vmatpush1.msra.mxu0 %v93
  %228 = vmatprep.subr.mxu0 0.0
  %229 = vmatpush1.msra.mxu0 %v94
  %230 = vmatprep.subr.mxu0 0.0
  %231 = vmatpush1.msra.mxu0 %v95
  %232 = vmatprep.subr.mxu0 0.0
  %233 = vmatpush1.msra.mxu0 %v96
  %234 = vmatprep.subr.mxu0 0.0
  %235 = vmatpush1.msra.mxu0 %v97
  %236 = vmatprep.subr.mxu0 0.0
  %237 = vmatpush1.msra.mxu0 %v98
  %238 = vmatprep.subr.mxu0 0.0
  %239 = vmatpush1.msra.mxu0 %v99
  %240 = vmatprep.subr.mxu0 0.0
  %241 = vmatpush1.msra.mxu0 %v100
  %242 = vmatprep.subr.mxu0 0.0
  %243 = vmatpush1.msra.mxu0 %v101
  %244 = vmatprep.subr.mxu0 0.0
  %245 = vmatpush1.msra.mxu0 %v102
  %246 = vmatprep.subr.mxu0 0.0
  %247 = vmatpush1.msra.mxu0 %v103
  %248 = vmatprep.subr.mxu0 0.0
  %249 = vmatpush1.msra.mxu0 %v104
  %250 = vmatprep.subr.mxu0 0.0
  %251 = vmatpush1.msra.mxu0 %v105
  %252 = vmatprep.subr.mxu0 0.0
  %253 = vmatpush1.msra.mxu0 %v106
  %254 = vmatprep.subr.mxu0 0.0
  %255 = vmatpush1.msra.mxu0 %v107
  %256 = vmatprep.subr.mxu0 0.0
  %257 = vmatpush1.msra.mxu0 %v108
  %258 = vmatprep.subr.mxu0 0.0
  %259 = vmatpush1.msra.mxu0 %v109
  %260 = vmatprep.subr.mxu0 0.0
  %261 = vmatpush1.msra.mxu0 %v110
  %262 = vmatprep.mubr.f32.mxu0 %v15
  %263 = vmatmul.mubr.f32.gmra.mrb[0].mxu0 %v14
  %v264 = vpop.f32.mrb[0].mxu0
  %v265 = vadd.f32 %v156, %v264
  %v266 = vpop.f32.mrb[0].mxu0
  %267 = vmatprep.mubr.f32.mxu0 %v20
  %268 = vmatmul.mubr.f32.gmra.mrb[0].mxu0 %v19
  %v269 = vpop.f32.mrb[0].mxu0
  %v270 = vadd.f32 %v156, %v269
  %v271 = vpop.f32.mrb[0].mxu0
  %272 = vmatprep.mubr.f32.mxu0 %v25
  %273 = vmatmul.mubr.f32.gmra.mrb[0].mxu0 %v24
  %v274 = vpop.f32.mrb[0].mxu0
  %v275 = vadd.f32 %v156, %v274
  %v276 = vpop.f32.mrb[0].mxu0
  %277 = vmatprep.mubr.f32.mxu0 %v30
  %278 = vmatmul.mubr.f32.gmra.mrb[0].mxu0 %v29
  %v279 = vpop.f32.mrb[0].mxu0
  %v280 = vadd.f32 %v156, %v279
  %v281 = vpop.f32.mrb[0].mxu0
  %282 = vmatprep.mubr.f32.mxu0 %v35
  %283 = vmatmul.mubr.f32.gmra.mrb[0].mxu0 %v34
  %v284 = vpop.f32.mrb[0].mxu0
  %v285 = vadd.f32 %v156, %v284
  %v286 = vpop.f32.mrb[0].mxu0
  %287 = vmatprep.mubr.f32.mxu0 %v40
  %288 = vmatmul.mubr.f32.gmra.mrb[0].mxu0 %v39
  %v289 = vpop.f32.mrb[0].mxu0
  %v290 = vadd.f32 %v156, %v289
  %v291 = vpop.f32.mrb[0].mxu0
  %292 = vmatprep.mubr.f32.mxu0 %v45
  %293 = vmatmul.mubr.f32.gmra.mrb[0].mxu0 %v44
  %v294 = vpop.f32.mrb[0].mxu0
  %v295 = vadd.f32 %v156, %v294
  %v296 = vpop.f32.mrb[0].mxu0
  %297 = vmatprep.mubr.f32.mxu0 %v50
  %298 = vmatmul.mubr.f32.gmra.mrb[0].mxu0 %v49
  %v299 = vpop.f32.mrb[0].mxu0
  %v300 = vadd.f32 %v156, %v299
  %v301 = vpop.f32.mrb[0].mxu0
  %302 = vmatprep.mubr.f32.mxu0 %v55
  %303 = vmatmul.mubr.f32.gmra.mrb[0].mxu0 %v54
  %v304 = vpop.f32.mrb[0].mxu0
  %v305 = vadd.f32 %v156, %v304
  %v306 = vpop.f32.mrb[0].mxu0
  %307 = vmatprep.mubr.f32.mxu0 %v60
  %308 = vmatmul.mubr.f32.gmra.mrb[0].mxu0 %v59
  %v309 = vpop.f32.mrb[0].mxu0
  %v310 = vadd.f32 %v156, %v309
  %v311 = vpop.f32.mrb[0].mxu0
  %312 = vmatprep.mubr.f32.mxu0 %v65
  %313 = vmatmul.mubr.f32.gmra.mrb[0].mxu0 %v64
  %v314 = vpop.f32.mrb[0].mxu0
  %v315 = vadd.f32 %v156, %v314
  %v316 = vpop.f32.mrb[0].mxu0
  %317 = vmatprep.mubr.f32.mxu0 %v70
  %318 = vmatmul.mubr.f32.gmra.mrb[0].mxu0 %v69
  %v319 = vpop.f32.mrb[0].mxu0
  %v320 = vadd.f32 %v156, %v319
  %v321 = vpop.f32.mrb[0].mxu0
  %322 = vmatprep.mubr.f32.mxu0 %v75
  %323 = vmatmul.mubr.f32.gmra.mrb[0].mxu0 %v74
  %v324 = vpop.f32.mrb[0].mxu0
  %v325 = vadd.f32 %v156, %v324
  %v326 = vpop.f32.mrb[0].mxu0
  %327 = vdwg.mxu0
  %328 = vmatprep.subr.mxu0 0.0
  %329 = vmatpush1.msra.mxu0 %v111
  %330 = vmatprep.subr.mxu0 0.0
  %331 = vmatpush1.msra.mxu0 %v112
  %332 = vmatprep.subr.mxu0 0.0
  %333 = vmatpush1.msra.mxu0 %v113
  %334 = vmatprep.subr.mxu0 0.0
  %335 = vmatpush1.msra.mxu0 %v114
  %336 = vmatprep.subr.mxu0 0.0
  %337 = vmatpush1.msra.mxu0 %v115
  %338 = vmatprep.subr.mxu0 0.0
  %339 = vmatpush1.msra.mxu0 %v116
  %340 = vmatprep.subr.mxu0 0.0
  %341 = vmatpush1.msra.mxu0 %v117
  %342 = vmatprep.subr.mxu0 0.0
  %343 = vmatpush1.msra.mxu0 %v118
  %344 = vmatprep.subr.mxu0 0.0
  %345 = vmatpush1.msra.mxu0 %v119
  %346 = vmatprep.subr.mxu0 0.0
  %347 = vmatpush1.msra.mxu0 %v120
  %348 = vmatprep.subr.mxu0 0.0
  %349 = vmatpush1.msra.mxu0 %v121
  %350 = vmatprep.subr.mxu0 0.0
  %351 = vmatpush1.msra.mxu0 %v122
  %352 = vmatprep.subr.mxu0 0.0
  %353 = vmatpush1.msra.mxu0 %v123
  %354 = vmatprep.subr.mxu0 0.0
  %355 = vmatpush1.msra.mxu0 %v124
  %356 = vmatprep.subr.mxu0 0.0
  %357 = vmatpush1.msra.mxu0 %v125
  %358 = vmatprep.subr.mxu0 0.0
  %359 = vmatpush1.msra.mxu0 %v126
  %360 = vmatprep.subr.mxu0 0.0
  %361 = vmatpush1.msra.mxu0 %v127
  %362 = vmatprep.subr.mxu0 0.0
  %363 = vmatpush1.msra.mxu0 %v128
  %364 = vmatprep.subr.mxu0 0.0
  %365 = vmatpush1.msra.mxu0 %v129
  %366 = vmatprep.subr.mxu0 0.0
  %367 = vmatpush1.msra.mxu0 %v130
  %368 = vmatprep.subr.mxu0 0.0
  %369 = vmatpush1.msra.mxu0 %v131
  %370 = vmatprep.subr.mxu0 0.0
  %371 = vmatpush1.msra.mxu0 %v132
  %372 = vmatprep.subr.mxu0 0.0
  %373 = vmatpush1.msra.mxu0 %v133
  %374 = vmatprep.subr.mxu0 0.0
  %375 = vmatpush1.msra.mxu0 %v134
  %376 = vmatprep.subr.mxu0 0.0
  %377 = vmatpush1.msra.mxu0 %v135
  %378 = vmatprep.subr.mxu0 0.0
  %379 = vmatpush1.msra.mxu0 %v136
  %380 = vmatprep.subr.mxu0 0.0
  %381 = vmatpush1.msra.mxu0 %v137
  %382 = vmatprep.subr.mxu0 0.0
  %383 = vmatpush1.msra.mxu0 %v138
  %384 = vmatprep.subr.mxu0 0.0
  %385 = vmatpush1.msra.mxu0 %v139
  %386 = vmatprep.subr.mxu0 0.0
  %387 = vmatpush1.msra.mxu0 %v140
  %388 = vmatprep.subr.mxu0 0.0
  %389 = vmatpush1.msra.mxu0 %v141
  %390 = vmatprep.subr.mxu0 0.0
  %391 = vmatpush1.msra.mxu0 %v142
  %392 = vmatprep.mubr.f32.mxu0 %v17
  %393 = vmatmul.mubr.f32.gmra.mrb[0].mxu0 %v16
  %v394 = vpop.f32.mrb[0].mxu0
  %v395 = vadd.f32 %v265, %v394
  %v396 = vpop.f32.mrb[0].mxu0
  %397 = vmatprep.mubr.f32.mxu0 %v22
  %398 = vmatmul.mubr.f32.gmra.mrb[0].mxu0 %v21
  %v399 = vpop.f32.mrb[0].mxu0
  %v400 = vadd.f32 %v270, %v399
  %v401 = vpop.f32.mrb[0].mxu0
  %402 = vmatprep.mubr.f32.mxu0 %v27
  %403 = vmatmul.mubr.f32.gmra.mrb[0].mxu0 %v26
  %v404 = vpop.f32.mrb[0].mxu0
  %v405 = vadd.f32 %v275, %v404
  %v406 = vpop.f32.mrb[0].mxu0
  %407 = vmatprep.mubr.f32.mxu0 %v32
  %408 = vmatmul.mubr.f32.gmra.mrb[0].mxu0 %v31
  %v409 = vpop.f32.mrb[0].mxu0
  %v410 = vadd.f32 %v280, %v409
  %v411 = vpop.f32.mrb[0].mxu0
  %412 = vmatprep.mubr.f32.mxu0 %v37
  %413 = vmatmul.mubr.f32.gmra.mrb[0].mxu0 %v36
  %v414 = vpop.f32.mrb[0].mxu0
  %v415 = vadd.f32 %v285, %v414
  %v416 = vpop.f32.mrb[0].mxu0
  %417 = vmatprep.mubr.f32.mxu0 %v42
  %418 = vmatmul.mubr.f32.gmra.mrb[0].mxu0 %v41
  %v419 = vpop.f32.mrb[0].mxu0
  %v420 = vadd.f32 %v290, %v419
  %v421 = vpop.f32.mrb[0].mxu0
  %422 = vmatprep.mubr.f32.mxu0 %v47
  %423 = vmatmul.mubr.f32.gmra.mrb[0].mxu0 %v46
  %v424 = vpop.f32.mrb[0].mxu0
  %v425 = vadd.f32 %v295, %v424
  %v426 = vpop.f32.mrb[0].mxu0
  %427 = vmatprep.mubr.f32.mxu0 %v52
  %428 = vmatmul.mubr.f32.gmra.mrb[0].mxu0 %v51
  %v429 = vpop.f32.mrb[0].mxu0
  %v430 = vadd.f32 %v300, %v429
  %v431 = vpop.f32.mrb[0].mxu0
  %432 = vmatprep.mubr.f32.mxu0 %v57
  %433 = vmatmul.mubr.f32.gmra.mrb[0].mxu0 %v56
  %v434 = vpop.f32.mrb[0].mxu0
  %v435 = vadd.f32 %v305, %v434
  %v436 = vpop.f32.mrb[0].mxu0
  %437 = vmatprep.mubr.f32.mxu0 %v62
  %438 = vmatmul.mubr.f32.gmra.mrb[0].mxu0 %v61
  %v439 = vpop.f32.mrb[0].mxu0
  %v440 = vadd.f32 %v310, %v439
  %v441 = vpop.f32.mrb[0].mxu0
  %442 = vmatprep.mubr.f32.mxu0 %v67
  %443 = vmatmul.mubr.f32.gmra.mrb[0].mxu0 %v66
  %v444 = vpop.f32.mrb[0].mxu0
  %v445 = vadd.f32 %v315, %v444
  %v446 = vpop.f32.mrb[0].mxu0
  %447 = vmatprep.mubr.f32.mxu0 %v72
  %448 = vmatmul.mubr.f32.gmra.mrb[0].mxu0 %v71
  %v449 = vpop.f32.mrb[0].mxu0
  %v450 = vadd.f32 %v320, %v449
  %v451 = vpop.f32.mrb[0].mxu0
  %452 = vmatprep.mubr.f32.mxu0 %v77
  %453 = vmatmul.mubr.f32.gmra.mrb[0].mxu0 %v76
  %v454 = vpop.f32.mrb[0].mxu0
  %v455 = vadd.f32 %v325, %v454
  %v456 = vpop.f32.mrb[0].mxu0
  %457 = vdwg.mxu0
  %458 = vmatprep.subr.mxu0 0.0
  %459 = vmatpush1.msra.mxu0 %v143
  %460 = vmatprep.subr.mxu0 0.0
  %461 = vmatpush1.msra.mxu0 %v144
  %462 = vmatprep.subr.mxu0 0.0
  %463 = vmatpush1.msra.mxu0 %v145
  %464 = vmatprep.subr.mxu0 0.0
  %465 = vmatpush1.msra.mxu0 %v146
  %466 = vmatprep.subr.mxu0 0.0
  %467 = vmatpush1.msra.mxu0 %v147
  %468 = vmatprep.subr.mxu0 0.0
  %469 = vmatpush1.msra.mxu0 %v148
  %470 = vmatprep.subr.mxu0 0.0
  %471 = vmatpush1.msra.mxu0 %v149
  %472 = vmatprep.subr.mxu0 0.0
  %473 = vmatpush1.msra.mxu0 %v150
  %474 = vmatprep.subr.mxu0 0.0
  %475 = vmatpush1.msra.mxu0 0.0
  %476 = vmatprep.subr.mxu0 0.0
  %477 = vmatpush1.msra.mxu0 0.0
  %478 = vmatprep.subr.mxu0 0.0
  %479 = vmatpush1.msra.mxu0 0.0
  %480 = vmatprep.subr.mxu0 0.0
  %481 = vmatpush1.msra.mxu0 0.0
  %482 = vmatprep.subr.mxu0 0.0
  %483 = vmatpush1.msra.mxu0 0.0
  %484 = vmatprep.subr.mxu0 0.0
  %485 = vmatpush1.msra.mxu0 0.0
  %486 = vmatprep.subr.mxu0 0.0
  %487 = vmatpush1.msra.mxu0 0.0
  %488 = vmatprep.subr.mxu0 0.0
  %489 = vmatpush1.msra.mxu0 0.0
  %490 = vmatprep.subr.mxu0 0.0
  %491 = vmatpush1.msra.mxu0 0.0
  %492 = vmatprep.subr.mxu0 0.0
  %493 = vmatpush1.msra.mxu0 0.0
  %494 = vmatprep.subr.mxu0 0.0
  %495 = vmatpush1.msra.mxu0 0.0
  %496 = vmatprep.subr.mxu0 0.0
  %497 = vmatpush1.msra.mxu0 0.0
  %498 = vmatprep.subr.mxu0 0.0
  %499 = vmatpush1.msra.mxu0 0.0
  %500 = vmatprep.subr.mxu0 0.0
  %501 = vmatpush1.msra.mxu0 0.0
  %502 = vmatprep.subr.mxu0 0.0
  %503 = vmatpush1.msra.mxu0 0.0
  %504 = vmatprep.subr.mxu0 0.0
  %505 = vmatpush1.msra.mxu0 0.0
  %506 = vmatprep.subr.mxu0 0.0
  %507 = vmatpush1.msra.mxu0 0.0
  %508 = vmatprep.subr.mxu0 0.0
  %509 = vmatpush1.msra.mxu0 0.0
  %510 = vmatprep.subr.mxu0 0.0
  %511 = vmatpush1.msra.mxu0 0.0
  %512 = vmatprep.subr.mxu0 0.0
  %513 = vmatpush1.msra.mxu0 0.0
  %514 = vmatprep.subr.mxu0 0.0
  %515 = vmatpush1.msra.mxu0 0.0
  %516 = vmatprep.subr.mxu0 0.0
  %517 = vmatpush1.msra.mxu0 0.0
  %518 = vmatprep.subr.mxu0 0.0
  %519 = vmatpush1.msra.mxu0 0.0
  %520 = vmatprep.subr.mxu0 0.0
  %521 = vmatpush1.msra.mxu0 0.0
  %522 = vmatprep.mubr.f32.mxu0 0.0
  %523 = vmatmul.mubr.f32.gmra.mrb[0].mxu0 %v160
  %v524 = vpop.f32.mrb[0].mxu0
  %v525 = vadd.f32 %v395, %v524
  %v526 = vpop.f32.mrb[0].mxu0
  %527 = vmatprep.mubr.f32.mxu0 0.0
  %528 = vmatmul.mubr.f32.gmra.mrb[0].mxu0 %v163
  %v529 = vpop.f32.mrb[0].mxu0
  %v530 = vadd.f32 %v400, %v529
  %v531 = vpop.f32.mrb[0].mxu0
  %532 = vmatprep.mubr.f32.mxu0 0.0
  %533 = vmatmul.mubr.f32.gmra.mrb[0].mxu0 %v166
  %v534 = vpop.f32.mrb[0].mxu0
  %v535 = vadd.f32 %v405, %v534
  %v536 = vpop.f32.mrb[0].mxu0
  %537 = vmatprep.mubr.f32.mxu0 0.0
  %538 = vmatmul.mubr.f32.gmra.mrb[0].mxu0 %v169
  %v539 = vpop.f32.mrb[0].mxu0
  %v540 = vadd.f32 %v410, %v539
  %v541 = vpop.f32.mrb[0].mxu0
  %542 = vmatprep.mubr.f32.mxu0 0.0
  %543 = vmatmul.mubr.f32.gmra.mrb[0].mxu0 %v172
  %v544 = vpop.f32.mrb[0].mxu0
  %v545 = vadd.f32 %v415, %v544
  %v546 = vpop.f32.mrb[0].mxu0
  %547 = vmatprep.mubr.f32.mxu0 0.0
  %548 = vmatmul.mubr.f32.gmra.mrb[0].mxu0 %v175
  %v549 = vpop.f32.mrb[0].mxu0
  %v550 = vadd.f32 %v420, %v549
  %v551 = vpop.f32.mrb[0].mxu0
  %552 = vmatprep.mubr.f32.mxu0 0.0
  %553 = vmatmul.mubr.f32.gmra.mrb[0].mxu0 %v178
  %v554 = vpop.f32.mrb[0].mxu0
  %v555 = vadd.f32 %v425, %v554
  %v556 = vpop.f32.mrb[0].mxu0
  %557 = vmatprep.mubr.f32.mxu0 0.0
  %558 = vmatmul.mubr.f32.gmra.mrb[0].mxu0 %v181
  %v559 = vpop.f32.mrb[0].mxu0
  %v560 = vadd.f32 %v430, %v559
  %v561 = vpop.f32.mrb[0].mxu0
  %562 = vmatprep.mubr.f32.mxu0 0.0
  %563 = vmatmul.mubr.f32.gmra.mrb[0].mxu0 %v184
  %v564 = vpop.f32.mrb[0].mxu0
  %v565 = vadd.f32 %v435, %v564
  %v566 = vpop.f32.mrb[0].mxu0
  %567 = vmatprep.mubr.f32.mxu0 0.0
  %568 = vmatmul.mubr.f32.gmra.mrb[0].mxu0 %v187
  %v569 = vpop.f32.mrb[0].mxu0
  %v570 = vadd.f32 %v440, %v569
  %v571 = vpop.f32.mrb[0].mxu0
  %572 = vmatprep.mubr.f32.mxu0 0.0
  %573 = vmatmul.mubr.f32.gmra.mrb[0].mxu0 %v190
  %v574 = vpop.f32.mrb[0].mxu0
  %v575 = vadd.f32 %v445, %v574
  %v576 = vpop.f32.mrb[0].mxu0
  %577 = vmatprep.mubr.f32.mxu0 0.0
  %578 = vmatmul.mubr.f32.gmra.mrb[0].mxu0 %v193
  %v579 = vpop.f32.mrb[0].mxu0
  %v580 = vadd.f32 %v450, %v579
  %v581 = vpop.f32.mrb[0].mxu0
  %582 = vmatprep.mubr.f32.mxu0 0.0
  %583 = vmatmul.mubr.f32.gmra.mrb[0].mxu0 %v196
  %v584 = vpop.f32.mrb[0].mxu0
  %v585 = vadd.f32 %v455, %v584
  %v586 = vpop.f32.mrb[0].mxu0
  %587 = vdwg.mxu0
  %v588 = vmax.f32 %v525, 0.0
  %v589 = vmax.f32 %v530, 0.0
  %v590 = vmax.f32 %v535, 0.0
  %v591 = vmax.f32 %v540, 0.0
  %v592 = vmax.f32 %v545, 0.0
  %v593 = vmax.f32 %v550, 0.0
  %v594 = vmax.f32 %v555, 0.0
  %v595 = vmax.f32 %v560, 0.0
  %v596 = vmax.f32 %v565, 0.0
  %v597 = vmax.f32 %v570, 0.0
  %v598 = vmax.f32 %v575, 0.0
  %v599 = vmax.f32 %v580, 0.0
  %v600 = vmax.f32 %v585, 0.0
  %601 = vst.msk [vmem:[%s3] sm:$0xff] %vm158, %v588
  %602 = vst.msk [vmem:[%s3 + $0x8] sm:$0xff] %vm158, %v589
  %603 = vst.msk [vmem:[%s3 + $0x10] sm:$0xff] %vm158, %v590
  %604 = vst.msk [vmem:[%s3 + $0x18] sm:$0xff] %vm158, %v591
  %605 = vst.msk [vmem:[%s3 + $0x20] sm:$0xff] %vm158, %v592
  %606 = vst.msk [vmem:[%s3 + $0x28] sm:$0xff] %vm158, %v593
  %607 = vst.msk [vmem:[%s3 + $0x30] sm:$0xff] %vm158, %v594
  %608 = vst.msk [vmem:[%s3 + $0x38] sm:$0xff] %vm158, %v595
  %609 = vst.msk [vmem:[%s3 + $0x40] sm:$0xff] %vm158, %v596
  %610 = vst.msk [vmem:[%s3 + $0x48] sm:$0xff] %vm158, %v597
  %611 = vst.msk [vmem:[%s3 + $0x50] sm:$0xff] %vm158, %v598
  %612 = vst.msk [vmem:[%s3 + $0x58] sm:$0xff] %vm158, %v599
  %vm613 = vcmask 517120
  %614 = vst.msk [vmem:[%s3 + $0x60] sm:$0x3] %vm613, %v600
  // Predicated region
  $region14: #{net_forward.6} parent=0 // pred_check
    _
  $region15: #{net_forward.6} parent=0 // pred_check_branch
    %616 = sbr.rel (0) target = $region17
  $region16: #{net_forward.6} parent=0 // pred_region
    _
  $region17: #{net_forward.6} parent=0 // pred_fallthru
    _
  // Predicated region
  $region18: #{net_forward.6} parent=0 // pred_check
    _
  $region19: #{net_forward.6} parent=0 // pred_check_branch
    %618 = sbr.rel (0) target = $region21
  $region20: #{net_forward.6} parent=0 // pred_region
    _
  $region21: #{net_forward.6} parent=0 // pred_fallthru
    _

// kernel: net_forward.7
$region0: #{net_forward.7}
  #allocation0 [shape = 'u32[]', space=smem, size = 0x4, offset = 0x4, fixed_abs, tag = 'smem constant byte address 0x4 - core index']
  #allocation1 [shape = 'u32[144,128]{1,0:T(1,128)}', space=vmem, size = 0x12000, scoped, tag = 'internal scratch']
  %s0 = inlined_call_operand.vmem [shape: f32[2,3136], index: 0, kind: input, shape index: {}]
  %s1 = inlined_call_operand.vmem [shape: f32[3136,512], index: 1, kind: input, shape index: {}]
  %s2 = inlined_call_operand.vmem [shape: f32[1,512], index: 2, kind: input, shape index: {}]
  %s3 = inlined_call_operand.vmem [shape: f32[512,128], index: 3, kind: input, shape index: {}]
  %s4 = inlined_call_operand.vmem [shape: f32[1,128], index: 4, kind: input, shape index: {}]
  %s5 = inlined_call_operand.hbm [shape: f32[2,128], index: 5, kind: output, shape index: {}]
  %s6 = sld [smem:[#allocation0]]
  $region30: #{net_forward.7} parent=0
    _
  %s8 = ssub.s32 1, %s6
  %s9 = scalar_select 0, %s8, %s6
  $region1: #{net_forward.7} parent=0
    #allocation2 [shape = 'u8[1024]{0}', space=vmem, size = 0x400, scoped, tag = 'output window, operand 0, single buffered']
    #allocation3 [shape = 's32[1]{0}', space=sflag, size = 0x4, scoped, tag = 'scoped memory for net_forward.7']
    %10 = vsyncpa [#allocation3], 0
    // Predicated region
    $region2: #{net_forward.7} parent=1 // pred_check
      _
    $region3: #{net_forward.7} parent=1 // pred_check_branch
      %12 = sbr.rel (0) target = $region5
    $region4: #{net_forward.7} parent=1 // pred_region
      _
    $region5: #{net_forward.7} parent=1 // pred_fallthru
      _
    // Predicated region
    $region6: #{net_forward.7} parent=1 // pred_check
      _
    $region7: #{net_forward.7} parent=1 // pred_check_branch
      %14 = sbr.rel (0) target = $region9
    $region8: #{net_forward.7} parent=1 // pred_region
      _
    $region9: #{net_forward.7} parent=1 // pred_fallthru
      _
    // Predicated region
    $region10: #{net_forward.7} parent=1 // pred_check
      _
    $region11: #{net_forward.7} parent=1 // pred_check_branch
      %16 = sbr.rel (0) target = $region13
    $region12: #{net_forward.7} parent=1 // pred_region
      _
    $region13: #{net_forward.7} parent=1 // pred_fallthru
      _
    // Predicated region
    $region14: #{net_forward.7} parent=1 // pred_check
      _
    $region15: #{net_forward.7} parent=1 // pred_check_branch
      %18 = sbr.rel (0) target = $region17
    $region16: #{net_forward.7} parent=1 // pred_region
      _
    $region17: #{net_forward.7} parent=1 // pred_fallthru
      _
    // Predicated region
    $region18: #{net_forward.7} parent=1 // pred_check
      _
    $region19: #{net_forward.7} parent=1 // pred_check_branch
      %20 = sbr.rel (0) target = $region21
    $region20: #{net_forward.7} parent=1 // pred_region
      _
    $region21: #{net_forward.7} parent=1 // pred_fallthru
      _
    %v21 = vld [vmem:[%s0] sm:$0xff]
    %v22 = vld [vmem:[%s0 + $0x8] sm:$0xff]
    %v23 = vld [vmem:[%s0 + $0x10] sm:$0xff]
    %v24 = vld [vmem:[%s0 + $0x18] sm:$0xff]
    %v25 = vld [vmem:[%s0 + $0x20] sm:$0xff]
    %v26 = vld [vmem:[%s0 + $0x28] sm:$0xff]
    %v27 = vld [vmem:[%s0 + $0x30] sm:$0x3]
    %v28 = vld [vmem:[%s1] sm:$0xff]
    %v29 = vld [vmem:[%s1 + $0x8] sm:$0xff]
    %v30 = vld [vmem:[%s1 + $0x10] sm:$0xff]
    %v31 = vld [vmem:[%s1 + $0x18] sm:$0xff]
    %v32 = vld [vmem:[%s1 + $0x20] sm:$0xff]
    %v33 = vld [vmem:[%s1 + $0x28] sm:$0xff]
    %v34 = vld [vmem:[%s1 + $0x30] sm:$0xff]
    %v35 = vld [vmem:[%s1 + $0x38] sm:$0xff]
    %v36 = vld [vmem:[%s1 + $0x40] sm:$0xff]
    %v37 = vld [vmem:[%s1 + $0x48] sm:$0xff]
    %v38 = vld [vmem:[%s1 + $0x50] sm:$0xff]
    %v39 = vld [vmem:[%s1 + $0x58] sm:$0xff]
    %v40 = vld [vmem:[%s1 + $0x60] sm:$0xff]
    %v41 = vld [vmem:[%s1 + $0x68] sm:$0xff]
    %v42 = vld [vmem:[%s1 + $0x70] sm:$0xff]
    %v43 = vld [vmem:[%s1 + $0x78] sm:$0xff]
    %v44 = vld [vmem:[%s1 + $0x80] sm:$0xff]
    %v45 = vld [vmem:[%s1 + $0x88] sm:$0xff]
    %v46 = vld [vmem:[%s1 + $0x90] sm:$0xff]
    %v47 = vld [vmem:[%s1 + $0x98] sm:$0xff]
    %v48 = vld [vmem:[%s1 + $0xa0] sm:$0xff]
    %v49 = vld [vmem:[%s1 + $0xa8] sm:$0xff]
    %v50 = vld [vmem:[%s1 + $0xb0] sm:$0xff]
    %v51 = vld [vmem:[%s1 + $0xb8] sm:$0xff]
    %v52 = vld [vmem:[%s1 + $0xc0] sm:$0xff]
    %v53 = vld [vmem:[%s1 + $0xc8] sm:$0xff]
    %v54 = vld [vmem:[%s1 + $0xd0] sm:$0xff]
    %v55 = vld [vmem:[%s1 + $0xd8] sm:$0xff]
    %v56 = vld [vmem:[%s1 + $0xe0] sm:$0xff]
    %v57 = vld [vmem:[%s1 + $0xe8] sm:$0xff]
    %v58 = vld [vmem:[%s1 + $0xf0] sm:$0xff]
    %v59 = vld [vmem:[%s1 + $0xf8] sm:$0xff]
    %v60 = vld [vmem:[%s1 + $0x100] sm:$0xff]
    %v61 = vld [vmem:[%s1 + $0x108] sm:$0xff]
    %v62 = vld [vmem:[%s1 + $0x110] sm:$0xff]
    %v63 = vld [vmem:[%s1 + $0x118] sm:$0xff]
    %v64 = vld [vmem:[%s1 + $0x120] sm:$0xff]
    %v65 = vld [vmem:[%s1 + $0x128] sm:$0xff]
    %v66 = vld [vmem:[%s1 + $0x130] sm:$0xff]
    %v67 = vld [vmem:[%s1 + $0x138] sm:$0xff]
    %v68 = vld [vmem:[%s1 + $0x140] sm:$0xff]
    %v69 = vld [vmem:[%s1 + $0x148] sm:$0xff]
    %v70 = vld [vmem:[%s1 + $0x150] sm:$0xff]
    %v71 = vld [vmem:[%s1 + $0x158] sm:$0xff]
    %v72 = vld [vmem:[%s1 + $0x160] sm:$0xff]
    %v73 = vld [vmem:[%s1 + $0x168] sm:$0xff]
    %v74 = vld [vmem:[%s1 + $0x170] sm:$0xff]
    %v75 = vld [vmem:[%s1 + $0x178] sm:$0xff]
    %v76 = vld [vmem:[%s1 + $0x180] sm:$0xff]
    %v77 = vld [vmem:[%s1 + $0x188] sm:$0xff]
    %v78 = vld [vmem:[%s1 + $0x190] sm:$0xff]
    %v79 = vld [vmem:[%s1 + $0x198] sm:$0xff]
    %v80 = vld [vmem:[%s1 + $0x1a0] sm:$0xff]
    %v81 = vld [vmem:[%s1 + $0x1a8] sm:$0xff]
    %v82 = vld [vmem:[%s1 + $0x1b0] sm:$0xff]
    %v83 = vld [vmem:[%s1 + $0x1b8] sm:$0xff]
    %v84 = vld [vmem:[%s1 + $0x1c0] sm:$0xff]
    %v85 = vld [vmem:[%s1 + $0x1c8] sm:$0xff]
    %v86 = vld [vmem:[%s1 + $0x1d0] sm:$0xff]
    %v87 = vld [vmem:[%s1 + $0x1d8] sm:$0xff]
    %v88 = vld [vmem:[%s1 + $0x1e0] sm:$0xff]
    %v89 = vld [vmem:[%s1 + $0x1e8] sm:$0xff]
    %v90 = vld [vmem:[%s1 + $0x1f0] sm:$0xff]
    %v91 = vld [vmem:[%s1 + $0x1f8] sm:$0xff]
    %v92 = vld [vmem:[%s1 + $0x200] sm:$0xff]
    %v93 = vld [vmem:[%s1 + $0x208] sm:$0xff]
    %v94 = vld [vmem:[%s1 + $0x210] sm:$0xff]
    %v95 = vld [vmem:[%s1 + $0x218] sm:$0xff]
    %v96 = vld [vmem:[%s1 + $0x220] sm:$0xff]
    %v97 = vld [vmem:[%s1 + $0x228] sm:$0xff]
    %v98 = vld [vmem:[%s1 + $0x230] sm:$0xff]
    %v99 = vld [vmem:[%s1 + $0x238] sm:$0xff]
    %v100 = vld [vmem:[%s1 + $0x240] sm:$0xff]
    %v101 = vld [vmem:[%s1 + $0x248] sm:$0xff]
    %v102 = vld [vmem:[%s1 + $0x250] sm:$0xff]
    %v103 = vld [vmem:[%s1 + $0x258] sm:$0xff]
    %v104 = vld [vmem:[%s1 + $0x260] sm:$0xff]
    %v105 = vld [vmem:[%s1 + $0x268] sm:$0xff]
    %v106 = vld [vmem:[%s1 + $0x270] sm:$0xff]
    %v107 = vld [vmem:[%s1 + $0x278] sm:$0xff]
    %v108 = vld [vmem:[%s1 + $0x280] sm:$0xff]
    %v109 = vld [vmem:[%s1 + $0x288] sm:$0xff]
    %v110 = vld [vmem:[%s1 + $0x290] sm:$0xff]
    %v111 = vld [vmem:[%s1 + $0x298] sm:$0xff]
    %v112 = vld [vmem:[%s1 + $0x2a0] sm:$0xff]
    %v113 = vld [vmem:[%s1 + $0x2a8] sm:$0xff]
    %v114 = vld [vmem:[%s1 + $0x2b0] sm:$0xff]
    %v115 = vld [vmem:[%s1 + $0x2b8] sm:$0xff]
    %v116 = vld [vmem:[%s1 + $0x2c0] sm:$0xff]
    %v117 = vld [vmem:[%s1 + $0x2c8] sm:$0xff]
    %v118 = vld [vmem:[%s1 + $0x2d0] sm:$0xff]
    %v119 = vld [vmem:[%s1 + $0x2d8] sm:$0xff]
    %v120 = vld [vmem:[%s1 + $0x2e0] sm:$0xff]
    %v121 = vld [vmem:[%s1 + $0x2e8] sm:$0xff]
    %v122 = vld [vmem:[%s1 + $0x2f0] sm:$0xff]
    %v123 = vld [vmem:[%s1 + $0x2f8] sm:$0xff]
    %v124 = vld [vmem:[%s1 + $0x300] sm:$0xff]
    %v125 = vld [vmem:[%s1 + $0x308] sm:$0xff]
    %v126 = vld [vmem:[%s1 + $0x310] sm:$0xff]
    %v127 = vld [vmem:[%s1 + $0x318] sm:$0xff]
    %v128 = vld [vmem:[%s1 + $0x320] sm:$0xff]
    %v129 = vld [vmem:[%s1 + $0x328] sm:$0xff]
    %v130 = vld [vmem:[%s1 + $0x330] sm:$0xff]
    %v131 = vld [vmem:[%s1 + $0x338] sm:$0xff]
    %v132 = vld [vmem:[%s1 + $0x340] sm:$0xff]
    %v133 = vld [vmem:[%s1 + $0x348] sm:$0xff]
    %v134 = vld [vmem:[%s1 + $0x350] sm:$0xff]
    %v135 = vld [vmem:[%s1 + $0x358] sm:$0xff]
    %v136 = vld [vmem:[%s1 + $0x360] sm:$0xff]
    %v137 = vld [vmem:[%s1 + $0x368] sm:$0xff]
    %v138 = vld [vmem:[%s1 + $0x370] sm:$0xff]
    %v139 = vld [vmem:[%s1 + $0x378] sm:$0xff]
    %v140 = vld [vmem:[%s1 + $0x380] sm:$0xff]
    %v141 = vld [vmem:[%s1 + $0x388] sm:$0xff]
    %v142 = vld [vmem:[%s1 + $0x390] sm:$0xff]
    %v143 = vld [vmem:[%s1 + $0x398] sm:$0xff]
    %v144 = vld [vmem:[%s1 + $0x3a0] sm:$0xff]
    %v145 = vld [vmem:[%s1 + $0x3a8] sm:$0xff]
    %v146 = vld [vmem:[%s1 + $0x3b0] sm:$0xff]
    %v147 = vld [vmem:[%s1 + $0x3b8] sm:$0xff]
    %v148 = vld [vmem:[%s1 + $0x3c0] sm:$0xff]
    %v149 = vld [vmem:[%s1 + $0x3c8] sm:$0xff]
    %v150 = vld [vmem:[%s1 + $0x3d0] sm:$0xff]
    %v151 = vld [vmem:[%s1 + $0x3d8] sm:$0xff]
    %v152 = vld [vmem:[%s1 + $0x3e0] sm:$0xff]
    %v153 = vld [vmem:[%s1 + $0x3e8] sm:$0xff]
    %v154 = vld [vmem:[%s1 + $0x3f0] sm:$0xff]
    %v155 = vld [vmem:[%s1 + $0x3f8] sm:$0xff]
    %v156 = vld [vmem:[%s1 + $0x400] sm:$0xff]
    %v157 = vld [vmem:[%s1 + $0x408] sm:$0xff]
    %v158 = vld [vmem:[%s1 + $0x410] sm:$0xff]
    %v159 = vld [vmem:[%s1 + $0x418] sm:$0xff]
    %v160 = vld [vmem:[%s1 + $0x420] sm:$0xff]
    %v161 = vld [vmem:[%s1 + $0x428] sm:$0xff]
    %v162 = vld [vmem:[%s1 + $0x430] sm:$0xff]
    %v163 = vld [vmem:[%s1 + $0x438] sm:$0xff]
    %v164 = vld [vmem:[%s1 + $0x440] sm:$0xff]
    %v165 = vld [vmem:[%s1 + $0x448] sm:$0xff]
    %v166 = vld [vmem:[%s1 + $0x450] sm:$0xff]
    %v167 = vld [vmem:[%s1 + $0x458] sm:$0xff]
    %v168 = vld [vmem:[%s1 + $0x460] sm:$0xff]
    %v169 = vld [vmem:[%s1 + $0x468] sm:$0xff]
    %v170 = vld [vmem:[%s1 + $0x470] sm:$0xff]
    %v171 = vld [vmem:[%s1 + $0x478] sm:$0xff]
    %v172 = vld [vmem:[%s1 + $0x480] sm:$0xff]
    %v173 = vld [vmem:[%s1 + $0x488] sm:$0xff]
    %v174 = vld [vmem:[%s1 + $0x490] sm:$0xff]
    %v175 = vld [vmem:[%s1 + $0x498] sm:$0xff]
    %v176 = vld [vmem:[%s1 + $0x4a0] sm:$0xff]
    %v177 = vld [vmem:[%s1 + $0x4a8] sm:$0xff]
    %v178 = vld [vmem:[%s1 + $0x4b0] sm:$0xff]
    %v179 = vld [vmem:[%s1 + $0x4b8] sm:$0xff]
    %v180 = vld [vmem:[%s1 + $0x4c0] sm:$0xff]
    %v181 = vld [vmem:[%s1 + $0x4c8] sm:$0xff]
    %v182 = vld [vmem:[%s1 + $0x4d0] sm:$0xff]
    %v183 = vld [vmem:[%s1 + $0x4d8] sm:$0xff]
    %v184 = vld [vmem:[%s1 + $0x4e0] sm:$0xff]
    %v185 = vld [vmem:[%s1 + $0x4e8] sm:$0xff]
    %v186 = vld [vmem:[%s1 + $0x4f0] sm:$0xff]
    %v187 = vld [vmem:[%s1 + $0x4f8] sm:$0xff]
    %v188 = vld [vmem:[%s1 + $0x500] sm:$0xff]
    %v189 = vld [vmem:[%s1 + $0x508] sm:$0xff]
    %v190 = vld [vmem:[%s1 + $0x510] sm:$0xff]
    %v191 = vld [vmem:[%s1 + $0x518] sm:$0xff]
    %v192 = vld [vmem:[%s1 + $0x520] sm:$0xff]
    %v193 = vld [vmem:[%s1 + $0x528] sm:$0xff]
    %v194 = vld [vmem:[%s1 + $0x530] sm:$0xff]
    %v195 = vld [vmem:[%s1 + $0x538] sm:$0xff]
    %v196 = vld [vmem:[%s1 + $0x540] sm:$0xff]
    %v197 = vld [vmem:[%s1 + $0x548] sm:$0xff]
    %v198 = vld [vmem:[%s1 + $0x550] sm:$0xff]
    %v199 = vld [vmem:[%s1 + $0x558] sm:$0xff]
    %v200 = vld [vmem:[%s1 + $0x560] sm:$0xff]
    %v201 = vld [vmem:[%s1 + $0x568] sm:$0xff]
    %v202 = vld [vmem:[%s1 + $0x570] sm:$0xff]
    %v203 = vld [vmem:[%s1 + $0x578] sm:$0xff]
    %v204 = vld [vmem:[%s1 + $0x580] sm:$0xff]
    %v205 = vld [vmem:[%s1 + $0x588] sm:$0xff]
    %v206 = vld [vmem:[%s1 + $0x590] sm:$0xff]
    %v207 = vld [vmem:[%s1 + $0x598] sm:$0xff]
    %v208 = vld [vmem:[%s1 + $0x5a0] sm:$0xff]
    %v209 = vld [vmem:[%s1 + $0x5a8] sm:$0xff]
    %v210 = vld [vmem:[%s1 + $0x5b0] sm:$0xff]
    %v211 = vld [vmem:[%s1 + $0x5b8] sm:$0xff]
    %v212 = vld [vmem:[%s1 + $0x5c0] sm:$0xff]
    %v213 = vld [vmem:[%s1 + $0x5c8] sm:$0xff]
    %v214 = vld [vmem:[%s1 + $0x5d0] sm:$0xff]
    %v215 = vld [vmem:[%s1 + $0x5d8] sm:$0xff]
    %v216 = vld [vmem:[%s1 + $0x5e0] sm:$0xff]
    %v217 = vld [vmem:[%s1 + $0x5e8] sm:$0xff]
    %v218 = vld [vmem:[%s1 + $0x5f0] sm:$0xff]
    %v219 = vld [vmem:[%s1 + $0x5f8] sm:$0xff]
    %v220 = vld [vmem:[%s1 + $0x600] sm:$0xff]
    %v221 = vld [vmem:[%s1 + $0x608] sm:$0xff]
    %v222 = vld [vmem:[%s1 + $0x610] sm:$0xff]
    %v223 = vld [vmem:[%s1 + $0x618] sm:$0xff]
    %v224 = vld [vmem:[%s1 + $0x620] sm:$0xff]
    %v225 = vld [vmem:[%s1 + $0x628] sm:$0xff]
    %v226 = vld [vmem:[%s1 + $0x630] sm:$0xff]
    %v227 = vld [vmem:[%s1 + $0x638] sm:$0xff]
    %v228 = vld [vmem:[%s1 + $0x640] sm:$0xff]
    %v229 = vld [vmem:[%s1 + $0x648] sm:$0xff]
    %v230 = vld [vmem:[%s1 + $0x650] sm:$0xff]
    %v231 = vld [vmem:[%s1 + $0x658] sm:$0xff]
    %v232 = vld [vmem:[%s1 + $0x660] sm:$0xff]
    %v233 = vld [vmem:[%s1 + $0x668] sm:$0xff]
    %v234 = vld [vmem:[%s1 + $0x670] sm:$0xff]
    %v235 = vld [vmem:[%s1 + $0x678] sm:$0xff]
    %v236 = vld [vmem:[%s1 + $0x680] sm:$0xff]
    %v237 = vld [vmem:[%s1 + $0x688] sm:$0xff]
    %v238 = vld [vmem:[%s1 + $0x690] sm:$0xff]
    %v239 = vld [vmem:[%s1 + $0x698] sm:$0xff]
    %v240 = vld [vmem:[%s1 + $0x6a0] sm:$0xff]
    %v241 = vld [vmem:[%s1 + $0x6a8] sm:$0xff]
    %v242 = vld [vmem:[%s1 + $0x6b0] sm:$0xff]
    %v243 = vld [vmem:[%s1 + $0x6b8] sm:$0xff]
    %v244 = vld [vmem:[%s1 + $0x6c0] sm:$0xff]
    %v245 = vld [vmem:[%s1 + $0x6c8] sm:$0xff]
    %v246 = vld [vmem:[%s1 + $0x6d0] sm:$0xff]
    %v247 = vld [vmem:[%s1 + $0x6d8] sm:$0xff]
    %v248 = vld [vmem:[%s1 + $0x6e0] sm:$0xff]
    %v249 = vld [vmem:[%s1 + $0x6e8] sm:$0xff]
    %v250 = vld [vmem:[%s1 + $0x6f0] sm:$0xff]
    %v251 = vld [vmem:[%s1 + $0x6f8] sm:$0xff]
    %v252 = vld [vmem:[%s1 + $0x700] sm:$0xff]
    %v253 = vld [vmem:[%s1 + $0x708] sm:$0xff]
    %v254 = vld [vmem:[%s1 + $0x710] sm:$0xff]
    %v255 = vld [vmem:[%s1 + $0x718] sm:$0xff]
    %v256 = vld [vmem:[%s1 + $0x720] sm:$0xff]
    %v257 = vld [vmem:[%s1 + $0x728] sm:$0xff]
    %v258 = vld [vmem:[%s1 + $0x730] sm:$0xff]
    %v259 = vld [vmem:[%s1 + $0x738] sm:$0xff]
    %v260 = vld [vmem:[%s1 + $0x740] sm:$0xff]
    %v261 = vld [vmem:[%s1 + $0x748] sm:$0xff]
    %v262 = vld [vmem:[%s1 + $0x750] sm:$0xff]
    %v263 = vld [vmem:[%s1 + $0x758] sm:$0xff]
    %v264 = vld [vmem:[%s1 + $0x760] sm:$0xff]
    %v265 = vld [vmem:[%s1 + $0x768] sm:$0xff]
    %v266 = vld [vmem:[%s1 + $0x770] sm:$0xff]
    %v267 = vld [vmem:[%s1 + $0x778] sm:$0xff]
    %v268 = vld [vmem:[%s1 + $0x780] sm:$0xff]
    %v269 = vld [vmem:[%s1 + $0x788] sm:$0xff]
    %v270 = vld [vmem:[%s1 + $0x790] sm:$0xff]
    %v271 = vld [vmem:[%s1 + $0x798] sm:$0xff]
    %v272 = vld [vmem:[%s1 + $0x7a0] sm:$0xff]
    %v273 = vld [vmem:[%s1 + $0x7a8] sm:$0xff]
    %v274 = vld [vmem:[%s1 + $0x7b0] sm:$0xff]
    %v275 = vld [vmem:[%s1 + $0x7b8] sm:$0xff]
    %v276 = vld [vmem:[%s1 + $0x7c0] sm:$0xff]
    %v277 = vld [vmem:[%s1 + $0x7c8] sm:$0xff]
    %v278 = vld [vmem:[%s1 + $0x7d0] sm:$0xff]
    %v279 = vld [vmem:[%s1 + $0x7d8] sm:$0xff]
    %v280 = vld [vmem:[%s1 + $0x7e0] sm:$0xff]
    %v281 = vld [vmem:[%s1 + $0x7e8] sm:$0xff]
    %v282 = vld [vmem:[%s1 + $0x7f0] sm:$0xff]
    %v283 = vld [vmem:[%s1 + $0x7f8] sm:$0xff]
    %v284 = vld [vmem:[%s1 + $0x800] sm:$0xff]
    %v285 = vld [vmem:[%s1 + $0x808] sm:$0xff]
    %v286 = vld [vmem:[%s1 + $0x810] sm:$0xff]
    %v287 = vld [vmem:[%s1 + $0x818] sm:$0xff]
    %v288 = vld [vmem:[%s1 + $0x820] sm:$0xff]
    %v289 = vld [vmem:[%s1 + $0x828] sm:$0xff]
    %v290 = vld [vmem:[%s1 + $0x830] sm:$0xff]
    %v291 = vld [vmem:[%s1 + $0x838] sm:$0xff]
    %v292 = vld [vmem:[%s1 + $0x840] sm:$0xff]
    %v293 = vld [vmem:[%s1 + $0x848] sm:$0xff]
    %v294 = vld [vmem:[%s1 + $0x850] sm:$0xff]
    %v295 = vld [vmem:[%s1 + $0x858] sm:$0xff]
    %v296 = vld [vmem:[%s1 + $0x860] sm:$0xff]
    %v297 = vld [vmem:[%s1 + $0x868] sm:$0xff]
    %v298 = vld [vmem:[%s1 + $0x870] sm:$0xff]
    %v299 = vld [vmem:[%s1 + $0x878] sm:$0xff]
    %v300 = vld [vmem:[%s1 + $0x880] sm:$0xff]
    %v301 = vld [vmem:[%s1 + $0x888] sm:$0xff]
    %v302 = vld [vmem:[%s1 + $0x890] sm:$0xff]
    %v303 = vld [vmem:[%s1 + $0x898] sm:$0xff]
    %v304 = vld [vmem:[%s1 + $0x8a0] sm:$0xff]
    %v305 = vld [vmem:[%s1 + $0x8a8] sm:$0xff]
    %v306 = vld [vmem:[%s1 + $0x8b0] sm:$0xff]
    %v307 = vld [vmem:[%s1 + $0x8b8] sm:$0xff]
    %v308 = vld [vmem:[%s1 + $0x8c0] sm:$0xff]
    %v309 = vld [vmem:[%s1 + $0x8c8] sm:$0xff]
    %v310 = vld [vmem:[%s1 + $0x8d0] sm:$0xff]
    %v311 = vld [vmem:[%s1 + $0x8d8] sm:$0xff]
    %v312 = vld [vmem:[%s1 + $0x8e0] sm:$0xff]
    %v313 = vld [vmem:[%s1 + $0x8e8] sm:$0xff]
    %v314 = vld [vmem:[%s1 + $0x8f0] sm:$0xff]
    %v315 = vld [vmem:[%s1 + $0x8f8] sm:$0xff]
    %v316 = vld [vmem:[%s1 + $0x900] sm:$0xff]
    %v317 = vld [vmem:[%s1 + $0x908] sm:$0xff]
    %v318 = vld [vmem:[%s1 + $0x910] sm:$0xff]
    %v319 = vld [vmem:[%s1 + $0x918] sm:$0xff]
    %v320 = vld [vmem:[%s1 + $0x920] sm:$0xff]
    %v321 = vld [vmem:[%s1 + $0x928] sm:$0xff]
    %v322 = vld [vmem:[%s1 + $0x930] sm:$0xff]
    %v323 = vld [vmem:[%s1 + $0x938] sm:$0xff]
    %v324 = vld [vmem:[%s1 + $0x940] sm:$0xff]
    %v325 = vld [vmem:[%s1 + $0x948] sm:$0xff]
    %v326 = vld [vmem:[%s1 + $0x950] sm:$0xff]
    %v327 = vld [vmem:[%s1 + $0x958] sm:$0xff]
    %v328 = vld [vmem:[%s1 + $0x960] sm:$0xff]
    %v329 = vld [vmem:[%s1 + $0x968] sm:$0xff]
    %v330 = vld [vmem:[%s1 + $0x970] sm:$0xff]
    %v331 = vld [vmem:[%s1 + $0x978] sm:$0xff]
    %v332 = vld [vmem:[%s1 + $0x980] sm:$0xff]
    %v333 = vld [vmem:[%s1 + $0x988] sm:$0xff]
    %v334 = vld [vmem:[%s1 + $0x990] sm:$0xff]
    %v335 = vld [vmem:[%s1 + $0x998] sm:$0xff]
    %v336 = vld [vmem:[%s1 + $0x9a0] sm:$0xff]
    %v337 = vld [vmem:[%s1 + $0x9a8] sm:$0xff]
    %v338 = vld [vmem:[%s1 + $0x9b0] sm:$0xff]
    %v339 = vld [vmem:[%s1 + $0x9b8] sm:$0xff]
    %v340 = vld [vmem:[%s1 + $0x9c0] sm:$0xff]
    %v341 = vld [vmem:[%s1 + $0x9c8] sm:$0xff]
    %v342 = vld [vmem:[%s1 + $0x9d0] sm:$0xff]
    %v343 = vld [vmem:[%s1 + $0x9d8] sm:$0xff]
    %v344 = vld [vmem:[%s1 + $0x9e0] sm:$0xff]
    %v345 = vld [vmem:[%s1 + $0x9e8] sm:$0xff]
    %v346 = vld [vmem:[%s1 + $0x9f0] sm:$0xff]
    %v347 = vld [vmem:[%s1 + $0x9f8] sm:$0xff]
    %v348 = vld [vmem:[%s1 + $0xa00] sm:$0xff]
    %v349 = vld [vmem:[%s1 + $0xa08] sm:$0xff]
    %v350 = vld [vmem:[%s1 + $0xa10] sm:$0xff]
    %v351 = vld [vmem:[%s1 + $0xa18] sm:$0xff]
    %v352 = vld [vmem:[%s1 + $0xa20] sm:$0xff]
    %v353 = vld [vmem:[%s1 + $0xa28] sm:$0xff]
    %v354 = vld [vmem:[%s1 + $0xa30] sm:$0xff]
    %v355 = vld [vmem:[%s1 + $0xa38] sm:$0xff]
    %v356 = vld [vmem:[%s1 + $0xa40] sm:$0xff]
    %v357 = vld [vmem:[%s1 + $0xa48] sm:$0xff]
    %v358 = vld [vmem:[%s1 + $0xa50] sm:$0xff]
    %v359 = vld [vmem:[%s1 + $0xa58] sm:$0xff]
    %v360 = vld [vmem:[%s1 + $0xa60] sm:$0xff]
    %v361 = vld [vmem:[%s1 + $0xa68] sm:$0xff]
    %v362 = vld [vmem:[%s1 + $0xa70] sm:$0xff]
    %v363 = vld [vmem:[%s1 + $0xa78] sm:$0xff]
    %v364 = vld [vmem:[%s1 + $0xa80] sm:$0xff]
    %v365 = vld [vmem:[%s1 + $0xa88] sm:$0xff]
    %v366 = vld [vmem:[%s1 + $0xa90] sm:$0xff]
    %v367 = vld [vmem:[%s1 + $0xa98] sm:$0xff]
    %v368 = vld [vmem:[%s1 + $0xaa0] sm:$0xff]
    %v369 = vld [vmem:[%s1 + $0xaa8] sm:$0xff]
    %v370 = vld [vmem:[%s1 + $0xab0] sm:$0xff]
    %v371 = vld [vmem:[%s1 + $0xab8] sm:$0xff]
    %v372 = vld [vmem:[%s1 + $0xac0] sm:$0xff]
    %v373 = vld [vmem:[%s1 + $0xac8] sm:$0xff]
    %v374 = vld [vmem:[%s1 + $0xad0] sm:$0xff]
    %v375 = vld [vmem:[%s1 + $0xad8] sm:$0xff]
    %v376 = vld [vmem:[%s1 + $0xae0] sm:$0xff]
    %v377 = vld [vmem:[%s1 + $0xae8] sm:$0xff]
    %v378 = vld [vmem:[%s1 + $0xaf0] sm:$0xff]
    %v379 = vld [vmem:[%s1 + $0xaf8] sm:$0xff]
    %v380 = vld [vmem:[%s1 + $0xb00] sm:$0xff]
    %v381 = vld [vmem:[%s1 + $0xb08] sm:$0xff]
    %v382 = vld [vmem:[%s1 + $0xb10] sm:$0xff]
    %v383 = vld [vmem:[%s1 + $0xb18] sm:$0xff]
    %v384 = vld [vmem:[%s1 + $0xb20] sm:$0xff]
    %v385 = vld [vmem:[%s1 + $0xb28] sm:$0xff]
    %v386 = vld [vmem:[%s1 + $0xb30] sm:$0xff]
    %v387 = vld [vmem:[%s1 + $0xb38] sm:$0xff]
    %v388 = vld [vmem:[%s1 + $0xb40] sm:$0xff]
    %v389 = vld [vmem:[%s1 + $0xb48] sm:$0xff]
    %v390 = vld [vmem:[%s1 + $0xb50] sm:$0xff]
    %v391 = vld [vmem:[%s1 + $0xb58] sm:$0xff]
    %v392 = vld [vmem:[%s1 + $0xb60] sm:$0xff]
    %v393 = vld [vmem:[%s1 + $0xb68] sm:$0xff]
    %v394 = vld [vmem:[%s1 + $0xb70] sm:$0xff]
    %v395 = vld [vmem:[%s1 + $0xb78] sm:$0xff]
    %v396 = vld [vmem:[%s1 + $0xb80] sm:$0xff]
    %v397 = vld [vmem:[%s1 + $0xb88] sm:$0xff]
    %v398 = vld [vmem:[%s1 + $0xb90] sm:$0xff]
    %v399 = vld [vmem:[%s1 + $0xb98] sm:$0xff]
    %v400 = vld [vmem:[%s1 + $0xba0] sm:$0xff]
    %v401 = vld [vmem:[%s1 + $0xba8] sm:$0xff]
    %v402 = vld [vmem:[%s1 + $0xbb0] sm:$0xff]
    %v403 = vld [vmem:[%s1 + $0xbb8] sm:$0xff]
    %v404 = vld [vmem:[%s1 + $0xbc0] sm:$0xff]
    %v405 = vld [vmem:[%s1 + $0xbc8] sm:$0xff]
    %v406 = vld [vmem:[%s1 + $0xbd0] sm:$0xff]
    %v407 = vld [vmem:[%s1 + $0xbd8] sm:$0xff]
    %v408 = vld [vmem:[%s1 + $0xbe0] sm:$0xff]
    %v409 = vld [vmem:[%s1 + $0xbe8] sm:$0xff]
    %v410 = vld [vmem:[%s1 + $0xbf0] sm:$0xff]
    %v411 = vld [vmem:[%s1 + $0xbf8] sm:$0xff]
    %v412 = vld [vmem:[%s1 + $0xc00] sm:$0xff]
    %v413 = vld [vmem:[%s1 + $0xc08] sm:$0xff]
    %v414 = vld [vmem:[%s1 + $0xc10] sm:$0xff]
    %v415 = vld [vmem:[%s1 + $0xc18] sm:$0xff]
    %v416 = vld [vmem:[%s1 + $0xc20] sm:$0xff]
    %v417 = vld [vmem:[%s1 + $0xc28] sm:$0xff]
    %v418 = vld [vmem:[%s1 + $0xc30] sm:$0xff]
    %v419 = vld [vmem:[%s1 + $0xc38] sm:$0xff]
    %v420 = vld [vmem:[%s1 + $0xc40] sm:$0xff]
    %v421 = vld [vmem:[%s1 + $0xc48] sm:$0xff]
    %v422 = vld [vmem:[%s1 + $0xc50] sm:$0xff]
    %v423 = vld [vmem:[%s1 + $0xc58] sm:$0xff]
    %v424 = vld [vmem:[%s1 + $0xc60] sm:$0xff]
    %v425 = vld [vmem:[%s1 + $0xc68] sm:$0xff]
    %v426 = vld [vmem:[%s1 + $0xc70] sm:$0xff]
    %v427 = vld [vmem:[%s1 + $0xc78] sm:$0xff]
    %v428 = vld [vmem:[%s1 + $0xc80] sm:$0xff]
    %v429 = vld [vmem:[%s1 + $0xc88] sm:$0xff]
    %v430 = vld [vmem:[%s1 + $0xc90] sm:$0xff]
    %v431 = vld [vmem:[%s1 + $0xc98] sm:$0xff]
    %v432 = vld [vmem:[%s1 + $0xca0] sm:$0xff]
    %v433 = vld [vmem:[%s1 + $0xca8] sm:$0xff]
    %v434 = vld [vmem:[%s1 + $0xcb0] sm:$0xff]
    %v435 = vld [vmem:[%s1 + $0xcb8] sm:$0xff]
    %v436 = vld [vmem:[%s1 + $0xcc0] sm:$0xff]
    %v437 = vld [vmem:[%s1 + $0xcc8] sm:$0xff]
    %v438 = vld [vmem:[%s1 + $0xcd0] sm:$0xff]
    %v439 = vld [vmem:[%s1 + $0xcd8] sm:$0xff]
    %v440 = vld [vmem:[%s1 + $0xce0] sm:$0xff]
    %v441 = vld [vmem:[%s1 + $0xce8] sm:$0xff]
    %v442 = vld [vmem:[%s1 + $0xcf0] sm:$0xff]
    %v443 = vld [vmem:[%s1 + $0xcf8] sm:$0xff]
    %v444 = vld [vmem:[%s1 + $0xd00] sm:$0xff]
    %v445 = vld [vmem:[%s1 + $0xd08] sm:$0xff]
    %v446 = vld [vmem:[%s1 + $0xd10] sm:$0xff]
    %v447 = vld [vmem:[%s1 + $0xd18] sm:$0xff]
    %v448 = vld [vmem:[%s1 + $0xd20] sm:$0xff]
    %v449 = vld [vmem:[%s1 + $0xd28] sm:$0xff]
    %v450 = vld [vmem:[%s1 + $0xd30] sm:$0xff]
    %v451 = vld [vmem:[%s1 + $0xd38] sm:$0xff]
    %v452 = vld [vmem:[%s1 + $0xd40] sm:$0xff]
    %v453 = vld [vmem:[%s1 + $0xd48] sm:$0xff]
    %v454 = vld [vmem:[%s1 + $0xd50] sm:$0xff]
    %v455 = vld [vmem:[%s1 + $0xd58] sm:$0xff]
    %v456 = vld [vmem:[%s1 + $0xd60] sm:$0xff]
    %v457 = vld [vmem:[%s1 + $0xd68] sm:$0xff]
    %v458 = vld [vmem:[%s1 + $0xd70] sm:$0xff]
    %v459 = vld [vmem:[%s1 + $0xd78] sm:$0xff]
    %v460 = vld [vmem:[%s1 + $0xd80] sm:$0xff]
    %v461 = vld [vmem:[%s1 + $0xd88] sm:$0xff]
    %v462 = vld [vmem:[%s1 + $0xd90] sm:$0xff]
    %v463 = vld [vmem:[%s1 + $0xd98] sm:$0xff]
    %v464 = vld [vmem:[%s1 + $0xda0] sm:$0xff]
    %v465 = vld [vmem:[%s1 + $0xda8] sm:$0xff]
    %v466 = vld [vmem:[%s1 + $0xdb0] sm:$0xff]
    %v467 = vld [vmem:[%s1 + $0xdb8] sm:$0xff]
    %v468 = vld [vmem:[%s1 + $0xdc0] sm:$0xff]
    %v469 = vld [vmem:[%s1 + $0xdc8] sm:$0xff]
    %v470 = vld [vmem:[%s1 + $0xdd0] sm:$0xff]
    %v471 = vld [vmem:[%s1 + $0xdd8] sm:$0xff]
    %v472 = vld [vmem:[%s1 + $0xde0] sm:$0xff]
    %v473 = vld [vmem:[%s1 + $0xde8] sm:$0xff]
    %v474 = vld [vmem:[%s1 + $0xdf0] sm:$0xff]
    %v475 = vld [vmem:[%s1 + $0xdf8] sm:$0xff]
    %v476 = vld [vmem:[%s1 + $0xe00] sm:$0xff]
    %v477 = vld [vmem:[%s1 + $0xe08] sm:$0xff]
    %v478 = vld [vmem:[%s1 + $0xe10] sm:$0xff]
    %v479 = vld [vmem:[%s1 + $0xe18] sm:$0xff]
    %v480 = vld [vmem:[%s1 + $0xe20] sm:$0xff]
    %v481 = vld [vmem:[%s1 + $0xe28] sm:$0xff]
    %v482 = vld [vmem:[%s1 + $0xe30] sm:$0xff]
    %v483 = vld [vmem:[%s1 + $0xe38] sm:$0xff]
    %v484 = vld [vmem:[%s1 + $0xe40] sm:$0xff]
    %v485 = vld [vmem:[%s1 + $0xe48] sm:$0xff]
    %v486 = vld [vmem:[%s1 + $0xe50] sm:$0xff]
    %v487 = vld [vmem:[%s1 + $0xe58] sm:$0xff]
    %v488 = vld [vmem:[%s1 + $0xe60] sm:$0xff]
    %v489 = vld [vmem:[%s1 + $0xe68] sm:$0xff]
    %v490 = vld [vmem:[%s1 + $0xe70] sm:$0xff]
    %v491 = vld [vmem:[%s1 + $0xe78] sm:$0xff]
    %v492 = vld [vmem:[%s1 + $0xe80] sm:$0xff]
    %v493 = vld [vmem:[%s1 + $0xe88] sm:$0xff]
    %v494 = vld [vmem:[%s1 + $0xe90] sm:$0xff]
    %v495 = vld [vmem:[%s1 + $0xe98] sm:$0xff]
    %v496 = vld [vmem:[%s1 + $0xea0] sm:$0xff]
    %v497 = vld [vmem:[%s1 + $0xea8] sm:$0xff]
    %v498 = vld [vmem:[%s1 + $0xeb0] sm:$0xff]
    %v499 = vld [vmem:[%s1 + $0xeb8] sm:$0xff]
    %v500 = vld [vmem:[%s1 + $0xec0] sm:$0xff]
    %v501 = vld [vmem:[%s1 + $0xec8] sm:$0xff]
    %v502 = vld [vmem:[%s1 + $0xed0] sm:$0xff]
    %v503 = vld [vmem:[%s1 + $0xed8] sm:$0xff]
    %v504 = vld [vmem:[%s1 + $0xee0] sm:$0xff]
    %v505 = vld [vmem:[%s1 + $0xee8] sm:$0xff]
    %v506 = vld [vmem:[%s1 + $0xef0] sm:$0xff]
    %v507 = vld [vmem:[%s1 + $0xef8] sm:$0xff]
    %v508 = vld [vmem:[%s1 + $0xf00] sm:$0xff]
    %v509 = vld [vmem:[%s1 + $0xf08] sm:$0xff]
    %v510 = vld [vmem:[%s1 + $0xf10] sm:$0xff]
    %v511 = vld [vmem:[%s1 + $0xf18] sm:$0xff]
    %v512 = vld [vmem:[%s1 + $0xf20] sm:$0xff]
    %v513 = vld [vmem:[%s1 + $0xf28] sm:$0xff]
    %v514 = vld [vmem:[%s1 + $0xf30] sm:$0xff]
    %v515 = vld [vmem:[%s1 + $0xf38] sm:$0xff]
    %v516 = vld [vmem:[%s1 + $0xf40] sm:$0xff]
    %v517 = vld [vmem:[%s1 + $0xf48] sm:$0xff]
    %v518 = vld [vmem:[%s1 + $0xf50] sm:$0xff]
    %v519 = vld [vmem:[%s1 + $0xf58] sm:$0xff]
    %v520 = vld [vmem:[%s1 + $0xf60] sm:$0xff]
    %v521 = vld [vmem:[%s1 + $0xf68] sm:$0xff]
    %v522 = vld [vmem:[%s1 + $0xf70] sm:$0xff]
    %v523 = vld [vmem:[%s1 + $0xf78] sm:$0xff]
    %v524 = vld [vmem:[%s1 + $0xf80] sm:$0xff]
    %v525 = vld [vmem:[%s1 + $0xf88] sm:$0xff]
    %v526 = vld [vmem:[%s1 + $0xf90] sm:$0xff]
    %v527 = vld [vmem:[%s1 + $0xf98] sm:$0xff]
    %v528 = vld [vmem:[%s1 + $0xfa0] sm:$0xff]
    %v529 = vld [vmem:[%s1 + $0xfa8] sm:$0xff]
    %v530 = vld [vmem:[%s1 + $0xfb0] sm:$0xff]
    %v531 = vld [vmem:[%s1 + $0xfb8] sm:$0xff]
    %v532 = vld [vmem:[%s1 + $0xfc0] sm:$0xff]
    %v533 = vld [vmem:[%s1 + $0xfc8] sm:$0xff]
    %v534 = vld [vmem:[%s1 + $0xfd0] sm:$0xff]
    %v535 = vld [vmem:[%s1 + $0xfd8] sm:$0xff]
    %v536 = vld [vmem:[%s1 + $0xfe0] sm:$0xff]
    %v537 = vld [vmem:[%s1 + $0xfe8] sm:$0xff]
    %v538 = vld [vmem:[%s1 + $0xff0] sm:$0xff]
    %v539 = vld [vmem:[%s1 + $0xff8] sm:$0xff]
    %v540 = vld [vmem:[%s1 + $0x1000] sm:$0xff]
    %v541 = vld [vmem:[%s1 + $0x1008] sm:$0xff]
    %v542 = vld [vmem:[%s1 + $0x1010] sm:$0xff]
    %v543 = vld [vmem:[%s1 + $0x1018] sm:$0xff]
    %v544 = vld [vmem:[%s1 + $0x1020] sm:$0xff]
    %v545 = vld [vmem:[%s1 + $0x1028] sm:$0xff]
    %v546 = vld [vmem:[%s1 + $0x1030] sm:$0xff]
    %v547 = vld [vmem:[%s1 + $0x1038] sm:$0xff]
    %v548 = vld [vmem:[%s1 + $0x1040] sm:$0xff]
    %v549 = vld [vmem:[%s1 + $0x1048] sm:$0xff]
    %v550 = vld [vmem:[%s1 + $0x1050] sm:$0xff]
    %v551 = vld [vmem:[%s1 + $0x1058] sm:$0xff]
    %v552 = vld [vmem:[%s1 + $0x1060] sm:$0xff]
    %v553 = vld [vmem:[%s1 + $0x1068] sm:$0xff]
    %v554 = vld [vmem:[%s1 + $0x1070] sm:$0xff]
    %v555 = vld [vmem:[%s1 + $0x1078] sm:$0xff]
    %v556 = vld [vmem:[%s1 + $0x1080] sm:$0xff]
    %v557 = vld [vmem:[%s1 + $0x1088] sm:$0xff]
    %v558 = vld [vmem:[%s1 + $0x1090] sm:$0xff]
    %v559 = vld [vmem:[%s1 + $0x1098] sm:$0xff]
    %v560 = vld [vmem:[%s1 + $0x10a0] sm:$0xff]
    %v561 = vld [vmem:[%s1 + $0x10a8] sm:$0xff]
    %v562 = vld [vmem:[%s1 + $0x10b0] sm:$0xff]
    %v563 = vld [vmem:[%s1 + $0x10b8] sm:$0xff]
    %v564 = vld [vmem:[%s1 + $0x10c0] sm:$0xff]
    %v565 = vld [vmem:[%s1 + $0x10c8] sm:$0xff]
    %v566 = vld [vmem:[%s1 + $0x10d0] sm:$0xff]
    %v567 = vld [vmem:[%s1 + $0x10d8] sm:$0xff]
    %v568 = vld [vmem:[%s1 + $0x10e0] sm:$0xff]
    %v569 = vld [vmem:[%s1 + $0x10e8] sm:$0xff]
    %v570 = vld [vmem:[%s1 + $0x10f0] sm:$0xff]
    %v571 = vld [vmem:[%s1 + $0x10f8] sm:$0xff]
    %v572 = vld [vmem:[%s1 + $0x1100] sm:$0xff]
    %v573 = vld [vmem:[%s1 + $0x1108] sm:$0xff]
    %v574 = vld [vmem:[%s1 + $0x1110] sm:$0xff]
    %v575 = vld [vmem:[%s1 + $0x1118] sm:$0xff]
    %v576 = vld [vmem:[%s1 + $0x1120] sm:$0xff]
    %v577 = vld [vmem:[%s1 + $0x1128] sm:$0xff]
    %v578 = vld [vmem:[%s1 + $0x1130] sm:$0xff]
    %v579 = vld [vmem:[%s1 + $0x1138] sm:$0xff]
    %v580 = vld [vmem:[%s1 + $0x1140] sm:$0xff]
    %v581 = vld [vmem:[%s1 + $0x1148] sm:$0xff]
    %v582 = vld [vmem:[%s1 + $0x1150] sm:$0xff]
    %v583 = vld [vmem:[%s1 + $0x1158] sm:$0xff]
    %v584 = vld [vmem:[%s1 + $0x1160] sm:$0xff]
    %v585 = vld [vmem:[%s1 + $0x1168] sm:$0xff]
    %v586 = vld [vmem:[%s1 + $0x1170] sm:$0xff]
    %v587 = vld [vmem:[%s1 + $0x1178] sm:$0xff]
    %v588 = vld [vmem:[%s1 + $0x1180] sm:$0xff]
    %v589 = vld [vmem:[%s1 + $0x1188] sm:$0xff]
    %v590 = vld [vmem:[%s1 + $0x1190] sm:$0xff]
    %v591 = vld [vmem:[%s1 + $0x1198] sm:$0xff]
    %v592 = vld [vmem:[%s1 + $0x11a0] sm:$0xff]
    %v593 = vld [vmem:[%s1 + $0x11a8] sm:$0xff]
    %v594 = vld [vmem:[%s1 + $0x11b0] sm:$0xff]
    %v595 = vld [vmem:[%s1 + $0x11b8] sm:$0xff]
    %v596 = vld [vmem:[%s1 + $0x11c0] sm:$0xff]
    %v597 = vld [vmem:[%s1 + $0x11c8] sm:$0xff]
    %v598 = vld [vmem:[%s1 + $0x11d0] sm:$0xff]
    %v599 = vld [vmem:[%s1 + $0x11d8] sm:$0xff]
    %v600 = vld [vmem:[%s1 + $0x11e0] sm:$0xff]
    %v601 = vld [vmem:[%s1 + $0x11e8] sm:$0xff]
    %v602 = vld [vmem:[%s1 + $0x11f0] sm:$0xff]
    %v603 = vld [vmem:[%s1 + $0x11f8] sm:$0xff]
    %v604 = vld [vmem:[%s1 + $0x1200] sm:$0xff]
    %v605 = vld [vmem:[%s1 + $0x1208] sm:$0xff]
    %v606 = vld [vmem:[%s1 + $0x1210] sm:$0xff]
    %v607 = vld [vmem:[%s1 + $0x1218] sm:$0xff]
    %v608 = vld [vmem:[%s1 + $0x1220] sm:$0xff]
    %v609 = vld [vmem:[%s1 + $0x1228] sm:$0xff]
    %v610 = vld [vmem:[%s1 + $0x1230] sm:$0xff]
    %v611 = vld [vmem:[%s1 + $0x1238] sm:$0xff]
    %v612 = vld [vmem:[%s1 + $0x1240] sm:$0xff]
    %v613 = vld [vmem:[%s1 + $0x1248] sm:$0xff]
    %v614 = vld [vmem:[%s1 + $0x1250] sm:$0xff]
    %v615 = vld [vmem:[%s1 + $0x1258] sm:$0xff]
    %v616 = vld [vmem:[%s1 + $0x1260] sm:$0xff]
    %v617 = vld [vmem:[%s1 + $0x1268] sm:$0xff]
    %v618 = vld [vmem:[%s1 + $0x1270] sm:$0xff]
    %v619 = vld [vmem:[%s1 + $0x1278] sm:$0xff]
    %v620 = vld [vmem:[%s1 + $0x1280] sm:$0xff]
    %v621 = vld [vmem:[%s1 + $0x1288] sm:$0xff]
    %v622 = vld [vmem:[%s1 + $0x1290] sm:$0xff]
    %v623 = vld [vmem:[%s1 + $0x1298] sm:$0xff]
    %v624 = vld [vmem:[%s1 + $0x12a0] sm:$0xff]
    %v625 = vld [vmem:[%s1 + $0x12a8] sm:$0xff]
    %v626 = vld [vmem:[%s1 + $0x12b0] sm:$0xff]
    %v627 = vld [vmem:[%s1 + $0x12b8] sm:$0xff]
    %v628 = vld [vmem:[%s1 + $0x12c0] sm:$0xff]
    %v629 = vld [vmem:[%s1 + $0x12c8] sm:$0xff]
    %v630 = vld [vmem:[%s1 + $0x12d0] sm:$0xff]
    %v631 = vld [vmem:[%s1 + $0x12d8] sm:$0xff]
    %v632 = vld [vmem:[%s1 + $0x12e0] sm:$0xff]
    %v633 = vld [vmem:[%s1 + $0x12e8] sm:$0xff]
    %v634 = vld [vmem:[%s1 + $0x12f0] sm:$0xff]
    %v635 = vld [vmem:[%s1 + $0x12f8] sm:$0xff]
    %v636 = vld [vmem:[%s1 + $0x1300] sm:$0xff]
    %v637 = vld [vmem:[%s1 + $0x1308] sm:$0xff]
    %v638 = vld [vmem:[%s1 + $0x1310] sm:$0xff]
    %v639 = vld [vmem:[%s1 + $0x1318] sm:$0xff]
    %v640 = vld [vmem:[%s1 + $0x1320] sm:$0xff]
    %v641 = vld [vmem:[%s1 + $0x1328] sm:$0xff]
    %v642 = vld [vmem:[%s1 + $0x1330] sm:$0xff]
    %v643 = vld [vmem:[%s1 + $0x1338] sm:$0xff]
    %v644 = vld [vmem:[%s1 + $0x1340] sm:$0xff]
    %v645 = vld [vmem:[%s1 + $0x1348] sm:$0xff]
    %v646 = vld [vmem:[%s1 + $0x1350] sm:$0xff]
    %v647 = vld [vmem:[%s1 + $0x1358] sm:$0xff]
    %v648 = vld [vmem:[%s1 + $0x1360] sm:$0xff]
    %v649 = vld [vmem:[%s1 + $0x1368] sm:$0xff]
    %v650 = vld [vmem:[%s1 + $0x1370] sm:$0xff]
    %v651 = vld [vmem:[%s1 + $0x1378] sm:$0xff]
    %v652 = vld [vmem:[%s1 + $0x1380] sm:$0xff]
    %v653 = vld [vmem:[%s1 + $0x1388] sm:$0xff]
    %v654 = vld [vmem:[%s1 + $0x1390] sm:$0xff]
    %v655 = vld [vmem:[%s1 + $0x1398] sm:$0xff]
    %v656 = vld [vmem:[%s1 + $0x13a0] sm:$0xff]
    %v657 = vld [vmem:[%s1 + $0x13a8] sm:$0xff]
    %v658 = vld [vmem:[%s1 + $0x13b0] sm:$0xff]
    %v659 = vld [vmem:[%s1 + $0x13b8] sm:$0xff]
    %v660 = vld [vmem:[%s1 + $0x13c0] sm:$0xff]
    %v661 = vld [vmem:[%s1 + $0x13c8] sm:$0xff]
    %v662 = vld [vmem:[%s1 + $0x13d0] sm:$0xff]
    %v663 = vld [vmem:[%s1 + $0x13d8] sm:$0xff]
    %v664 = vld [vmem:[%s1 + $0x13e0] sm:$0xff]
    %v665 = vld [vmem:[%s1 + $0x13e8] sm:$0xff]
    %v666 = vld [vmem:[%s1 + $0x13f0] sm:$0xff]
    %v667 = vld [vmem:[%s1 + $0x13f8] sm:$0xff]
    %v668 = vld [vmem:[%s1 + $0x1400] sm:$0xff]
    %v669 = vld [vmem:[%s1 + $0x1408] sm:$0xff]
    %v670 = vld [vmem:[%s1 + $0x1410] sm:$0xff]
    %v671 = vld [vmem:[%s1 + $0x1418] sm:$0xff]
    %v672 = vld [vmem:[%s1 + $0x1420] sm:$0xff]
    %v673 = vld [vmem:[%s1 + $0x1428] sm:$0xff]
    %v674 = vld [vmem:[%s1 + $0x1430] sm:$0xff]
    %v675 = vld [vmem:[%s1 + $0x1438] sm:$0xff]
    %v676 = vld [vmem:[%s1 + $0x1440] sm:$0xff]
    %v677 = vld [vmem:[%s1 + $0x1448] sm:$0xff]
    %v678 = vld [vmem:[%s1 + $0x1450] sm:$0xff]
    %v679 = vld [vmem:[%s1 + $0x1458] sm:$0xff]
    %v680 = vld [vmem:[%s1 + $0x1460] sm:$0xff]
    %v681 = vld [vmem:[%s1 + $0x1468] sm:$0xff]
    %v682 = vld [vmem:[%s1 + $0x1470] sm:$0xff]
    %v683 = vld [vmem:[%s1 + $0x1478] sm:$0xff]
    %v684 = vld [vmem:[%s1 + $0x1480] sm:$0xff]
    %v685 = vld [vmem:[%s1 + $0x1488] sm:$0xff]
    %v686 = vld [vmem:[%s1 + $0x1490] sm:$0xff]
    %v687 = vld [vmem:[%s1 + $0x1498] sm:$0xff]
    %v688 = vld [vmem:[%s1 + $0x14a0] sm:$0xff]
    %v689 = vld [vmem:[%s1 + $0x14a8] sm:$0xff]
    %v690 = vld [vmem:[%s1 + $0x14b0] sm:$0xff]
    %v691 = vld [vmem:[%s1 + $0x14b8] sm:$0xff]
    %v692 = vld [vmem:[%s1 + $0x14c0] sm:$0xff]
    %v693 = vld [vmem:[%s1 + $0x14c8] sm:$0xff]
    %v694 = vld [vmem:[%s1 + $0x14d0] sm:$0xff]
    %v695 = vld [vmem:[%s1 + $0x14d8] sm:$0xff]
    %v696 = vld [vmem:[%s1 + $0x14e0] sm:$0xff]
    %v697 = vld [vmem:[%s1 + $0x14e8] sm:$0xff]
    %v698 = vld [vmem:[%s1 + $0x14f0] sm:$0xff]
    %v699 = vld [vmem:[%s1 + $0x14f8] sm:$0xff]
    %v700 = vld [vmem:[%s1 + $0x1500] sm:$0xff]
    %v701 = vld [vmem:[%s1 + $0x1508] sm:$0xff]
    %v702 = vld [vmem:[%s1 + $0x1510] sm:$0xff]
    %v703 = vld [vmem:[%s1 + $0x1518] sm:$0xff]
    %v704 = vld [vmem:[%s1 + $0x1520] sm:$0xff]
    %v705 = vld [vmem:[%s1 + $0x1528] sm:$0xff]
    %v706 = vld [vmem:[%s1 + $0x1530] sm:$0xff]
    %v707 = vld [vmem:[%s1 + $0x1538] sm:$0xff]
    %v708 = vld [vmem:[%s1 + $0x1540] sm:$0xff]
    %v709 = vld [vmem:[%s1 + $0x1548] sm:$0xff]
    %v710 = vld [vmem:[%s1 + $0x1550] sm:$0xff]
    %v711 = vld [vmem:[%s1 + $0x1558] sm:$0xff]
    %v712 = vld [vmem:[%s1 + $0x1560] sm:$0xff]
    %v713 = vld [vmem:[%s1 + $0x1568] sm:$0xff]
    %v714 = vld [vmem:[%s1 + $0x1570] sm:$0xff]
    %v715 = vld [vmem:[%s1 + $0x1578] sm:$0xff]
    %v716 = vld [vmem:[%s1 + $0x1580] sm:$0xff]
    %v717 = vld [vmem:[%s1 + $0x1588] sm:$0xff]
    %v718 = vld [vmem:[%s1 + $0x1590] sm:$0xff]
    %v719 = vld [vmem:[%s1 + $0x1598] sm:$0xff]
    %v720 = vld [vmem:[%s1 + $0x15a0] sm:$0xff]
    %v721 = vld [vmem:[%s1 + $0x15a8] sm:$0xff]
    %v722 = vld [vmem:[%s1 + $0x15b0] sm:$0xff]
    %v723 = vld [vmem:[%s1 + $0x15b8] sm:$0xff]
    %v724 = vld [vmem:[%s1 + $0x15c0] sm:$0xff]
    %v725 = vld [vmem:[%s1 + $0x15c8] sm:$0xff]
    %v726 = vld [vmem:[%s1 + $0x15d0] sm:$0xff]
    %v727 = vld [vmem:[%s1 + $0x15d8] sm:$0xff]
    %v728 = vld [vmem:[%s1 + $0x15e0] sm:$0xff]
    %v729 = vld [vmem:[%s1 + $0x15e8] sm:$0xff]
    %v730 = vld [vmem:[%s1 + $0x15f0] sm:$0xff]
    %v731 = vld [vmem:[%s1 + $0x15f8] sm:$0xff]
    %v732 = vld [vmem:[%s1 + $0x1600] sm:$0xff]
    %v733 = vld [vmem:[%s1 + $0x1608] sm:$0xff]
    %v734 = vld [vmem:[%s1 + $0x1610] sm:$0xff]
    %v735 = vld [vmem:[%s1 + $0x1618] sm:$0xff]
    %v736 = vld [vmem:[%s1 + $0x1620] sm:$0xff]
    %v737 = vld [vmem:[%s1 + $0x1628] sm:$0xff]
    %v738 = vld [vmem:[%s1 + $0x1630] sm:$0xff]
    %v739 = vld [vmem:[%s1 + $0x1638] sm:$0xff]
    %v740 = vld [vmem:[%s1 + $0x1640] sm:$0xff]
    %v741 = vld [vmem:[%s1 + $0x1648] sm:$0xff]
    %v742 = vld [vmem:[%s1 + $0x1650] sm:$0xff]
    %v743 = vld [vmem:[%s1 + $0x1658] sm:$0xff]
    %v744 = vld [vmem:[%s1 + $0x1660] sm:$0xff]
    %v745 = vld [vmem:[%s1 + $0x1668] sm:$0xff]
    %v746 = vld [vmem:[%s1 + $0x1670] sm:$0xff]
    %v747 = vld [vmem:[%s1 + $0x1678] sm:$0xff]
    %v748 = vld [vmem:[%s1 + $0x1680] sm:$0xff]
    %v749 = vld [vmem:[%s1 + $0x1688] sm:$0xff]
    %v750 = vld [vmem:[%s1 + $0x1690] sm:$0xff]
    %v751 = vld [vmem:[%s1 + $0x1698] sm:$0xff]
    %v752 = vld [vmem:[%s1 + $0x16a0] sm:$0xff]
    %v753 = vld [vmem:[%s1 + $0x16a8] sm:$0xff]
    %v754 = vld [vmem:[%s1 + $0x16b0] sm:$0xff]
    %v755 = vld [vmem:[%s1 + $0x16b8] sm:$0xff]
    %v756 = vld [vmem:[%s1 + $0x16c0] sm:$0xff]
    %v757 = vld [vmem:[%s1 + $0x16c8] sm:$0xff]
    %v758 = vld [vmem:[%s1 + $0x16d0] sm:$0xff]
    %v759 = vld [vmem:[%s1 + $0x16d8] sm:$0xff]
    %v760 = vld [vmem:[%s1 + $0x16e0] sm:$0xff]
    %v761 = vld [vmem:[%s1 + $0x16e8] sm:$0xff]
    %v762 = vld [vmem:[%s1 + $0x16f0] sm:$0xff]
    %v763 = vld [vmem:[%s1 + $0x16f8] sm:$0xff]
    %v764 = vld [vmem:[%s1 + $0x1700] sm:$0xff]
    %v765 = vld [vmem:[%s1 + $0x1708] sm:$0xff]
    %v766 = vld [vmem:[%s1 + $0x1710] sm:$0xff]
    %v767 = vld [vmem:[%s1 + $0x1718] sm:$0xff]
    %v768 = vld [vmem:[%s1 + $0x1720] sm:$0xff]
    %v769 = vld [vmem:[%s1 + $0x1728] sm:$0xff]
    %v770 = vld [vmem:[%s1 + $0x1730] sm:$0xff]
    %v771 = vld [vmem:[%s1 + $0x1738] sm:$0xff]
    %v772 = vld [vmem:[%s1 + $0x1740] sm:$0xff]
    %v773 = vld [vmem:[%s1 + $0x1748] sm:$0xff]
    %v774 = vld [vmem:[%s1 + $0x1750] sm:$0xff]
    %v775 = vld [vmem:[%s1 + $0x1758] sm:$0xff]
    %v776 = vld [vmem:[%s1 + $0x1760] sm:$0xff]
    %v777 = vld [vmem:[%s1 + $0x1768] sm:$0xff]
    %v778 = vld [vmem:[%s1 + $0x1770] sm:$0xff]
    %v779 = vld [vmem:[%s1 + $0x1778] sm:$0xff]
    %v780 = vld [vmem:[%s1 + $0x1780] sm:$0xff]
    %v781 = vld [vmem:[%s1 + $0x1788] sm:$0xff]
    %v782 = vld [vmem:[%s1 + $0x1790] sm:$0xff]
    %v783 = vld [vmem:[%s1 + $0x1798] sm:$0xff]
    %v784 = vld [vmem:[%s1 + $0x17a0] sm:$0xff]
    %v785 = vld [vmem:[%s1 + $0x17a8] sm:$0xff]
    %v786 = vld [vmem:[%s1 + $0x17b0] sm:$0xff]
    %v787 = vld [vmem:[%s1 + $0x17b8] sm:$0xff]
    %v788 = vld [vmem:[%s1 + $0x17c0] sm:$0xff]
    %v789 = vld [vmem:[%s1 + $0x17c8] sm:$0xff]
    %v790 = vld [vmem:[%s1 + $0x17d0] sm:$0xff]
    %v791 = vld [vmem:[%s1 + $0x17d8] sm:$0xff]
    %v792 = vld [vmem:[%s1 + $0x17e0] sm:$0xff]
    %v793 = vld [vmem:[%s1 + $0x17e8] sm:$0xff]
    %v794 = vld [vmem:[%s1 + $0x17f0] sm:$0xff]
    %v795 = vld [vmem:[%s1 + $0x17f8] sm:$0xff]
    %v796 = vld [vmem:[%s1 + $0x1800] sm:$0xff]
    %v797 = vld [vmem:[%s1 + $0x1808] sm:$0xff]
    %v798 = vld [vmem:[%s1 + $0x1810] sm:$0xff]
    %v799 = vld [vmem:[%s1 + $0x1818] sm:$0xff]
    %v800 = vld [vmem:[%s1 + $0x1820] sm:$0xff]
    %v801 = vld [vmem:[%s1 + $0x1828] sm:$0xff]
    %v802 = vld [vmem:[%s1 + $0x1830] sm:$0xff]
    %v803 = vld [vmem:[%s1 + $0x1838] sm:$0xff]
    %v804 = vld [vmem:[%s1 + $0x1840] sm:$0xff]
    %v805 = vld [vmem:[%s1 + $0x1848] sm:$0xff]
    %v806 = vld [vmem:[%s1 + $0x1850] sm:$0xff]
    %v807 = vld [vmem:[%s1 + $0x1858] sm:$0xff]
    %v808 = vld [vmem:[%s1 + $0x1860] sm:$0xff]
    %v809 = vld [vmem:[%s1 + $0x1868] sm:$0xff]
    %v810 = vld [vmem:[%s1 + $0x1870] sm:$0xff]
    %v811 = vld [vmem:[%s1 + $0x1878] sm:$0xff]
    %v812 = vld [vmem:[%s1 + $0x1880] sm:$0xff]
    %v813 = vld [vmem:[%s1 + $0x1888] sm:$0xff]
    %v814 = vld [vmem:[%s1 + $0x1890] sm:$0xff]
    %v815 = vld [vmem:[%s1 + $0x1898] sm:$0xff]
    %v816 = vld [vmem:[%s1 + $0x18a0] sm:$0xff]
    %v817 = vld [vmem:[%s1 + $0x18a8] sm:$0xff]
    %v818 = vld [vmem:[%s1 + $0x18b0] sm:$0xff]
    %v819 = vld [vmem:[%s1 + $0x18b8] sm:$0xff]
    %v820 = vld [vmem:[%s1 + $0x18c0] sm:$0xff]
    %v821 = vld [vmem:[%s1 + $0x18c8] sm:$0xff]
    %v822 = vld [vmem:[%s1 + $0x18d0] sm:$0xff]
    %v823 = vld [vmem:[%s1 + $0x18d8] sm:$0xff]
    %v824 = vld [vmem:[%s1 + $0x18e0] sm:$0xff]
    %v825 = vld [vmem:[%s1 + $0x18e8] sm:$0xff]
    %v826 = vld [vmem:[%s1 + $0x18f0] sm:$0xff]
    %v827 = vld [vmem:[%s1 + $0x18f8] sm:$0xff]
    %v828 = vld [vmem:[%s1 + $0x1900] sm:$0xff]
    %v829 = vld [vmem:[%s1 + $0x1908] sm:$0xff]
    %v830 = vld [vmem:[%s1 + $0x1910] sm:$0xff]
    %v831 = vld [vmem:[%s1 + $0x1918] sm:$0xff]
    %v832 = vld [vmem:[%s1 + $0x1920] sm:$0xff]
    %v833 = vld [vmem:[%s1 + $0x1928] sm:$0xff]
    %v834 = vld [vmem:[%s1 + $0x1930] sm:$0xff]
    %v835 = vld [vmem:[%s1 + $0x1938] sm:$0xff]
    %v836 = vld [vmem:[%s1 + $0x1940] sm:$0xff]
    %v837 = vld [vmem:[%s1 + $0x1948] sm:$0xff]
    %v838 = vld [vmem:[%s1 + $0x1950] sm:$0xff]
    %v839 = vld [vmem:[%s1 + $0x1958] sm:$0xff]
    %v840 = vld [vmem:[%s1 + $0x1960] sm:$0xff]
    %v841 = vld [vmem:[%s1 + $0x1968] sm:$0xff]
    %v842 = vld [vmem:[%s1 + $0x1970] sm:$0xff]
    %v843 = vld [vmem:[%s1 + $0x1978] sm:$0xff]
    %v844 = vld [vmem:[%s1 + $0x1980] sm:$0xff]
    %v845 = vld [vmem:[%s1 + $0x1988] sm:$0xff]
    %v846 = vld [vmem:[%s1 + $0x1990] sm:$0xff]
    %v847 = vld [vmem:[%s1 + $0x1998] sm:$0xff]
    %v848 = vld [vmem:[%s1 + $0x19a0] sm:$0xff]
    %v849 = vld [vmem:[%s1 + $0x19a8] sm:$0xff]
    %v850 = vld [vmem:[%s1 + $0x19b0] sm:$0xff]
    %v851 = vld [vmem:[%s1 + $0x19b8] sm:$0xff]
    %v852 = vld [vmem:[%s1 + $0x19c0] sm:$0xff]
    %v853 = vld [vmem:[%s1 + $0x19c8] sm:$0xff]
    %v854 = vld [vmem:[%s1 + $0x19d0] sm:$0xff]
    %v855 = vld [vmem:[%s1 + $0x19d8] sm:$0xff]
    %v856 = vld [vmem:[%s1 + $0x19e0] sm:$0xff]
    %v857 = vld [vmem:[%s1 + $0x19e8] sm:$0xff]
    %v858 = vld [vmem:[%s1 + $0x19f0] sm:$0xff]
    %v859 = vld [vmem:[%s1 + $0x19f8] sm:$0xff]
    %v860 = vld [vmem:[%s1 + $0x1a00] sm:$0xff]
    %v861 = vld [vmem:[%s1 + $0x1a08] sm:$0xff]
    %v862 = vld [vmem:[%s1 + $0x1a10] sm:$0xff]
    %v863 = vld [vmem:[%s1 + $0x1a18] sm:$0xff]
    %v864 = vld [vmem:[%s1 + $0x1a20] sm:$0xff]
    %v865 = vld [vmem:[%s1 + $0x1a28] sm:$0xff]
    %v866 = vld [vmem:[%s1 + $0x1a30] sm:$0xff]
    %v867 = vld [vmem:[%s1 + $0x1a38] sm:$0xff]
    %v868 = vld [vmem:[%s1 + $0x1a40] sm:$0xff]
    %v869 = vld [vmem:[%s1 + $0x1a48] sm:$0xff]
    %v870 = vld [vmem:[%s1 + $0x1a50] sm:$0xff]
    %v871 = vld [vmem:[%s1 + $0x1a58] sm:$0xff]
    %v872 = vld [vmem:[%s1 + $0x1a60] sm:$0xff]
    %v873 = vld [vmem:[%s1 + $0x1a68] sm:$0xff]
    %v874 = vld [vmem:[%s1 + $0x1a70] sm:$0xff]
    %v875 = vld [vmem:[%s1 + $0x1a78] sm:$0xff]
    %v876 = vld [vmem:[%s1 + $0x1a80] sm:$0xff]
    %v877 = vld [vmem:[%s1 + $0x1a88] sm:$0xff]
    %v878 = vld [vmem:[%s1 + $0x1a90] sm:$0xff]
    %v879 = vld [vmem:[%s1 + $0x1a98] sm:$0xff]
    %v880 = vld [vmem:[%s1 + $0x1aa0] sm:$0xff]
    %v881 = vld [vmem:[%s1 + $0x1aa8] sm:$0xff]
    %v882 = vld [vmem:[%s1 + $0x1ab0] sm:$0xff]
    %v883 = vld [vmem:[%s1 + $0x1ab8] sm:$0xff]
    %v884 = vld [vmem:[%s1 + $0x1ac0] sm:$0xff]
    %v885 = vld [vmem:[%s1 + $0x1ac8] sm:$0xff]
    %v886 = vld [vmem:[%s1 + $0x1ad0] sm:$0xff]
    %v887 = vld [vmem:[%s1 + $0x1ad8] sm:$0xff]
    %v888 = vld [vmem:[%s1 + $0x1ae0] sm:$0xff]
    %v889 = vld [vmem:[%s1 + $0x1ae8] sm:$0xff]
    %v890 = vld [vmem:[%s1 + $0x1af0] sm:$0xff]
    %v891 = vld [vmem:[%s1 + $0x1af8] sm:$0xff]
    %v892 = vld [vmem:[%s1 + $0x1b00] sm:$0xff]
    %v893 = vld [vmem:[%s1 + $0x1b08] sm:$0xff]
    %v894 = vld [vmem:[%s1 + $0x1b10] sm:$0xff]
    %v895 = vld [vmem:[%s1 + $0x1b18] sm:$0xff]
    %v896 = vld [vmem:[%s1 + $0x1b20] sm:$0xff]
    %v897 = vld [vmem:[%s1 + $0x1b28] sm:$0xff]
    %v898 = vld [vmem:[%s1 + $0x1b30] sm:$0xff]
    %v899 = vld [vmem:[%s1 + $0x1b38] sm:$0xff]
    %v900 = vld [vmem:[%s1 + $0x1b40] sm:$0xff]
    %v901 = vld [vmem:[%s1 + $0x1b48] sm:$0xff]
    %v902 = vld [vmem:[%s1 + $0x1b50] sm:$0xff]
    %v903 = vld [vmem:[%s1 + $0x1b58] sm:$0xff]
    %v904 = vld [vmem:[%s1 + $0x1b60] sm:$0xff]
    %v905 = vld [vmem:[%s1 + $0x1b68] sm:$0xff]
    %v906 = vld [vmem:[%s1 + $0x1b70] sm:$0xff]
    %v907 = vld [vmem:[%s1 + $0x1b78] sm:$0xff]
    %v908 = vld [vmem:[%s1 + $0x1b80] sm:$0xff]
    %v909 = vld [vmem:[%s1 + $0x1b88] sm:$0xff]
    %v910 = vld [vmem:[%s1 + $0x1b90] sm:$0xff]
    %v911 = vld [vmem:[%s1 + $0x1b98] sm:$0xff]
    %v912 = vld [vmem:[%s1 + $0x1ba0] sm:$0xff]
    %v913 = vld [vmem:[%s1 + $0x1ba8] sm:$0xff]
    %v914 = vld [vmem:[%s1 + $0x1bb0] sm:$0xff]
    %v915 = vld [vmem:[%s1 + $0x1bb8] sm:$0xff]
    %v916 = vld [vmem:[%s1 + $0x1bc0] sm:$0xff]
    %v917 = vld [vmem:[%s1 + $0x1bc8] sm:$0xff]
    %v918 = vld [vmem:[%s1 + $0x1bd0] sm:$0xff]
    %v919 = vld [vmem:[%s1 + $0x1bd8] sm:$0xff]
    %v920 = vld [vmem:[%s1 + $0x1be0] sm:$0xff]
    %v921 = vld [vmem:[%s1 + $0x1be8] sm:$0xff]
    %v922 = vld [vmem:[%s1 + $0x1bf0] sm:$0xff]
    %v923 = vld [vmem:[%s1 + $0x1bf8] sm:$0xff]
    %v924 = vld [vmem:[%s1 + $0x1c00] sm:$0xff]
    %v925 = vld [vmem:[%s1 + $0x1c08] sm:$0xff]
    %v926 = vld [vmem:[%s1 + $0x1c10] sm:$0xff]
    %v927 = vld [vmem:[%s1 + $0x1c18] sm:$0xff]
    %v928 = vld [vmem:[%s1 + $0x1c20] sm:$0xff]
    %v929 = vld [vmem:[%s1 + $0x1c28] sm:$0xff]
    %v930 = vld [vmem:[%s1 + $0x1c30] sm:$0xff]
    %v931 = vld [vmem:[%s1 + $0x1c38] sm:$0xff]
    %v932 = vld [vmem:[%s1 + $0x1c40] sm:$0xff]
    %v933 = vld [vmem:[%s1 + $0x1c48] sm:$0xff]
    %v934 = vld [vmem:[%s1 + $0x1c50] sm:$0xff]
    %v935 = vld [vmem:[%s1 + $0x1c58] sm:$0xff]
    %v936 = vld [vmem:[%s1 + $0x1c60] sm:$0xff]
    %v937 = vld [vmem:[%s1 + $0x1c68] sm:$0xff]
    %v938 = vld [vmem:[%s1 + $0x1c70] sm:$0xff]
    %v939 = vld [vmem:[%s1 + $0x1c78] sm:$0xff]
    %v940 = vld [vmem:[%s1 + $0x1c80] sm:$0xff]
    %v941 = vld [vmem:[%s1 + $0x1c88] sm:$0xff]
    %v942 = vld [vmem:[%s1 + $0x1c90] sm:$0xff]
    %v943 = vld [vmem:[%s1 + $0x1c98] sm:$0xff]
    %v944 = vld [vmem:[%s1 + $0x1ca0] sm:$0xff]
    %v945 = vld [vmem:[%s1 + $0x1ca8] sm:$0xff]
    %v946 = vld [vmem:[%s1 + $0x1cb0] sm:$0xff]
    %v947 = vld [vmem:[%s1 + $0x1cb8] sm:$0xff]
    %v948 = vld [vmem:[%s1 + $0x1cc0] sm:$0xff]
    %v949 = vld [vmem:[%s1 + $0x1cc8] sm:$0xff]
    %v950 = vld [vmem:[%s1 + $0x1cd0] sm:$0xff]
    %v951 = vld [vmem:[%s1 + $0x1cd8] sm:$0xff]
    %v952 = vld [vmem:[%s1 + $0x1ce0] sm:$0xff]
    %v953 = vld [vmem:[%s1 + $0x1ce8] sm:$0xff]
    %v954 = vld [vmem:[%s1 + $0x1cf0] sm:$0xff]
    %v955 = vld [vmem:[%s1 + $0x1cf8] sm:$0xff]
    %v956 = vld [vmem:[%s1 + $0x1d00] sm:$0xff]
    %v957 = vld [vmem:[%s1 + $0x1d08] sm:$0xff]
    %v958 = vld [vmem:[%s1 + $0x1d10] sm:$0xff]
    %v959 = vld [vmem:[%s1 + $0x1d18] sm:$0xff]
    %v960 = vld [vmem:[%s1 + $0x1d20] sm:$0xff]
    %v961 = vld [vmem:[%s1 + $0x1d28] sm:$0xff]
    %v962 = vld [vmem:[%s1 + $0x1d30] sm:$0xff]
    %v963 = vld [vmem:[%s1 + $0x1d38] sm:$0xff]
    %v964 = vld [vmem:[%s1 + $0x1d40] sm:$0xff]
    %v965 = vld [vmem:[%s1 + $0x1d48] sm:$0xff]
    %v966 = vld [vmem:[%s1 + $0x1d50] sm:$0xff]
    %v967 = vld [vmem:[%s1 + $0x1d58] sm:$0xff]
    %v968 = vld [vmem:[%s1 + $0x1d60] sm:$0xff]
    %v969 = vld [vmem:[%s1 + $0x1d68] sm:$0xff]
    %v970 = vld [vmem:[%s1 + $0x1d70] sm:$0xff]
    %v971 = vld [vmem:[%s1 + $0x1d78] sm:$0xff]
    %v972 = vld [vmem:[%s1 + $0x1d80] sm:$0xff]
    %v973 = vld [vmem:[%s1 + $0x1d88] sm:$0xff]
    %v974 = vld [vmem:[%s1 + $0x1d90] sm:$0xff]
    %v975 = vld [vmem:[%s1 + $0x1d98] sm:$0xff]
    %v976 = vld [vmem:[%s1 + $0x1da0] sm:$0xff]
    %v977 = vld [vmem:[%s1 + $0x1da8] sm:$0xff]
    %v978 = vld [vmem:[%s1 + $0x1db0] sm:$0xff]
    %v979 = vld [vmem:[%s1 + $0x1db8] sm:$0xff]
    %v980 = vld [vmem:[%s1 + $0x1dc0] sm:$0xff]
    %v981 = vld [vmem:[%s1 + $0x1dc8] sm:$0xff]
    %v982 = vld [vmem:[%s1 + $0x1dd0] sm:$0xff]
    %v983 = vld [vmem:[%s1 + $0x1dd8] sm:$0xff]
    %v984 = vld [vmem:[%s1 + $0x1de0] sm:$0xff]
    %v985 = vld [vmem:[%s1 + $0x1de8] sm:$0xff]
    %v986 = vld [vmem:[%s1 + $0x1df0] sm:$0xff]
    %v987 = vld [vmem:[%s1 + $0x1df8] sm:$0xff]
    %v988 = vld [vmem:[%s1 + $0x1e00] sm:$0xff]
    %v989 = vld [vmem:[%s1 + $0x1e08] sm:$0xff]
    %v990 = vld [vmem:[%s1 + $0x1e10] sm:$0xff]
    %v991 = vld [vmem:[%s1 + $0x1e18] sm:$0xff]
    %v992 = vld [vmem:[%s1 + $0x1e20] sm:$0xff]
    %v993 = vld [vmem:[%s1 + $0x1e28] sm:$0xff]
    %v994 = vld [vmem:[%s1 + $0x1e30] sm:$0xff]
    %v995 = vld [vmem:[%s1 + $0x1e38] sm:$0xff]
    %v996 = vld [vmem:[%s1 + $0x1e40] sm:$0xff]
    %v997 = vld [vmem:[%s1 + $0x1e48] sm:$0xff]
    %v998 = vld [vmem:[%s1 + $0x1e50] sm:$0xff]
    %v999 = vld [vmem:[%s1 + $0x1e58] sm:$0xff]
    %v1000 = vld [vmem:[%s1 + $0x1e60] sm:$0xff]
    %v1001 = vld [vmem:[%s1 + $0x1e68] sm:$0xff]
    %v1002 = vld [vmem:[%s1 + $0x1e70] sm:$0xff]
    %v1003 = vld [vmem:[%s1 + $0x1e78] sm:$0xff]
    %v1004 = vld [vmem:[%s1 + $0x1e80] sm:$0xff]
    %v1005 = vld [vmem:[%s1 + $0x1e88] sm:$0xff]
    %v1006 = vld [vmem:[%s1 + $0x1e90] sm:$0xff]
    %v1007 = vld [vmem:[%s1 + $0x1e98] sm:$0xff]
    %v1008 = vld [vmem:[%s1 + $0x1ea0] sm:$0xff]
    %v1009 = vld [vmem:[%s1 + $0x1ea8] sm:$0xff]
    %v1010 = vld [vmem:[%s1 + $0x1eb0] sm:$0xff]
    %v1011 = vld [vmem:[%s1 + $0x1eb8] sm:$0xff]
    %v1012 = vld [vmem:[%s1 + $0x1ec0] sm:$0xff]
    %v1013 = vld [vmem:[%s1 + $0x1ec8] sm:$0xff]
    %v1014 = vld [vmem:[%s1 + $0x1ed0] sm:$0xff]
    %v1015 = vld [vmem:[%s1 + $0x1ed8] sm:$0xff]
    %v1016 = vld [vmem:[%s1 + $0x1ee0] sm:$0xff]
    %v1017 = vld [vmem:[%s1 + $0x1ee8] sm:$0xff]
    %v1018 = vld [vmem:[%s1 + $0x1ef0] sm:$0xff]
    %v1019 = vld [vmem:[%s1 + $0x1ef8] sm:$0xff]
    %v1020 = vld [vmem:[%s1 + $0x1f00] sm:$0xff]
    %v1021 = vld [vmem:[%s1 + $0x1f08] sm:$0xff]
    %v1022 = vld [vmem:[%s1 + $0x1f10] sm:$0xff]
    %v1023 = vld [vmem:[%s1 + $0x1f18] sm:$0xff]
    %v1024 = vld [vmem:[%s1 + $0x1f20] sm:$0xff]
    %v1025 = vld [vmem:[%s1 + $0x1f28] sm:$0xff]
    %v1026 = vld [vmem:[%s1 + $0x1f30] sm:$0xff]
    %v1027 = vld [vmem:[%s1 + $0x1f38] sm:$0xff]
    %v1028 = vld [vmem:[%s1 + $0x1f40] sm:$0xff]
    %v1029 = vld [vmem:[%s1 + $0x1f48] sm:$0xff]
    %v1030 = vld [vmem:[%s1 + $0x1f50] sm:$0xff]
    %v1031 = vld [vmem:[%s1 + $0x1f58] sm:$0xff]
    %v1032 = vld [vmem:[%s1 + $0x1f60] sm:$0xff]
    %v1033 = vld [vmem:[%s1 + $0x1f68] sm:$0xff]
    %v1034 = vld [vmem:[%s1 + $0x1f70] sm:$0xff]
    %v1035 = vld [vmem:[%s1 + $0x1f78] sm:$0xff]
    %v1036 = vld [vmem:[%s1 + $0x1f80] sm:$0xff]
    %v1037 = vld [vmem:[%s1 + $0x1f88] sm:$0xff]
    %v1038 = vld [vmem:[%s1 + $0x1f90] sm:$0xff]
    %v1039 = vld [vmem:[%s1 + $0x1f98] sm:$0xff]
    %v1040 = vld [vmem:[%s1 + $0x1fa0] sm:$0xff]
    %v1041 = vld [vmem:[%s1 + $0x1fa8] sm:$0xff]
    %v1042 = vld [vmem:[%s1 + $0x1fb0] sm:$0xff]
    %v1043 = vld [vmem:[%s1 + $0x1fb8] sm:$0xff]
    %v1044 = vld [vmem:[%s1 + $0x1fc0] sm:$0xff]
    %v1045 = vld [vmem:[%s1 + $0x1fc8] sm:$0xff]
    %v1046 = vld [vmem:[%s1 + $0x1fd0] sm:$0xff]
    %v1047 = vld [vmem:[%s1 + $0x1fd8] sm:$0xff]
    %v1048 = vld [vmem:[%s1 + $0x1fe0] sm:$0xff]
    %v1049 = vld [vmem:[%s1 + $0x1fe8] sm:$0xff]
    %v1050 = vld [vmem:[%s1 + $0x1ff0] sm:$0xff]
    %v1051 = vld [vmem:[%s1 + $0x1ff8] sm:$0xff]
    %v1052 = vld [vmem:[%s1 + $0x2000] sm:$0xff]
    %v1053 = vld [vmem:[%s1 + $0x2008] sm:$0xff]
    %v1054 = vld [vmem:[%s1 + $0x2010] sm:$0xff]
    %v1055 = vld [vmem:[%s1 + $0x2018] sm:$0xff]
    %v1056 = vld [vmem:[%s1 + $0x2020] sm:$0xff]
    %v1057 = vld [vmem:[%s1 + $0x2028] sm:$0xff]
    %v1058 = vld [vmem:[%s1 + $0x2030] sm:$0xff]
    %v1059 = vld [vmem:[%s1 + $0x2038] sm:$0xff]
    %v1060 = vld [vmem:[%s1 + $0x2040] sm:$0xff]
    %v1061 = vld [vmem:[%s1 + $0x2048] sm:$0xff]
    %v1062 = vld [vmem:[%s1 + $0x2050] sm:$0xff]
    %v1063 = vld [vmem:[%s1 + $0x2058] sm:$0xff]
    %v1064 = vld [vmem:[%s1 + $0x2060] sm:$0xff]
    %v1065 = vld [vmem:[%s1 + $0x2068] sm:$0xff]
    %v1066 = vld [vmem:[%s1 + $0x2070] sm:$0xff]
    %v1067 = vld [vmem:[%s1 + $0x2078] sm:$0xff]
    %v1068 = vld [vmem:[%s1 + $0x2080] sm:$0xff]
    %v1069 = vld [vmem:[%s1 + $0x2088] sm:$0xff]
    %v1070 = vld [vmem:[%s1 + $0x2090] sm:$0xff]
    %v1071 = vld [vmem:[%s1 + $0x2098] sm:$0xff]
    %v1072 = vld [vmem:[%s1 + $0x20a0] sm:$0xff]
    %v1073 = vld [vmem:[%s1 + $0x20a8] sm:$0xff]
    %v1074 = vld [vmem:[%s1 + $0x20b0] sm:$0xff]
    %v1075 = vld [vmem:[%s1 + $0x20b8] sm:$0xff]
    %v1076 = vld [vmem:[%s1 + $0x20c0] sm:$0xff]
    %v1077 = vld [vmem:[%s1 + $0x20c8] sm:$0xff]
    %v1078 = vld [vmem:[%s1 + $0x20d0] sm:$0xff]
    %v1079 = vld [vmem:[%s1 + $0x20d8] sm:$0xff]
    %v1080 = vld [vmem:[%s1 + $0x20e0] sm:$0xff]
    %v1081 = vld [vmem:[%s1 + $0x20e8] sm:$0xff]
    %v1082 = vld [vmem:[%s1 + $0x20f0] sm:$0xff]
    %v1083 = vld [vmem:[%s1 + $0x20f8] sm:$0xff]
    %v1084 = vld [vmem:[%s1 + $0x2100] sm:$0xff]
    %v1085 = vld [vmem:[%s1 + $0x2108] sm:$0xff]
    %v1086 = vld [vmem:[%s1 + $0x2110] sm:$0xff]
    %v1087 = vld [vmem:[%s1 + $0x2118] sm:$0xff]
    %v1088 = vld [vmem:[%s1 + $0x2120] sm:$0xff]
    %v1089 = vld [vmem:[%s1 + $0x2128] sm:$0xff]
    %v1090 = vld [vmem:[%s1 + $0x2130] sm:$0xff]
    %v1091 = vld [vmem:[%s1 + $0x2138] sm:$0xff]
    %v1092 = vld [vmem:[%s1 + $0x2140] sm:$0xff]
    %v1093 = vld [vmem:[%s1 + $0x2148] sm:$0xff]
    %v1094 = vld [vmem:[%s1 + $0x2150] sm:$0xff]
    %v1095 = vld [vmem:[%s1 + $0x2158] sm:$0xff]
    %v1096 = vld [vmem:[%s1 + $0x2160] sm:$0xff]
    %v1097 = vld [vmem:[%s1 + $0x2168] sm:$0xff]
    %v1098 = vld [vmem:[%s1 + $0x2170] sm:$0xff]
    %v1099 = vld [vmem:[%s1 + $0x2178] sm:$0xff]
    %v1100 = vld [vmem:[%s1 + $0x2180] sm:$0xff]
    %v1101 = vld [vmem:[%s1 + $0x2188] sm:$0xff]
    %v1102 = vld [vmem:[%s1 + $0x2190] sm:$0xff]
    %v1103 = vld [vmem:[%s1 + $0x2198] sm:$0xff]
    %v1104 = vld [vmem:[%s1 + $0x21a0] sm:$0xff]
    %v1105 = vld [vmem:[%s1 + $0x21a8] sm:$0xff]
    %v1106 = vld [vmem:[%s1 + $0x21b0] sm:$0xff]
    %v1107 = vld [vmem:[%s1 + $0x21b8] sm:$0xff]
    %v1108 = vld [vmem:[%s1 + $0x21c0] sm:$0xff]
    %v1109 = vld [vmem:[%s1 + $0x21c8] sm:$0xff]
    %v1110 = vld [vmem:[%s1 + $0x21d0] sm:$0xff]
    %v1111 = vld [vmem:[%s1 + $0x21d8] sm:$0xff]
    %v1112 = vld [vmem:[%s1 + $0x21e0] sm:$0xff]
    %v1113 = vld [vmem:[%s1 + $0x21e8] sm:$0xff]
    %v1114 = vld [vmem:[%s1 + $0x21f0] sm:$0xff]
    %v1115 = vld [vmem:[%s1 + $0x21f8] sm:$0xff]
    %v1116 = vld [vmem:[%s1 + $0x2200] sm:$0xff]
    %v1117 = vld [vmem:[%s1 + $0x2208] sm:$0xff]
    %v1118 = vld [vmem:[%s1 + $0x2210] sm:$0xff]
    %v1119 = vld [vmem:[%s1 + $0x2218] sm:$0xff]
    %v1120 = vld [vmem:[%s1 + $0x2220] sm:$0xff]
    %v1121 = vld [vmem:[%s1 + $0x2228] sm:$0xff]
    %v1122 = vld [vmem:[%s1 + $0x2230] sm:$0xff]
    %v1123 = vld [vmem:[%s1 + $0x2238] sm:$0xff]
    %v1124 = vld [vmem:[%s1 + $0x2240] sm:$0xff]
    %v1125 = vld [vmem:[%s1 + $0x2248] sm:$0xff]
    %v1126 = vld [vmem:[%s1 + $0x2250] sm:$0xff]
    %v1127 = vld [vmem:[%s1 + $0x2258] sm:$0xff]
    %v1128 = vld [vmem:[%s1 + $0x2260] sm:$0xff]
    %v1129 = vld [vmem:[%s1 + $0x2268] sm:$0xff]
    %v1130 = vld [vmem:[%s1 + $0x2270] sm:$0xff]
    %v1131 = vld [vmem:[%s1 + $0x2278] sm:$0xff]
    %v1132 = vld [vmem:[%s1 + $0x2280] sm:$0xff]
    %v1133 = vld [vmem:[%s1 + $0x2288] sm:$0xff]
    %v1134 = vld [vmem:[%s1 + $0x2290] sm:$0xff]
    %v1135 = vld [vmem:[%s1 + $0x2298] sm:$0xff]
    %v1136 = vld [vmem:[%s1 + $0x22a0] sm:$0xff]
    %v1137 = vld [vmem:[%s1 + $0x22a8] sm:$0xff]
    %v1138 = vld [vmem:[%s1 + $0x22b0] sm:$0xff]
    %v1139 = vld [vmem:[%s1 + $0x22b8] sm:$0xff]
    %v1140 = vld [vmem:[%s1 + $0x22c0] sm:$0xff]
    %v1141 = vld [vmem:[%s1 + $0x22c8] sm:$0xff]
    %v1142 = vld [vmem:[%s1 + $0x22d0] sm:$0xff]
    %v1143 = vld [vmem:[%s1 + $0x22d8] sm:$0xff]
    %v1144 = vld [vmem:[%s1 + $0x22e0] sm:$0xff]
    %v1145 = vld [vmem:[%s1 + $0x22e8] sm:$0xff]
    %v1146 = vld [vmem:[%s1 + $0x22f0] sm:$0xff]
    %v1147 = vld [vmem:[%s1 + $0x22f8] sm:$0xff]
    %v1148 = vld [vmem:[%s1 + $0x2300] sm:$0xff]
    %v1149 = vld [vmem:[%s1 + $0x2308] sm:$0xff]
    %v1150 = vld [vmem:[%s1 + $0x2310] sm:$0xff]
    %v1151 = vld [vmem:[%s1 + $0x2318] sm:$0xff]
    %v1152 = vld [vmem:[%s1 + $0x2320] sm:$0xff]
    %v1153 = vld [vmem:[%s1 + $0x2328] sm:$0xff]
    %v1154 = vld [vmem:[%s1 + $0x2330] sm:$0xff]
    %v1155 = vld [vmem:[%s1 + $0x2338] sm:$0xff]
    %v1156 = vld [vmem:[%s1 + $0x2340] sm:$0xff]
    %v1157 = vld [vmem:[%s1 + $0x2348] sm:$0xff]
    %v1158 = vld [vmem:[%s1 + $0x2350] sm:$0xff]
    %v1159 = vld [vmem:[%s1 + $0x2358] sm:$0xff]
    %v1160 = vld [vmem:[%s1 + $0x2360] sm:$0xff]
    %v1161 = vld [vmem:[%s1 + $0x2368] sm:$0xff]
    %v1162 = vld [vmem:[%s1 + $0x2370] sm:$0xff]
    %v1163 = vld [vmem:[%s1 + $0x2378] sm:$0xff]
    %v1164 = vld [vmem:[%s1 + $0x2380] sm:$0xff]
    %v1165 = vld [vmem:[%s1 + $0x2388] sm:$0xff]
    %v1166 = vld [vmem:[%s1 + $0x2390] sm:$0xff]
    %v1167 = vld [vmem:[%s1 + $0x2398] sm:$0xff]
    %v1168 = vld [vmem:[%s1 + $0x23a0] sm:$0xff]
    %v1169 = vld [vmem:[%s1 + $0x23a8] sm:$0xff]
    %v1170 = vld [vmem:[%s1 + $0x23b0] sm:$0xff]
    %v1171 = vld [vmem:[%s1 + $0x23b8] sm:$0xff]
    %v1172 = vld [vmem:[%s1 + $0x23c0] sm:$0xff]
    %v1173 = vld [vmem:[%s1 + $0x23c8] sm:$0xff]
    %v1174 = vld [vmem:[%s1 + $0x23d0] sm:$0xff]
    %v1175 = vld [vmem:[%s1 + $0x23d8] sm:$0xff]
    %v1176 = vld [vmem:[%s1 + $0x23e0] sm:$0xff]
    %v1177 = vld [vmem:[%s1 + $0x23e8] sm:$0xff]
    %v1178 = vld [vmem:[%s1 + $0x23f0] sm:$0xff]
    %v1179 = vld [vmem:[%s1 + $0x23f8] sm:$0xff]
    %v1180 = vld [vmem:[%s1 + $0x2400] sm:$0xff]
    %v1181 = vld [vmem:[%s1 + $0x2408] sm:$0xff]
    %v1182 = vld [vmem:[%s1 + $0x2410] sm:$0xff]
    %v1183 = vld [vmem:[%s1 + $0x2418] sm:$0xff]
    %v1184 = vld [vmem:[%s1 + $0x2420] sm:$0xff]
    %v1185 = vld [vmem:[%s1 + $0x2428] sm:$0xff]
    %v1186 = vld [vmem:[%s1 + $0x2430] sm:$0xff]
    %v1187 = vld [vmem:[%s1 + $0x2438] sm:$0xff]
    %v1188 = vld [vmem:[%s1 + $0x2440] sm:$0xff]
    %v1189 = vld [vmem:[%s1 + $0x2448] sm:$0xff]
    %v1190 = vld [vmem:[%s1 + $0x2450] sm:$0xff]
    %v1191 = vld [vmem:[%s1 + $0x2458] sm:$0xff]
    %v1192 = vld [vmem:[%s1 + $0x2460] sm:$0xff]
    %v1193 = vld [vmem:[%s1 + $0x2468] sm:$0xff]
    %v1194 = vld [vmem:[%s1 + $0x2470] sm:$0xff]
    %v1195 = vld [vmem:[%s1 + $0x2478] sm:$0xff]
    %v1196 = vld [vmem:[%s1 + $0x2480] sm:$0xff]
    %v1197 = vld [vmem:[%s1 + $0x2488] sm:$0xff]
    %v1198 = vld [vmem:[%s1 + $0x2490] sm:$0xff]
    %v1199 = vld [vmem:[%s1 + $0x2498] sm:$0xff]
    %v1200 = vld [vmem:[%s1 + $0x24a0] sm:$0xff]
    %v1201 = vld [vmem:[%s1 + $0x24a8] sm:$0xff]
    %v1202 = vld [vmem:[%s1 + $0x24b0] sm:$0xff]
    %v1203 = vld [vmem:[%s1 + $0x24b8] sm:$0xff]
    %v1204 = vld [vmem:[%s1 + $0x24c0] sm:$0xff]
    %v1205 = vld [vmem:[%s1 + $0x24c8] sm:$0xff]
    %v1206 = vld [vmem:[%s1 + $0x24d0] sm:$0xff]
    %v1207 = vld [vmem:[%s1 + $0x24d8] sm:$0xff]
    %v1208 = vld [vmem:[%s1 + $0x24e0] sm:$0xff]
    %v1209 = vld [vmem:[%s1 + $0x24e8] sm:$0xff]
    %v1210 = vld [vmem:[%s1 + $0x24f0] sm:$0xff]
    %v1211 = vld [vmem:[%s1 + $0x24f8] sm:$0xff]
    %v1212 = vld [vmem:[%s1 + $0x2500] sm:$0xff]
    %v1213 = vld [vmem:[%s1 + $0x2508] sm:$0xff]
    %v1214 = vld [vmem:[%s1 + $0x2510] sm:$0xff]
    %v1215 = vld [vmem:[%s1 + $0x2518] sm:$0xff]
    %v1216 = vld [vmem:[%s1 + $0x2520] sm:$0xff]
    %v1217 = vld [vmem:[%s1 + $0x2528] sm:$0xff]
    %v1218 = vld [vmem:[%s1 + $0x2530] sm:$0xff]
    %v1219 = vld [vmem:[%s1 + $0x2538] sm:$0xff]
    %v1220 = vld [vmem:[%s1 + $0x2540] sm:$0xff]
    %v1221 = vld [vmem:[%s1 + $0x2548] sm:$0xff]
    %v1222 = vld [vmem:[%s1 + $0x2550] sm:$0xff]
    %v1223 = vld [vmem:[%s1 + $0x2558] sm:$0xff]
    %v1224 = vld [vmem:[%s1 + $0x2560] sm:$0xff]
    %v1225 = vld [vmem:[%s1 + $0x2568] sm:$0xff]
    %v1226 = vld [vmem:[%s1 + $0x2570] sm:$0xff]
    %v1227 = vld [vmem:[%s1 + $0x2578] sm:$0xff]
    %v1228 = vld [vmem:[%s1 + $0x2580] sm:$0xff]
    %v1229 = vld [vmem:[%s1 + $0x2588] sm:$0xff]
    %v1230 = vld [vmem:[%s1 + $0x2590] sm:$0xff]
    %v1231 = vld [vmem:[%s1 + $0x2598] sm:$0xff]
    %v1232 = vld [vmem:[%s1 + $0x25a0] sm:$0xff]
    %v1233 = vld [vmem:[%s1 + $0x25a8] sm:$0xff]
    %v1234 = vld [vmem:[%s1 + $0x25b0] sm:$0xff]
    %v1235 = vld [vmem:[%s1 + $0x25b8] sm:$0xff]
    %v1236 = vld [vmem:[%s1 + $0x25c0] sm:$0xff]
    %v1237 = vld [vmem:[%s1 + $0x25c8] sm:$0xff]
    %v1238 = vld [vmem:[%s1 + $0x25d0] sm:$0xff]
    %v1239 = vld [vmem:[%s1 + $0x25d8] sm:$0xff]
    %v1240 = vld [vmem:[%s1 + $0x25e0] sm:$0xff]
    %v1241 = vld [vmem:[%s1 + $0x25e8] sm:$0xff]
    %v1242 = vld [vmem:[%s1 + $0x25f0] sm:$0xff]
    %v1243 = vld [vmem:[%s1 + $0x25f8] sm:$0xff]
    %v1244 = vld [vmem:[%s1 + $0x2600] sm:$0xff]
    %v1245 = vld [vmem:[%s1 + $0x2608] sm:$0xff]
    %v1246 = vld [vmem:[%s1 + $0x2610] sm:$0xff]
    %v1247 = vld [vmem:[%s1 + $0x2618] sm:$0xff]
    %v1248 = vld [vmem:[%s1 + $0x2620] sm:$0xff]
    %v1249 = vld [vmem:[%s1 + $0x2628] sm:$0xff]
    %v1250 = vld [vmem:[%s1 + $0x2630] sm:$0xff]
    %v1251 = vld [vmem:[%s1 + $0x2638] sm:$0xff]
    %v1252 = vld [vmem:[%s1 + $0x2640] sm:$0xff]
    %v1253 = vld [vmem:[%s1 + $0x2648] sm:$0xff]
    %v1254 = vld [vmem:[%s1 + $0x2650] sm:$0xff]
    %v1255 = vld [vmem:[%s1 + $0x2658] sm:$0xff]
    %v1256 = vld [vmem:[%s1 + $0x2660] sm:$0xff]
    %v1257 = vld [vmem:[%s1 + $0x2668] sm:$0xff]
    %v1258 = vld [vmem:[%s1 + $0x2670] sm:$0xff]
    %v1259 = vld [vmem:[%s1 + $0x2678] sm:$0xff]
    %v1260 = vld [vmem:[%s1 + $0x2680] sm:$0xff]
    %v1261 = vld [vmem:[%s1 + $0x2688] sm:$0xff]
    %v1262 = vld [vmem:[%s1 + $0x2690] sm:$0xff]
    %v1263 = vld [vmem:[%s1 + $0x2698] sm:$0xff]
    %v1264 = vld [vmem:[%s1 + $0x26a0] sm:$0xff]
    %v1265 = vld [vmem:[%s1 + $0x26a8] sm:$0xff]
    %v1266 = vld [vmem:[%s1 + $0x26b0] sm:$0xff]
    %v1267 = vld [vmem:[%s1 + $0x26b8] sm:$0xff]
    %v1268 = vld [vmem:[%s1 + $0x26c0] sm:$0xff]
    %v1269 = vld [vmem:[%s1 + $0x26c8] sm:$0xff]
    %v1270 = vld [vmem:[%s1 + $0x26d0] sm:$0xff]
    %v1271 = vld [vmem:[%s1 + $0x26d8] sm:$0xff]
    %v1272 = vld [vmem:[%s1 + $0x26e0] sm:$0xff]
    %v1273 = vld [vmem:[%s1 + $0x26e8] sm:$0xff]
    %v1274 = vld [vmem:[%s1 + $0x26f0] sm:$0xff]
    %v1275 = vld [vmem:[%s1 + $0x26f8] sm:$0xff]
    %v1276 = vld [vmem:[%s1 + $0x2700] sm:$0xff]
    %v1277 = vld [vmem:[%s1 + $0x2708] sm:$0xff]
    %v1278 = vld [vmem:[%s1 + $0x2710] sm:$0xff]
    %v1279 = vld [vmem:[%s1 + $0x2718] sm:$0xff]
    %v1280 = vld [vmem:[%s1 + $0x2720] sm:$0xff]
    %v1281 = vld [vmem:[%s1 + $0x2728] sm:$0xff]
    %v1282 = vld [vmem:[%s1 + $0x2730] sm:$0xff]
    %v1283 = vld [vmem:[%s1 + $0x2738] sm:$0xff]
    %v1284 = vld [vmem:[%s1 + $0x2740] sm:$0xff]
    %v1285 = vld [vmem:[%s1 + $0x2748] sm:$0xff]
    %v1286 = vld [vmem:[%s1 + $0x2750] sm:$0xff]
    %v1287 = vld [vmem:[%s1 + $0x2758] sm:$0xff]
    %v1288 = vld [vmem:[%s1 + $0x2760] sm:$0xff]
    %v1289 = vld [vmem:[%s1 + $0x2768] sm:$0xff]
    %v1290 = vld [vmem:[%s1 + $0x2770] sm:$0xff]
    %v1291 = vld [vmem:[%s1 + $0x2778] sm:$0xff]
    %v1292 = vld [vmem:[%s1 + $0x2780] sm:$0xff]
    %v1293 = vld [vmem:[%s1 + $0x2788] sm:$0xff]
    %v1294 = vld [vmem:[%s1 + $0x2790] sm:$0xff]
    %v1295 = vld [vmem:[%s1 + $0x2798] sm:$0xff]
    %v1296 = vld [vmem:[%s1 + $0x27a0] sm:$0xff]
    %v1297 = vld [vmem:[%s1 + $0x27a8] sm:$0xff]
    %v1298 = vld [vmem:[%s1 + $0x27b0] sm:$0xff]
    %v1299 = vld [vmem:[%s1 + $0x27b8] sm:$0xff]
    %v1300 = vld [vmem:[%s1 + $0x27c0] sm:$0xff]
    %v1301 = vld [vmem:[%s1 + $0x27c8] sm:$0xff]
    %v1302 = vld [vmem:[%s1 + $0x27d0] sm:$0xff]
    %v1303 = vld [vmem:[%s1 + $0x27d8] sm:$0xff]
    %v1304 = vld [vmem:[%s1 + $0x27e0] sm:$0xff]
    %v1305 = vld [vmem:[%s1 + $0x27e8] sm:$0xff]
    %v1306 = vld [vmem:[%s1 + $0x27f0] sm:$0xff]
    %v1307 = vld [vmem:[%s1 + $0x27f8] sm:$0xff]
    %v1308 = vld [vmem:[%s1 + $0x2800] sm:$0xff]
    %v1309 = vld [vmem:[%s1 + $0x2808] sm:$0xff]
    %v1310 = vld [vmem:[%s1 + $0x2810] sm:$0xff]
    %v1311 = vld [vmem:[%s1 + $0x2818] sm:$0xff]
    %v1312 = vld [vmem:[%s1 + $0x2820] sm:$0xff]
    %v1313 = vld [vmem:[%s1 + $0x2828] sm:$0xff]
    %v1314 = vld [vmem:[%s1 + $0x2830] sm:$0xff]
    %v1315 = vld [vmem:[%s1 + $0x2838] sm:$0xff]
    %v1316 = vld [vmem:[%s1 + $0x2840] sm:$0xff]
    %v1317 = vld [vmem:[%s1 + $0x2848] sm:$0xff]
    %v1318 = vld [vmem:[%s1 + $0x2850] sm:$0xff]
    %v1319 = vld [vmem:[%s1 + $0x2858] sm:$0xff]
    %v1320 = vld [vmem:[%s1 + $0x2860] sm:$0xff]
    %v1321 = vld [vmem:[%s1 + $0x2868] sm:$0xff]
    %v1322 = vld [vmem:[%s1 + $0x2870] sm:$0xff]
    %v1323 = vld [vmem:[%s1 + $0x2878] sm:$0xff]
    %v1324 = vld [vmem:[%s1 + $0x2880] sm:$0xff]
    %v1325 = vld [vmem:[%s1 + $0x2888] sm:$0xff]
    %v1326 = vld [vmem:[%s1 + $0x2890] sm:$0xff]
    %v1327 = vld [vmem:[%s1 + $0x2898] sm:$0xff]
    %v1328 = vld [vmem:[%s1 + $0x28a0] sm:$0xff]
    %v1329 = vld [vmem:[%s1 + $0x28a8] sm:$0xff]
    %v1330 = vld [vmem:[%s1 + $0x28b0] sm:$0xff]
    %v1331 = vld [vmem:[%s1 + $0x28b8] sm:$0xff]
    %v1332 = vld [vmem:[%s1 + $0x28c0] sm:$0xff]
    %v1333 = vld [vmem:[%s1 + $0x28c8] sm:$0xff]
    %v1334 = vld [vmem:[%s1 + $0x28d0] sm:$0xff]
    %v1335 = vld [vmem:[%s1 + $0x28d8] sm:$0xff]
    %v1336 = vld [vmem:[%s1 + $0x28e0] sm:$0xff]
    %v1337 = vld [vmem:[%s1 + $0x28e8] sm:$0xff]
    %v1338 = vld [vmem:[%s1 + $0x28f0] sm:$0xff]
    %v1339 = vld [vmem:[%s1 + $0x28f8] sm:$0xff]
    %v1340 = vld [vmem:[%s1 + $0x2900] sm:$0xff]
    %v1341 = vld [vmem:[%s1 + $0x2908] sm:$0xff]
    %v1342 = vld [vmem:[%s1 + $0x2910] sm:$0xff]
    %v1343 = vld [vmem:[%s1 + $0x2918] sm:$0xff]
    %v1344 = vld [vmem:[%s1 + $0x2920] sm:$0xff]
    %v1345 = vld [vmem:[%s1 + $0x2928] sm:$0xff]
    %v1346 = vld [vmem:[%s1 + $0x2930] sm:$0xff]
    %v1347 = vld [vmem:[%s1 + $0x2938] sm:$0xff]
    %v1348 = vld [vmem:[%s1 + $0x2940] sm:$0xff]
    %v1349 = vld [vmem:[%s1 + $0x2948] sm:$0xff]
    %v1350 = vld [vmem:[%s1 + $0x2950] sm:$0xff]
    %v1351 = vld [vmem:[%s1 + $0x2958] sm:$0xff]
    %v1352 = vld [vmem:[%s1 + $0x2960] sm:$0xff]
    %v1353 = vld [vmem:[%s1 + $0x2968] sm:$0xff]
    %v1354 = vld [vmem:[%s1 + $0x2970] sm:$0xff]
    %v1355 = vld [vmem:[%s1 + $0x2978] sm:$0xff]
    %v1356 = vld [vmem:[%s1 + $0x2980] sm:$0xff]
    %v1357 = vld [vmem:[%s1 + $0x2988] sm:$0xff]
    %v1358 = vld [vmem:[%s1 + $0x2990] sm:$0xff]
    %v1359 = vld [vmem:[%s1 + $0x2998] sm:$0xff]
    %v1360 = vld [vmem:[%s1 + $0x29a0] sm:$0xff]
    %v1361 = vld [vmem:[%s1 + $0x29a8] sm:$0xff]
    %v1362 = vld [vmem:[%s1 + $0x29b0] sm:$0xff]
    %v1363 = vld [vmem:[%s1 + $0x29b8] sm:$0xff]
    %v1364 = vld [vmem:[%s1 + $0x29c0] sm:$0xff]
    %v1365 = vld [vmem:[%s1 + $0x29c8] sm:$0xff]
    %v1366 = vld [vmem:[%s1 + $0x29d0] sm:$0xff]
    %v1367 = vld [vmem:[%s1 + $0x29d8] sm:$0xff]
    %v1368 = vld [vmem:[%s1 + $0x29e0] sm:$0xff]
    %v1369 = vld [vmem:[%s1 + $0x29e8] sm:$0xff]
    %v1370 = vld [vmem:[%s1 + $0x29f0] sm:$0xff]
    %v1371 = vld [vmem:[%s1 + $0x29f8] sm:$0xff]
    %v1372 = vld [vmem:[%s1 + $0x2a00] sm:$0xff]
    %v1373 = vld [vmem:[%s1 + $0x2a08] sm:$0xff]
    %v1374 = vld [vmem:[%s1 + $0x2a10] sm:$0xff]
    %v1375 = vld [vmem:[%s1 + $0x2a18] sm:$0xff]
    %v1376 = vld [vmem:[%s1 + $0x2a20] sm:$0xff]
    %v1377 = vld [vmem:[%s1 + $0x2a28] sm:$0xff]
    %v1378 = vld [vmem:[%s1 + $0x2a30] sm:$0xff]
    %v1379 = vld [vmem:[%s1 + $0x2a38] sm:$0xff]
    %v1380 = vld [vmem:[%s1 + $0x2a40] sm:$0xff]
    %v1381 = vld [vmem:[%s1 + $0x2a48] sm:$0xff]
    %v1382 = vld [vmem:[%s1 + $0x2a50] sm:$0xff]
    %v1383 = vld [vmem:[%s1 + $0x2a58] sm:$0xff]
    %v1384 = vld [vmem:[%s1 + $0x2a60] sm:$0xff]
    %v1385 = vld [vmem:[%s1 + $0x2a68] sm:$0xff]
    %v1386 = vld [vmem:[%s1 + $0x2a70] sm:$0xff]
    %v1387 = vld [vmem:[%s1 + $0x2a78] sm:$0xff]
    %v1388 = vld [vmem:[%s1 + $0x2a80] sm:$0xff]
    %v1389 = vld [vmem:[%s1 + $0x2a88] sm:$0xff]
    %v1390 = vld [vmem:[%s1 + $0x2a90] sm:$0xff]
    %v1391 = vld [vmem:[%s1 + $0x2a98] sm:$0xff]
    %v1392 = vld [vmem:[%s1 + $0x2aa0] sm:$0xff]
    %v1393 = vld [vmem:[%s1 + $0x2aa8] sm:$0xff]
    %v1394 = vld [vmem:[%s1 + $0x2ab0] sm:$0xff]
    %v1395 = vld [vmem:[%s1 + $0x2ab8] sm:$0xff]
    %v1396 = vld [vmem:[%s1 + $0x2ac0] sm:$0xff]
    %v1397 = vld [vmem:[%s1 + $0x2ac8] sm:$0xff]
    %v1398 = vld [vmem:[%s1 + $0x2ad0] sm:$0xff]
    %v1399 = vld [vmem:[%s1 + $0x2ad8] sm:$0xff]
    %v1400 = vld [vmem:[%s1 + $0x2ae0] sm:$0xff]
    %v1401 = vld [vmem:[%s1 + $0x2ae8] sm:$0xff]
    %v1402 = vld [vmem:[%s1 + $0x2af0] sm:$0xff]
    %v1403 = vld [vmem:[%s1 + $0x2af8] sm:$0xff]
    %v1404 = vld [vmem:[%s1 + $0x2b00] sm:$0xff]
    %v1405 = vld [vmem:[%s1 + $0x2b08] sm:$0xff]
    %v1406 = vld [vmem:[%s1 + $0x2b10] sm:$0xff]
    %v1407 = vld [vmem:[%s1 + $0x2b18] sm:$0xff]
    %v1408 = vld [vmem:[%s1 + $0x2b20] sm:$0xff]
    %v1409 = vld [vmem:[%s1 + $0x2b28] sm:$0xff]
    %v1410 = vld [vmem:[%s1 + $0x2b30] sm:$0xff]
    %v1411 = vld [vmem:[%s1 + $0x2b38] sm:$0xff]
    %v1412 = vld [vmem:[%s1 + $0x2b40] sm:$0xff]
    %v1413 = vld [vmem:[%s1 + $0x2b48] sm:$0xff]
    %v1414 = vld [vmem:[%s1 + $0x2b50] sm:$0xff]
    %v1415 = vld [vmem:[%s1 + $0x2b58] sm:$0xff]
    %v1416 = vld [vmem:[%s1 + $0x2b60] sm:$0xff]
    %v1417 = vld [vmem:[%s1 + $0x2b68] sm:$0xff]
    %v1418 = vld [vmem:[%s1 + $0x2b70] sm:$0xff]
    %v1419 = vld [vmem:[%s1 + $0x2b78] sm:$0xff]
    %v1420 = vld [vmem:[%s1 + $0x2b80] sm:$0xff]
    %v1421 = vld [vmem:[%s1 + $0x2b88] sm:$0xff]
    %v1422 = vld [vmem:[%s1 + $0x2b90] sm:$0xff]
    %v1423 = vld [vmem:[%s1 + $0x2b98] sm:$0xff]
    %v1424 = vld [vmem:[%s1 + $0x2ba0] sm:$0xff]
    %v1425 = vld [vmem:[%s1 + $0x2ba8] sm:$0xff]
    %v1426 = vld [vmem:[%s1 + $0x2bb0] sm:$0xff]
    %v1427 = vld [vmem:[%s1 + $0x2bb8] sm:$0xff]
    %v1428 = vld [vmem:[%s1 + $0x2bc0] sm:$0xff]
    %v1429 = vld [vmem:[%s1 + $0x2bc8] sm:$0xff]
    %v1430 = vld [vmem:[%s1 + $0x2bd0] sm:$0xff]
    %v1431 = vld [vmem:[%s1 + $0x2bd8] sm:$0xff]
    %v1432 = vld [vmem:[%s1 + $0x2be0] sm:$0xff]
    %v1433 = vld [vmem:[%s1 + $0x2be8] sm:$0xff]
    %v1434 = vld [vmem:[%s1 + $0x2bf0] sm:$0xff]
    %v1435 = vld [vmem:[%s1 + $0x2bf8] sm:$0xff]
    %v1436 = vld [vmem:[%s1 + $0x2c00] sm:$0xff]
    %v1437 = vld [vmem:[%s1 + $0x2c08] sm:$0xff]
    %v1438 = vld [vmem:[%s1 + $0x2c10] sm:$0xff]
    %v1439 = vld [vmem:[%s1 + $0x2c18] sm:$0xff]
    %v1440 = vld [vmem:[%s1 + $0x2c20] sm:$0xff]
    %v1441 = vld [vmem:[%s1 + $0x2c28] sm:$0xff]
    %v1442 = vld [vmem:[%s1 + $0x2c30] sm:$0xff]
    %v1443 = vld [vmem:[%s1 + $0x2c38] sm:$0xff]
    %v1444 = vld [vmem:[%s1 + $0x2c40] sm:$0xff]
    %v1445 = vld [vmem:[%s1 + $0x2c48] sm:$0xff]
    %v1446 = vld [vmem:[%s1 + $0x2c50] sm:$0xff]
    %v1447 = vld [vmem:[%s1 + $0x2c58] sm:$0xff]
    %v1448 = vld [vmem:[%s1 + $0x2c60] sm:$0xff]
    %v1449 = vld [vmem:[%s1 + $0x2c68] sm:$0xff]
    %v1450 = vld [vmem:[%s1 + $0x2c70] sm:$0xff]
    %v1451 = vld [vmem:[%s1 + $0x2c78] sm:$0xff]
    %v1452 = vld [vmem:[%s1 + $0x2c80] sm:$0xff]
    %v1453 = vld [vmem:[%s1 + $0x2c88] sm:$0xff]
    %v1454 = vld [vmem:[%s1 + $0x2c90] sm:$0xff]
    %v1455 = vld [vmem:[%s1 + $0x2c98] sm:$0xff]
    %v1456 = vld [vmem:[%s1 + $0x2ca0] sm:$0xff]
    %v1457 = vld [vmem:[%s1 + $0x2ca8] sm:$0xff]
    %v1458 = vld [vmem:[%s1 + $0x2cb0] sm:$0xff]
    %v1459 = vld [vmem:[%s1 + $0x2cb8] sm:$0xff]
    %v1460 = vld [vmem:[%s1 + $0x2cc0] sm:$0xff]
    %v1461 = vld [vmem:[%s1 + $0x2cc8] sm:$0xff]
    %v1462 = vld [vmem:[%s1 + $0x2cd0] sm:$0xff]
    %v1463 = vld [vmem:[%s1 + $0x2cd8] sm:$0xff]
    %v1464 = vld [vmem:[%s1 + $0x2ce0] sm:$0xff]
    %v1465 = vld [vmem:[%s1 + $0x2ce8] sm:$0xff]
    %v1466 = vld [vmem:[%s1 + $0x2cf0] sm:$0xff]
    %v1467 = vld [vmem:[%s1 + $0x2cf8] sm:$0xff]
    %v1468 = vld [vmem:[%s1 + $0x2d00] sm:$0xff]
    %v1469 = vld [vmem:[%s1 + $0x2d08] sm:$0xff]
    %v1470 = vld [vmem:[%s1 + $0x2d10] sm:$0xff]
    %v1471 = vld [vmem:[%s1 + $0x2d18] sm:$0xff]
    %v1472 = vld [vmem:[%s1 + $0x2d20] sm:$0xff]
    %v1473 = vld [vmem:[%s1 + $0x2d28] sm:$0xff]
    %v1474 = vld [vmem:[%s1 + $0x2d30] sm:$0xff]
    %v1475 = vld [vmem:[%s1 + $0x2d38] sm:$0xff]
    %v1476 = vld [vmem:[%s1 + $0x2d40] sm:$0xff]
    %v1477 = vld [vmem:[%s1 + $0x2d48] sm:$0xff]
    %v1478 = vld [vmem:[%s1 + $0x2d50] sm:$0xff]
    %v1479 = vld [vmem:[%s1 + $0x2d58] sm:$0xff]
    %v1480 = vld [vmem:[%s1 + $0x2d60] sm:$0xff]
    %v1481 = vld [vmem:[%s1 + $0x2d68] sm:$0xff]
    %v1482 = vld [vmem:[%s1 + $0x2d70] sm:$0xff]
    %v1483 = vld [vmem:[%s1 + $0x2d78] sm:$0xff]
    %v1484 = vld [vmem:[%s1 + $0x2d80] sm:$0xff]
    %v1485 = vld [vmem:[%s1 + $0x2d88] sm:$0xff]
    %v1486 = vld [vmem:[%s1 + $0x2d90] sm:$0xff]
    %v1487 = vld [vmem:[%s1 + $0x2d98] sm:$0xff]
    %v1488 = vld [vmem:[%s1 + $0x2da0] sm:$0xff]
    %v1489 = vld [vmem:[%s1 + $0x2da8] sm:$0xff]
    %v1490 = vld [vmem:[%s1 + $0x2db0] sm:$0xff]
    %v1491 = vld [vmem:[%s1 + $0x2db8] sm:$0xff]
    %v1492 = vld [vmem:[%s1 + $0x2dc0] sm:$0xff]
    %v1493 = vld [vmem:[%s1 + $0x2dc8] sm:$0xff]
    %v1494 = vld [vmem:[%s1 + $0x2dd0] sm:$0xff]
    %v1495 = vld [vmem:[%s1 + $0x2dd8] sm:$0xff]
    %v1496 = vld [vmem:[%s1 + $0x2de0] sm:$0xff]
    %v1497 = vld [vmem:[%s1 + $0x2de8] sm:$0xff]
    %v1498 = vld [vmem:[%s1 + $0x2df0] sm:$0xff]
    %v1499 = vld [vmem:[%s1 + $0x2df8] sm:$0xff]
    %v1500 = vld [vmem:[%s1 + $0x2e00] sm:$0xff]
    %v1501 = vld [vmem:[%s1 + $0x2e08] sm:$0xff]
    %v1502 = vld [vmem:[%s1 + $0x2e10] sm:$0xff]
    %v1503 = vld [vmem:[%s1 + $0x2e18] sm:$0xff]
    %v1504 = vld [vmem:[%s1 + $0x2e20] sm:$0xff]
    %v1505 = vld [vmem:[%s1 + $0x2e28] sm:$0xff]
    %v1506 = vld [vmem:[%s1 + $0x2e30] sm:$0xff]
    %v1507 = vld [vmem:[%s1 + $0x2e38] sm:$0xff]
    %v1508 = vld [vmem:[%s1 + $0x2e40] sm:$0xff]
    %v1509 = vld [vmem:[%s1 + $0x2e48] sm:$0xff]
    %v1510 = vld [vmem:[%s1 + $0x2e50] sm:$0xff]
    %v1511 = vld [vmem:[%s1 + $0x2e58] sm:$0xff]
    %v1512 = vld [vmem:[%s1 + $0x2e60] sm:$0xff]
    %v1513 = vld [vmem:[%s1 + $0x2e68] sm:$0xff]
    %v1514 = vld [vmem:[%s1 + $0x2e70] sm:$0xff]
    %v1515 = vld [vmem:[%s1 + $0x2e78] sm:$0xff]
    %v1516 = vld [vmem:[%s1 + $0x2e80] sm:$0xff]
    %v1517 = vld [vmem:[%s1 + $0x2e88] sm:$0xff]
    %v1518 = vld [vmem:[%s1 + $0x2e90] sm:$0xff]
    %v1519 = vld [vmem:[%s1 + $0x2e98] sm:$0xff]
    %v1520 = vld [vmem:[%s1 + $0x2ea0] sm:$0xff]
    %v1521 = vld [vmem:[%s1 + $0x2ea8] sm:$0xff]
    %v1522 = vld [vmem:[%s1 + $0x2eb0] sm:$0xff]
    %v1523 = vld [vmem:[%s1 + $0x2eb8] sm:$0xff]
    %v1524 = vld [vmem:[%s1 + $0x2ec0] sm:$0xff]
    %v1525 = vld [vmem:[%s1 + $0x2ec8] sm:$0xff]
    %v1526 = vld [vmem:[%s1 + $0x2ed0] sm:$0xff]
    %v1527 = vld [vmem:[%s1 + $0x2ed8] sm:$0xff]
    %v1528 = vld [vmem:[%s1 + $0x2ee0] sm:$0xff]
    %v1529 = vld [vmem:[%s1 + $0x2ee8] sm:$0xff]
    %v1530 = vld [vmem:[%s1 + $0x2ef0] sm:$0xff]
    %v1531 = vld [vmem:[%s1 + $0x2ef8] sm:$0xff]
    %v1532 = vld [vmem:[%s1 + $0x2f00] sm:$0xff]
    %v1533 = vld [vmem:[%s1 + $0x2f08] sm:$0xff]
    %v1534 = vld [vmem:[%s1 + $0x2f10] sm:$0xff]
    %v1535 = vld [vmem:[%s1 + $0x2f18] sm:$0xff]
    %v1536 = vld [vmem:[%s1 + $0x2f20] sm:$0xff]
    %v1537 = vld [vmem:[%s1 + $0x2f28] sm:$0xff]
    %v1538 = vld [vmem:[%s1 + $0x2f30] sm:$0xff]
    %v1539 = vld [vmem:[%s1 + $0x2f38] sm:$0xff]
    %v1540 = vld [vmem:[%s1 + $0x2f40] sm:$0xff]
    %v1541 = vld [vmem:[%s1 + $0x2f48] sm:$0xff]
    %v1542 = vld [vmem:[%s1 + $0x2f50] sm:$0xff]
    %v1543 = vld [vmem:[%s1 + $0x2f58] sm:$0xff]
    %v1544 = vld [vmem:[%s1 + $0x2f60] sm:$0xff]
    %v1545 = vld [vmem:[%s1 + $0x2f68] sm:$0xff]
    %v1546 = vld [vmem:[%s1 + $0x2f70] sm:$0xff]
    %v1547 = vld [vmem:[%s1 + $0x2f78] sm:$0xff]
    %v1548 = vld [vmem:[%s1 + $0x2f80] sm:$0xff]
    %v1549 = vld [vmem:[%s1 + $0x2f88] sm:$0xff]
    %v1550 = vld [vmem:[%s1 + $0x2f90] sm:$0xff]
    %v1551 = vld [vmem:[%s1 + $0x2f98] sm:$0xff]
    %v1552 = vld [vmem:[%s1 + $0x2fa0] sm:$0xff]
    %v1553 = vld [vmem:[%s1 + $0x2fa8] sm:$0xff]
    %v1554 = vld [vmem:[%s1 + $0x2fb0] sm:$0xff]
    %v1555 = vld [vmem:[%s1 + $0x2fb8] sm:$0xff]
    %v1556 = vld [vmem:[%s1 + $0x2fc0] sm:$0xff]
    %v1557 = vld [vmem:[%s1 + $0x2fc8] sm:$0xff]
    %v1558 = vld [vmem:[%s1 + $0x2fd0] sm:$0xff]
    %v1559 = vld [vmem:[%s1 + $0x2fd8] sm:$0xff]
    %v1560 = vld [vmem:[%s1 + $0x2fe0] sm:$0xff]
    %v1561 = vld [vmem:[%s1 + $0x2fe8] sm:$0xff]
    %v1562 = vld [vmem:[%s1 + $0x2ff0] sm:$0xff]
    %v1563 = vld [vmem:[%s1 + $0x2ff8] sm:$0xff]
    %v1564 = vld [vmem:[%s1 + $0x3000] sm:$0xff]
    %v1565 = vld [vmem:[%s1 + $0x3008] sm:$0xff]
    %v1566 = vld [vmem:[%s1 + $0x3010] sm:$0xff]
    %v1567 = vld [vmem:[%s1 + $0x3018] sm:$0xff]
    %v1568 = vld [vmem:[%s1 + $0x3020] sm:$0xff]
    %v1569 = vld [vmem:[%s1 + $0x3028] sm:$0xff]
    %v1570 = vld [vmem:[%s1 + $0x3030] sm:$0xff]
    %v1571 = vld [vmem:[%s1 + $0x3038] sm:$0xff]
    %v1572 = vld [vmem:[%s1 + $0x3040] sm:$0xff]
    %v1573 = vld [vmem:[%s1 + $0x3048] sm:$0xff]
    %v1574 = vld [vmem:[%s1 + $0x3050] sm:$0xff]
    %v1575 = vld [vmem:[%s1 + $0x3058] sm:$0xff]
    %v1576 = vld [vmem:[%s1 + $0x3060] sm:$0xff]
    %v1577 = vld [vmem:[%s1 + $0x3068] sm:$0xff]
    %v1578 = vld [vmem:[%s1 + $0x3070] sm:$0xff]
    %v1579 = vld [vmem:[%s1 + $0x3078] sm:$0xff]
    %v1580 = vld [vmem:[%s1 + $0x3080] sm:$0xff]
    %v1581 = vld [vmem:[%s1 + $0x3088] sm:$0xff]
    %v1582 = vld [vmem:[%s1 + $0x3090] sm:$0xff]
    %v1583 = vld [vmem:[%s1 + $0x3098] sm:$0xff]
    %v1584 = vld [vmem:[%s1 + $0x30a0] sm:$0xff]
    %v1585 = vld [vmem:[%s1 + $0x30a8] sm:$0xff]
    %v1586 = vld [vmem:[%s1 + $0x30b0] sm:$0xff]
    %v1587 = vld [vmem:[%s1 + $0x30b8] sm:$0xff]
    %v1588 = vld [vmem:[%s1 + $0x30c0] sm:$0xff]
    %v1589 = vld [vmem:[%s1 + $0x30c8] sm:$0xff]
    %v1590 = vld [vmem:[%s1 + $0x30d0] sm:$0xff]
    %v1591 = vld [vmem:[%s1 + $0x30d8] sm:$0xff]
    %v1592 = vld [vmem:[%s1 + $0x30e0] sm:$0xff]
    %v1593 = vld [vmem:[%s1 + $0x30e8] sm:$0xff]
    %v1594 = vld [vmem:[%s1 + $0x30f0] sm:$0xff]
    %v1595 = vld [vmem:[%s1 + $0x30f8] sm:$0xff]
    %v1596 = vld [vmem:[%s2] sm:$0xf]
    %v1598 = vlaneseq
    %v1599 = vshrl.u32 %v1598, 7
    %v1600 = vsub.s32 0, %v1599
    %v1601 = vrot.slane %v1596, %v1600
    %v1602 = vlaneseq
    %v1603 = vshrl.u32 %v1602, 7
    %v1604 = vsub.s32 1, %v1603
    %v1605 = vrot.slane %v1596, %v1604
    %v1606 = vlaneseq
    %v1607 = vshrl.u32 %v1606, 7
    %v1608 = vsub.s32 2, %v1607
    %v1609 = vrot.slane %v1596, %v1608
    %v1610 = vlaneseq
    %v1611 = vshrl.u32 %v1610, 7
    %v1612 = vsub.s32 3, %v1611
    %v1613 = vrot.slane %v1596, %v1612
    %v1625 = vcombine.high %v21, %v21
    %v1627 = vunpack.c.l.s4 1983009808
    %v1628 = vunpack.c.0.s8 %v1627
    %v1629 = vlaneseq
    %v1630 = vshrl.u32 %v1629, 7
    %v1631 = vsub.s32 %v1628, %v1630
    %v1632 = vrot.slane %v21, %v1631
    %v1634 = vunpack.c.l.s4 1983009808
    %v1635 = vunpack.c.0.s8 %v1634
    %v1636 = vlaneseq
    %v1637 = vshrl.u32 %v1636, 7
    %v1638 = vsub.s32 %v1635, %v1637
    %v1639 = vrot.slane %v1625, %v1638
    %v1640 = vcombine.high %v1632, %v1632
    %v1641 = vcombine.high %v1639, %v1639
    %v1642 = vcombine.high %v22, %v22
    %v1644 = vunpack.c.l.s4 1983009808
    %v1645 = vunpack.c.0.s8 %v1644
    %v1646 = vlaneseq
    %v1647 = vshrl.u32 %v1646, 7
    %v1648 = vsub.s32 %v1645, %v1647
    %v1649 = vrot.slane %v22, %v1648
    %v1651 = vunpack.c.l.s4 1983009808
    %v1652 = vunpack.c.0.s8 %v1651
    %v1653 = vlaneseq
    %v1654 = vshrl.u32 %v1653, 7
    %v1655 = vsub.s32 %v1652, %v1654
    %v1656 = vrot.slane %v1642, %v1655
    %v1657 = vcombine.high %v1649, %v1649
    %v1658 = vcombine.high %v1656, %v1656
    %v1659 = vcombine.high %v23, %v23
    %v1661 = vunpack.c.l.s4 1983009808
    %v1662 = vunpack.c.0.s8 %v1661
    %v1663 = vlaneseq
    %v1664 = vshrl.u32 %v1663, 7
    %v1665 = vsub.s32 %v1662, %v1664
    %v1666 = vrot.slane %v23, %v1665
    %v1668 = vunpack.c.l.s4 1983009808
    %v1669 = vunpack.c.0.s8 %v1668
    %v1670 = vlaneseq
    %v1671 = vshrl.u32 %v1670, 7
    %v1672 = vsub.s32 %v1669, %v1671
    %v1673 = vrot.slane %v1659, %v1672
    %v1674 = vcombine.high %v1666, %v1666
    %v1675 = vcombine.high %v1673, %v1673
    %v1676 = vcombine.high %v24, %v24
    %v1678 = vunpack.c.l.s4 1983009808
    %v1679 = vunpack.c.0.s8 %v1678
    %v1680 = vlaneseq
    %v1681 = vshrl.u32 %v1680, 7
    %v1682 = vsub.s32 %v1679, %v1681
    %v1683 = vrot.slane %v24, %v1682
    %v1685 = vunpack.c.l.s4 1983009808
    %v1686 = vunpack.c.0.s8 %v1685
    %v1687 = vlaneseq
    %v1688 = vshrl.u32 %v1687, 7
    %v1689 = vsub.s32 %v1686, %v1688
    %v1690 = vrot.slane %v1676, %v1689
    %v1691 = vcombine.high %v1683, %v1683
    %v1692 = vcombine.high %v1690, %v1690
    %v1693 = vcombine.high %v25, %v25
    %v1695 = vunpack.c.l.s4 1983009808
    %v1696 = vunpack.c.0.s8 %v1695
    %v1697 = vlaneseq
    %v1698 = vshrl.u32 %v1697, 7
    %v1699 = vsub.s32 %v1696, %v1698
    %v1700 = vrot.slane %v25, %v1699
    %v1702 = vunpack.c.l.s4 1983009808
    %v1703 = vunpack.c.0.s8 %v1702
    %v1704 = vlaneseq
    %v1705 = vshrl.u32 %v1704, 7
    %v1706 = vsub.s32 %v1703, %v1705
    %v1707 = vrot.slane %v1693, %v1706
    %v1708 = vcombine.high %v1700, %v1700
    %v1709 = vcombine.high %v1707, %v1707
    %v1710 = vcombine.high %v26, %v26
    %v1712 = vunpack.c.l.s4 1983009808
    %v1713 = vunpack.c.0.s8 %v1712
    %v1714 = vlaneseq
    %v1715 = vshrl.u32 %v1714, 7
    %v1716 = vsub.s32 %v1713, %v1715
    %v1717 = vrot.slane %v26, %v1716
    %v1719 = vunpack.c.l.s4 1983009808
    %v1720 = vunpack.c.0.s8 %v1719
    %v1721 = vlaneseq
    %v1722 = vshrl.u32 %v1721, 7
    %v1723 = vsub.s32 %v1720, %v1722
    %v1724 = vrot.slane %v1710, %v1723
    %v1725 = vcombine.high %v1717, %v1717
    %v1726 = vcombine.high %v1724, %v1724
    %v1728 = vunpack.c.l.s4 1983009808
    %v1729 = vunpack.c.0.s8 %v1728
    %v1730 = vlaneseq
    %v1731 = vshrl.u32 %v1730, 7
    %v1732 = vsub.s32 %v1729, %v1731
    %v1733 = vrot.slane %v27, %v1732
    %vm1758 = vcmask 523264
    %v1759 = vsel %vm1758, %v1733, 0
    %1761 = vmatprep.subr.mxu0 %v29
    %1762 = vmatpush1.msra.mxu0 %v28
    %1763 = vmatprep.subr.mxu0 %v33
    %1764 = vmatpush1.msra.mxu0 %v32
    %1765 = vmatprep.subr.mxu0 %v37
    %1766 = vmatpush1.msra.mxu0 %v36
    %1767 = vmatprep.subr.mxu0 %v41
    %1768 = vmatpush1.msra.mxu0 %v40
    %1769 = vmatprep.subr.mxu0 %v45
    %1770 = vmatpush1.msra.mxu0 %v44
    %1771 = vmatprep.subr.mxu0 %v49
    %1772 = vmatpush1.msra.mxu0 %v48
    %1773 = vmatprep.subr.mxu0 %v53
    %1774 = vmatpush1.msra.mxu0 %v52
    %1775 = vmatprep.subr.mxu0 %v57
    %1776 = vmatpush1.msra.mxu0 %v56
    %1777 = vmatprep.subr.mxu0 %v61
    %1778 = vmatpush1.msra.mxu0 %v60
    %1779 = vmatprep.subr.mxu0 %v65
    %1780 = vmatpush1.msra.mxu0 %v64
    %1781 = vmatprep.subr.mxu0 %v69
    %1782 = vmatpush1.msra.mxu0 %v68
    %1783 = vmatprep.subr.mxu0 %v73
    %1784 = vmatpush1.msra.mxu0 %v72
    %1785 = vmatprep.subr.mxu0 %v77
    %1786 = vmatpush1.msra.mxu0 %v76
    %1787 = vmatprep.subr.mxu0 %v81
    %1788 = vmatpush1.msra.mxu0 %v80
    %1789 = vmatprep.subr.mxu0 %v85
    %1790 = vmatpush1.msra.mxu0 %v84
    %1791 = vmatprep.subr.mxu0 %v89
    %1792 = vmatpush1.msra.mxu0 %v88
    %1793 = vmatprep.subr.mxu0 %v93
    %1794 = vmatpush1.msra.mxu0 %v92
    %1795 = vmatprep.subr.mxu0 %v97
    %1796 = vmatpush1.msra.mxu0 %v96
    %1797 = vmatprep.subr.mxu0 %v101
    %1798 = vmatpush1.msra.mxu0 %v100
    %1799 = vmatprep.subr.mxu0 %v105
    %1800 = vmatpush1.msra.mxu0 %v104
    %1801 = vmatprep.subr.mxu0 %v109
    %1802 = vmatpush1.msra.mxu0 %v108
    %1803 = vmatprep.subr.mxu0 %v113
    %1804 = vmatpush1.msra.mxu0 %v112
    %1805 = vmatprep.subr.mxu0 %v117
    %1806 = vmatpush1.msra.mxu0 %v116
    %1807 = vmatprep.subr.mxu0 %v121
    %1808 = vmatpush1.msra.mxu0 %v120
    %1809 = vmatprep.subr.mxu0 %v125
    %1810 = vmatpush1.msra.mxu0 %v124
    %1811 = vmatprep.subr.mxu0 %v129
    %1812 = vmatpush1.msra.mxu0 %v128
    %1813 = vmatprep.subr.mxu0 %v133
    %1814 = vmatpush1.msra.mxu0 %v132
    %1815 = vmatprep.subr.mxu0 %v137
    %1816 = vmatpush1.msra.mxu0 %v136
    %1817 = vmatprep.subr.mxu0 %v141
    %1818 = vmatpush1.msra.mxu0 %v140
    %1819 = vmatprep.subr.mxu0 %v145
    %1820 = vmatpush1.msra.mxu0 %v144
    %1821 = vmatprep.subr.mxu0 %v149
    %1822 = vmatpush1.msra.mxu0 %v148
    %1823 = vmatprep.subr.mxu0 %v153
    %1824 = vmatpush1.msra.mxu0 %v152
    %1825 = vmatprep.mubr.f32.mxu0 %v1640
    %1826 = vmatmul.mubr.f32.gmra.mrb[0].mxu0 %v1632
    %v1827 = vpop.f32.mrb[0].mxu0
    %v1828 = vadd.f32 %v1601, %v1827
    %v1829 = vpop.f32.mrb[0].mxu0
    %v1830 = vadd.f32 %v1605, %v1829
    %1831 = vdwg.mxu0
    %1832 = vmatprep.subr.mxu0 %v157
    %1833 = vmatpush1.msra.mxu0 %v156
    %1834 = vmatprep.subr.mxu0 %v161
    %1835 = vmatpush1.msra.mxu0 %v160
    %1836 = vmatprep.subr.mxu0 %v165
    %1837 = vmatpush1.msra.mxu0 %v164
    %1838 = vmatprep.subr.mxu0 %v169
    %1839 = vmatpush1.msra.mxu0 %v168
    %1840 = vmatprep.subr.mxu0 %v173
    %1841 = vmatpush1.msra.mxu0 %v172
    %1842 = vmatprep.subr.mxu0 %v177
    %1843 = vmatpush1.msra.mxu0 %v176
    %1844 = vmatprep.subr.mxu0 %v181
    %1845 = vmatpush1.msra.mxu0 %v180
    %1846 = vmatprep.subr.mxu0 %v185
    %1847 = vmatpush1.msra.mxu0 %v184
    %1848 = vmatprep.subr.mxu0 %v189
    %1849 = vmatpush1.msra.mxu0 %v188
    %1850 = vmatprep.subr.mxu0 %v193
    %1851 = vmatpush1.msra.mxu0 %v192
    %1852 = vmatprep.subr.mxu0 %v197
    %1853 = vmatpush1.msra.mxu0 %v196
    %1854 = vmatprep.subr.mxu0 %v201
    %1855 = vmatpush1.msra.mxu0 %v200
    %1856 = vmatprep.subr.mxu0 %v205
    %1857 = vmatpush1.msra.mxu0 %v204
    %1858 = vmatprep.subr.mxu0 %v209
    %1859 = vmatpush1.msra.mxu0 %v208
    %1860 = vmatprep.subr.mxu0 %v213
    %1861 = vmatpush1.msra.mxu0 %v212
    %1862 = vmatprep.subr.mxu0 %v217
    %1863 = vmatpush1.msra.mxu0 %v216
    %1864 = vmatprep.subr.mxu0 %v221
    %1865 = vmatpush1.msra.mxu0 %v220
    %1866 = vmatprep.subr.mxu0 %v225
    %1867 = vmatpush1.msra.mxu0 %v224
    %1868 = vmatprep.subr.mxu0 %v229
    %1869 = vmatpush1.msra.mxu0 %v228
    %1870 = vmatprep.subr.mxu0 %v233
    %1871 = vmatpush1.msra.mxu0 %v232
    %1872 = vmatprep.subr.mxu0 %v237
    %1873 = vmatpush1.msra.mxu0 %v236
    %1874 = vmatprep.subr.mxu0 %v241
    %1875 = vmatpush1.msra.mxu0 %v240
    %1876 = vmatprep.subr.mxu0 %v245
    %1877 = vmatpush1.msra.mxu0 %v244
    %1878 = vmatprep.subr.mxu0 %v249
    %1879 = vmatpush1.msra.mxu0 %v248
    %1880 = vmatprep.subr.mxu0 %v253
    %1881 = vmatpush1.msra.mxu0 %v252
    %1882 = vmatprep.subr.mxu0 %v257
    %1883 = vmatpush1.msra.mxu0 %v256
    %1884 = vmatprep.subr.mxu0 %v261
    %1885 = vmatpush1.msra.mxu0 %v260
    %1886 = vmatprep.subr.mxu0 %v265
    %1887 = vmatpush1.msra.mxu0 %v264
    %1888 = vmatprep.subr.mxu0 %v269
    %1889 = vmatpush1.msra.mxu0 %v268
    %1890 = vmatprep.subr.mxu0 %v273
    %1891 = vmatpush1.msra.mxu0 %v272
    %1892 = vmatprep.subr.mxu0 %v277
    %1893 = vmatpush1.msra.mxu0 %v276
    %1894 = vmatprep.subr.mxu0 %v281
    %1895 = vmatpush1.msra.mxu0 %v280
    %1896 = vmatprep.mubr.f32.mxu0 %v1641
    %1897 = vmatmul.mubr.f32.gmra.mrb[0].mxu0 %v1639
    %v1898 = vpop.f32.mrb[0].mxu0
    %v1899 = vadd.f32 %v1828, %v1898
    %v1900 = vpop.f32.mrb[0].mxu0
    %v1901 = vadd.f32 %v1830, %v1900
    %1902 = vdwg.mxu0
    %1903 = vmatprep.subr.mxu0 %v285
    %1904 = vmatpush1.msra.mxu0 %v284
    %1905 = vmatprep.subr.mxu0 %v289
    %1906 = vmatpush1.msra.mxu0 %v288
    %1907 = vmatprep.subr.mxu0 %v293
    %1908 = vmatpush1.msra.mxu0 %v292
    %1909 = vmatprep.subr.mxu0 %v297
    %1910 = vmatpush1.msra.mxu0 %v296
    %1911 = vmatprep.subr.mxu0 %v301
    %1912 = vmatpush1.msra.mxu0 %v300
    %1913 = vmatprep.subr.mxu0 %v305
    %1914 = vmatpush1.msra.mxu0 %v304
    %1915 = vmatprep.subr.mxu0 %v309
    %1916 = vmatpush1.msra.mxu0 %v308
    %1917 = vmatprep.subr.mxu0 %v313
    %1918 = vmatpush1.msra.mxu0 %v312
    %1919 = vmatprep.subr.mxu0 %v317
    %1920 = vmatpush1.msra.mxu0 %v316
    %1921 = vmatprep.subr.mxu0 %v321
    %1922 = vmatpush1.msra.mxu0 %v320
    %1923 = vmatprep.subr.mxu0 %v325
    %1924 = vmatpush1.msra.mxu0 %v324
    %1925 = vmatprep.subr.mxu0 %v329
    %1926 = vmatpush1.msra.mxu0 %v328
    %1927 = vmatprep.subr.mxu0 %v333
    %1928 = vmatpush1.msra.mxu0 %v332
    %1929 = vmatprep.subr.mxu0 %v337
    %1930 = vmatpush1.msra.mxu0 %v336
    %1931 = vmatprep.subr.mxu0 %v341
    %1932 = vmatpush1.msra.mxu0 %v340
    %1933 = vmatprep.subr.mxu0 %v345
    %1934 = vmatpush1.msra.mxu0 %v344
    %1935 = vmatprep.subr.mxu0 %v349
    %1936 = vmatpush1.msra.mxu0 %v348
    %1937 = vmatprep.subr.mxu0 %v353
    %1938 = vmatpush1.msra.mxu0 %v352
    %1939 = vmatprep.subr.mxu0 %v357
    %1940 = vmatpush1.msra.mxu0 %v356
    %1941 = vmatprep.subr.mxu0 %v361
    %1942 = vmatpush1.msra.mxu0 %v360
    %1943 = vmatprep.subr.mxu0 %v365
    %1944 = vmatpush1.msra.mxu0 %v364
    %1945 = vmatprep.subr.mxu0 %v369
    %1946 = vmatpush1.msra.mxu0 %v368
    %1947 = vmatprep.subr.mxu0 %v373
    %1948 = vmatpush1.msra.mxu0 %v372
    %1949 = vmatprep.subr.mxu0 %v377
    %1950 = vmatpush1.msra.mxu0 %v376
    %1951 = vmatprep.subr.mxu0 %v381
    %1952 = vmatpush1.msra.mxu0 %v380
    %1953 = vmatprep.subr.mxu0 %v385
    %1954 = vmatpush1.msra.mxu0 %v384
    %1955 = vmatprep.subr.mxu0 %v389
    %1956 = vmatpush1.msra.mxu0 %v388
    %1957 = vmatprep.subr.mxu0 %v393
    %1958 = vmatpush1.msra.mxu0 %v392
    %1959 = vmatprep.subr.mxu0 %v397
    %1960 = vmatpush1.msra.mxu0 %v396
    %1961 = vmatprep.subr.mxu0 %v401
    %1962 = vmatpush1.msra.mxu0 %v400
    %1963 = vmatprep.subr.mxu0 %v405
    %1964 = vmatpush1.msra.mxu0 %v404
    %1965 = vmatprep.subr.mxu0 %v409
    %1966 = vmatpush1.msra.mxu0 %v408
    %1967 = vmatprep.mubr.f32.mxu0 %v1657
    %1968 = vmatmul.mubr.f32.gmra.mrb[0].mxu0 %v1649
    %v1969 = vpop.f32.mrb[0].mxu0
    %v1970 = vadd.f32 %v1899, %v1969
    %v1971 = vpop.f32.mrb[0].mxu0
    %v1972 = vadd.f32 %v1901, %v1971
    %1973 = vdwg.mxu0
    %1974 = vmatprep.subr.mxu0 %v413
    %1975 = vmatpush1.msra.mxu0 %v412
    %1976 = vmatprep.subr.mxu0 %v417
    %1977 = vmatpush1.msra.mxu0 %v416
    %1978 = vmatprep.subr.mxu0 %v421
    %1979 = vmatpush1.msra.mxu0 %v420
    %1980 = vmatprep.subr.mxu0 %v425
    %1981 = vmatpush1.msra.mxu0 %v424
    %1982 = vmatprep.subr.mxu0 %v429
    %1983 = vmatpush1.msra.mxu0 %v428
    %1984 = vmatprep.subr.mxu0 %v433
    %1985 = vmatpush1.msra.mxu0 %v432
    %1986 = vmatprep.subr.mxu0 %v437
    %1987 = vmatpush1.msra.mxu0 %v436
    %1988 = vmatprep.subr.mxu0 %v441
    %1989 = vmatpush1.msra.mxu0 %v440
    %1990 = vmatprep.subr.mxu0 %v445
    %1991 = vmatpush1.msra.mxu0 %v444
    %1992 = vmatprep.subr.mxu0 %v449
    %1993 = vmatpush1.msra.mxu0 %v448
    %1994 = vmatprep.subr.mxu0 %v453
    %1995 = vmatpush1.msra.mxu0 %v452
    %1996 = vmatprep.subr.mxu0 %v457
    %1997 = vmatpush1.msra.mxu0 %v456
    %1998 = vmatprep.subr.mxu0 %v461
    %1999 = vmatpush1.msra.mxu0 %v460
    %2000 = vmatprep.subr.mxu0 %v465
    %2001 = vmatpush1.msra.mxu0 %v464
    %2002 = vmatprep.subr.mxu0 %v469
    %2003 = vmatpush1.msra.mxu0 %v468
    %2004 = vmatprep.subr.mxu0 %v473
    %2005 = vmatpush1.msra.mxu0 %v472
    %2006 = vmatprep.subr.mxu0 %v477
    %2007 = vmatpush1.msra.mxu0 %v476
    %2008 = vmatprep.subr.mxu0 %v481
    %2009 = vmatpush1.msra.mxu0 %v480
    %2010 = vmatprep.subr.mxu0 %v485
    %2011 = vmatpush1.msra.mxu0 %v484
    %2012 = vmatprep.subr.mxu0 %v489
    %2013 = vmatpush1.msra.mxu0 %v488
    %2014 = vmatprep.subr.mxu0 %v493
    %2015 = vmatpush1.msra.mxu0 %v492
    %2016 = vmatprep.subr.mxu0 %v497
    %2017 = vmatpush1.msra.mxu0 %v496
    %2018 = vmatprep.subr.mxu0 %v501
    %2019 = vmatpush1.msra.mxu0 %v500
    %2020 = vmatprep.subr.mxu0 %v505
    %2021 = vmatpush1.msra.mxu0 %v504
    %2022 = vmatprep.subr.mxu0 %v509
    %2023 = vmatpush1.msra.mxu0 %v508
    %2024 = vmatprep.subr.mxu0 %v513
    %2025 = vmatpush1.msra.mxu0 %v512
    %2026 = vmatprep.subr.mxu0 %v517
    %2027 = vmatpush1.msra.mxu0 %v516
    %2028 = vmatprep.subr.mxu0 %v521
    %2029 = vmatpush1.msra.mxu0 %v520
    %2030 = vmatprep.subr.mxu0 %v525
    %2031 = vmatpush1.msra.mxu0 %v524
    %2032 = vmatprep.subr.mxu0 %v529
    %2033 = vmatpush1.msra.mxu0 %v528
    %2034 = vmatprep.subr.mxu0 %v533
    %2035 = vmatpush1.msra.mxu0 %v532
    %2036 = vmatprep.subr.mxu0 %v537
    %2037 = vmatpush1.msra.mxu0 %v536
    %2038 = vmatprep.mubr.f32.mxu0 %v1658
    %2039 = vmatmul.mubr.f32.gmra.mrb[0].mxu0 %v1656
    %v2040 = vpop.f32.mrb[0].mxu0
    %v2041 = vadd.f32 %v1970, %v2040
    %v2042 = vpop.f32.mrb[0].mxu0
    %v2043 = vadd.f32 %v1972, %v2042
    %2044 = vdwg.mxu0
    %2045 = vmatprep.subr.mxu0 %v541
    %2046 = vmatpush1.msra.mxu0 %v540
    %2047 = vmatprep.subr.mxu0 %v545
    %2048 = vmatpush1.msra.mxu0 %v544
    %2049 = vmatprep.subr.mxu0 %v549
    %2050 = vmatpush1.msra.mxu0 %v548
    %2051 = vmatprep.subr.mxu0 %v553
    %2052 = vmatpush1.msra.mxu0 %v552
    %2053 = vmatprep.subr.mxu0 %v557
    %2054 = vmatpush1.msra.mxu0 %v556
    %2055 = vmatprep.subr.mxu0 %v561
    %2056 = vmatpush1.msra.mxu0 %v560
    %2057 = vmatprep.subr.mxu0 %v565
    %2058 = vmatpush1.msra.mxu0 %v564
    %2059 = vmatprep.subr.mxu0 %v569
    %2060 = vmatpush1.msra.mxu0 %v568
    %2061 = vmatprep.subr.mxu0 %v573
    %2062 = vmatpush1.msra.mxu0 %v572
    %2063 = vmatprep.subr.mxu0 %v577
    %2064 = vmatpush1.msra.mxu0 %v576
    %2065 = vmatprep.subr.mxu0 %v581
    %2066 = vmatpush1.msra.mxu0 %v580
    %2067 = vmatprep.subr.mxu0 %v585
    %2068 = vmatpush1.msra.mxu0 %v584
    %2069 = vmatprep.subr.mxu0 %v589
    %2070 = vmatpush1.msra.mxu0 %v588
    %2071 = vmatprep.subr.mxu0 %v593
    %2072 = vmatpush1.msra.mxu0 %v592
    %2073 = vmatprep.subr.mxu0 %v597
    %2074 = vmatpush1.msra.mxu0 %v596
    %2075 = vmatprep.subr.mxu0 %v601
    %2076 = vmatpush1.msra.mxu0 %v600
    %2077 = vmatprep.subr.mxu0 %v605
    %2078 = vmatpush1.msra.mxu0 %v604
    %2079 = vmatprep.subr.mxu0 %v609
    %2080 = vmatpush1.msra.mxu0 %v608
    %2081 = vmatprep.subr.mxu0 %v613
    %2082 = vmatpush1.msra.mxu0 %v612
    %2083 = vmatprep.subr.mxu0 %v617
    %2084 = vmatpush1.msra.mxu0 %v616
    %2085 = vmatprep.subr.mxu0 %v621
    %2086 = vmatpush1.msra.mxu0 %v620
    %2087 = vmatprep.subr.mxu0 %v625
    %2088 = vmatpush1.msra.mxu0 %v624
    %2089 = vmatprep.subr.mxu0 %v629
    %2090 = vmatpush1.msra.mxu0 %v628
    %2091 = vmatprep.subr.mxu0 %v633
    %2092 = vmatpush1.msra.mxu0 %v632
    %2093 = vmatprep.subr.mxu0 %v637
    %2094 = vmatpush1.msra.mxu0 %v636
    %2095 = vmatprep.subr.mxu0 %v641
    %2096 = vmatpush1.msra.mxu0 %v640
    %2097 = vmatprep.subr.mxu0 %v645
    %2098 = vmatpush1.msra.mxu0 %v644
    %2099 = vmatprep.subr.mxu0 %v649
    %2100 = vmatpush1.msra.mxu0 %v648
    %2101 = vmatprep.subr.mxu0 %v653
    %2102 = vmatpush1.msra.mxu0 %v652
    %2103 = vmatprep.subr.mxu0 %v657
    %2104 = vmatpush1.msra.mxu0 %v656
    %2105 = vmatprep.subr.mxu0 %v661
    %2106 = vmatpush1.msra.mxu0 %v660
    %2107 = vmatprep.subr.mxu0 %v665
    %2108 = vmatpush1.msra.mxu0 %v664
    %2109 = vmatprep.mubr.f32.mxu0 %v1674
    %2110 = vmatmul.mubr.f32.gmra.mrb[0].mxu0 %v1666
    %v2111 = vpop.f32.mrb[0].mxu0
    %v2112 = vadd.f32 %v2041, %v2111
    %v2113 = vpop.f32.mrb[0].mxu0
    %v2114 = vadd.f32 %v2043, %v2113
    %2115 = vdwg.mxu0
    %2116 = vmatprep.subr.mxu0 %v669
    %2117 = vmatpush1.msra.mxu0 %v668
    %2118 = vmatprep.subr.mxu0 %v673
    %2119 = vmatpush1.msra.mxu0 %v672
    %2120 = vmatprep.subr.mxu0 %v677
    %2121 = vmatpush1.msra.mxu0 %v676
    %2122 = vmatprep.subr.mxu0 %v681
    %2123 = vmatpush1.msra.mxu0 %v680
    %2124 = vmatprep.subr.mxu0 %v685
    %2125 = vmatpush1.msra.mxu0 %v684
    %2126 = vmatprep.subr.mxu0 %v689
    %2127 = vmatpush1.msra.mxu0 %v688
    %2128 = vmatprep.subr.mxu0 %v693
    %2129 = vmatpush1.msra.mxu0 %v692
    %2130 = vmatprep.subr.mxu0 %v697
    %2131 = vmatpush1.msra.mxu0 %v696
    %2132 = vmatprep.subr.mxu0 %v701
    %2133 = vmatpush1.msra.mxu0 %v700
    %2134 = vmatprep.subr.mxu0 %v705
    %2135 = vmatpush1.msra.mxu0 %v704
    %2136 = vmatprep.subr.mxu0 %v709
    %2137 = vmatpush1.msra.mxu0 %v708
    %2138 = vmatprep.subr.mxu0 %v713
    %2139 = vmatpush1.msra.mxu0 %v712
    %2140 = vmatprep.subr.mxu0 %v717
    %2141 = vmatpush1.msra.mxu0 %v716
    %2142 = vmatprep.subr.mxu0 %v721
    %2143 = vmatpush1.msra.mxu0 %v720
    %2144 = vmatprep.subr.mxu0 %v725
    %2145 = vmatpush1.msra.mxu0 %v724
    %2146 = vmatprep.subr.mxu0 %v729
    %2147 = vmatpush1.msra.mxu0 %v728
    %2148 = vmatprep.subr.mxu0 %v733
    %2149 = vmatpush1.msra.mxu0 %v732
    %2150 = vmatprep.subr.mxu0 %v737
    %2151 = vmatpush1.msra.mxu0 %v736
    %2152 = vmatprep.subr.mxu0 %v741
    %2153 = vmatpush1.msra.mxu0 %v740
    %2154 = vmatprep.subr.mxu0 %v745
    %2155 = vmatpush1.msra.mxu0 %v744
    %2156 = vmatprep.subr.mxu0 %v749
    %2157 = vmatpush1.msra.mxu0 %v748
    %2158 = vmatprep.subr.mxu0 %v753
    %2159 = vmatpush1.msra.mxu0 %v752
    %2160 = vmatprep.subr.mxu0 %v757
    %2161 = vmatpush1.msra.mxu0 %v756
    %2162 = vmatprep.subr.mxu0 %v761
    %2163 = vmatpush1.msra.mxu0 %v760
    %2164 = vmatprep.subr.mxu0 %v765
    %2165 = vmatpush1.msra.mxu0 %v764
    %2166 = vmatprep.subr.mxu0 %v769
    %2167 = vmatpush1.msra.mxu0 %v768
    %2168 = vmatprep.subr.mxu0 %v773
    %2169 = vmatpush1.msra.mxu0 %v772
    %2170 = vmatprep.subr.mxu0 %v777
    %2171 = vmatpush1.msra.mxu0 %v776
    %2172 = vmatprep.subr.mxu0 %v781
    %2173 = vmatpush1.msra.mxu0 %v780
    %2174 = vmatprep.subr.mxu0 %v785
    %2175 = vmatpush1.msra.mxu0 %v784
    %2176 = vmatprep.subr.mxu0 %v789
    %2177 = vmatpush1.msra.mxu0 %v788
    %2178 = vmatprep.subr.mxu0 %v793
    %2179 = vmatpush1.msra.mxu0 %v792
    %2180 = vmatprep.mubr.f32.mxu0 %v1675
    %2181 = vmatmul.mubr.f32.gmra.mrb[0].mxu0 %v1673
    %v2182 = vpop.f32.mrb[0].mxu0
    %v2183 = vadd.f32 %v2112, %v2182
    %v2184 = vpop.f32.mrb[0].mxu0
    %v2185 = vadd.f32 %v2114, %v2184
    %2186 = vdwg.mxu0
    %2187 = vmatprep.subr.mxu0 %v797
    %2188 = vmatpush1.msra.mxu0 %v796
    %2189 = vmatprep.subr.mxu0 %v801
    %2190 = vmatpush1.msra.mxu0 %v800
    %2191 = vmatprep.subr.mxu0 %v805
    %2192 = vmatpush1.msra.mxu0 %v804
    %2193 = vmatprep.subr.mxu0 %v809
    %2194 = vmatpush1.msra.mxu0 %v808
    %2195 = vmatprep.subr.mxu0 %v813
    %2196 = vmatpush1.msra.mxu0 %v812
    %2197 = vmatprep.subr.mxu0 %v817
    %2198 = vmatpush1.msra.mxu0 %v816
    %2199 = vmatprep.subr.mxu0 %v821
    %2200 = vmatpush1.msra.mxu0 %v820
    %2201 = vmatprep.subr.mxu0 %v825
    %2202 = vmatpush1.msra.mxu0 %v824
    %2203 = vmatprep.subr.mxu0 %v829
    %2204 = vmatpush1.msra.mxu0 %v828
    %2205 = vmatprep.subr.mxu0 %v833
    %2206 = vmatpush1.msra.mxu0 %v832
    %2207 = vmatprep.subr.mxu0 %v837
    %2208 = vmatpush1.msra.mxu0 %v836
    %2209 = vmatprep.subr.mxu0 %v841
    %2210 = vmatpush1.msra.mxu0 %v840
    %2211 = vmatprep.subr.mxu0 %v845
    %2212 = vmatpush1.msra.mxu0 %v844
    %2213 = vmatprep.subr.mxu0 %v849
    %2214 = vmatpush1.msra.mxu0 %v848
    %2215 = vmatprep.subr.mxu0 %v853
    %2216 = vmatpush1.msra.mxu0 %v852
    %2217 = vmatprep.subr.mxu0 %v857
    %2218 = vmatpush1.msra.mxu0 %v856
    %2219 = vmatprep.subr.mxu0 %v861
    %2220 = vmatpush1.msra.mxu0 %v860
    %2221 = vmatprep.subr.mxu0 %v865
    %2222 = vmatpush1.msra.mxu0 %v864
    %2223 = vmatprep.subr.mxu0 %v869
    %2224 = vmatpush1.msra.mxu0 %v868
    %2225 = vmatprep.subr.mxu0 %v873
    %2226 = vmatpush1.msra.mxu0 %v872
    %2227 = vmatprep.subr.mxu0 %v877
    %2228 = vmatpush1.msra.mxu0 %v876
    %2229 = vmatprep.subr.mxu0 %v881
    %2230 = vmatpush1.msra.mxu0 %v880
    %2231 = vmatprep.subr.mxu0 %v885
    %2232 = vmatpush1.msra.mxu0 %v884
    %2233 = vmatprep.subr.mxu0 %v889
    %2234 = vmatpush1.msra.mxu0 %v888
    %2235 = vmatprep.subr.mxu0 %v893
    %2236 = vmatpush1.msra.mxu0 %v892
    %2237 = vmatprep.subr.mxu0 %v897
    %2238 = vmatpush1.msra.mxu0 %v896
    %2239 = vmatprep.subr.mxu0 %v901
    %2240 = vmatpush1.msra.mxu0 %v900
    %2241 = vmatprep.subr.mxu0 %v905
    %2242 = vmatpush1.msra.mxu0 %v904
    %2243 = vmatprep.subr.mxu0 %v909
    %2244 = vmatpush1.msra.mxu0 %v908
    %2245 = vmatprep.subr.mxu0 %v913
    %2246 = vmatpush1.msra.mxu0 %v912
    %2247 = vmatprep.subr.mxu0 %v917
    %2248 = vmatpush1.msra.mxu0 %v916
    %2249 = vmatprep.subr.mxu0 %v921
    %2250 = vmatpush1.msra.mxu0 %v920
    %2251 = vmatprep.mubr.f32.mxu0 %v1691
    %2252 = vmatmul.mubr.f32.gmra.mrb[0].mxu0 %v1683
    %v2253 = vpop.f32.mrb[0].mxu0
    %v2254 = vadd.f32 %v2183, %v2253
    %v2255 = vpop.f32.mrb[0].mxu0
    %v2256 = vadd.f32 %v2185, %v2255
    %2257 = vdwg.mxu0
    %2258 = vmatprep.subr.mxu0 %v925
    %2259 = vmatpush1.msra.mxu0 %v924
    %2260 = vmatprep.subr.mxu0 %v929
    %2261 = vmatpush1.msra.mxu0 %v928
    %2262 = vmatprep.subr.mxu0 %v933
    %2263 = vmatpush1.msra.mxu0 %v932
    %2264 = vmatprep.subr.mxu0 %v937
    %2265 = vmatpush1.msra.mxu0 %v936
    %2266 = vmatprep.subr.mxu0 %v941
    %2267 = vmatpush1.msra.mxu0 %v940
    %2268 = vmatprep.subr.mxu0 %v945
    %2269 = vmatpush1.msra.mxu0 %v944
    %2270 = vmatprep.subr.mxu0 %v949
    %2271 = vmatpush1.msra.mxu0 %v948
    %2272 = vmatprep.subr.mxu0 %v953
    %2273 = vmatpush1.msra.mxu0 %v952
    %2274 = vmatprep.subr.mxu0 %v957
    %2275 = vmatpush1.msra.mxu0 %v956
    %2276 = vmatprep.subr.mxu0 %v961
    %2277 = vmatpush1.msra.mxu0 %v960
    %2278 = vmatprep.subr.mxu0 %v965
    %2279 = vmatpush1.msra.mxu0 %v964
    %2280 = vmatprep.subr.mxu0 %v969
    %2281 = vmatpush1.msra.mxu0 %v968
    %2282 = vmatprep.subr.mxu0 %v973
    %2283 = vmatpush1.msra.mxu0 %v972
    %2284 = vmatprep.subr.mxu0 %v977
    %2285 = vmatpush1.msra.mxu0 %v976
    %2286 = vmatprep.subr.mxu0 %v981
    %2287 = vmatpush1.msra.mxu0 %v980
    %2288 = vmatprep.subr.mxu0 %v985
    %2289 = vmatpush1.msra.mxu0 %v984
    %2290 = vmatprep.subr.mxu0 %v989
    %2291 = vmatpush1.msra.mxu0 %v988
    %2292 = vmatprep.subr.mxu0 %v993
    %2293 = vmatpush1.msra.mxu0 %v992
    %2294 = vmatprep.subr.mxu0 %v997
    %2295 = vmatpush1.msra.mxu0 %v996
    %2296 = vmatprep.subr.mxu0 %v1001
    %2297 = vmatpush1.msra.mxu0 %v1000
    %2298 = vmatprep.subr.mxu0 %v1005
    %2299 = vmatpush1.msra.mxu0 %v1004
    %2300 = vmatprep.subr.mxu0 %v1009
    %2301 = vmatpush1.msra.mxu0 %v1008
    %2302 = vmatprep.subr.mxu0 %v1013
    %2303 = vmatpush1.msra.mxu0 %v1012
    %2304 = vmatprep.subr.mxu0 %v1017
    %2305 = vmatpush1.msra.mxu0 %v1016
    %2306 = vmatprep.subr.mxu0 %v1021
    %2307 = vmatpush1.msra.mxu0 %v1020
    %2308 = vmatprep.subr.mxu0 %v1025
    %2309 = vmatpush1.msra.mxu0 %v1024
    %2310 = vmatprep.subr.mxu0 %v1029
    %2311 = vmatpush1.msra.mxu0 %v1028
    %2312 = vmatprep.subr.mxu0 %v1033
    %2313 = vmatpush1.msra.mxu0 %v1032
    %2314 = vmatprep.subr.mxu0 %v1037
    %2315 = vmatpush1.msra.mxu0 %v1036
    %2316 = vmatprep.subr.mxu0 %v1041
    %2317 = vmatpush1.msra.mxu0 %v1040
    %2318 = vmatprep.subr.mxu0 %v1045
    %2319 = vmatpush1.msra.mxu0 %v1044
    %2320 = vmatprep.subr.mxu0 %v1049
    %2321 = vmatpush1.msra.mxu0 %v1048
    %2322 = vmatprep.mubr.f32.mxu0 %v1692
    %2323 = vmatmul.mubr.f32.gmra.mrb[0].mxu0 %v1690
    %v2324 = vpop.f32.mrb[0].mxu0
    %v2325 = vadd.f32 %v2254, %v2324
    %v2326 = vpop.f32.mrb[0].mxu0
    %v2327 = vadd.f32 %v2256, %v2326
    %2328 = vdwg.mxu0
    %2329 = vmatprep.subr.mxu0 %v1053
    %2330 = vmatpush1.msra.mxu0 %v1052
    %2331 = vmatprep.subr.mxu0 %v1057
    %2332 = vmatpush1.msra.mxu0 %v1056
    %2333 = vmatprep.subr.mxu0 %v1061
    %2334 = vmatpush1.msra.mxu0 %v1060
    %2335 = vmatprep.subr.mxu0 %v1065
    %2336 = vmatpush1.msra.mxu0 %v1064
    %2337 = vmatprep.subr.mxu0 %v1069
    %2338 = vmatpush1.msra.mxu0 %v1068
    %2339 = vmatprep.subr.mxu0 %v1073
    %2340 = vmatpush1.msra.mxu0 %v1072
    %2341 = vmatprep.subr.mxu0 %v1077
    %2342 = vmatpush1.msra.mxu0 %v1076
    %2343 = vmatprep.subr.mxu0 %v1081
    %2344 = vmatpush1.msra.mxu0 %v1080
    %2345 = vmatprep.subr.mxu0 %v1085
    %2346 = vmatpush1.msra.mxu0 %v1084
    %2347 = vmatprep.subr.mxu0 %v1089
    %2348 = vmatpush1.msra.mxu0 %v1088
    %2349 = vmatprep.subr.mxu0 %v1093
    %2350 = vmatpush1.msra.mxu0 %v1092
    %2351 = vmatprep.subr.mxu0 %v1097
    %2352 = vmatpush1.msra.mxu0 %v1096
    %2353 = vmatprep.subr.mxu0 %v1101
    %2354 = vmatpush1.msra.mxu0 %v1100
    %2355 = vmatprep.subr.mxu0 %v1105
    %2356 = vmatpush1.msra.mxu0 %v1104
    %2357 = vmatprep.subr.mxu0 %v1109
    %2358 = vmatpush1.msra.mxu0 %v1108
    %2359 = vmatprep.subr.mxu0 %v1113
    %2360 = vmatpush1.msra.mxu0 %v1112
    %2361 = vmatprep.subr.mxu0 %v1117
    %2362 = vmatpush1.msra.mxu0 %v1116
    %2363 = vmatprep.subr.mxu0 %v1121
    %2364 = vmatpush1.msra.mxu0 %v1120
    %2365 = vmatprep.subr.mxu0 %v1125
    %2366 = vmatpush1.msra.mxu0 %v1124
    %2367 = vmatprep.subr.mxu0 %v1129
    %2368 = vmatpush1.msra.mxu0 %v1128
    %2369 = vmatprep.subr.mxu0 %v1133
    %2370 = vmatpush1.msra.mxu0 %v1132
    %2371 = vmatprep.subr.mxu0 %v1137
    %2372 = vmatpush1.msra.mxu0 %v1136
    %2373 = vmatprep.subr.mxu0 %v1141
    %2374 = vmatpush1.msra.mxu0 %v1140
    %2375 = vmatprep.subr.mxu0 %v1145
    %2376 = vmatpush1.msra.mxu0 %v1144
    %2377 = vmatprep.subr.mxu0 %v1149
    %2378 = vmatpush1.msra.mxu0 %v1148
    %2379 = vmatprep.subr.mxu0 %v1153
    %2380 = vmatpush1.msra.mxu0 %v1152
    %2381 = vmatprep.subr.mxu0 %v1157
    %2382 = vmatpush1.msra.mxu0 %v1156
    %2383 = vmatprep.subr.mxu0 %v1161
    %2384 = vmatpush1.msra.mxu0 %v1160
    %2385 = vmatprep.subr.mxu0 %v1165
    %2386 = vmatpush1.msra.mxu0 %v1164
    %2387 = vmatprep.subr.mxu0 %v1169
    %2388 = vmatpush1.msra.mxu0 %v1168
    %2389 = vmatprep.subr.mxu0 %v1173
    %2390 = vmatpush1.msra.mxu0 %v1172
    %2391 = vmatprep.subr.mxu0 %v1177
    %2392 = vmatpush1.msra.mxu0 %v1176
    %2393 = vmatprep.mubr.f32.mxu0 %v1708
    %2394 = vmatmul.mubr.f32.gmra.mrb[0].mxu0 %v1700
    %v2395 = vpop.f32.mrb[0].mxu0
    %v2396 = vadd.f32 %v2325, %v2395
    %v2397 = vpop.f32.mrb[0].mxu0
    %v2398 = vadd.f32 %v2327, %v2397
    %2399 = vdwg.mxu0
    %2400 = vmatprep.subr.mxu0 %v1181
    %2401 = vmatpush1.msra.mxu0 %v1180
    %2402 = vmatprep.subr.mxu0 %v1185
    %2403 = vmatpush1.msra.mxu0 %v1184
    %2404 = vmatprep.subr.mxu0 %v1189
    %2405 = vmatpush1.msra.mxu0 %v1188
    %2406 = vmatprep.subr.mxu0 %v1193
    %2407 = vmatpush1.msra.mxu0 %v1192
    %2408 = vmatprep.subr.mxu0 %v1197
    %2409 = vmatpush1.msra.mxu0 %v1196
    %2410 = vmatprep.subr.mxu0 %v1201
    %2411 = vmatpush1.msra.mxu0 %v1200
    %2412 = vmatprep.subr.mxu0 %v1205
    %2413 = vmatpush1.msra.mxu0 %v1204
    %2414 = vmatprep.subr.mxu0 %v1209
    %2415 = vmatpush1.msra.mxu0 %v1208
    %2416 = vmatprep.subr.mxu0 %v1213
    %2417 = vmatpush1.msra.mxu0 %v1212
    %2418 = vmatprep.subr.mxu0 %v1217
    %2419 = vmatpush1.msra.mxu0 %v1216
    %2420 = vmatprep.subr.mxu0 %v1221
    %2421 = vmatpush1.msra.mxu0 %v1220
    %2422 = vmatprep.subr.mxu0 %v1225
    %2423 = vmatpush1.msra.mxu0 %v1224
    %2424 = vmatprep.subr.mxu0 %v1229
    %2425 = vmatpush1.msra.mxu0 %v1228
    %2426 = vmatprep.subr.mxu0 %v1233
    %2427 = vmatpush1.msra.mxu0 %v1232
    %2428 = vmatprep.subr.mxu0 %v1237
    %2429 = vmatpush1.msra.mxu0 %v1236
    %2430 = vmatprep.subr.mxu0 %v1241
    %2431 = vmatpush1.msra.mxu0 %v1240
    %2432 = vmatprep.subr.mxu0 %v1245
    %2433 = vmatpush1.msra.mxu0 %v1244
    %2434 = vmatprep.subr.mxu0 %v1249
    %2435 = vmatpush1.msra.mxu0 %v1248
    %2436 = vmatprep.subr.mxu0 %v1253
    %2437 = vmatpush1.msra.mxu0 %v1252
    %2438 = vmatprep.subr.mxu0 %v1257
    %2439 = vmatpush1.msra.mxu0 %v1256
    %2440 = vmatprep.subr.mxu0 %v1261
    %2441 = vmatpush1.msra.mxu0 %v1260
    %2442 = vmatprep.subr.mxu0 %v1265
    %2443 = vmatpush1.msra.mxu0 %v1264
    %2444 = vmatprep.subr.mxu0 %v1269
    %2445 = vmatpush1.msra.mxu0 %v1268
    %2446 = vmatprep.subr.mxu0 %v1273
    %2447 = vmatpush1.msra.mxu0 %v1272
    %2448 = vmatprep.subr.mxu0 %v1277
    %2449 = vmatpush1.msra.mxu0 %v1276
    %2450 = vmatprep.subr.mxu0 %v1281
    %2451 = vmatpush1.msra.mxu0 %v1280
    %2452 = vmatprep.subr.mxu0 %v1285
    %2453 = vmatpush1.msra.mxu0 %v1284
    %2454 = vmatprep.subr.mxu0 %v1289
    %2455 = vmatpush1.msra.mxu0 %v1288
    %2456 = vmatprep.subr.mxu0 %v1293
    %2457 = vmatpush1.msra.mxu0 %v1292
    %2458 = vmatprep.subr.mxu0 %v1297
    %2459 = vmatpush1.msra.mxu0 %v1296
    %2460 = vmatprep.subr.mxu0 %v1301
    %2461 = vmatpush1.msra.mxu0 %v1300
    %2462 = vmatprep.subr.mxu0 %v1305
    %2463 = vmatpush1.msra.mxu0 %v1304
    %2464 = vmatprep.mubr.f32.mxu0 %v1709
    %2465 = vmatmul.mubr.f32.gmra.mrb[0].mxu0 %v1707
    %v2466 = vpop.f32.mrb[0].mxu0
    %v2467 = vadd.f32 %v2396, %v2466
    %v2468 = vpop.f32.mrb[0].mxu0
    %v2469 = vadd.f32 %v2398, %v2468
    %2470 = vdwg.mxu0
    %2471 = vmatprep.subr.mxu0 %v1309
    %2472 = vmatpush1.msra.mxu0 %v1308
    %2473 = vmatprep.subr.mxu0 %v1313
    %2474 = vmatpush1.msra.mxu0 %v1312
    %2475 = vmatprep.subr.mxu0 %v1317
    %2476 = vmatpush1.msra.mxu0 %v1316
    %2477 = vmatprep.subr.mxu0 %v1321
    %2478 = vmatpush1.msra.mxu0 %v1320
    %2479 = vmatprep.subr.mxu0 %v1325
    %2480 = vmatpush1.msra.mxu0 %v1324
    %2481 = vmatprep.subr.mxu0 %v1329
    %2482 = vmatpush1.msra.mxu0 %v1328
    %2483 = vmatprep.subr.mxu0 %v1333
    %2484 = vmatpush1.msra.mxu0 %v1332
    %2485 = vmatprep.subr.mxu0 %v1337
    %2486 = vmatpush1.msra.mxu0 %v1336
    %2487 = vmatprep.subr.mxu0 %v1341
    %2488 = vmatpush1.msra.mxu0 %v1340
    %2489 = vmatprep.subr.mxu0 %v1345
    %2490 = vmatpush1.msra.mxu0 %v1344
    %2491 = vmatprep.subr.mxu0 %v1349
    %2492 = vmatpush1.msra.mxu0 %v1348
    %2493 = vmatprep.subr.mxu0 %v1353
    %2494 = vmatpush1.msra.mxu0 %v1352
    %2495 = vmatprep.subr.mxu0 %v1357
    %2496 = vmatpush1.msra.mxu0 %v1356
    %2497 = vmatprep.subr.mxu0 %v1361
    %2498 = vmatpush1.msra.mxu0 %v1360
    %2499 = vmatprep.subr.mxu0 %v1365
    %2500 = vmatpush1.msra.mxu0 %v1364
    %2501 = vmatprep.subr.mxu0 %v1369
    %2502 = vmatpush1.msra.mxu0 %v1368
    %2503 = vmatprep.subr.mxu0 %v1373
    %2504 = vmatpush1.msra.mxu0 %v1372
    %2505 = vmatprep.subr.mxu0 %v1377
    %2506 = vmatpush1.msra.mxu0 %v1376
    %2507 = vmatprep.subr.mxu0 %v1381
    %2508 = vmatpush1.msra.mxu0 %v1380
    %2509 = vmatprep.subr.mxu0 %v1385
    %2510 = vmatpush1.msra.mxu0 %v1384
    %2511 = vmatprep.subr.mxu0 %v1389
    %2512 = vmatpush1.msra.mxu0 %v1388
    %2513 = vmatprep.subr.mxu0 %v1393
    %2514 = vmatpush1.msra.mxu0 %v1392
    %2515 = vmatprep.subr.mxu0 %v1397
    %2516 = vmatpush1.msra.mxu0 %v1396
    %2517 = vmatprep.subr.mxu0 %v1401
    %2518 = vmatpush1.msra.mxu0 %v1400
    %2519 = vmatprep.subr.mxu0 %v1405
    %2520 = vmatpush1.msra.mxu0 %v1404
    %2521 = vmatprep.subr.mxu0 %v1409
    %2522 = vmatpush1.msra.mxu0 %v1408
    %2523 = vmatprep.subr.mxu0 %v1413
    %2524 = vmatpush1.msra.mxu0 %v1412
    %2525 = vmatprep.subr.mxu0 %v1417
    %2526 = vmatpush1.msra.mxu0 %v1416
    %2527 = vmatprep.subr.mxu0 %v1421
    %2528 = vmatpush1.msra.mxu0 %v1420
    %2529 = vmatprep.subr.mxu0 %v1425
    %2530 = vmatpush1.msra.mxu0 %v1424
    %2531 = vmatprep.subr.mxu0 %v1429
    %2532 = vmatpush1.msra.mxu0 %v1428
    %2533 = vmatprep.subr.mxu0 %v1433
    %2534 = vmatpush1.msra.mxu0 %v1432
    %2535 = vmatprep.mubr.f32.mxu0 %v1725
    %2536 = vmatmul.mubr.f32.gmra.mrb[0].mxu0 %v1717
    %v2537 = vpop.f32.mrb[0].mxu0
    %v2538 = vadd.f32 %v2467, %v2537
    %v2539 = vpop.f32.mrb[0].mxu0
    %v2540 = vadd.f32 %v2469, %v2539
    %2541 = vdwg.mxu0
    %2542 = vmatprep.subr.mxu0 %v1437
    %2543 = vmatpush1.msra.mxu0 %v1436
    %2544 = vmatprep.subr.mxu0 %v1441
    %2545 = vmatpush1.msra.mxu0 %v1440
    %2546 = vmatprep.subr.mxu0 %v1445
    %2547 = vmatpush1.msra.mxu0 %v1444
    %2548 = vmatprep.subr.mxu0 %v1449
    %2549 = vmatpush1.msra.mxu0 %v1448
    %2550 = vmatprep.subr.mxu0 %v1453
    %2551 = vmatpush1.msra.mxu0 %v1452
    %2552 = vmatprep.subr.mxu0 %v1457
    %2553 = vmatpush1.msra.mxu0 %v1456
    %2554 = vmatprep.subr.mxu0 %v1461
    %2555 = vmatpush1.msra.mxu0 %v1460
    %2556 = vmatprep.subr.mxu0 %v1465
    %2557 = vmatpush1.msra.mxu0 %v1464
    %2558 = vmatprep.subr.mxu0 %v1469
    %2559 = vmatpush1.msra.mxu0 %v1468
    %2560 = vmatprep.subr.mxu0 %v1473
    %2561 = vmatpush1.msra.mxu0 %v1472
    %2562 = vmatprep.subr.mxu0 %v1477
    %2563 = vmatpush1.msra.mxu0 %v1476
    %2564 = vmatprep.subr.mxu0 %v1481
    %2565 = vmatpush1.msra.mxu0 %v1480
    %2566 = vmatprep.subr.mxu0 %v1485
    %2567 = vmatpush1.msra.mxu0 %v1484
    %2568 = vmatprep.subr.mxu0 %v1489
    %2569 = vmatpush1.msra.mxu0 %v1488
    %2570 = vmatprep.subr.mxu0 %v1493
    %2571 = vmatpush1.msra.mxu0 %v1492
    %2572 = vmatprep.subr.mxu0 %v1497
    %2573 = vmatpush1.msra.mxu0 %v1496
    %2574 = vmatprep.subr.mxu0 %v1501
    %2575 = vmatpush1.msra.mxu0 %v1500
    %2576 = vmatprep.subr.mxu0 %v1505
    %2577 = vmatpush1.msra.mxu0 %v1504
    %2578 = vmatprep.subr.mxu0 %v1509
    %2579 = vmatpush1.msra.mxu0 %v1508
    %2580 = vmatprep.subr.mxu0 %v1513
    %2581 = vmatpush1.msra.mxu0 %v1512
    %2582 = vmatprep.subr.mxu0 %v1517
    %2583 = vmatpush1.msra.mxu0 %v1516
    %2584 = vmatprep.subr.mxu0 %v1521
    %2585 = vmatpush1.msra.mxu0 %v1520
    %2586 = vmatprep.subr.mxu0 %v1525
    %2587 = vmatpush1.msra.mxu0 %v1524
    %2588 = vmatprep.subr.mxu0 %v1529
    %2589 = vmatpush1.msra.mxu0 %v1528
    %2590 = vmatprep.subr.mxu0 %v1533
    %2591 = vmatpush1.msra.mxu0 %v1532
    %2592 = vmatprep.subr.mxu0 %v1537
    %2593 = vmatpush1.msra.mxu0 %v1536
    %2594 = vmatprep.subr.mxu0 %v1541
    %2595 = vmatpush1.msra.mxu0 %v1540
    %2596 = vmatprep.subr.mxu0 %v1545
    %2597 = vmatpush1.msra.mxu0 %v1544
    %2598 = vmatprep.subr.mxu0 %v1549
    %2599 = vmatpush1.msra.mxu0 %v1548
    %2600 = vmatprep.subr.mxu0 %v1553
    %2601 = vmatpush1.msra.mxu0 %v1552
    %2602 = vmatprep.subr.mxu0 %v1557
    %2603 = vmatpush1.msra.mxu0 %v1556
    %2604 = vmatprep.subr.mxu0 %v1561
    %2605 = vmatpush1.msra.mxu0 %v1560
    %2606 = vmatprep.mubr.f32.mxu0 %v1726
    %2607 = vmatmul.mubr.f32.gmra.mrb[0].mxu0 %v1724
    %v2608 = vpop.f32.mrb[0].mxu0
    %v2609 = vadd.f32 %v2538, %v2608
    %v2610 = vpop.f32.mrb[0].mxu0
    %v2611 = vadd.f32 %v2540, %v2610
    %2612 = vdwg.mxu0
    %2613 = vmatprep.subr.mxu0 %v1565
    %2614 = vmatpush1.msra.mxu0 %v1564
    %2615 = vmatprep.subr.mxu0 %v1569
    %2616 = vmatpush1.msra.mxu0 %v1568
    %2617 = vmatprep.subr.mxu0 %v1573
    %2618 = vmatpush1.msra.mxu0 %v1572
    %2619 = vmatprep.subr.mxu0 %v1577
    %2620 = vmatpush1.msra.mxu0 %v1576
    %2621 = vmatprep.subr.mxu0 %v1581
    %2622 = vmatpush1.msra.mxu0 %v1580
    %2623 = vmatprep.subr.mxu0 %v1585
    %2624 = vmatpush1.msra.mxu0 %v1584
    %2625 = vmatprep.subr.mxu0 %v1589
    %2626 = vmatpush1.msra.mxu0 %v1588
    %2627 = vmatprep.subr.mxu0 %v1593
    %2628 = vmatpush1.msra.mxu0 %v1592
    %2629 = vmatprep.subr.mxu0 0.0
    %2630 = vmatpush1.msra.mxu0 0.0
    %2631 = vmatprep.subr.mxu0 0.0
    %2632 = vmatpush1.msra.mxu0 0.0
    %2633 = vmatprep.subr.mxu0 0.0
    %2634 = vmatpush1.msra.mxu0 0.0
    %2635 = vmatprep.subr.mxu0 0.0
    %2636 = vmatpush1.msra.mxu0 0.0
    %2637 = vmatprep.subr.mxu0 0.0
    %2638 = vmatpush1.msra.mxu0 0.0
    %2639 = vmatprep.subr.mxu0 0.0
    %2640 = vmatpush1.msra.mxu0 0.0
    %2641 = vmatprep.subr.mxu0 0.0
    %2642 = vmatpush1.msra.mxu0 0.0
    %2643 = vmatprep.subr.mxu0 0.0
    %2644 = vmatpush1.msra.mxu0 0.0
    %2645 = vmatprep.subr.mxu0 0.0
    %2646 = vmatpush1.msra.mxu0 0.0
    %2647 = vmatprep.subr.mxu0 0.0
    %2648 = vmatpush1.msra.mxu0 0.0
    %2649 = vmatprep.subr.mxu0 0.0
    %2650 = vmatpush1.msra.mxu0 0.0
    %2651 = vmatprep.subr.mxu0 0.0
    %2652 = vmatpush1.msra.mxu0 0.0
    %2653 = vmatprep.subr.mxu0 0.0
    %2654 = vmatpush1.msra.mxu0 0.0
    %2655 = vmatprep.subr.mxu0 0.0
    %2656 = vmatpush1.msra.mxu0 0.0
    %2657 = vmatprep.subr.mxu0 0.0
    %2658 = vmatpush1.msra.mxu0 0.0
    %2659 = vmatprep.subr.mxu0 0.0
    %2660 = vmatpush1.msra.mxu0 0.0
    %2661 = vmatprep.subr.mxu0 0.0
    %2662 = vmatpush1.msra.mxu0 0.0
    %2663 = vmatprep.subr.mxu0 0.0
    %2664 = vmatpush1.msra.mxu0 0.0
    %2665 = vmatprep.subr.mxu0 0.0
    %2666 = vmatpush1.msra.mxu0 0.0
    %2667 = vmatprep.subr.mxu0 0.0
    %2668 = vmatpush1.msra.mxu0 0.0
    %2669 = vmatprep.subr.mxu0 0.0
    %2670 = vmatpush1.msra.mxu0 0.0
    %2671 = vmatprep.subr.mxu0 0.0
    %2672 = vmatpush1.msra.mxu0 0.0
    %2673 = vmatprep.subr.mxu0 0.0
    %2674 = vmatpush1.msra.mxu0 0.0
    %2675 = vmatprep.subr.mxu0 0.0
    %2676 = vmatpush1.msra.mxu0 0.0
    %2677 = vmatprep.mubr.f32.mxu0 0.0
    %2678 = vmatmul.mubr.f32.gmra.mrb[0].mxu0 %v1759
    %v2679 = vpop.f32.mrb[0].mxu0
    %v2680 = vadd.f32 %v2609, %v2679
    %v2681 = vpop.f32.mrb[0].mxu0
    %v2682 = vadd.f32 %v2611, %v2681
    %2683 = vdwg.mxu0
    %2684 = vmatprep.subr.mxu0 %v31
    %2685 = vmatpush1.msra.mxu0 %v30
    %2686 = vmatprep.subr.mxu0 %v35
    %2687 = vmatpush1.msra.mxu0 %v34
    %2688 = vmatprep.subr.mxu0 %v39
    %2689 = vmatpush1.msra.mxu0 %v38
    %2690 = vmatprep.subr.mxu0 %v43
    %2691 = vmatpush1.msra.mxu0 %v42
    %2692 = vmatprep.subr.mxu0 %v47
    %2693 = vmatpush1.msra.mxu0 %v46
    %2694 = vmatprep.subr.mxu0 %v51
    %2695 = vmatpush1.msra.mxu0 %v50
    %2696 = vmatprep.subr.mxu0 %v55
    %2697 = vmatpush1.msra.mxu0 %v54
    %2698 = vmatprep.subr.mxu0 %v59
    %2699 = vmatpush1.msra.mxu0 %v58
    %2700 = vmatprep.subr.mxu0 %v63
    %2701 = vmatpush1.msra.mxu0 %v62
    %2702 = vmatprep.subr.mxu0 %v67
    %2703 = vmatpush1.msra.mxu0 %v66
    %2704 = vmatprep.subr.mxu0 %v71
    %2705 = vmatpush1.msra.mxu0 %v70
    %2706 = vmatprep.subr.mxu0 %v75
    %2707 = vmatpush1.msra.mxu0 %v74
    %2708 = vmatprep.subr.mxu0 %v79
    %2709 = vmatpush1.msra.mxu0 %v78
    %2710 = vmatprep.subr.mxu0 %v83
    %2711 = vmatpush1.msra.mxu0 %v82
    %2712 = vmatprep.subr.mxu0 %v87
    %2713 = vmatpush1.msra.mxu0 %v86
    %2714 = vmatprep.subr.mxu0 %v91
    %2715 = vmatpush1.msra.mxu0 %v90
    %2716 = vmatprep.subr.mxu0 %v95
    %2717 = vmatpush1.msra.mxu0 %v94
    %2718 = vmatprep.subr.mxu0 %v99
    %2719 = vmatpush1.msra.mxu0 %v98
    %2720 = vmatprep.subr.mxu0 %v103
    %2721 = vmatpush1.msra.mxu0 %v102
    %2722 = vmatprep.subr.mxu0 %v107
    %2723 = vmatpush1.msra.mxu0 %v106
    %2724 = vmatprep.subr.mxu0 %v111
    %2725 = vmatpush1.msra.mxu0 %v110
    %2726 = vmatprep.subr.mxu0 %v115
    %2727 = vmatpush1.msra.mxu0 %v114
    %2728 = vmatprep.subr.mxu0 %v119
    %2729 = vmatpush1.msra.mxu0 %v118
    %2730 = vmatprep.subr.mxu0 %v123
    %2731 = vmatpush1.msra.mxu0 %v122
    %2732 = vmatprep.subr.mxu0 %v127
    %2733 = vmatpush1.msra.mxu0 %v126
    %2734 = vmatprep.subr.mxu0 %v131
    %2735 = vmatpush1.msra.mxu0 %v130
    %2736 = vmatprep.subr.mxu0 %v135
    %2737 = vmatpush1.msra.mxu0 %v134
    %2738 = vmatprep.subr.mxu0 %v139
    %2739 = vmatpush1.msra.mxu0 %v138
    %2740 = vmatprep.subr.mxu0 %v143
    %2741 = vmatpush1.msra.mxu0 %v142
    %2742 = vmatprep.subr.mxu0 %v147
    %2743 = vmatpush1.msra.mxu0 %v146
    %2744 = vmatprep.subr.mxu0 %v151
    %2745 = vmatpush1.msra.mxu0 %v150
    %2746 = vmatprep.subr.mxu0 %v155
    %2747 = vmatpush1.msra.mxu0 %v154
    %2748 = vmatprep.mubr.f32.mxu0 %v1640
    %2749 = vmatmul.mubr.f32.gmra.mrb[0].mxu0 %v1632
    %v2750 = vpop.f32.mrb[0].mxu0
    %v2751 = vadd.f32 %v1609, %v2750
    %v2752 = vpop.f32.mrb[0].mxu0
    %v2753 = vadd.f32 %v1613, %v2752
    %2754 = vdwg.mxu0
    %2755 = vmatprep.subr.mxu0 %v159
    %2756 = vmatpush1.msra.mxu0 %v158
    %2757 = vmatprep.subr.mxu0 %v163
    %2758 = vmatpush1.msra.mxu0 %v162
    %2759 = vmatprep.subr.mxu0 %v167
    %2760 = vmatpush1.msra.mxu0 %v166
    %2761 = vmatprep.subr.mxu0 %v171
    %2762 = vmatpush1.msra.mxu0 %v170
    %2763 = vmatprep.subr.mxu0 %v175
    %2764 = vmatpush1.msra.mxu0 %v174
    %2765 = vmatprep.subr.mxu0 %v179
    %2766 = vmatpush1.msra.mxu0 %v178
    %2767 = vmatprep.subr.mxu0 %v183
    %2768 = vmatpush1.msra.mxu0 %v182
    %2769 = vmatprep.subr.mxu0 %v187
    %2770 = vmatpush1.msra.mxu0 %v186
    %2771 = vmatprep.subr.mxu0 %v191
    %2772 = vmatpush1.msra.mxu0 %v190
    %2773 = vmatprep.subr.mxu0 %v195
    %2774 = vmatpush1.msra.mxu0 %v194
    %2775 = vmatprep.subr.mxu0 %v199
    %2776 = vmatpush1.msra.mxu0 %v198
    %2777 = vmatprep.subr.mxu0 %v203
    %2778 = vmatpush1.msra.mxu0 %v202
    %2779 = vmatprep.subr.mxu0 %v207
    %2780 = vmatpush1.msra.mxu0 %v206
    %2781 = vmatprep.subr.mxu0 %v211
    %2782 = vmatpush1.msra.mxu0 %v210
    %2783 = vmatprep.subr.mxu0 %v215
    %2784 = vmatpush1.msra.mxu0 %v214
    %2785 = vmatprep.subr.mxu0 %v219
    %2786 = vmatpush1.msra.mxu0 %v218
    %2787 = vmatprep.subr.mxu0 %v223
    %2788 = vmatpush1.msra.mxu0 %v222
    %2789 = vmatprep.subr.mxu0 %v227
    %2790 = vmatpush1.msra.mxu0 %v226
    %2791 = vmatprep.subr.mxu0 %v231
    %2792 = vmatpush1.msra.mxu0 %v230
    %2793 = vmatprep.subr.mxu0 %v235
    %2794 = vmatpush1.msra.mxu0 %v234
    %2795 = vmatprep.subr.mxu0 %v239
    %2796 = vmatpush1.msra.mxu0 %v238
    %2797 = vmatprep.subr.mxu0 %v243
    %2798 = vmatpush1.msra.mxu0 %v242
    %2799 = vmatprep.subr.mxu0 %v247
    %2800 = vmatpush1.msra.mxu0 %v246
    %2801 = vmatprep.subr.mxu0 %v251
    %2802 = vmatpush1.msra.mxu0 %v250
    %2803 = vmatprep.subr.mxu0 %v255
    %2804 = vmatpush1.msra.mxu0 %v254
    %2805 = vmatprep.subr.mxu0 %v259
    %2806 = vmatpush1.msra.mxu0 %v258
    %2807 = vmatprep.subr.mxu0 %v263
    %2808 = vmatpush1.msra.mxu0 %v262
    %2809 = vmatprep.subr.mxu0 %v267
    %2810 = vmatpush1.msra.mxu0 %v266
    %2811 = vmatprep.subr.mxu0 %v271
    %2812 = vmatpush1.msra.mxu0 %v270
    %2813 = vmatprep.subr.mxu0 %v275
    %2814 = vmatpush1.msra.mxu0 %v274
    %2815 = vmatprep.subr.mxu0 %v279
    %2816 = vmatpush1.msra.mxu0 %v278
    %2817 = vmatprep.subr.mxu0 %v283
    %2818 = vmatpush1.msra.mxu0 %v282
    %2819 = vmatprep.mubr.f32.mxu0 %v1641
    %2820 = vmatmul.mubr.f32.gmra.mrb[0].mxu0 %v1639
    %v2821 = vpop.f32.mrb[0].mxu0
    %v2822 = vadd.f32 %v2751, %v2821
    %v2823 = vpop.f32.mrb[0].mxu0
    %v2824 = vadd.f32 %v2753, %v2823
    %2825 = vdwg.mxu0
    %2826 = vmatprep.subr.mxu0 %v287
    %2827 = vmatpush1.msra.mxu0 %v286
    %2828 = vmatprep.subr.mxu0 %v291
    %2829 = vmatpush1.msra.mxu0 %v290
    %2830 = vmatprep.subr.mxu0 %v295
    %2831 = vmatpush1.msra.mxu0 %v294
    %2832 = vmatprep.subr.mxu0 %v299
    %2833 = vmatpush1.msra.mxu0 %v298
    %2834 = vmatprep.subr.mxu0 %v303
    %2835 = vmatpush1.msra.mxu0 %v302
    %2836 = vmatprep.subr.mxu0 %v307
    %2837 = vmatpush1.msra.mxu0 %v306
    %2838 = vmatprep.subr.mxu0 %v311
    %2839 = vmatpush1.msra.mxu0 %v310
    %2840 = vmatprep.subr.mxu0 %v315
    %2841 = vmatpush1.msra.mxu0 %v314
    %2842 = vmatprep.subr.mxu0 %v319
    %2843 = vmatpush1.msra.mxu0 %v318
    %2844 = vmatprep.subr.mxu0 %v323
    %2845 = vmatpush1.msra.mxu0 %v322
    %2846 = vmatprep.subr.mxu0 %v327
    %2847 = vmatpush1.msra.mxu0 %v326
    %2848 = vmatprep.subr.mxu0 %v331
    %2849 = vmatpush1.msra.mxu0 %v330
    %2850 = vmatprep.subr.mxu0 %v335
    %2851 = vmatpush1.msra.mxu0 %v334
    %2852 = vmatprep.subr.mxu0 %v339
    %2853 = vmatpush1.msra.mxu0 %v338
    %2854 = vmatprep.subr.mxu0 %v343
    %2855 = vmatpush1.msra.mxu0 %v342
    %2856 = vmatprep.subr.mxu0 %v347
    %2857 = vmatpush1.msra.mxu0 %v346
    %2858 = vmatprep.subr.mxu0 %v351
    %2859 = vmatpush1.msra.mxu0 %v350
    %2860 = vmatprep.subr.mxu0 %v355
    %2861 = vmatpush1.msra.mxu0 %v354
    %2862 = vmatprep.subr.mxu0 %v359
    %2863 = vmatpush1.msra.mxu0 %v358
    %2864 = vmatprep.subr.mxu0 %v363
    %2865 = vmatpush1.msra.mxu0 %v362
    %2866 = vmatprep.subr.mxu0 %v367
    %2867 = vmatpush1.msra.mxu0 %v366
    %2868 = vmatprep.subr.mxu0 %v371
    %2869 = vmatpush1.msra.mxu0 %v370
    %2870 = vmatprep.subr.mxu0 %v375
    %2871 = vmatpush1.msra.mxu0 %v374
    %2872 = vmatprep.subr.mxu0 %v379
    %2873 = vmatpush1.msra.mxu0 %v378
    %2874 = vmatprep.subr.mxu0 %v383
    %2875 = vmatpush1.msra.mxu0 %v382
    %2876 = vmatprep.subr.mxu0 %v387
    %2877 = vmatpush1.msra.mxu0 %v386
    %2878 = vmatprep.subr.mxu0 %v391
    %2879 = vmatpush1.msra.mxu0 %v390
    %2880 = vmatprep.subr.mxu0 %v395
    %2881 = vmatpush1.msra.mxu0 %v394
    %2882 = vmatprep.subr.mxu0 %v399
    %2883 = vmatpush1.msra.mxu0 %v398
    %2884 = vmatprep.subr.mxu0 %v403
    %2885 = vmatpush1.msra.mxu0 %v402
    %2886 = vmatprep.subr.mxu0 %v407
    %2887 = vmatpush1.msra.mxu0 %v406
    %2888 = vmatprep.subr.mxu0 %v411
    %2889 = vmatpush1.msra.mxu0 %v410
    %2890 = vmatprep.mubr.f32.mxu0 %v1657
    %2891 = vmatmul.mubr.f32.gmra.mrb[0].mxu0 %v1649
    %v2892 = vpop.f32.mrb[0].mxu0
    %v2893 = vadd.f32 %v2822, %v2892
    %v2894 = vpop.f32.mrb[0].mxu0
    %v2895 = vadd.f32 %v2824, %v2894
    %2896 = vdwg.mxu0
    %2897 = vmatprep.subr.mxu0 %v415
    %2898 = vmatpush1.msra.mxu0 %v414
    %2899 = vmatprep.subr.mxu0 %v419
    %2900 = vmatpush1.msra.mxu0 %v418
    %2901 = vmatprep.subr.mxu0 %v423
    %2902 = vmatpush1.msra.mxu0 %v422
    %2903 = vmatprep.subr.mxu0 %v427
    %2904 = vmatpush1.msra.mxu0 %v426
    %2905 = vmatprep.subr.mxu0 %v431
    %2906 = vmatpush1.msra.mxu0 %v430
    %2907 = vmatprep.subr.mxu0 %v435
    %2908 = vmatpush1.msra.mxu0 %v434
    %2909 = vmatprep.subr.mxu0 %v439
    %2910 = vmatpush1.msra.mxu0 %v438
    %2911 = vmatprep.subr.mxu0 %v443
    %2912 = vmatpush1.msra.mxu0 %v442
    %2913 = vmatprep.subr.mxu0 %v447
    %2914 = vmatpush1.msra.mxu0 %v446
    %2915 = vmatprep.subr.mxu0 %v451
    %2916 = vmatpush1.msra.mxu0 %v450
    %2917 = vmatprep.subr.mxu0 %v455
    %2918 = vmatpush1.msra.mxu0 %v454
    %2919 = vmatprep.subr.mxu0 %v459
    %2920 = vmatpush1.msra.mxu0 %v458
    %2921 = vmatprep.subr.mxu0 %v463
    %2922 = vmatpush1.msra.mxu0 %v462
    %2923 = vmatprep.subr.mxu0 %v467
    %2924 = vmatpush1.msra.mxu0 %v466
    %2925 = vmatprep.subr.mxu0 %v471
    %2926 = vmatpush1.msra.mxu0 %v470
    %2927 = vmatprep.subr.mxu0 %v475
    %2928 = vmatpush1.msra.mxu0 %v474
    %2929 = vmatprep.subr.mxu0 %v479
    %2930 = vmatpush1.msra.mxu0 %v478
    %2931 = vmatprep.subr.mxu0 %v483
    %2932 = vmatpush1.msra.mxu0 %v482
    %2933 = vmatprep.subr.mxu0 %v487
    %2934 = vmatpush1.msra.mxu0 %v486
    %2935 = vmatprep.subr.mxu0 %v491
    %2936 = vmatpush1.msra.mxu0 %v490
    %2937 = vmatprep.subr.mxu0 %v495
    %2938 = vmatpush1.msra.mxu0 %v494
    %2939 = vmatprep.subr.mxu0 %v499
    %2940 = vmatpush1.msra.mxu0 %v498
    %2941 = vmatprep.subr.mxu0 %v503
    %2942 = vmatpush1.msra.mxu0 %v502
    %2943 = vmatprep.subr.mxu0 %v507
    %2944 = vmatpush1.msra.mxu0 %v506
    %2945 = vmatprep.subr.mxu0 %v511
    %2946 = vmatpush1.msra.mxu0 %v510
    %2947 = vmatprep.subr.mxu0 %v515
    %2948 = vmatpush1.msra.mxu0 %v514
    %2949 = vmatprep.subr.mxu0 %v519
    %2950 = vmatpush1.msra.mxu0 %v518
    %2951 = vmatprep.subr.mxu0 %v523
    %2952 = vmatpush1.msra.mxu0 %v522
    %2953 = vmatprep.subr.mxu0 %v527
    %2954 = vmatpush1.msra.mxu0 %v526
    %2955 = vmatprep.subr.mxu0 %v531
    %2956 = vmatpush1.msra.mxu0 %v530
    %2957 = vmatprep.subr.mxu0 %v535
    %2958 = vmatpush1.msra.mxu0 %v534
    %2959 = vmatprep.subr.mxu0 %v539
    %2960 = vmatpush1.msra.mxu0 %v538
    %2961 = vmatprep.mubr.f32.mxu0 %v1658
    %2962 = vmatmul.mubr.f32.gmra.mrb[0].mxu0 %v1656
    %v2963 = vpop.f32.mrb[0].mxu0
    %v2964 = vadd.f32 %v2893, %v2963
    %v2965 = vpop.f32.mrb[0].mxu0
    %v2966 = vadd.f32 %v2895, %v2965
    %2967 = vdwg.mxu0
    %2968 = vmatprep.subr.mxu0 %v543
    %2969 = vmatpush1.msra.mxu0 %v542
    %2970 = vmatprep.subr.mxu0 %v547
    %2971 = vmatpush1.msra.mxu0 %v546
    %2972 = vmatprep.subr.mxu0 %v551
    %2973 = vmatpush1.msra.mxu0 %v550
    %2974 = vmatprep.subr.mxu0 %v555
    %2975 = vmatpush1.msra.mxu0 %v554
    %2976 = vmatprep.subr.mxu0 %v559
    %2977 = vmatpush1.msra.mxu0 %v558
    %2978 = vmatprep.subr.mxu0 %v563
    %2979 = vmatpush1.msra.mxu0 %v562
    %2980 = vmatprep.subr.mxu0 %v567
    %2981 = vmatpush1.msra.mxu0 %v566
    %2982 = vmatprep.subr.mxu0 %v571
    %2983 = vmatpush1.msra.mxu0 %v570
    %2984 = vmatprep.subr.mxu0 %v575
    %2985 = vmatpush1.msra.mxu0 %v574
    %2986 = vmatprep.subr.mxu0 %v579
    %2987 = vmatpush1.msra.mxu0 %v578
    %2988 = vmatprep.subr.mxu0 %v583
    %2989 = vmatpush1.msra.mxu0 %v582
    %2990 = vmatprep.subr.mxu0 %v587
    %2991 = vmatpush1.msra.mxu0 %v586
    %2992 = vmatprep.subr.mxu0 %v591
    %2993 = vmatpush1.msra.mxu0 %v590
    %2994 = vmatprep.subr.mxu0 %v595
    %2995 = vmatpush1.msra.mxu0 %v594
    %2996 = vmatprep.subr.mxu0 %v599
    %2997 = vmatpush1.msra.mxu0 %v598
    %2998 = vmatprep.subr.mxu0 %v603
    %2999 = vmatpush1.msra.mxu0 %v602
    %3000 = vmatprep.subr.mxu0 %v607
    %3001 = vmatpush1.msra.mxu0 %v606
    %3002 = vmatprep.subr.mxu0 %v611
    %3003 = vmatpush1.msra.mxu0 %v610
    %3004 = vmatprep.subr.mxu0 %v615
    %3005 = vmatpush1.msra.mxu0 %v614
    %3006 = vmatprep.subr.mxu0 %v619
    %3007 = vmatpush1.msra.mxu0 %v618
    %3008 = vmatprep.subr.mxu0 %v623
    %3009 = vmatpush1.msra.mxu0 %v622
    %3010 = vmatprep.subr.mxu0 %v627
    %3011 = vmatpush1.msra.mxu0 %v626
    %3012 = vmatprep.subr.mxu0 %v631
    %3013 = vmatpush1.msra.mxu0 %v630
    %3014 = vmatprep.subr.mxu0 %v635
    %3015 = vmatpush1.msra.mxu0 %v634
    %3016 = vmatprep.subr.mxu0 %v639
    %3017 = vmatpush1.msra.mxu0 %v638
    %3018 = vmatprep.subr.mxu0 %v643
    %3019 = vmatpush1.msra.mxu0 %v642
    %3020 = vmatprep.subr.mxu0 %v647
    %3021 = vmatpush1.msra.mxu0 %v646
    %3022 = vmatprep.subr.mxu0 %v651
    %3023 = vmatpush1.msra.mxu0 %v650
    %3024 = vmatprep.subr.mxu0 %v655
    %3025 = vmatpush1.msra.mxu0 %v654
    %3026 = vmatprep.subr.mxu0 %v659
    %3027 = vmatpush1.msra.mxu0 %v658
    %3028 = vmatprep.subr.mxu0 %v663
    %3029 = vmatpush1.msra.mxu0 %v662
    %3030 = vmatprep.subr.mxu0 %v667
    %3031 = vmatpush1.msra.mxu0 %v666
    %3032 = vmatprep.mubr.f32.mxu0 %v1674
    %3033 = vmatmul.mubr.f32.gmra.mrb[0].mxu0 %v1666
    %v3034 = vpop.f32.mrb[0].mxu0
    %v3035 = vadd.f32 %v2964, %v3034
    %v3036 = vpop.f32.mrb[0].mxu0
    %v3037 = vadd.f32 %v2966, %v3036
    %3038 = vdwg.mxu0
    %3039 = vmatprep.subr.mxu0 %v671
    %3040 = vmatpush1.msra.mxu0 %v670
    %3041 = vmatprep.subr.mxu0 %v675
    %3042 = vmatpush1.msra.mxu0 %v674
    %3043 = vmatprep.subr.mxu0 %v679
    %3044 = vmatpush1.msra.mxu0 %v678
    %3045 = vmatprep.subr.mxu0 %v683
    %3046 = vmatpush1.msra.mxu0 %v682
    %3047 = vmatprep.subr.mxu0 %v687
    %3048 = vmatpush1.msra.mxu0 %v686
    %3049 = vmatprep.subr.mxu0 %v691
    %3050 = vmatpush1.msra.mxu0 %v690
    %3051 = vmatprep.subr.mxu0 %v695
    %3052 = vmatpush1.msra.mxu0 %v694
    %3053 = vmatprep.subr.mxu0 %v699
    %3054 = vmatpush1.msra.mxu0 %v698
    %3055 = vmatprep.subr.mxu0 %v703
    %3056 = vmatpush1.msra.mxu0 %v702
    %3057 = vmatprep.subr.mxu0 %v707
    %3058 = vmatpush1.msra.mxu0 %v706
    %3059 = vmatprep.subr.mxu0 %v711
    %3060 = vmatpush1.msra.mxu0 %v710
    %3061 = vmatprep.subr.mxu0 %v715
    %3062 = vmatpush1.msra.mxu0 %v714
    %3063 = vmatprep.subr.mxu0 %v719
    %3064 = vmatpush1.msra.mxu0 %v718
    %3065 = vmatprep.subr.mxu0 %v723
    %3066 = vmatpush1.msra.mxu0 %v722
    %3067 = vmatprep.subr.mxu0 %v727
    %3068 = vmatpush1.msra.mxu0 %v726
    %3069 = vmatprep.subr.mxu0 %v731
    %3070 = vmatpush1.msra.mxu0 %v730
    %3071 = vmatprep.subr.mxu0 %v735
    %3072 = vmatpush1.msra.mxu0 %v734
    %3073 = vmatprep.subr.mxu0 %v739
    %3074 = vmatpush1.msra.mxu0 %v738
    %3075 = vmatprep.subr.mxu0 %v743
    %3076 = vmatpush1.msra.mxu0 %v742
    %3077 = vmatprep.subr.mxu0 %v747
    %3078 = vmatpush1.msra.mxu0 %v746
    %3079 = vmatprep.subr.mxu0 %v751
    %3080 = vmatpush1.msra.mxu0 %v750
    %3081 = vmatprep.subr.mxu0 %v755
    %3082 = vmatpush1.msra.mxu0 %v754
    %3083 = vmatprep.subr.mxu0 %v759
    %3084 = vmatpush1.msra.mxu0 %v758
    %3085 = vmatprep.subr.mxu0 %v763
    %3086 = vmatpush1.msra.mxu0 %v762
    %3087 = vmatprep.subr.mxu0 %v767
    %3088 = vmatpush1.msra.mxu0 %v766
    %3089 = vmatprep.subr.mxu0 %v771
    %3090 = vmatpush1.msra.mxu0 %v770
    %3091 = vmatprep.subr.mxu0 %v775
    %3092 = vmatpush1.msra.mxu0 %v774
    %3093 = vmatprep.subr.mxu0 %v779
    %3094 = vmatpush1.msra.mxu0 %v778
    %3095 = vmatprep.subr.mxu0 %v783
    %3096 = vmatpush1.msra.mxu0 %v782
    %3097 = vmatprep.subr.mxu0 %v787
    %3098 = vmatpush1.msra.mxu0 %v786
    %3099 = vmatprep.subr.mxu0 %v791
    %3100 = vmatpush1.msra.mxu0 %v790
    %3101 = vmatprep.subr.mxu0 %v795
    %3102 = vmatpush1.msra.mxu0 %v794
    %3103 = vmatprep.mubr.f32.mxu0 %v1675
    %3104 = vmatmul.mubr.f32.gmra.mrb[0].mxu0 %v1673
    %v3105 = vpop.f32.mrb[0].mxu0
    %v3106 = vadd.f32 %v3035, %v3105
    %v3107 = vpop.f32.mrb[0].mxu0
    %v3108 = vadd.f32 %v3037, %v3107
    %3109 = vdwg.mxu0
    %3110 = vmatprep.subr.mxu0 %v799
    %3111 = vmatpush1.msra.mxu0 %v798
    %3112 = vmatprep.subr.mxu0 %v803
    %3113 = vmatpush1.msra.mxu0 %v802
    %3114 = vmatprep.subr.mxu0 %v807
    %3115 = vmatpush1.msra.mxu0 %v806
    %3116 = vmatprep.subr.mxu0 %v811
    %3117 = vmatpush1.msra.mxu0 %v810
    %3118 = vmatprep.subr.mxu0 %v815
    %3119 = vmatpush1.msra.mxu0 %v814
    %3120 = vmatprep.subr.mxu0 %v819
    %3121 = vmatpush1.msra.mxu0 %v818
    %3122 = vmatprep.subr.mxu0 %v823
    %3123 = vmatpush1.msra.mxu0 %v822
    %3124 = vmatprep.subr.mxu0 %v827
    %3125 = vmatpush1.msra.mxu0 %v826
    %3126 = vmatprep.subr.mxu0 %v831
    %3127 = vmatpush1.msra.mxu0 %v830
    %3128 = vmatprep.subr.mxu0 %v835
    %3129 = vmatpush1.msra.mxu0 %v834
    %3130 = vmatprep.subr.mxu0 %v839
    %3131 = vmatpush1.msra.mxu0 %v838
    %3132 = vmatprep.subr.mxu0 %v843
    %3133 = vmatpush1.msra.mxu0 %v842
    %3134 = vmatprep.subr.mxu0 %v847
    %3135 = vmatpush1.msra.mxu0 %v846
    %3136 = vmatprep.subr.mxu0 %v851
    %3137 = vmatpush1.msra.mxu0 %v850
    %3138 = vmatprep.subr.mxu0 %v855
    %3139 = vmatpush1.msra.mxu0 %v854
    %3140 = vmatprep.subr.mxu0 %v859
    %3141 = vmatpush1.msra.mxu0 %v858
    %3142 = vmatprep.subr.mxu0 %v863
    %3143 = vmatpush1.msra.mxu0 %v862
    %3144 = vmatprep.subr.mxu0 %v867
    %3145 = vmatpush1.msra.mxu0 %v866
    %3146 = vmatprep.subr.mxu0 %v871
    %3147 = vmatpush1.msra.mxu0 %v870
    %3148 = vmatprep.subr.mxu0 %v875
    %3149 = vmatpush1.msra.mxu0 %v874
    %3150 = vmatprep.subr.mxu0 %v879
    %3151 = vmatpush1.msra.mxu0 %v878
    %3152 = vmatprep.subr.mxu0 %v883
    %3153 = vmatpush1.msra.mxu0 %v882
    %3154 = vmatprep.subr.mxu0 %v887
    %3155 = vmatpush1.msra.mxu0 %v886
    %3156 = vmatprep.subr.mxu0 %v891
    %3157 = vmatpush1.msra.mxu0 %v890
    %3158 = vmatprep.subr.mxu0 %v895
    %3159 = vmatpush1.msra.mxu0 %v894
    %3160 = vmatprep.subr.mxu0 %v899
    %3161 = vmatpush1.msra.mxu0 %v898
    %3162 = vmatprep.subr.mxu0 %v903
    %3163 = vmatpush1.msra.mxu0 %v902
    %3164 = vmatprep.subr.mxu0 %v907
    %3165 = vmatpush1.msra.mxu0 %v906
    %3166 = vmatprep.subr.mxu0 %v911
    %3167 = vmatpush1.msra.mxu0 %v910
    %3168 = vmatprep.subr.mxu0 %v915
    %3169 = vmatpush1.msra.mxu0 %v914
    %3170 = vmatprep.subr.mxu0 %v919
    %3171 = vmatpush1.msra.mxu0 %v918
    %3172 = vmatprep.subr.mxu0 %v923
    %3173 = vmatpush1.msra.mxu0 %v922
    %3174 = vmatprep.mubr.f32.mxu0 %v1691
    %3175 = vmatmul.mubr.f32.gmra.mrb[0].mxu0 %v1683
    %v3176 = vpop.f32.mrb[0].mxu0
    %v3177 = vadd.f32 %v3106, %v3176
    %v3178 = vpop.f32.mrb[0].mxu0
    %v3179 = vadd.f32 %v3108, %v3178
    %3180 = vdwg.mxu0
    %3181 = vmatprep.subr.mxu0 %v927
    %3182 = vmatpush1.msra.mxu0 %v926
    %3183 = vmatprep.subr.mxu0 %v931
    %3184 = vmatpush1.msra.mxu0 %v930
    %3185 = vmatprep.subr.mxu0 %v935
    %3186 = vmatpush1.msra.mxu0 %v934
    %3187 = vmatprep.subr.mxu0 %v939
    %3188 = vmatpush1.msra.mxu0 %v938
    %3189 = vmatprep.subr.mxu0 %v943
    %3190 = vmatpush1.msra.mxu0 %v942
    %3191 = vmatprep.subr.mxu0 %v947
    %3192 = vmatpush1.msra.mxu0 %v946
    %3193 = vmatprep.subr.mxu0 %v951
    %3194 = vmatpush1.msra.mxu0 %v950
    %3195 = vmatprep.subr.mxu0 %v955
    %3196 = vmatpush1.msra.mxu0 %v954
    %3197 = vmatprep.subr.mxu0 %v959
    %3198 = vmatpush1.msra.mxu0 %v958
    %3199 = vmatprep.subr.mxu0 %v963
    %3200 = vmatpush1.msra.mxu0 %v962
    %3201 = vmatprep.subr.mxu0 %v967
    %3202 = vmatpush1.msra.mxu0 %v966
    %3203 = vmatprep.subr.mxu0 %v971
    %3204 = vmatpush1.msra.mxu0 %v970
    %3205 = vmatprep.subr.mxu0 %v975
    %3206 = vmatpush1.msra.mxu0 %v974
    %3207 = vmatprep.subr.mxu0 %v979
    %3208 = vmatpush1.msra.mxu0 %v978
    %3209 = vmatprep.subr.mxu0 %v983
    %3210 = vmatpush1.msra.mxu0 %v982
    %3211 = vmatprep.subr.mxu0 %v987
    %3212 = vmatpush1.msra.mxu0 %v986
    %3213 = vmatprep.subr.mxu0 %v991
    %3214 = vmatpush1.msra.mxu0 %v990
    %3215 = vmatprep.subr.mxu0 %v995
    %3216 = vmatpush1.msra.mxu0 %v994
    %3217 = vmatprep.subr.mxu0 %v999
    %3218 = vmatpush1.msra.mxu0 %v998
    %3219 = vmatprep.subr.mxu0 %v1003
    %3220 = vmatpush1.msra.mxu0 %v1002
    %3221 = vmatprep.subr.mxu0 %v1007
    %3222 = vmatpush1.msra.mxu0 %v1006
    %3223 = vmatprep.subr.mxu0 %v1011
    %3224 = vmatpush1.msra.mxu0 %v1010
    %3225 = vmatprep.subr.mxu0 %v1015
    %3226 = vmatpush1.msra.mxu0 %v1014
    %3227 = vmatprep.subr.mxu0 %v1019
    %3228 = vmatpush1.msra.mxu0 %v1018
    %3229 = vmatprep.subr.mxu0 %v1023
    %3230 = vmatpush1.msra.mxu0 %v1022
    %3231 = vmatprep.subr.mxu0 %v1027
    %3232 = vmatpush1.msra.mxu0 %v1026
    %3233 = vmatprep.subr.mxu0 %v1031
    %3234 = vmatpush1.msra.mxu0 %v1030
    %3235 = vmatprep.subr.mxu0 %v1035
    %3236 = vmatpush1.msra.mxu0 %v1034
    %3237 = vmatprep.subr.mxu0 %v1039
    %3238 = vmatpush1.msra.mxu0 %v1038
    %3239 = vmatprep.subr.mxu0 %v1043
    %3240 = vmatpush1.msra.mxu0 %v1042
    %3241 = vmatprep.subr.mxu0 %v1047
    %3242 = vmatpush1.msra.mxu0 %v1046
    %3243 = vmatprep.subr.mxu0 %v1051
    %3244 = vmatpush1.msra.mxu0 %v1050
    %3245 = vmatprep.mubr.f32.mxu0 %v1692
    %3246 = vmatmul.mubr.f32.gmra.mrb[0].mxu0 %v1690
    %v3247 = vpop.f32.mrb[0].mxu0
    %v3248 = vadd.f32 %v3177, %v3247
    %v3249 = vpop.f32.mrb[0].mxu0
    %v3250 = vadd.f32 %v3179, %v3249
    %3251 = vdwg.mxu0
    %3252 = vmatprep.subr.mxu0 %v1055
    %3253 = vmatpush1.msra.mxu0 %v1054
    %3254 = vmatprep.subr.mxu0 %v1059
    %3255 = vmatpush1.msra.mxu0 %v1058
    %3256 = vmatprep.subr.mxu0 %v1063
    %3257 = vmatpush1.msra.mxu0 %v1062
    %3258 = vmatprep.subr.mxu0 %v1067
    %3259 = vmatpush1.msra.mxu0 %v1066
    %3260 = vmatprep.subr.mxu0 %v1071
    %3261 = vmatpush1.msra.mxu0 %v1070
    %3262 = vmatprep.subr.mxu0 %v1075
    %3263 = vmatpush1.msra.mxu0 %v1074
    %3264 = vmatprep.subr.mxu0 %v1079
    %3265 = vmatpush1.msra.mxu0 %v1078
    %3266 = vmatprep.subr.mxu0 %v1083
    %3267 = vmatpush1.msra.mxu0 %v1082
    %3268 = vmatprep.subr.mxu0 %v1087
    %3269 = vmatpush1.msra.mxu0 %v1086
    %3270 = vmatprep.subr.mxu0 %v1091
    %3271 = vmatpush1.msra.mxu0 %v1090
    %3272 = vmatprep.subr.mxu0 %v1095
    %3273 = vmatpush1.msra.mxu0 %v1094
    %3274 = vmatprep.subr.mxu0 %v1099
    %3275 = vmatpush1.msra.mxu0 %v1098
    %3276 = vmatprep.subr.mxu0 %v1103
    %3277 = vmatpush1.msra.mxu0 %v1102
    %3278 = vmatprep.subr.mxu0 %v1107
    %3279 = vmatpush1.msra.mxu0 %v1106
    %3280 = vmatprep.subr.mxu0 %v1111
    %3281 = vmatpush1.msra.mxu0 %v1110
    %3282 = vmatprep.subr.mxu0 %v1115
    %3283 = vmatpush1.msra.mxu0 %v1114
    %3284 = vmatprep.subr.mxu0 %v1119
    %3285 = vmatpush1.msra.mxu0 %v1118
    %3286 = vmatprep.subr.mxu0 %v1123
    %3287 = vmatpush1.msra.mxu0 %v1122
    %3288 = vmatprep.subr.mxu0 %v1127
    %3289 = vmatpush1.msra.mxu0 %v1126
    %3290 = vmatprep.subr.mxu0 %v1131
    %3291 = vmatpush1.msra.mxu0 %v1130
    %3292 = vmatprep.subr.mxu0 %v1135
    %3293 = vmatpush1.msra.mxu0 %v1134
    %3294 = vmatprep.subr.mxu0 %v1139
    %3295 = vmatpush1.msra.mxu0 %v1138
    %3296 = vmatprep.subr.mxu0 %v1143
    %3297 = vmatpush1.msra.mxu0 %v1142
    %3298 = vmatprep.subr.mxu0 %v1147
    %3299 = vmatpush1.msra.mxu0 %v1146
    %3300 = vmatprep.subr.mxu0 %v1151
    %3301 = vmatpush1.msra.mxu0 %v1150
    %3302 = vmatprep.subr.mxu0 %v1155
    %3303 = vmatpush1.msra.mxu0 %v1154
    %3304 = vmatprep.subr.mxu0 %v1159
    %3305 = vmatpush1.msra.mxu0 %v1158
    %3306 = vmatprep.subr.mxu0 %v1163
    %3307 = vmatpush1.msra.mxu0 %v1162
    %3308 = vmatprep.subr.mxu0 %v1167
    %3309 = vmatpush1.msra.mxu0 %v1166
    %3310 = vmatprep.subr.mxu0 %v1171
    %3311 = vmatpush1.msra.mxu0 %v1170
    %3312 = vmatprep.subr.mxu0 %v1175
    %3313 = vmatpush1.msra.mxu0 %v1174
    %3314 = vmatprep.subr.mxu0 %v1179
    %3315 = vmatpush1.msra.mxu0 %v1178
    %3316 = vmatprep.mubr.f32.mxu0 %v1708
    %3317 = vmatmul.mubr.f32.gmra.mrb[0].mxu0 %v1700
    %v3318 = vpop.f32.mrb[0].mxu0
    %v3319 = vadd.f32 %v3248, %v3318
    %v3320 = vpop.f32.mrb[0].mxu0
    %v3321 = vadd.f32 %v3250, %v3320
    %3322 = vdwg.mxu0
    %3323 = vmatprep.subr.mxu0 %v1183
    %3324 = vmatpush1.msra.mxu0 %v1182
    %3325 = vmatprep.subr.mxu0 %v1187
    %3326 = vmatpush1.msra.mxu0 %v1186
    %3327 = vmatprep.subr.mxu0 %v1191
    %3328 = vmatpush1.msra.mxu0 %v1190
    %3329 = vmatprep.subr.mxu0 %v1195
    %3330 = vmatpush1.msra.mxu0 %v1194
    %3331 = vmatprep.subr.mxu0 %v1199
    %3332 = vmatpush1.msra.mxu0 %v1198
    %3333 = vmatprep.subr.mxu0 %v1203
    %3334 = vmatpush1.msra.mxu0 %v1202
    %3335 = vmatprep.subr.mxu0 %v1207
    %3336 = vmatpush1.msra.mxu0 %v1206
    %3337 = vmatprep.subr.mxu0 %v1211
    %3338 = vmatpush1.msra.mxu0 %v1210
    %3339 = vmatprep.subr.mxu0 %v1215
    %3340 = vmatpush1.msra.mxu0 %v1214
    %3341 = vmatprep.subr.mxu0 %v1219
    %3342 = vmatpush1.msra.mxu0 %v1218
    %3343 = vmatprep.subr.mxu0 %v1223
    %3344 = vmatpush1.msra.mxu0 %v1222
    %3345 = vmatprep.subr.mxu0 %v1227
    %3346 = vmatpush1.msra.mxu0 %v1226
    %3347 = vmatprep.subr.mxu0 %v1231
    %3348 = vmatpush1.msra.mxu0 %v1230
    %3349 = vmatprep.subr.mxu0 %v1235
    %3350 = vmatpush1.msra.mxu0 %v1234
    %3351 = vmatprep.subr.mxu0 %v1239
    %3352 = vmatpush1.msra.mxu0 %v1238
    %3353 = vmatprep.subr.mxu0 %v1243
    %3354 = vmatpush1.msra.mxu0 %v1242
    %3355 = vmatprep.subr.mxu0 %v1247
    %3356 = vmatpush1.msra.mxu0 %v1246
    %3357 = vmatprep.subr.mxu0 %v1251
    %3358 = vmatpush1.msra.mxu0 %v1250
    %3359 = vmatprep.subr.mxu0 %v1255
    %3360 = vmatpush1.msra.mxu0 %v1254
    %3361 = vmatprep.subr.mxu0 %v1259
    %3362 = vmatpush1.msra.mxu0 %v1258
    %3363 = vmatprep.subr.mxu0 %v1263
    %3364 = vmatpush1.msra.mxu0 %v1262
    %3365 = vmatprep.subr.mxu0 %v1267
    %3366 = vmatpush1.msra.mxu0 %v1266
    %3367 = vmatprep.subr.mxu0 %v1271
    %3368 = vmatpush1.msra.mxu0 %v1270
    %3369 = vmatprep.subr.mxu0 %v1275
    %3370 = vmatpush1.msra.mxu0 %v1274
    %3371 = vmatprep.subr.mxu0 %v1279
    %3372 = vmatpush1.msra.mxu0 %v1278
    %3373 = vmatprep.subr.mxu0 %v1283
    %3374 = vmatpush1.msra.mxu0 %v1282
    %3375 = vmatprep.subr.mxu0 %v1287
    %3376 = vmatpush1.msra.mxu0 %v1286
    %3377 = vmatprep.subr.mxu0 %v1291
    %3378 = vmatpush1.msra.mxu0 %v1290
    %3379 = vmatprep.subr.mxu0 %v1295
    %3380 = vmatpush1.msra.mxu0 %v1294
    %3381 = vmatprep.subr.mxu0 %v1299
    %3382 = vmatpush1.msra.mxu0 %v1298
    %3383 = vmatprep.subr.mxu0 %v1303
    %3384 = vmatpush1.msra.mxu0 %v1302
    %3385 = vmatprep.subr.mxu0 %v1307
    %3386 = vmatpush1.msra.mxu0 %v1306
    %3387 = vmatprep.mubr.f32.mxu0 %v1709
    %3388 = vmatmul.mubr.f32.gmra.mrb[0].mxu0 %v1707
    %v3389 = vpop.f32.mrb[0].mxu0
    %v3390 = vadd.f32 %v3319, %v3389
    %v3391 = vpop.f32.mrb[0].mxu0
    %v3392 = vadd.f32 %v3321, %v3391
    %3393 = vdwg.mxu0
    %3394 = vmatprep.subr.mxu0 %v1311
    %3395 = vmatpush1.msra.mxu0 %v1310
    %3396 = vmatprep.subr.mxu0 %v1315
    %3397 = vmatpush1.msra.mxu0 %v1314
    %3398 = vmatprep.subr.mxu0 %v1319
    %3399 = vmatpush1.msra.mxu0 %v1318
    %3400 = vmatprep.subr.mxu0 %v1323
    %3401 = vmatpush1.msra.mxu0 %v1322
    %3402 = vmatprep.subr.mxu0 %v1327
    %3403 = vmatpush1.msra.mxu0 %v1326
    %3404 = vmatprep.subr.mxu0 %v1331
    %3405 = vmatpush1.msra.mxu0 %v1330
    %3406 = vmatprep.subr.mxu0 %v1335
    %3407 = vmatpush1.msra.mxu0 %v1334
    %3408 = vmatprep.subr.mxu0 %v1339
    %3409 = vmatpush1.msra.mxu0 %v1338
    %3410 = vmatprep.subr.mxu0 %v1343
    %3411 = vmatpush1.msra.mxu0 %v1342
    %3412 = vmatprep.subr.mxu0 %v1347
    %3413 = vmatpush1.msra.mxu0 %v1346
    %3414 = vmatprep.subr.mxu0 %v1351
    %3415 = vmatpush1.msra.mxu0 %v1350
    %3416 = vmatprep.subr.mxu0 %v1355
    %3417 = vmatpush1.msra.mxu0 %v1354
    %3418 = vmatprep.subr.mxu0 %v1359
    %3419 = vmatpush1.msra.mxu0 %v1358
    %3420 = vmatprep.subr.mxu0 %v1363
    %3421 = vmatpush1.msra.mxu0 %v1362
    %3422 = vmatprep.subr.mxu0 %v1367
    %3423 = vmatpush1.msra.mxu0 %v1366
    %3424 = vmatprep.subr.mxu0 %v1371
    %3425 = vmatpush1.msra.mxu0 %v1370
    %3426 = vmatprep.subr.mxu0 %v1375
    %3427 = vmatpush1.msra.mxu0 %v1374
    %3428 = vmatprep.subr.mxu0 %v1379
    %3429 = vmatpush1.msra.mxu0 %v1378
    %3430 = vmatprep.subr.mxu0 %v1383
    %3431 = vmatpush1.msra.mxu0 %v1382
    %3432 = vmatprep.subr.mxu0 %v1387
    %3433 = vmatpush1.msra.mxu0 %v1386
    %3434 = vmatprep.subr.mxu0 %v1391
    %3435 = vmatpush1.msra.mxu0 %v1390
    %3436 = vmatprep.subr.mxu0 %v1395
    %3437 = vmatpush1.msra.mxu0 %v1394
    %3438 = vmatprep.subr.mxu0 %v1399
    %3439 = vmatpush1.msra.mxu0 %v1398
    %3440 = vmatprep.subr.mxu0 %v1403
    %3441 = vmatpush1.msra.mxu0 %v1402
    %3442 = vmatprep.subr.mxu0 %v1407
    %3443 = vmatpush1.msra.mxu0 %v1406
    %3444 = vmatprep.subr.mxu0 %v1411
    %3445 = vmatpush1.msra.mxu0 %v1410
    %3446 = vmatprep.subr.mxu0 %v1415
    %3447 = vmatpush1.msra.mxu0 %v1414
    %3448 = vmatprep.subr.mxu0 %v1419
    %3449 = vmatpush1.msra.mxu0 %v1418
    %3450 = vmatprep.subr.mxu0 %v1423
    %3451 = vmatpush1.msra.mxu0 %v1422
    %3452 = vmatprep.subr.mxu0 %v1427
    %3453 = vmatpush1.msra.mxu0 %v1426
    %3454 = vmatprep.subr.mxu0 %v1431
    %3455 = vmatpush1.msra.mxu0 %v1430
    %3456 = vmatprep.subr.mxu0 %v1435
    %3457 = vmatpush1.msra.mxu0 %v1434
    %3458 = vmatprep.mubr.f32.mxu0 %v1725
    %3459 = vmatmul.mubr.f32.gmra.mrb[0].mxu0 %v1717
    %v3460 = vpop.f32.mrb[0].mxu0
    %v3461 = vadd.f32 %v3390, %v3460
    %v3462 = vpop.f32.mrb[0].mxu0
    %v3463 = vadd.f32 %v3392, %v3462
    %3464 = vdwg.mxu0
    %3465 = vmatprep.subr.mxu0 %v1439
    %3466 = vmatpush1.msra.mxu0 %v1438
    %3467 = vmatprep.subr.mxu0 %v1443
    %3468 = vmatpush1.msra.mxu0 %v1442
    %3469 = vmatprep.subr.mxu0 %v1447
    %3470 = vmatpush1.msra.mxu0 %v1446
    %3471 = vmatprep.subr.mxu0 %v1451
    %3472 = vmatpush1.msra.mxu0 %v1450
    %3473 = vmatprep.subr.mxu0 %v1455
    %3474 = vmatpush1.msra.mxu0 %v1454
    %3475 = vmatprep.subr.mxu0 %v1459
    %3476 = vmatpush1.msra.mxu0 %v1458
    %3477 = vmatprep.subr.mxu0 %v1463
    %3478 = vmatpush1.msra.mxu0 %v1462
    %3479 = vmatprep.subr.mxu0 %v1467
    %3480 = vmatpush1.msra.mxu0 %v1466
    %3481 = vmatprep.subr.mxu0 %v1471
    %3482 = vmatpush1.msra.mxu0 %v1470
    %3483 = vmatprep.subr.mxu0 %v1475
    %3484 = vmatpush1.msra.mxu0 %v1474
    %3485 = vmatprep.subr.mxu0 %v1479
    %3486 = vmatpush1.msra.mxu0 %v1478
    %3487 = vmatprep.subr.mxu0 %v1483
    %3488 = vmatpush1.msra.mxu0 %v1482
    %3489 = vmatprep.subr.mxu0 %v1487
    %3490 = vmatpush1.msra.mxu0 %v1486
    %3491 = vmatprep.subr.mxu0 %v1491
    %3492 = vmatpush1.msra.mxu0 %v1490
    %3493 = vmatprep.subr.mxu0 %v1495
    %3494 = vmatpush1.msra.mxu0 %v1494
    %3495 = vmatprep.subr.mxu0 %v1499
    %3496 = vmatpush1.msra.mxu0 %v1498
    %3497 = vmatprep.subr.mxu0 %v1503
    %3498 = vmatpush1.msra.mxu0 %v1502
    %3499 = vmatprep.subr.mxu0 %v1507
    %3500 = vmatpush1.msra.mxu0 %v1506
    %3501 = vmatprep.subr.mxu0 %v1511
    %3502 = vmatpush1.msra.mxu0 %v1510
    %3503 = vmatprep.subr.mxu0 %v1515
    %3504 = vmatpush1.msra.mxu0 %v1514
    %3505 = vmatprep.subr.mxu0 %v1519
    %3506 = vmatpush1.msra.mxu0 %v1518
    %3507 = vmatprep.subr.mxu0 %v1523
    %3508 = vmatpush1.msra.mxu0 %v1522
    %3509 = vmatprep.subr.mxu0 %v1527
    %3510 = vmatpush1.msra.mxu0 %v1526
    %3511 = vmatprep.subr.mxu0 %v1531
    %3512 = vmatpush1.msra.mxu0 %v1530
    %3513 = vmatprep.subr.mxu0 %v1535
    %3514 = vmatpush1.msra.mxu0 %v1534
    %3515 = vmatprep.subr.mxu0 %v1539
    %3516 = vmatpush1.msra.mxu0 %v1538
    %3517 = vmatprep.subr.mxu0 %v1543
    %3518 = vmatpush1.msra.mxu0 %v1542
    %3519 = vmatprep.subr.mxu0 %v1547
    %3520 = vmatpush1.msra.mxu0 %v1546
    %3521 = vmatprep.subr.mxu0 %v1551
    %3522 = vmatpush1.msra.mxu0 %v1550
    %3523 = vmatprep.subr.mxu0 %v1555
    %3524 = vmatpush1.msra.mxu0 %v1554
    %3525 = vmatprep.subr.mxu0 %v1559
    %3526 = vmatpush1.msra.mxu0 %v1558
    %3527 = vmatprep.subr.mxu0 %v1563
    %3528 = vmatpush1.msra.mxu0 %v1562
    %3529 = vmatprep.mubr.f32.mxu0 %v1726
    %3530 = vmatmul.mubr.f32.gmra.mrb[0].mxu0 %v1724
    %v3531 = vpop.f32.mrb[0].mxu0
    %v3532 = vadd.f32 %v3461, %v3531
    %v3533 = vpop.f32.mrb[0].mxu0
    %v3534 = vadd.f32 %v3463, %v3533
    %3535 = vdwg.mxu0
    %3536 = vmatprep.subr.mxu0 %v1567
    %3537 = vmatpush1.msra.mxu0 %v1566
    %3538 = vmatprep.subr.mxu0 %v1571
    %3539 = vmatpush1.msra.mxu0 %v1570
    %3540 = vmatprep.subr.mxu0 %v1575
    %3541 = vmatpush1.msra.mxu0 %v1574
    %3542 = vmatprep.subr.mxu0 %v1579
    %3543 = vmatpush1.msra.mxu0 %v1578
    %3544 = vmatprep.subr.mxu0 %v1583
    %3545 = vmatpush1.msra.mxu0 %v1582
    %3546 = vmatprep.subr.mxu0 %v1587
    %3547 = vmatpush1.msra.mxu0 %v1586
    %3548 = vmatprep.subr.mxu0 %v1591
    %3549 = vmatpush1.msra.mxu0 %v1590
    %3550 = vmatprep.subr.mxu0 %v1595
    %3551 = vmatpush1.msra.mxu0 %v1594
    %3552 = vmatprep.subr.mxu0 0.0
    %3553 = vmatpush1.msra.mxu0 0.0
    %3554 = vmatprep.subr.mxu0 0.0
    %3555 = vmatpush1.msra.mxu0 0.0
    %3556 = vmatprep.subr.mxu0 0.0
    %3557 = vmatpush1.msra.mxu0 0.0
    %3558 = vmatprep.subr.mxu0 0.0
    %3559 = vmatpush1.msra.mxu0 0.0
    %3560 = vmatprep.subr.mxu0 0.0
    %3561 = vmatpush1.msra.mxu0 0.0
    %3562 = vmatprep.subr.mxu0 0.0
    %3563 = vmatpush1.msra.mxu0 0.0
    %3564 = vmatprep.subr.mxu0 0.0
    %3565 = vmatpush1.msra.mxu0 0.0
    %3566 = vmatprep.subr.mxu0 0.0
    %3567 = vmatpush1.msra.mxu0 0.0
    %3568 = vmatprep.subr.mxu0 0.0
    %3569 = vmatpush1.msra.mxu0 0.0
    %3570 = vmatprep.subr.mxu0 0.0
    %3571 = vmatpush1.msra.mxu0 0.0
    %3572 = vmatprep.subr.mxu0 0.0
    %3573 = vmatpush1.msra.mxu0 0.0
    %3574 = vmatprep.subr.mxu0 0.0
    %3575 = vmatpush1.msra.mxu0 0.0
    %3576 = vmatprep.subr.mxu0 0.0
    %3577 = vmatpush1.msra.mxu0 0.0
    %3578 = vmatprep.subr.mxu0 0.0
    %3579 = vmatpush1.msra.mxu0 0.0
    %3580 = vmatprep.subr.mxu0 0.0
    %3581 = vmatpush1.msra.mxu0 0.0
    %3582 = vmatprep.subr.mxu0 0.0
    %3583 = vmatpush1.msra.mxu0 0.0
    %3584 = vmatprep.subr.mxu0 0.0
    %3585 = vmatpush1.msra.mxu0 0.0
    %3586 = vmatprep.subr.mxu0 0.0
    %3587 = vmatpush1.msra.mxu0 0.0
    %3588 = vmatprep.subr.mxu0 0.0
    %3589 = vmatpush1.msra.mxu0 0.0
    %3590 = vmatprep.subr.mxu0 0.0
    %3591 = vmatpush1.msra.mxu0 0.0
    %3592 = vmatprep.subr.mxu0 0.0
    %3593 = vmatpush1.msra.mxu0 0.0
    %3594 = vmatprep.subr.mxu0 0.0
    %3595 = vmatpush1.msra.mxu0 0.0
    %3596 = vmatprep.subr.mxu0 0.0
    %3597 = vmatpush1.msra.mxu0 0.0
    %3598 = vmatprep.subr.mxu0 0.0
    %3599 = vmatpush1.msra.mxu0 0.0
    %3600 = vmatprep.mubr.f32.mxu0 0.0
    %3601 = vmatmul.mubr.f32.gmra.mrb[0].mxu0 %v1759
    %v3602 = vpop.f32.mrb[0].mxu0
    %v3603 = vadd.f32 %v3532, %v3602
    %v3604 = vpop.f32.mrb[0].mxu0
    %v3605 = vadd.f32 %v3534, %v3604
    %3606 = vdwg.mxu0
    %v3607 = vmax.f32 %v2680, 0.0
    %v3608 = vmax.f32 %v2682, 0.0
    %v3609 = vmax.f32 %v3603, 0.0
    %v3610 = vmax.f32 %v3605, 0.0
    %v3611 = vld [vmem:[%s3] sm:$0xff]
    %v3612 = vld [vmem:[%s3 + $0x8] sm:$0xff]
    %v3613 = vld [vmem:[%s3 + $0x10] sm:$0xff]
    %v3614 = vld [vmem:[%s3 + $0x18] sm:$0xff]
    %v3615 = vld [vmem:[%s3 + $0x20] sm:$0xff]
    %v3616 = vld [vmem:[%s3 + $0x28] sm:$0xff]
    %v3617 = vld [vmem:[%s3 + $0x30] sm:$0xff]
    %v3618 = vld [vmem:[%s3 + $0x38] sm:$0xff]
    %v3619 = vld [vmem:[%s3 + $0x40] sm:$0xff]
    %v3620 = vld [vmem:[%s3 + $0x48] sm:$0xff]
    %v3621 = vld [vmem:[%s3 + $0x50] sm:$0xff]
    %v3622 = vld [vmem:[%s3 + $0x58] sm:$0xff]
    %v3623 = vld [vmem:[%s3 + $0x60] sm:$0xff]
    %v3624 = vld [vmem:[%s3 + $0x68] sm:$0xff]
    %v3625 = vld [vmem:[%s3 + $0x70] sm:$0xff]
    %v3626 = vld [vmem:[%s3 + $0x78] sm:$0xff]
    %v3627 = vld [vmem:[%s3 + $0x80] sm:$0xff]
    %v3628 = vld [vmem:[%s3 + $0x88] sm:$0xff]
    %v3629 = vld [vmem:[%s3 + $0x90] sm:$0xff]
    %v3630 = vld [vmem:[%s3 + $0x98] sm:$0xff]
    %v3631 = vld [vmem:[%s3 + $0xa0] sm:$0xff]
    %v3632 = vld [vmem:[%s3 + $0xa8] sm:$0xff]
    %v3633 = vld [vmem:[%s3 + $0xb0] sm:$0xff]
    %v3634 = vld [vmem:[%s3 + $0xb8] sm:$0xff]
    %v3635 = vld [vmem:[%s3 + $0xc0] sm:$0xff]
    %v3636 = vld [vmem:[%s3 + $0xc8] sm:$0xff]
    %v3637 = vld [vmem:[%s3 + $0xd0] sm:$0xff]
    %v3638 = vld [vmem:[%s3 + $0xd8] sm:$0xff]
    %v3639 = vld [vmem:[%s3 + $0xe0] sm:$0xff]
    %v3640 = vld [vmem:[%s3 + $0xe8] sm:$0xff]
    %v3641 = vld [vmem:[%s3 + $0xf0] sm:$0xff]
    %v3642 = vld [vmem:[%s3 + $0xf8] sm:$0xff]
    %v3643 = vld [vmem:[%s3 + $0x100] sm:$0xff]
    %v3644 = vld [vmem:[%s3 + $0x108] sm:$0xff]
    %v3645 = vld [vmem:[%s3 + $0x110] sm:$0xff]
    %v3646 = vld [vmem:[%s3 + $0x118] sm:$0xff]
    %v3647 = vld [vmem:[%s3 + $0x120] sm:$0xff]
    %v3648 = vld [vmem:[%s3 + $0x128] sm:$0xff]
    %v3649 = vld [vmem:[%s3 + $0x130] sm:$0xff]
    %v3650 = vld [vmem:[%s3 + $0x138] sm:$0xff]
    %v3651 = vld [vmem:[%s3 + $0x140] sm:$0xff]
    %v3652 = vld [vmem:[%s3 + $0x148] sm:$0xff]
    %v3653 = vld [vmem:[%s3 + $0x150] sm:$0xff]
    %v3654 = vld [vmem:[%s3 + $0x158] sm:$0xff]
    %v3655 = vld [vmem:[%s3 + $0x160] sm:$0xff]
    %v3656 = vld [vmem:[%s3 + $0x168] sm:$0xff]
    %v3657 = vld [vmem:[%s3 + $0x170] sm:$0xff]
    %v3658 = vld [vmem:[%s3 + $0x178] sm:$0xff]
    %v3659 = vld [vmem:[%s3 + $0x180] sm:$0xff]
    %v3660 = vld [vmem:[%s3 + $0x188] sm:$0xff]
    %v3661 = vld [vmem:[%s3 + $0x190] sm:$0xff]
    %v3662 = vld [vmem:[%s3 + $0x198] sm:$0xff]
    %v3663 = vld [vmem:[%s3 + $0x1a0] sm:$0xff]
    %v3664 = vld [vmem:[%s3 + $0x1a8] sm:$0xff]
    %v3665 = vld [vmem:[%s3 + $0x1b0] sm:$0xff]
    %v3666 = vld [vmem:[%s3 + $0x1b8] sm:$0xff]
    %v3667 = vld [vmem:[%s3 + $0x1c0] sm:$0xff]
    %v3668 = vld [vmem:[%s3 + $0x1c8] sm:$0xff]
    %v3669 = vld [vmem:[%s3 + $0x1d0] sm:$0xff]
    %v3670 = vld [vmem:[%s3 + $0x1d8] sm:$0xff]
    %v3671 = vld [vmem:[%s3 + $0x1e0] sm:$0xff]
    %v3672 = vld [vmem:[%s3 + $0x1e8] sm:$0xff]
    %v3673 = vld [vmem:[%s3 + $0x1f0] sm:$0xff]
    %v3674 = vld [vmem:[%s3 + $0x1f8] sm:$0xff]
    %v3675 = vld [vmem:[%s4] sm:$0x1]
    %v3677 = vlaneseq
    %v3678 = vshrl.u32 %v3677, 7
    %v3679 = vsub.s32 0, %v3678
    %v3680 = vrot.slane %v3675, %v3679
    %3682 = vmatprep.subr.mxu0 0.0
    %3683 = vmatpush1.msra.mxu0 %v3611
    %3684 = vmatprep.subr.mxu0 0.0
    %3685 = vmatpush1.msra.mxu0 %v3612
    %3686 = vmatprep.subr.mxu0 0.0
    %3687 = vmatpush1.msra.mxu0 %v3613
    %3688 = vmatprep.subr.mxu0 0.0
    %3689 = vmatpush1.msra.mxu0 %v3614
    %3690 = vmatprep.subr.mxu0 0.0
    %3691 = vmatpush1.msra.mxu0 %v3615
    %3692 = vmatprep.subr.mxu0 0.0
    %3693 = vmatpush1.msra.mxu0 %v3616
    %3694 = vmatprep.subr.mxu0 0.0
    %3695 = vmatpush1.msra.mxu0 %v3617
    %3696 = vmatprep.subr.mxu0 0.0
    %3697 = vmatpush1.msra.mxu0 %v3618
    %3698 = vmatprep.subr.mxu0 0.0
    %3699 = vmatpush1.msra.mxu0 %v3619
    %3700 = vmatprep.subr.mxu0 0.0
    %3701 = vmatpush1.msra.mxu0 %v3620
    %3702 = vmatprep.subr.mxu0 0.0
    %3703 = vmatpush1.msra.mxu0 %v3621
    %3704 = vmatprep.subr.mxu0 0.0
    %3705 = vmatpush1.msra.mxu0 %v3622
    %3706 = vmatprep.subr.mxu0 0.0
    %3707 = vmatpush1.msra.mxu0 %v3623
    %3708 = vmatprep.subr.mxu0 0.0
    %3709 = vmatpush1.msra.mxu0 %v3624
    %3710 = vmatprep.subr.mxu0 0.0
    %3711 = vmatpush1.msra.mxu0 %v3625
    %3712 = vmatprep.subr.mxu0 0.0
    %3713 = vmatpush1.msra.mxu0 %v3626
    %3714 = vmatprep.subr.mxu0 0.0
    %3715 = vmatpush1.msra.mxu0 %v3627
    %3716 = vmatprep.subr.mxu0 0.0
    %3717 = vmatpush1.msra.mxu0 %v3628
    %3718 = vmatprep.subr.mxu0 0.0
    %3719 = vmatpush1.msra.mxu0 %v3629
    %3720 = vmatprep.subr.mxu0 0.0
    %3721 = vmatpush1.msra.mxu0 %v3630
    %3722 = vmatprep.subr.mxu0 0.0
    %3723 = vmatpush1.msra.mxu0 %v3631
    %3724 = vmatprep.subr.mxu0 0.0
    %3725 = vmatpush1.msra.mxu0 %v3632
    %3726 = vmatprep.subr.mxu0 0.0
    %3727 = vmatpush1.msra.mxu0 %v3633
    %3728 = vmatprep.subr.mxu0 0.0
    %3729 = vmatpush1.msra.mxu0 %v3634
    %3730 = vmatprep.subr.mxu0 0.0
    %3731 = vmatpush1.msra.mxu0 %v3635
    %3732 = vmatprep.subr.mxu0 0.0
    %3733 = vmatpush1.msra.mxu0 %v3636
    %3734 = vmatprep.subr.mxu0 0.0
    %3735 = vmatpush1.msra.mxu0 %v3637
    %3736 = vmatprep.subr.mxu0 0.0
    %3737 = vmatpush1.msra.mxu0 %v3638
    %3738 = vmatprep.subr.mxu0 0.0
    %3739 = vmatpush1.msra.mxu0 %v3639
    %3740 = vmatprep.subr.mxu0 0.0
    %3741 = vmatpush1.msra.mxu0 %v3640
    %3742 = vmatprep.subr.mxu0 0.0
    %3743 = vmatpush1.msra.mxu0 %v3641
    %3744 = vmatprep.subr.mxu0 0.0
    %3745 = vmatpush1.msra.mxu0 %v3642
    %3746 = vmatprep.mubr.f32.mxu0 %v3608
    %3747 = vmatmul.mubr.f32.gmra.mrb[0].mxu0 %v3607
    %v3748 = vpop.f32.mrb[0].mxu0
    %v3749 = vadd.f32 %v3680, %v3748
    %v3750 = vpop.f32.mrb[0].mxu0
    %3751 = vdwg.mxu0
    %3752 = vmatprep.subr.mxu0 0.0
    %3753 = vmatpush1.msra.mxu0 %v3643
    %3754 = vmatprep.subr.mxu0 0.0
    %3755 = vmatpush1.msra.mxu0 %v3644
    %3756 = vmatprep.subr.mxu0 0.0
    %3757 = vmatpush1.msra.mxu0 %v3645
    %3758 = vmatprep.subr.mxu0 0.0
    %3759 = vmatpush1.msra.mxu0 %v3646
    %3760 = vmatprep.subr.mxu0 0.0
    %3761 = vmatpush1.msra.mxu0 %v3647
    %3762 = vmatprep.subr.mxu0 0.0
    %3763 = vmatpush1.msra.mxu0 %v3648
    %3764 = vmatprep.subr.mxu0 0.0
    %3765 = vmatpush1.msra.mxu0 %v3649
    %3766 = vmatprep.subr.mxu0 0.0
    %3767 = vmatpush1.msra.mxu0 %v3650
    %3768 = vmatprep.subr.mxu0 0.0
    %3769 = vmatpush1.msra.mxu0 %v3651
    %3770 = vmatprep.subr.mxu0 0.0
    %3771 = vmatpush1.msra.mxu0 %v3652
    %3772 = vmatprep.subr.mxu0 0.0
    %3773 = vmatpush1.msra.mxu0 %v3653
    %3774 = vmatprep.subr.mxu0 0.0
    %3775 = vmatpush1.msra.mxu0 %v3654
    %3776 = vmatprep.subr.mxu0 0.0
    %3777 = vmatpush1.msra.mxu0 %v3655
    %3778 = vmatprep.subr.mxu0 0.0
    %3779 = vmatpush1.msra.mxu0 %v3656
    %3780 = vmatprep.subr.mxu0 0.0
    %3781 = vmatpush1.msra.mxu0 %v3657
    %3782 = vmatprep.subr.mxu0 0.0
    %3783 = vmatpush1.msra.mxu0 %v3658
    %3784 = vmatprep.subr.mxu0 0.0
    %3785 = vmatpush1.msra.mxu0 %v3659
    %3786 = vmatprep.subr.mxu0 0.0
    %3787 = vmatpush1.msra.mxu0 %v3660
    %3788 = vmatprep.subr.mxu0 0.0
    %3789 = vmatpush1.msra.mxu0 %v3661
    %3790 = vmatprep.subr.mxu0 0.0
    %3791 = vmatpush1.msra.mxu0 %v3662
    %3792 = vmatprep.subr.mxu0 0.0
    %3793 = vmatpush1.msra.mxu0 %v3663
    %3794 = vmatprep.subr.mxu0 0.0
    %3795 = vmatpush1.msra.mxu0 %v3664
    %3796 = vmatprep.subr.mxu0 0.0
    %3797 = vmatpush1.msra.mxu0 %v3665
    %3798 = vmatprep.subr.mxu0 0.0
    %3799 = vmatpush1.msra.mxu0 %v3666
    %3800 = vmatprep.subr.mxu0 0.0
    %3801 = vmatpush1.msra.mxu0 %v3667
    %3802 = vmatprep.subr.mxu0 0.0
    %3803 = vmatpush1.msra.mxu0 %v3668
    %3804 = vmatprep.subr.mxu0 0.0
    %3805 = vmatpush1.msra.mxu0 %v3669
    %3806 = vmatprep.subr.mxu0 0.0
    %3807 = vmatpush1.msra.mxu0 %v3670
    %3808 = vmatprep.subr.mxu0 0.0
    %3809 = vmatpush1.msra.mxu0 %v3671
    %3810 = vmatprep.subr.mxu0 0.0
    %3811 = vmatpush1.msra.mxu0 %v3672
    %3812 = vmatprep.subr.mxu0 0.0
    %3813 = vmatpush1.msra.mxu0 %v3673
    %3814 = vmatprep.subr.mxu0 0.0
    %3815 = vmatpush1.msra.mxu0 %v3674
    %3816 = vmatprep.mubr.f32.mxu0 %v3610
    %3817 = vmatmul.mubr.f32.gmra.mrb[0].mxu0 %v3609
    %v3818 = vpop.f32.mrb[0].mxu0
    %v3819 = vadd.f32 %v3749, %v3818
    %v3820 = vpop.f32.mrb[0].mxu0
    %3821 = vdwg.mxu0
    %3822 = vst [vmem:[#allocation2] sm:$0x3] %v3819
    // Predicated region
    $region22: #{net_forward.7} parent=1 // pred_check
      _
    $region23: #{net_forward.7} parent=1 // pred_check_branch
      %3824 = sbr.rel (0) target = $region25
    $region24: #{net_forward.7} parent=1 // pred_region
      %s3826 = ssub.s32 32, 32
      %3827 = vsyncadd [#allocation3], %s3826
      %s3829 = sshll.u32 [#allocation2], 4
      %s3830 = int_to_ptr.vmem [resolvable:$true] %s3829
      %3832 = dma.vmem_to_hbm [thread:$0]  %s3830, 32, %s5, [#allocation3]
    $region25: #{net_forward.7} parent=1 // pred_fallthru
      _
    // Predicated region
    $region26: #{net_forward.7} parent=1 // pred_check
      _
    $region27: #{net_forward.7} parent=1 // pred_check_branch
      %3834 = sbr.rel (0) target = $region29
    $region28: #{net_forward.7} parent=1 // pred_region
      %3835 = dma.done [#allocation3], 32
    $region29: #{net_forward.7} parent=1 // pred_fallthru
      _
    %3836 = vsyncpa [#allocation3], 1

</llo_original>
